<compile_context>
chip_gen: v6e
topology: v6e:2x2x1
jax: 0.10.0
libtpu: 0.0.40
codegen_flags: <defaults>
</compile_context>

<pallas_src>
import functools

import jax
import jax.numpy as jnp
from jax import lax
from jax.experimental import pallas as pl
from jax.experimental.pallas import tpu as pltpu


# ----------------------------------------------------------------------------- in-kernel helpers
def _mha_block(x_res, q_in, k_in, v_in, w_in, b_in, w_out, b_out, num_heads):
    """Multi-head attention with identity residual, fully in-register.

    x_res:(Lq,E) residual; q_in/k_in:(Lq,E)/(Lk,E) (pos already added); v_in:(Lk,E)
    w_in:(E,3E)=[Wq|Wk|Wv], b_in:(1,3E), w_out:(E,E), b_out:(1,E)
    """
    Lq, E = q_in.shape
    Dh = E // num_heads
    scale = 1.0 / float(Dh) ** 0.5

    q = jnp.dot(q_in, w_in[:, 0:E], preferred_element_type=jnp.float32) + b_in[:, 0:E]
    k = jnp.dot(k_in, w_in[:, E:2 * E], preferred_element_type=jnp.float32) + b_in[:, E:2 * E]
    v = jnp.dot(v_in, w_in[:, 2 * E:3 * E], preferred_element_type=jnp.float32) + b_in[:, 2 * E:3 * E]

    acc = jnp.zeros((Lq, E), jnp.float32)
    # static unroll over heads; output projection folded into the loop so no concat needed
    for h in range(num_heads):
        sl = slice(h * Dh, (h + 1) * Dh)
        qh = q[:, sl]                                   # (Lq, Dh)
        kh = k[:, sl]                                   # (Lk, Dh)
        vh = v[:, sl]                                   # (Lk, Dh)
        s = lax.dot_general(qh, kh, (((1,), (1,)), ((), ())),
                            preferred_element_type=jnp.float32) * scale   # (Lq, Lk)
        s = s - jnp.max(s, axis=-1, keepdims=True)
        p = jnp.exp(s)
        p = p * pl.reciprocal(jnp.sum(p, axis=-1, keepdims=True), approx=True)
        oh = jnp.dot(p, vh, preferred_element_type=jnp.float32)           # (Lq, Dh)
        acc = acc + jnp.dot(oh, w_out[sl, :], preferred_element_type=jnp.float32)
    return x_res + acc + b_out                          # identity residual (dropout = eval)


def _layer_norm(x, gamma, beta, eps):
    mu = jnp.mean(x, axis=-1, keepdims=True)
    xc = x - mu
    var = jnp.mean(xc * xc, axis=-1, keepdims=True)
    return xc * lax.rsqrt(var + eps) * gamma + beta


# ----------------------------------------------------------------------------- fused kernels
def _fine_layer_kernel(q_ref, k_ref, v_ref, bevp_ref, qpos_ref, kpos_ref,
                       w_in0_ref, b_in0_ref, w_out0_ref, b_out0_ref,
                       w_in1_ref, b_in1_ref, w_out1_ref, b_out1_ref,
                       ffn_w1_ref, ffn_b1_ref, ffn_w2_ref, ffn_b2_ref,
                       ln_g_ref, ln_b_ref,
                       o_ref, *, num_heads, eps):
    x = q_ref[0].astype(jnp.float32)            # (Lq, E)
    key = k_ref[0].astype(jnp.float32)          # (Lk, E)
    value = v_ref[0].astype(jnp.float32)        # (Lk, E)
    bev_pos = bevp_ref[0].astype(jnp.float32)
    q_pos = qpos_ref[0].astype(jnp.float32)
    k_pos = kpos_ref[0].astype(jnp.float32)

    # --- self-attention (key = value = query, positional embedding = bev_pos) + residual
    xp = x + bev_pos
    x = _mha_block(x, xp, xp, x,
                   w_in0_ref[...], b_in0_ref[...], w_out0_ref[...], b_out0_ref[...],
                   num_heads)
    x = _layer_norm(x, ln_g_ref[0:1, :], ln_b_ref[0:1, :], eps)

    # --- cross-attention against image features + residual
    x = _mha_block(x, x + q_pos, key + k_pos, value,
                   w_in1_ref[...], b_in1_ref[...], w_out1_ref[...], b_out1_ref[...],
                   num_heads)
    x = _layer_norm(x, ln_g_ref[1:2, :], ln_b_ref[1:2, :], eps)

    # --- FFN (2-layer ReLU) with identity residual + final norm
    h = jnp.maximum(
        jnp.dot(x, ffn_w1_ref[...], preferred_element_type=jnp.float32) + ffn_b1_ref[...],
        0.0)
    x = x + jnp.dot(h, ffn_w2_ref[...], preferred_element_type=jnp.float32) + ffn_b2_ref[...]
    x = _layer_norm(x, ln_g_ref[2:3, :], ln_b_ref[2:3, :], eps)

    o_ref[0] = x.astype(o_ref.dtype)


def _coarse_layer_kernel(q_ref, k_ref, v_ref, qpos_ref, kpos_ref,
                         w_in_ref, b_in_ref, w_out_ref, b_out_ref,
                         o_ref, *, num_heads):
    x = q_ref[0].astype(jnp.float32)
    key = k_ref[0].astype(jnp.float32)
    value = v_ref[0].astype(jnp.float32)
    y = _mha_block(x,
                   x + qpos_ref[0].astype(jnp.float32),
                   key + kpos_ref[0].astype(jnp.float32),
                   value,
                   w_in_ref[...], b_in_ref[...], w_out_ref[...], b_out_ref[...],
                   num_heads)
    o_ref[0] = y.astype(o_ref.dtype)


# ----------------------------------------------------------------------------- params
def init_params(key, embed_dims, feedforward_channels, mode, dtype=jnp.float32):
    E = embed_dims

    def dense(k, fan_in, fan_out):
        return jax.random.normal(k, (fan_in, fan_out), dtype) * 0.02

    def mha_params(k):
        ks = jax.random.split(k, 2)
        return dict(
            w_in=dense(ks[0], E, 3 * E),                 # packed [Wq | Wk | Wv]
            b_in=jnp.zeros((1, 3 * E), dtype),
            w_out=dense(ks[1], E, E),
            b_out=jnp.zeros((1, E), dtype),
        )

    keys = jax.random.split(key, 4)
    params = {}
    if mode == "coarse":
        params["attn0"] = mha_params(keys[0])            # UVCoarseAttention stand-in
    elif mode == "fine":
        params["attn0"] = mha_params(keys[0])            # UVSelfAttention stand-in
        params["attn1"] = mha_params(keys[1])            # UVCrossAttention stand-in
        params["ffn"] = dict(
            w1=dense(keys[2], E, feedforward_channels),
            b1=jnp.zeros((1, feedforward_channels), dtype),
            w2=dense(keys[3], feedforward_channels, E),
            b2=jnp.zeros((1, E), dtype),
        )
        params["ln_gamma"] = jnp.ones((3, E), dtype)      # 3 LayerNorms packed row-wise
        params["ln_beta"] = jnp.zeros((3, E), dtype)
    else:
        raise NotImplementedError
    return params


# ----------------------------------------------------------------------------- module wrapper
def uv_transformer_encoder_layer(params, query, key, value, *, mode, num_heads,
                                 bev_pos=None, query_pos=None, key_pos=None, eps=1e-5):
    """query: (Lq, B, E); key/value: (Lk, B, E)  (sequence-first, batch_first=False)."""
    Lq, B, E = query.shape
    Lk = key.shape[0]

    def bf(x, L):  # seq-first -> batch-first slab; zeros for absent positional embeddings
        if x is None:
            return jnp.zeros((B, L, E), query.dtype)
        return jnp.swapaxes(x, 0, 1)

    q_b, k_b, v_b = bf(query, Lq), bf(key, Lk), bf(value, Lk)

    q_spec = pl.BlockSpec((1, Lq, E), lambda b: (b, 0, 0))
    k_spec = pl.BlockSpec((1, Lk, E), lambda b: (b, 0, 0))

    def wspec(shape):  # weights stay resident across the (tiny) batch grid
        return pl.BlockSpec(shape, lambda b: tuple(0 for _ in shape))

    cparams = pltpu.CompilerParams(dimension_semantics=("parallel",))

    if mode == "coarse":
        a = params["attn0"]
        out_b = pl.pallas_call(
            functools.partial(_coarse_layer_kernel, num_heads=num_heads),
            out_shape=jax.ShapeDtypeStruct((B, Lq, E), query.dtype),
            grid=(B,),
            in_specs=[q_spec, k_spec, k_spec, q_spec, k_spec,
                      wspec((E, 3 * E)), wspec((1, 3 * E)),
                      wspec((E, E)), wspec((1, E))],
            out_specs=q_spec,
            compiler_params=cparams,
        )(q_b, k_b, v_b, bf(query_pos, Lq), bf(key_pos, Lk),
          a["w_in"], a["b_in"], a["w_out"], a["b_out"])
    elif mode == "fine":
        a0, a1, f = params["attn0"], params["attn1"], params["ffn"]
        F = f["w1"].shape[1]
        out_b = pl.pallas_call(
            functools.partial(_fine_layer_kernel, num_heads=num_heads, eps=eps),
            out_shape=jax.ShapeDtypeStruct((B, Lq, E), query.dtype),
            grid=(B,),
            in_specs=[q_spec, k_spec, k_spec, q_spec, q_spec, k_spec,
                      wspec((E, 3 * E)), wspec((1, 3 * E)), wspec((E, E)), wspec((1, E)),
                      wspec((E, 3 * E)), wspec((1, 3 * E)), wspec((E, E)), wspec((1, E)),
                      wspec((E, F)), wspec((1, F)), wspec((F, E)), wspec((1, E)),
                      wspec((3, E)), wspec((3, E))],
            out_specs=q_spec,
            compiler_params=cparams,
        )(q_b, k_b, v_b, bf(bev_pos, Lq), bf(query_pos, Lq), bf(key_pos, Lk),
          a0["w_in"], a0["b_in"], a0["w_out"], a0["b_out"],
          a1["w_in"], a1["b_in"], a1["w_out"], a1["b_out"],
          f["w1"], f["b1"], f["w2"], f["b2"],
          params["ln_gamma"], params["ln_beta"])
    else:
        raise NotImplementedError
    return jnp.swapaxes(out_b, 0, 1)                     # back to (Lq, B, E)


# ----------------------------------------------------------------------------- main
if __name__ == "__main__":
    embed_dims = 32
    num_heads = 8
    feedforward_channels = 64
    bev_u, bev_v = 4, 4
    Lq = bev_u * bev_v          # BEV query length
    Lk = 8                      # key/value (image feature) length
    B = 2

    root = jax.random.PRNGKey(0)
    k_in, k_par = jax.random.split(root)
    kq, kk, kv, kbp, kqp = jax.random.split(k_in, 5)

    query = jax.random.normal(kq, (Lq, B, embed_dims), jnp.float32)
    key = jax.random.normal(kk, (Lk, B, embed_dims), jnp.float32)
    value = jax.random.normal(kv, (Lk, B, embed_dims), jnp.float32)
    bev_pos = jax.random.normal(kbp, (Lq, B, embed_dims), jnp.float32)
    query_pos = jax.random.normal(kqp, (Lq, B, embed_dims), jnp.float32)

    # --- fine mode (self-attn -> LN -> cross-attn -> LN -> FFN -> LN), fully fused
    params_fine = init_params(k_par, embed_dims, feedforward_channels, mode="fine")
    layer_fine = jax.jit(functools.partial(
        uv_transformer_encoder_layer, mode="fine", num_heads=num_heads))
    out = layer_fine(params_fine, query, key, value,
                     bev_pos=bev_pos, query_pos=query_pos)
    out = jax.block_until_ready(out)
    assert out.shape == (Lq, B, embed_dims) and out.dtype == jnp.float32
    assert bool(jnp.all(jnp.isfinite(out)))

    # --- coarse mode (single cross-attention), fully fused
    params_coarse = init_params(k_par, embed_dims, feedforward_channels, mode="coarse")
    layer_coarse = jax.jit(functools.partial(
        uv_transformer_encoder_layer, mode="coarse", num_heads=num_heads))
    out_c = layer_coarse(params_coarse, query, key, value, query_pos=query_pos)
    out_c = jax.block_until_ready(out_c)
    assert out_c.shape == (Lq, B, embed_dims)
    assert bool(jnp.all(jnp.isfinite(out_c)))

    print("KERNEL_OK")
</pallas_src>

<mosaic_0001>
module attributes {stable_mosaic.version = 11 : i64} {
  func.func @_fine_layer_kernel(%arg0: i32, %arg1: memref<1x16x32xf32, #tpu.memory_space<vmem>>, %arg2: memref<1x8x32xf32, #tpu.memory_space<vmem>>, %arg3: memref<1x8x32xf32, #tpu.memory_space<vmem>>, %arg4: memref<1x16x32xf32, #tpu.memory_space<vmem>>, %arg5: memref<1x16x32xf32, #tpu.memory_space<vmem>>, %arg6: memref<1x8x32xf32, #tpu.memory_space<vmem>>, %arg7: memref<32x96xf32, #tpu.memory_space<vmem>>, %arg8: memref<1x96xf32, #tpu.memory_space<vmem>>, %arg9: memref<32x32xf32, #tpu.memory_space<vmem>>, %arg10: memref<1x32xf32, #tpu.memory_space<vmem>>, %arg11: memref<32x96xf32, #tpu.memory_space<vmem>>, %arg12: memref<1x96xf32, #tpu.memory_space<vmem>>, %arg13: memref<32x32xf32, #tpu.memory_space<vmem>>, %arg14: memref<1x32xf32, #tpu.memory_space<vmem>>, %arg15: memref<32x64xf32, #tpu.memory_space<vmem>>, %arg16: memref<1x64xf32, #tpu.memory_space<vmem>>, %arg17: memref<64x32xf32, #tpu.memory_space<vmem>>, %arg18: memref<1x32xf32, #tpu.memory_space<vmem>>, %arg19: memref<3x32xf32, #tpu.memory_space<vmem>>, %arg20: memref<3x32xf32, #tpu.memory_space<vmem>>, %arg21: memref<1x16x32xf32, #tpu.memory_space<vmem>>) attributes {dimension_semantics = [#tpu.dimension_semantics<parallel>], iteration_bounds = array<i64: 2>, scalar_prefetch = 0 : i64, scratch_operands = 0 : i64, tpu.core_type = #tpu.core_type<tc>, window_params = [{transform_indices = @transform_0, window_bounds = array<i64: 1, 16, 32>}, {transform_indices = @transform_1, window_bounds = array<i64: 1, 8, 32>}, {transform_indices = @transform_2, window_bounds = array<i64: 1, 8, 32>}, {transform_indices = @transform_3, window_bounds = array<i64: 1, 16, 32>}, {transform_indices = @transform_4, window_bounds = array<i64: 1, 16, 32>}, {transform_indices = @transform_5, window_bounds = array<i64: 1, 8, 32>}, {pipeline_mode = #tpu.pipeline_mode<synchronous>, transform_indices = @transform_6, window_bounds = array<i64: 32, 96>}, {pipeline_mode = #tpu.pipeline_mode<synchronous>, transform_indices = @transform_7, window_bounds = array<i64: 1, 96>}, {pipeline_mode = #tpu.pipeline_mode<synchronous>, transform_indices = @transform_8, window_bounds = array<i64: 32, 32>}, {pipeline_mode = #tpu.pipeline_mode<synchronous>, transform_indices = @transform_9, window_bounds = array<i64: 1, 32>}, {pipeline_mode = #tpu.pipeline_mode<synchronous>, transform_indices = @transform_10, window_bounds = array<i64: 32, 96>}, {pipeline_mode = #tpu.pipeline_mode<synchronous>, transform_indices = @transform_11, window_bounds = array<i64: 1, 96>}, {pipeline_mode = #tpu.pipeline_mode<synchronous>, transform_indices = @transform_12, window_bounds = array<i64: 32, 32>}, {pipeline_mode = #tpu.pipeline_mode<synchronous>, transform_indices = @transform_13, window_bounds = array<i64: 1, 32>}, {pipeline_mode = #tpu.pipeline_mode<synchronous>, transform_indices = @transform_14, window_bounds = array<i64: 32, 64>}, {pipeline_mode = #tpu.pipeline_mode<synchronous>, transform_indices = @transform_15, window_bounds = array<i64: 1, 64>}, {pipeline_mode = #tpu.pipeline_mode<synchronous>, transform_indices = @transform_16, window_bounds = array<i64: 64, 32>}, {pipeline_mode = #tpu.pipeline_mode<synchronous>, transform_indices = @transform_17, window_bounds = array<i64: 1, 32>}, {pipeline_mode = #tpu.pipeline_mode<synchronous>, transform_indices = @transform_18, window_bounds = array<i64: 3, 32>}, {pipeline_mode = #tpu.pipeline_mode<synchronous>, transform_indices = @transform_19, window_bounds = array<i64: 3, 32>}, {transform_indices = @transform_20, window_bounds = array<i64: 1, 16, 32>}]} {
    %c0 = arith.constant 0 : index
    %c0_0 = arith.constant 0 : index
    %c0_1 = arith.constant 0 : index
    %0 = vector.load %arg1[%c0, %c0_0, %c0_1] : memref<1x16x32xf32, #tpu.memory_space<vmem>>, vector<1x16x32xf32>
    %1 = vector.shape_cast %0 : vector<1x16x32xf32> to vector<16x32xf32>
    %c0_2 = arith.constant 0 : index
    %c0_3 = arith.constant 0 : index
    %c0_4 = arith.constant 0 : index
    %2 = vector.load %arg2[%c0_2, %c0_3, %c0_4] : memref<1x8x32xf32, #tpu.memory_space<vmem>>, vector<1x8x32xf32>
    %3 = vector.shape_cast %2 : vector<1x8x32xf32> to vector<8x32xf32>
    %c0_5 = arith.constant 0 : index
    %c0_6 = arith.constant 0 : index
    %c0_7 = arith.constant 0 : index
    %4 = vector.load %arg3[%c0_5, %c0_6, %c0_7] : memref<1x8x32xf32, #tpu.memory_space<vmem>>, vector<1x8x32xf32>
    %5 = vector.shape_cast %4 : vector<1x8x32xf32> to vector<8x32xf32>
    %c0_8 = arith.constant 0 : index
    %c0_9 = arith.constant 0 : index
    %c0_10 = arith.constant 0 : index
    %6 = vector.load %arg4[%c0_8, %c0_9, %c0_10] : memref<1x16x32xf32, #tpu.memory_space<vmem>>, vector<1x16x32xf32>
    %7 = vector.shape_cast %6 : vector<1x16x32xf32> to vector<16x32xf32>
    %c0_11 = arith.constant 0 : index
    %c0_12 = arith.constant 0 : index
    %c0_13 = arith.constant 0 : index
    %8 = vector.load %arg5[%c0_11, %c0_12, %c0_13] : memref<1x16x32xf32, #tpu.memory_space<vmem>>, vector<1x16x32xf32>
    %9 = vector.shape_cast %8 : vector<1x16x32xf32> to vector<16x32xf32>
    %c0_14 = arith.constant 0 : index
    %c0_15 = arith.constant 0 : index
    %c0_16 = arith.constant 0 : index
    %10 = vector.load %arg6[%c0_14, %c0_15, %c0_16] : memref<1x8x32xf32, #tpu.memory_space<vmem>>, vector<1x8x32xf32>
    %11 = vector.shape_cast %10 : vector<1x8x32xf32> to vector<8x32xf32>
    %12 = arith.addf %1, %7 : vector<16x32xf32>
    %c0_17 = arith.constant 0 : index
    %c0_18 = arith.constant 0 : index
    %13 = vector.load %arg7[%c0_17, %c0_18] : memref<32x96xf32, #tpu.memory_space<vmem>>, vector<32x96xf32>
    %c0_19 = arith.constant 0 : index
    %c0_20 = arith.constant 0 : index
    %14 = vector.load %arg8[%c0_19, %c0_20] : memref<1x96xf32, #tpu.memory_space<vmem>>, vector<1x96xf32>
    %c0_21 = arith.constant 0 : index
    %c0_22 = arith.constant 0 : index
    %15 = vector.load %arg9[%c0_21, %c0_22] : memref<32x32xf32, #tpu.memory_space<vmem>>, vector<32x32xf32>
    %c0_23 = arith.constant 0 : index
    %c0_24 = arith.constant 0 : index
    %16 = vector.load %arg10[%c0_23, %c0_24] : memref<1x32xf32, #tpu.memory_space<vmem>>, vector<1x32xf32>
    %17 = vector.extract_strided_slice %13 {offsets = [0, 0], sizes = [32, 32], strides = [1, 1]} : vector<32x96xf32> to vector<32x32xf32>
    %cst = arith.constant dense<0.000000e+00> : vector<16x32xf32>
    %18 = tpu.matmul %12, %17, %cst {dimension_numbers = #tpu.dot_dimension_numbers<[1], [0], [0], [1], [0, 0, 1, 1], [], []>} : vector<16x32xf32>, vector<32x32xf32>, vector<16x32xf32> -> vector<16x32xf32>
    %19 = vector.extract_strided_slice %14 {offsets = [0, 0], sizes = [1, 32], strides = [1, 1]} : vector<1x96xf32> to vector<1x32xf32>
    %20 = vector.broadcast %19 : vector<1x32xf32> to vector<16x32xf32>
    %21 = arith.addf %18, %20 : vector<16x32xf32>
    %22 = vector.extract_strided_slice %13 {offsets = [0, 32], sizes = [32, 32], strides = [1, 1]} : vector<32x96xf32> to vector<32x32xf32>
    %cst_25 = arith.constant dense<0.000000e+00> : vector<16x32xf32>
    %23 = tpu.matmul %12, %22, %cst_25 {dimension_numbers = #tpu.dot_dimension_numbers<[1], [0], [0], [1], [0, 0, 1, 1], [], []>} : vector<16x32xf32>, vector<32x32xf32>, vector<16x32xf32> -> vector<16x32xf32>
    %24 = vector.extract_strided_slice %14 {offsets = [0, 32], sizes = [1, 32], strides = [1, 1]} : vector<1x96xf32> to vector<1x32xf32>
    %25 = vector.broadcast %24 : vector<1x32xf32> to vector<16x32xf32>
    %26 = arith.addf %23, %25 : vector<16x32xf32>
    %27 = vector.extract_strided_slice %13 {offsets = [0, 64], sizes = [32, 32], strides = [1, 1]} : vector<32x96xf32> to vector<32x32xf32>
    %cst_26 = arith.constant dense<0.000000e+00> : vector<16x32xf32>
    %28 = tpu.matmul %1, %27, %cst_26 {dimension_numbers = #tpu.dot_dimension_numbers<[1], [0], [0], [1], [0, 0, 1, 1], [], []>} : vector<16x32xf32>, vector<32x32xf32>, vector<16x32xf32> -> vector<16x32xf32>
    %29 = vector.extract_strided_slice %14 {offsets = [0, 64], sizes = [1, 32], strides = [1, 1]} : vector<1x96xf32> to vector<1x32xf32>
    %30 = vector.broadcast %29 : vector<1x32xf32> to vector<16x32xf32>
    %31 = arith.addf %28, %30 : vector<16x32xf32>
    %cst_27 = arith.constant 0.000000e+00 : f32
    %32 = vector.broadcast %cst_27 : f32 to vector<16x32xf32>
    %33 = vector.extract_strided_slice %21 {offsets = [0, 0], sizes = [16, 4], strides = [1, 1]} : vector<16x32xf32> to vector<16x4xf32>
    %34 = vector.extract_strided_slice %26 {offsets = [0, 0], sizes = [16, 4], strides = [1, 1]} : vector<16x32xf32> to vector<16x4xf32>
    %35 = vector.extract_strided_slice %31 {offsets = [0, 0], sizes = [16, 4], strides = [1, 1]} : vector<16x32xf32> to vector<16x4xf32>
    %cst_28 = arith.constant dense<0.000000e+00> : vector<16x16xf32>
    %36 = tpu.matmul %33, %34, %cst_28 {dimension_numbers = #tpu.dot_dimension_numbers<[1], [1], [0], [0], [0, 0, 1, 0], [], []>} : vector<16x4xf32>, vector<16x4xf32>, vector<16x16xf32> -> vector<16x16xf32>
    %cst_29 = arith.constant 5.000000e-01 : f32
    %37 = vector.broadcast %cst_29 : f32 to vector<16x16xf32>
    %38 = arith.mulf %36, %37 : vector<16x16xf32>
    %cst_30 = arith.constant dense<0xFF800000> : vector<16xf32>
    %39 = vector.multi_reduction <maximumf>, %38, %cst_30 [1] : vector<16x16xf32> to vector<16xf32>
    %40 = vector.shape_cast %39 : vector<16xf32> to vector<16x1xf32>
    %41 = vector.broadcast %40 : vector<16x1xf32> to vector<16x16xf32>
    %42 = arith.subf %38, %41 : vector<16x16xf32>
    %43 = math.exp %42 : vector<16x16xf32>
    %cst_31 = arith.constant dense<0.000000e+00> : vector<16xf32>
    %44 = vector.multi_reduction <add>, %43, %cst_31 [1] : vector<16x16xf32> to vector<16xf32>
    %45 = vector.shape_cast %44 : vector<16xf32> to vector<16x1xf32>
    %46 = tpu.reciprocal %45 {approx = true} : vector<16x1xf32> -> vector<16x1xf32>
    %47 = vector.broadcast %46 : vector<16x1xf32> to vector<16x16xf32>
    %48 = arith.mulf %43, %47 : vector<16x16xf32>
    %cst_32 = arith.constant dense<0.000000e+00> : vector<16x4xf32>
    %49 = tpu.matmul %48, %35, %cst_32 {dimension_numbers = #tpu.dot_dimension_numbers<[1], [0], [0], [1], [0, 0, 1, 1], [], []>} : vector<16x16xf32>, vector<16x4xf32>, vector<16x4xf32> -> vector<16x4xf32>
    %50 = vector.extract_strided_slice %15 {offsets = [0, 0], sizes = [4, 32], strides = [1, 1]} : vector<32x32xf32> to vector<4x32xf32>
    %cst_33 = arith.constant dense<0.000000e+00> : vector<16x32xf32>
    %51 = tpu.matmul %49, %50, %cst_33 {dimension_numbers = #tpu.dot_dimension_numbers<[1], [0], [0], [1], [0, 0, 1, 1], [], []>} : vector<16x4xf32>, vector<4x32xf32>, vector<16x32xf32> -> vector<16x32xf32>
    %52 = arith.addf %32, %51 : vector<16x32xf32>
    %53 = vector.extract_strided_slice %21 {offsets = [0, 4], sizes = [16, 4], strides = [1, 1]} : vector<16x32xf32> to vector<16x4xf32>
    %54 = vector.extract_strided_slice %26 {offsets = [0, 4], sizes = [16, 4], strides = [1, 1]} : vector<16x32xf32> to vector<16x4xf32>
    %55 = vector.extract_strided_slice %31 {offsets = [0, 4], sizes = [16, 4], strides = [1, 1]} : vector<16x32xf32> to vector<16x4xf32>
    %cst_34 = arith.constant dense<0.000000e+00> : vector<16x16xf32>
    %56 = tpu.matmul %53, %54, %cst_34 {dimension_numbers = #tpu.dot_dimension_numbers<[1], [1], [0], [0], [0, 0, 1, 0], [], []>} : vector<16x4xf32>, vector<16x4xf32>, vector<16x16xf32> -> vector<16x16xf32>
    %cst_35 = arith.constant 5.000000e-01 : f32
    %57 = vector.broadcast %cst_35 : f32 to vector<16x16xf32>
    %58 = arith.mulf %56, %57 : vector<16x16xf32>
    %cst_36 = arith.constant dense<0xFF800000> : vector<16xf32>
    %59 = vector.multi_reduction <maximumf>, %58, %cst_36 [1] : vector<16x16xf32> to vector<16xf32>
    %60 = vector.shape_cast %59 : vector<16xf32> to vector<16x1xf32>
    %61 = vector.broadcast %60 : vector<16x1xf32> to vector<16x16xf32>
    %62 = arith.subf %58, %61 : vector<16x16xf32>
    %63 = math.exp %62 : vector<16x16xf32>
    %cst_37 = arith.constant dense<0.000000e+00> : vector<16xf32>
    %64 = vector.multi_reduction <add>, %63, %cst_37 [1] : vector<16x16xf32> to vector<16xf32>
    %65 = vector.shape_cast %64 : vector<16xf32> to vector<16x1xf32>
    %66 = tpu.reciprocal %65 {approx = true} : vector<16x1xf32> -> vector<16x1xf32>
    %67 = vector.broadcast %66 : vector<16x1xf32> to vector<16x16xf32>
    %68 = arith.mulf %63, %67 : vector<16x16xf32>
    %cst_38 = arith.constant dense<0.000000e+00> : vector<16x4xf32>
    %69 = tpu.matmul %68, %55, %cst_38 {dimension_numbers = #tpu.dot_dimension_numbers<[1], [0], [0], [1], [0, 0, 1, 1], [], []>} : vector<16x16xf32>, vector<16x4xf32>, vector<16x4xf32> -> vector<16x4xf32>
    %70 = vector.extract_strided_slice %15 {offsets = [4, 0], sizes = [4, 32], strides = [1, 1]} : vector<32x32xf32> to vector<4x32xf32>
    %cst_39 = arith.constant dense<0.000000e+00> : vector<16x32xf32>
    %71 = tpu.matmul %69, %70, %cst_39 {dimension_numbers = #tpu.dot_dimension_numbers<[1], [0], [0], [1], [0, 0, 1, 1], [], []>} : vector<16x4xf32>, vector<4x32xf32>, vector<16x32xf32> -> vector<16x32xf32>
    %72 = arith.addf %52, %71 : vector<16x32xf32>
    %73 = vector.extract_strided_slice %21 {offsets = [0, 8], sizes = [16, 4], strides = [1, 1]} : vector<16x32xf32> to vector<16x4xf32>
    %74 = vector.extract_strided_slice %26 {offsets = [0, 8], sizes = [16, 4], strides = [1, 1]} : vector<16x32xf32> to vector<16x4xf32>
    %75 = vector.extract_strided_slice %31 {offsets = [0, 8], sizes = [16, 4], strides = [1, 1]} : vector<16x32xf32> to vector<16x4xf32>
    %cst_40 = arith.constant dense<0.000000e+00> : vector<16x16xf32>
    %76 = tpu.matmul %73, %74, %cst_40 {dimension_numbers = #tpu.dot_dimension_numbers<[1], [1], [0], [0], [0, 0, 1, 0], [], []>} : vector<16x4xf32>, vector<16x4xf32>, vector<16x16xf32> -> vector<16x16xf32>
    %cst_41 = arith.constant 5.000000e-01 : f32
    %77 = vector.broadcast %cst_41 : f32 to vector<16x16xf32>
    %78 = arith.mulf %76, %77 : vector<16x16xf32>
    %cst_42 = arith.constant dense<0xFF800000> : vector<16xf32>
    %79 = vector.multi_reduction <maximumf>, %78, %cst_42 [1] : vector<16x16xf32> to vector<16xf32>
    %80 = vector.shape_cast %79 : vector<16xf32> to vector<16x1xf32>
    %81 = vector.broadcast %80 : vector<16x1xf32> to vector<16x16xf32>
    %82 = arith.subf %78, %81 : vector<16x16xf32>
    %83 = math.exp %82 : vector<16x16xf32>
    %cst_43 = arith.constant dense<0.000000e+00> : vector<16xf32>
    %84 = vector.multi_reduction <add>, %83, %cst_43 [1] : vector<16x16xf32> to vector<16xf32>
    %85 = vector.shape_cast %84 : vector<16xf32> to vector<16x1xf32>
    %86 = tpu.reciprocal %85 {approx = true} : vector<16x1xf32> -> vector<16x1xf32>
    %87 = vector.broadcast %86 : vector<16x1xf32> to vector<16x16xf32>
    %88 = arith.mulf %83, %87 : vector<16x16xf32>
    %cst_44 = arith.constant dense<0.000000e+00> : vector<16x4xf32>
    %89 = tpu.matmul %88, %75, %cst_44 {dimension_numbers = #tpu.dot_dimension_numbers<[1], [0], [0], [1], [0, 0, 1, 1], [], []>} : vector<16x16xf32>, vector<16x4xf32>, vector<16x4xf32> -> vector<16x4xf32>
    %90 = vector.extract_strided_slice %15 {offsets = [8, 0], sizes = [4, 32], strides = [1, 1]} : vector<32x32xf32> to vector<4x32xf32>
    %cst_45 = arith.constant dense<0.000000e+00> : vector<16x32xf32>
    %91 = tpu.matmul %89, %90, %cst_45 {dimension_numbers = #tpu.dot_dimension_numbers<[1], [0], [0], [1], [0, 0, 1, 1], [], []>} : vector<16x4xf32>, vector<4x32xf32>, vector<16x32xf32> -> vector<16x32xf32>
    %92 = arith.addf %72, %91 : vector<16x32xf32>
    %93 = vector.extract_strided_slice %21 {offsets = [0, 12], sizes = [16, 4], strides = [1, 1]} : vector<16x32xf32> to vector<16x4xf32>
    %94 = vector.extract_strided_slice %26 {offsets = [0, 12], sizes = [16, 4], strides = [1, 1]} : vector<16x32xf32> to vector<16x4xf32>
    %95 = vector.extract_strided_slice %31 {offsets = [0, 12], sizes = [16, 4], strides = [1, 1]} : vector<16x32xf32> to vector<16x4xf32>
    %cst_46 = arith.constant dense<0.000000e+00> : vector<16x16xf32>
    %96 = tpu.matmul %93, %94, %cst_46 {dimension_numbers = #tpu.dot_dimension_numbers<[1], [1], [0], [0], [0, 0, 1, 0], [], []>} : vector<16x4xf32>, vector<16x4xf32>, vector<16x16xf32> -> vector<16x16xf32>
    %cst_47 = arith.constant 5.000000e-01 : f32
    %97 = vector.broadcast %cst_47 : f32 to vector<16x16xf32>
    %98 = arith.mulf %96, %97 : vector<16x16xf32>
    %cst_48 = arith.constant dense<0xFF800000> : vector<16xf32>
    %99 = vector.multi_reduction <maximumf>, %98, %cst_48 [1] : vector<16x16xf32> to vector<16xf32>
    %100 = vector.shape_cast %99 : vector<16xf32> to vector<16x1xf32>
    %101 = vector.broadcast %100 : vector<16x1xf32> to vector<16x16xf32>
    %102 = arith.subf %98, %101 : vector<16x16xf32>
    %103 = math.exp %102 : vector<16x16xf32>
    %cst_49 = arith.constant dense<0.000000e+00> : vector<16xf32>
    %104 = vector.multi_reduction <add>, %103, %cst_49 [1] : vector<16x16xf32> to vector<16xf32>
    %105 = vector.shape_cast %104 : vector<16xf32> to vector<16x1xf32>
    %106 = tpu.reciprocal %105 {approx = true} : vector<16x1xf32> -> vector<16x1xf32>
    %107 = vector.broadcast %106 : vector<16x1xf32> to vector<16x16xf32>
    %108 = arith.mulf %103, %107 : vector<16x16xf32>
    %cst_50 = arith.constant dense<0.000000e+00> : vector<16x4xf32>
    %109 = tpu.matmul %108, %95, %cst_50 {dimension_numbers = #tpu.dot_dimension_numbers<[1], [0], [0], [1], [0, 0, 1, 1], [], []>} : vector<16x16xf32>, vector<16x4xf32>, vector<16x4xf32> -> vector<16x4xf32>
    %110 = vector.extract_strided_slice %15 {offsets = [12, 0], sizes = [4, 32], strides = [1, 1]} : vector<32x32xf32> to vector<4x32xf32>
    %cst_51 = arith.constant dense<0.000000e+00> : vector<16x32xf32>
    %111 = tpu.matmul %109, %110, %cst_51 {dimension_numbers = #tpu.dot_dimension_numbers<[1], [0], [0], [1], [0, 0, 1, 1], [], []>} : vector<16x4xf32>, vector<4x32xf32>, vector<16x32xf32> -> vector<16x32xf32>
    %112 = arith.addf %92, %111 : vector<16x32xf32>
    %113 = vector.extract_strided_slice %21 {offsets = [0, 16], sizes = [16, 4], strides = [1, 1]} : vector<16x32xf32> to vector<16x4xf32>
    %114 = vector.extract_strided_slice %26 {offsets = [0, 16], sizes = [16, 4], strides = [1, 1]} : vector<16x32xf32> to vector<16x4xf32>
    %115 = vector.extract_strided_slice %31 {offsets = [0, 16], sizes = [16, 4], strides = [1, 1]} : vector<16x32xf32> to vector<16x4xf32>
    %cst_52 = arith.constant dense<0.000000e+00> : vector<16x16xf32>
    %116 = tpu.matmul %113, %114, %cst_52 {dimension_numbers = #tpu.dot_dimension_numbers<[1], [1], [0], [0], [0, 0, 1, 0], [], []>} : vector<16x4xf32>, vector<16x4xf32>, vector<16x16xf32> -> vector<16x16xf32>
    %cst_53 = arith.constant 5.000000e-01 : f32
    %117 = vector.broadcast %cst_53 : f32 to vector<16x16xf32>
    %118 = arith.mulf %116, %117 : vector<16x16xf32>
    %cst_54 = arith.constant dense<0xFF800000> : vector<16xf32>
    %119 = vector.multi_reduction <maximumf>, %118, %cst_54 [1] : vector<16x16xf32> to vector<16xf32>
    %120 = vector.shape_cast %119 : vector<16xf32> to vector<16x1xf32>
    %121 = vector.broadcast %120 : vector<16x1xf32> to vector<16x16xf32>
    %122 = arith.subf %118, %121 : vector<16x16xf32>
    %123 = math.exp %122 : vector<16x16xf32>
    %cst_55 = arith.constant dense<0.000000e+00> : vector<16xf32>
    %124 = vector.multi_reduction <add>, %123, %cst_55 [1] : vector<16x16xf32> to vector<16xf32>
    %125 = vector.shape_cast %124 : vector<16xf32> to vector<16x1xf32>
    %126 = tpu.reciprocal %125 {approx = true} : vector<16x1xf32> -> vector<16x1xf32>
    %127 = vector.broadcast %126 : vector<16x1xf32> to vector<16x16xf32>
    %128 = arith.mulf %123, %127 : vector<16x16xf32>
    %cst_56 = arith.constant dense<0.000000e+00> : vector<16x4xf32>
    %129 = tpu.matmul %128, %115, %cst_56 {dimension_numbers = #tpu.dot_dimension_numbers<[1], [0], [0], [1], [0, 0, 1, 1], [], []>} : vector<16x16xf32>, vector<16x4xf32>, vector<16x4xf32> -> vector<16x4xf32>
    %130 = vector.extract_strided_slice %15 {offsets = [16, 0], sizes = [4, 32], strides = [1, 1]} : vector<32x32xf32> to vector<4x32xf32>
    %cst_57 = arith.constant dense<0.000000e+00> : vector<16x32xf32>
    %131 = tpu.matmul %129, %130, %cst_57 {dimension_numbers = #tpu.dot_dimension_numbers<[1], [0], [0], [1], [0, 0, 1, 1], [], []>} : vector<16x4xf32>, vector<4x32xf32>, vector<16x32xf32> -> vector<16x32xf32>
    %132 = arith.addf %112, %131 : vector<16x32xf32>
    %133 = vector.extract_strided_slice %21 {offsets = [0, 20], sizes = [16, 4], strides = [1, 1]} : vector<16x32xf32> to vector<16x4xf32>
    %134 = vector.extract_strided_slice %26 {offsets = [0, 20], sizes = [16, 4], strides = [1, 1]} : vector<16x32xf32> to vector<16x4xf32>
    %135 = vector.extract_strided_slice %31 {offsets = [0, 20], sizes = [16, 4], strides = [1, 1]} : vector<16x32xf32> to vector<16x4xf32>
    %cst_58 = arith.constant dense<0.000000e+00> : vector<16x16xf32>
    %136 = tpu.matmul %133, %134, %cst_58 {dimension_numbers = #tpu.dot_dimension_numbers<[1], [1], [0], [0], [0, 0, 1, 0], [], []>} : vector<16x4xf32>, vector<16x4xf32>, vector<16x16xf32> -> vector<16x16xf32>
    %cst_59 = arith.constant 5.000000e-01 : f32
    %137 = vector.broadcast %cst_59 : f32 to vector<16x16xf32>
    %138 = arith.mulf %136, %137 : vector<16x16xf32>
    %cst_60 = arith.constant dense<0xFF800000> : vector<16xf32>
    %139 = vector.multi_reduction <maximumf>, %138, %cst_60 [1] : vector<16x16xf32> to vector<16xf32>
    %140 = vector.shape_cast %139 : vector<16xf32> to vector<16x1xf32>
    %141 = vector.broadcast %140 : vector<16x1xf32> to vector<16x16xf32>
    %142 = arith.subf %138, %141 : vector<16x16xf32>
    %143 = math.exp %142 : vector<16x16xf32>
    %cst_61 = arith.constant dense<0.000000e+00> : vector<16xf32>
    %144 = vector.multi_reduction <add>, %143, %cst_61 [1] : vector<16x16xf32> to vector<16xf32>
    %145 = vector.shape_cast %144 : vector<16xf32> to vector<16x1xf32>
    %146 = tpu.reciprocal %145 {approx = true} : vector<16x1xf32> -> vector<16x1xf32>
    %147 = vector.broadcast %146 : vector<16x1xf32> to vector<16x16xf32>
    %148 = arith.mulf %143, %147 : vector<16x16xf32>
    %cst_62 = arith.constant dense<0.000000e+00> : vector<16x4xf32>
    %149 = tpu.matmul %148, %135, %cst_62 {dimension_numbers = #tpu.dot_dimension_numbers<[1], [0], [0], [1], [0, 0, 1, 1], [], []>} : vector<16x16xf32>, vector<16x4xf32>, vector<16x4xf32> -> vector<16x4xf32>
    %150 = vector.extract_strided_slice %15 {offsets = [20, 0], sizes = [4, 32], strides = [1, 1]} : vector<32x32xf32> to vector<4x32xf32>
    %cst_63 = arith.constant dense<0.000000e+00> : vector<16x32xf32>
    %151 = tpu.matmul %149, %150, %cst_63 {dimension_numbers = #tpu.dot_dimension_numbers<[1], [0], [0], [1], [0, 0, 1, 1], [], []>} : vector<16x4xf32>, vector<4x32xf32>, vector<16x32xf32> -> vector<16x32xf32>
    %152 = arith.addf %132, %151 : vector<16x32xf32>
    %153 = vector.extract_strided_slice %21 {offsets = [0, 24], sizes = [16, 4], strides = [1, 1]} : vector<16x32xf32> to vector<16x4xf32>
    %154 = vector.extract_strided_slice %26 {offsets = [0, 24], sizes = [16, 4], strides = [1, 1]} : vector<16x32xf32> to vector<16x4xf32>
    %155 = vector.extract_strided_slice %31 {offsets = [0, 24], sizes = [16, 4], strides = [1, 1]} : vector<16x32xf32> to vector<16x4xf32>
    %cst_64 = arith.constant dense<0.000000e+00> : vector<16x16xf32>
    %156 = tpu.matmul %153, %154, %cst_64 {dimension_numbers = #tpu.dot_dimension_numbers<[1], [1], [0], [0], [0, 0, 1, 0], [], []>} : vector<16x4xf32>, vector<16x4xf32>, vector<16x16xf32> -> vector<16x16xf32>
    %cst_65 = arith.constant 5.000000e-01 : f32
    %157 = vector.broadcast %cst_65 : f32 to vector<16x16xf32>
    %158 = arith.mulf %156, %157 : vector<16x16xf32>
    %cst_66 = arith.constant dense<0xFF800000> : vector<16xf32>
    %159 = vector.multi_reduction <maximumf>, %158, %cst_66 [1] : vector<16x16xf32> to vector<16xf32>
    %160 = vector.shape_cast %159 : vector<16xf32> to vector<16x1xf32>
    %161 = vector.broadcast %160 : vector<16x1xf32> to vector<16x16xf32>
    %162 = arith.subf %158, %161 : vector<16x16xf32>
    %163 = math.exp %162 : vector<16x16xf32>
    %cst_67 = arith.constant dense<0.000000e+00> : vector<16xf32>
    %164 = vector.multi_reduction <add>, %163, %cst_67 [1] : vector<16x16xf32> to vector<16xf32>
    %165 = vector.shape_cast %164 : vector<16xf32> to vector<16x1xf32>
    %166 = tpu.reciprocal %165 {approx = true} : vector<16x1xf32> -> vector<16x1xf32>
    %167 = vector.broadcast %166 : vector<16x1xf32> to vector<16x16xf32>
    %168 = arith.mulf %163, %167 : vector<16x16xf32>
    %cst_68 = arith.constant dense<0.000000e+00> : vector<16x4xf32>
    %169 = tpu.matmul %168, %155, %cst_68 {dimension_numbers = #tpu.dot_dimension_numbers<[1], [0], [0], [1], [0, 0, 1, 1], [], []>} : vector<16x16xf32>, vector<16x4xf32>, vector<16x4xf32> -> vector<16x4xf32>
    %170 = vector.extract_strided_slice %15 {offsets = [24, 0], sizes = [4, 32], strides = [1, 1]} : vector<32x32xf32> to vector<4x32xf32>
    %cst_69 = arith.constant dense<0.000000e+00> : vector<16x32xf32>
    %171 = tpu.matmul %169, %170, %cst_69 {dimension_numbers = #tpu.dot_dimension_numbers<[1], [0], [0], [1], [0, 0, 1, 1], [], []>} : vector<16x4xf32>, vector<4x32xf32>, vector<16x32xf32> -> vector<16x32xf32>
    %172 = arith.addf %152, %171 : vector<16x32xf32>
    %173 = vector.extract_strided_slice %21 {offsets = [0, 28], sizes = [16, 4], strides = [1, 1]} : vector<16x32xf32> to vector<16x4xf32>
    %174 = vector.extract_strided_slice %26 {offsets = [0, 28], sizes = [16, 4], strides = [1, 1]} : vector<16x32xf32> to vector<16x4xf32>
    %175 = vector.extract_strided_slice %31 {offsets = [0, 28], sizes = [16, 4], strides = [1, 1]} : vector<16x32xf32> to vector<16x4xf32>
    %cst_70 = arith.constant dense<0.000000e+00> : vector<16x16xf32>
    %176 = tpu.matmul %173, %174, %cst_70 {dimension_numbers = #tpu.dot_dimension_numbers<[1], [1], [0], [0], [0, 0, 1, 0], [], []>} : vector<16x4xf32>, vector<16x4xf32>, vector<16x16xf32> -> vector<16x16xf32>
    %cst_71 = arith.constant 5.000000e-01 : f32
    %177 = vector.broadcast %cst_71 : f32 to vector<16x16xf32>
    %178 = arith.mulf %176, %177 : vector<16x16xf32>
    %cst_72 = arith.constant dense<0xFF800000> : vector<16xf32>
    %179 = vector.multi_reduction <maximumf>, %178, %cst_72 [1] : vector<16x16xf32> to vector<16xf32>
    %180 = vector.shape_cast %179 : vector<16xf32> to vector<16x1xf32>
    %181 = vector.broadcast %180 : vector<16x1xf32> to vector<16x16xf32>
    %182 = arith.subf %178, %181 : vector<16x16xf32>
    %183 = math.exp %182 : vector<16x16xf32>
    %cst_73 = arith.constant dense<0.000000e+00> : vector<16xf32>
    %184 = vector.multi_reduction <add>, %183, %cst_73 [1] : vector<16x16xf32> to vector<16xf32>
    %185 = vector.shape_cast %184 : vector<16xf32> to vector<16x1xf32>
    %186 = tpu.reciprocal %185 {approx = true} : vector<16x1xf32> -> vector<16x1xf32>
    %187 = vector.broadcast %186 : vector<16x1xf32> to vector<16x16xf32>
    %188 = arith.mulf %183, %187 : vector<16x16xf32>
    %cst_74 = arith.constant dense<0.000000e+00> : vector<16x4xf32>
    %189 = tpu.matmul %188, %175, %cst_74 {dimension_numbers = #tpu.dot_dimension_numbers<[1], [0], [0], [1], [0, 0, 1, 1], [], []>} : vector<16x16xf32>, vector<16x4xf32>, vector<16x4xf32> -> vector<16x4xf32>
    %190 = vector.extract_strided_slice %15 {offsets = [28, 0], sizes = [4, 32], strides = [1, 1]} : vector<32x32xf32> to vector<4x32xf32>
    %cst_75 = arith.constant dense<0.000000e+00> : vector<16x32xf32>
    %191 = tpu.matmul %189, %190, %cst_75 {dimension_numbers = #tpu.dot_dimension_numbers<[1], [0], [0], [1], [0, 0, 1, 1], [], []>} : vector<16x4xf32>, vector<4x32xf32>, vector<16x32xf32> -> vector<16x32xf32>
    %192 = arith.addf %172, %191 : vector<16x32xf32>
    %193 = arith.addf %1, %192 : vector<16x32xf32>
    %194 = vector.broadcast %16 : vector<1x32xf32> to vector<16x32xf32>
    %195 = arith.addf %193, %194 : vector<16x32xf32>
    %c0_76 = arith.constant 0 : index
    %c0_77 = arith.constant 0 : index
    %196 = vector.load %arg19[%c0_76, %c0_77] : memref<3x32xf32, #tpu.memory_space<vmem>>, vector<1x32xf32>
    %c0_78 = arith.constant 0 : index
    %c0_79 = arith.constant 0 : index
    %197 = vector.load %arg20[%c0_78, %c0_79] : memref<3x32xf32, #tpu.memory_space<vmem>>, vector<1x32xf32>
    %cst_80 = arith.constant dense<0.000000e+00> : vector<16xf32>
    %198 = vector.multi_reduction <add>, %195, %cst_80 [1] : vector<16x32xf32> to vector<16xf32>
    %199 = vector.shape_cast %198 : vector<16xf32> to vector<16x1xf32>
    %cst_81 = arith.constant 3.200000e+01 : f32
    %200 = vector.broadcast %cst_81 : f32 to vector<16x1xf32>
    %201 = arith.divf %199, %200 : vector<16x1xf32>
    %202 = vector.broadcast %201 : vector<16x1xf32> to vector<16x32xf32>
    %203 = arith.subf %195, %202 : vector<16x32xf32>
    %204 = arith.mulf %203, %203 : vector<16x32xf32>
    %cst_82 = arith.constant dense<0.000000e+00> : vector<16xf32>
    %205 = vector.multi_reduction <add>, %204, %cst_82 [1] : vector<16x32xf32> to vector<16xf32>
    %206 = vector.shape_cast %205 : vector<16xf32> to vector<16x1xf32>
    %cst_83 = arith.constant 3.200000e+01 : f32
    %207 = vector.broadcast %cst_83 : f32 to vector<16x1xf32>
    %208 = arith.divf %206, %207 : vector<16x1xf32>
    %cst_84 = arith.constant 9.99999974E-6 : f32
    %209 = vector.broadcast %cst_84 : f32 to vector<16x1xf32>
    %210 = arith.addf %208, %209 : vector<16x1xf32>
    %211 = math.rsqrt %210 : vector<16x1xf32>
    %212 = vector.broadcast %211 : vector<16x1xf32> to vector<16x32xf32>
    %213 = arith.mulf %203, %212 : vector<16x32xf32>
    %214 = vector.broadcast %196 : vector<1x32xf32> to vector<16x32xf32>
    %215 = arith.mulf %213, %214 : vector<16x32xf32>
    %216 = vector.broadcast %197 : vector<1x32xf32> to vector<16x32xf32>
    %217 = arith.addf %215, %216 : vector<16x32xf32>
    %218 = arith.addf %217, %9 : vector<16x32xf32>
    %219 = arith.addf %3, %11 : vector<8x32xf32>
    %c0_85 = arith.constant 0 : index
    %c0_86 = arith.constant 0 : index
    %220 = vector.load %arg11[%c0_85, %c0_86] : memref<32x96xf32, #tpu.memory_space<vmem>>, vector<32x96xf32>
    %c0_87 = arith.constant 0 : index
    %c0_88 = arith.constant 0 : index
    %221 = vector.load %arg12[%c0_87, %c0_88] : memref<1x96xf32, #tpu.memory_space<vmem>>, vector<1x96xf32>
    %c0_89 = arith.constant 0 : index
    %c0_90 = arith.constant 0 : index
    %222 = vector.load %arg13[%c0_89, %c0_90] : memref<32x32xf32, #tpu.memory_space<vmem>>, vector<32x32xf32>
    %c0_91 = arith.constant 0 : index
    %c0_92 = arith.constant 0 : index
    %223 = vector.load %arg14[%c0_91, %c0_92] : memref<1x32xf32, #tpu.memory_space<vmem>>, vector<1x32xf32>
    %224 = vector.extract_strided_slice %220 {offsets = [0, 0], sizes = [32, 32], strides = [1, 1]} : vector<32x96xf32> to vector<32x32xf32>
    %cst_93 = arith.constant dense<0.000000e+00> : vector<16x32xf32>
    %225 = tpu.matmul %218, %224, %cst_93 {dimension_numbers = #tpu.dot_dimension_numbers<[1], [0], [0], [1], [0, 0, 1, 1], [], []>} : vector<16x32xf32>, vector<32x32xf32>, vector<16x32xf32> -> vector<16x32xf32>
    %226 = vector.extract_strided_slice %221 {offsets = [0, 0], sizes = [1, 32], strides = [1, 1]} : vector<1x96xf32> to vector<1x32xf32>
    %227 = vector.broadcast %226 : vector<1x32xf32> to vector<16x32xf32>
    %228 = arith.addf %225, %227 : vector<16x32xf32>
    %229 = vector.extract_strided_slice %220 {offsets = [0, 32], sizes = [32, 32], strides = [1, 1]} : vector<32x96xf32> to vector<32x32xf32>
    %cst_94 = arith.constant dense<0.000000e+00> : vector<8x32xf32>
    %230 = tpu.matmul %219, %229, %cst_94 {dimension_numbers = #tpu.dot_dimension_numbers<[1], [0], [0], [1], [0, 0, 1, 1], [], []>} : vector<8x32xf32>, vector<32x32xf32>, vector<8x32xf32> -> vector<8x32xf32>
    %231 = vector.extract_strided_slice %221 {offsets = [0, 32], sizes = [1, 32], strides = [1, 1]} : vector<1x96xf32> to vector<1x32xf32>
    %232 = vector.broadcast %231 : vector<1x32xf32> to vector<8x32xf32>
    %233 = arith.addf %230, %232 : vector<8x32xf32>
    %234 = vector.extract_strided_slice %220 {offsets = [0, 64], sizes = [32, 32], strides = [1, 1]} : vector<32x96xf32> to vector<32x32xf32>
    %cst_95 = arith.constant dense<0.000000e+00> : vector<8x32xf32>
    %235 = tpu.matmul %5, %234, %cst_95 {dimension_numbers = #tpu.dot_dimension_numbers<[1], [0], [0], [1], [0, 0, 1, 1], [], []>} : vector<8x32xf32>, vector<32x32xf32>, vector<8x32xf32> -> vector<8x32xf32>
    %236 = vector.extract_strided_slice %221 {offsets = [0, 64], sizes = [1, 32], strides = [1, 1]} : vector<1x96xf32> to vector<1x32xf32>
    %237 = vector.broadcast %236 : vector<1x32xf32> to vector<8x32xf32>
    %238 = arith.addf %235, %237 : vector<8x32xf32>
    %cst_96 = arith.constant 0.000000e+00 : f32
    %239 = vector.broadcast %cst_96 : f32 to vector<16x32xf32>
    %240 = vector.extract_strided_slice %228 {offsets = [0, 0], sizes = [16, 4], strides = [1, 1]} : vector<16x32xf32> to vector<16x4xf32>
    %241 = vector.extract_strided_slice %233 {offsets = [0, 0], sizes = [8, 4], strides = [1, 1]} : vector<8x32xf32> to vector<8x4xf32>
    %242 = vector.extract_strided_slice %238 {offsets = [0, 0], sizes = [8, 4], strides = [1, 1]} : vector<8x32xf32> to vector<8x4xf32>
    %cst_97 = arith.constant dense<0.000000e+00> : vector<16x8xf32>
    %243 = tpu.matmul %240, %241, %cst_97 {dimension_numbers = #tpu.dot_dimension_numbers<[1], [1], [0], [0], [0, 0, 1, 0], [], []>} : vector<16x4xf32>, vector<8x4xf32>, vector<16x8xf32> -> vector<16x8xf32>
    %cst_98 = arith.constant 5.000000e-01 : f32
    %244 = vector.broadcast %cst_98 : f32 to vector<16x8xf32>
    %245 = arith.mulf %243, %244 : vector<16x8xf32>
    %cst_99 = arith.constant dense<0xFF800000> : vector<16xf32>
    %246 = vector.multi_reduction <maximumf>, %245, %cst_99 [1] : vector<16x8xf32> to vector<16xf32>
    %247 = vector.shape_cast %246 : vector<16xf32> to vector<16x1xf32>
    %248 = vector.broadcast %247 : vector<16x1xf32> to vector<16x8xf32>
    %249 = arith.subf %245, %248 : vector<16x8xf32>
    %250 = math.exp %249 : vector<16x8xf32>
    %cst_100 = arith.constant dense<0.000000e+00> : vector<16xf32>
    %251 = vector.multi_reduction <add>, %250, %cst_100 [1] : vector<16x8xf32> to vector<16xf32>
    %252 = vector.shape_cast %251 : vector<16xf32> to vector<16x1xf32>
    %253 = tpu.reciprocal %252 {approx = true} : vector<16x1xf32> -> vector<16x1xf32>
    %254 = vector.broadcast %253 : vector<16x1xf32> to vector<16x8xf32>
    %255 = arith.mulf %250, %254 : vector<16x8xf32>
    %cst_101 = arith.constant dense<0.000000e+00> : vector<16x4xf32>
    %256 = tpu.matmul %255, %242, %cst_101 {dimension_numbers = #tpu.dot_dimension_numbers<[1], [0], [0], [1], [0, 0, 1, 1], [], []>} : vector<16x8xf32>, vector<8x4xf32>, vector<16x4xf32> -> vector<16x4xf32>
    %257 = vector.extract_strided_slice %222 {offsets = [0, 0], sizes = [4, 32], strides = [1, 1]} : vector<32x32xf32> to vector<4x32xf32>
    %cst_102 = arith.constant dense<0.000000e+00> : vector<16x32xf32>
    %258 = tpu.matmul %256, %257, %cst_102 {dimension_numbers = #tpu.dot_dimension_numbers<[1], [0], [0], [1], [0, 0, 1, 1], [], []>} : vector<16x4xf32>, vector<4x32xf32>, vector<16x32xf32> -> vector<16x32xf32>
    %259 = arith.addf %239, %258 : vector<16x32xf32>
    %260 = vector.extract_strided_slice %228 {offsets = [0, 4], sizes = [16, 4], strides = [1, 1]} : vector<16x32xf32> to vector<16x4xf32>
    %261 = vector.extract_strided_slice %233 {offsets = [0, 4], sizes = [8, 4], strides = [1, 1]} : vector<8x32xf32> to vector<8x4xf32>
    %262 = vector.extract_strided_slice %238 {offsets = [0, 4], sizes = [8, 4], strides = [1, 1]} : vector<8x32xf32> to vector<8x4xf32>
    %cst_103 = arith.constant dense<0.000000e+00> : vector<16x8xf32>
    %263 = tpu.matmul %260, %261, %cst_103 {dimension_numbers = #tpu.dot_dimension_numbers<[1], [1], [0], [0], [0, 0, 1, 0], [], []>} : vector<16x4xf32>, vector<8x4xf32>, vector<16x8xf32> -> vector<16x8xf32>
    %cst_104 = arith.constant 5.000000e-01 : f32
    %264 = vector.broadcast %cst_104 : f32 to vector<16x8xf32>
    %265 = arith.mulf %263, %264 : vector<16x8xf32>
    %cst_105 = arith.constant dense<0xFF800000> : vector<16xf32>
    %266 = vector.multi_reduction <maximumf>, %265, %cst_105 [1] : vector<16x8xf32> to vector<16xf32>
    %267 = vector.shape_cast %266 : vector<16xf32> to vector<16x1xf32>
    %268 = vector.broadcast %267 : vector<16x1xf32> to vector<16x8xf32>
    %269 = arith.subf %265, %268 : vector<16x8xf32>
    %270 = math.exp %269 : vector<16x8xf32>
    %cst_106 = arith.constant dense<0.000000e+00> : vector<16xf32>
    %271 = vector.multi_reduction <add>, %270, %cst_106 [1] : vector<16x8xf32> to vector<16xf32>
    %272 = vector.shape_cast %271 : vector<16xf32> to vector<16x1xf32>
    %273 = tpu.reciprocal %272 {approx = true} : vector<16x1xf32> -> vector<16x1xf32>
    %274 = vector.broadcast %273 : vector<16x1xf32> to vector<16x8xf32>
    %275 = arith.mulf %270, %274 : vector<16x8xf32>
    %cst_107 = arith.constant dense<0.000000e+00> : vector<16x4xf32>
    %276 = tpu.matmul %275, %262, %cst_107 {dimension_numbers = #tpu.dot_dimension_numbers<[1], [0], [0], [1], [0, 0, 1, 1], [], []>} : vector<16x8xf32>, vector<8x4xf32>, vector<16x4xf32> -> vector<16x4xf32>
    %277 = vector.extract_strided_slice %222 {offsets = [4, 0], sizes = [4, 32], strides = [1, 1]} : vector<32x32xf32> to vector<4x32xf32>
    %cst_108 = arith.constant dense<0.000000e+00> : vector<16x32xf32>
    %278 = tpu.matmul %276, %277, %cst_108 {dimension_numbers = #tpu.dot_dimension_numbers<[1], [0], [0], [1], [0, 0, 1, 1], [], []>} : vector<16x4xf32>, vector<4x32xf32>, vector<16x32xf32> -> vector<16x32xf32>
    %279 = arith.addf %259, %278 : vector<16x32xf32>
    %280 = vector.extract_strided_slice %228 {offsets = [0, 8], sizes = [16, 4], strides = [1, 1]} : vector<16x32xf32> to vector<16x4xf32>
    %281 = vector.extract_strided_slice %233 {offsets = [0, 8], sizes = [8, 4], strides = [1, 1]} : vector<8x32xf32> to vector<8x4xf32>
    %282 = vector.extract_strided_slice %238 {offsets = [0, 8], sizes = [8, 4], strides = [1, 1]} : vector<8x32xf32> to vector<8x4xf32>
    %cst_109 = arith.constant dense<0.000000e+00> : vector<16x8xf32>
    %283 = tpu.matmul %280, %281, %cst_109 {dimension_numbers = #tpu.dot_dimension_numbers<[1], [1], [0], [0], [0, 0, 1, 0], [], []>} : vector<16x4xf32>, vector<8x4xf32>, vector<16x8xf32> -> vector<16x8xf32>
    %cst_110 = arith.constant 5.000000e-01 : f32
    %284 = vector.broadcast %cst_110 : f32 to vector<16x8xf32>
    %285 = arith.mulf %283, %284 : vector<16x8xf32>
    %cst_111 = arith.constant dense<0xFF800000> : vector<16xf32>
    %286 = vector.multi_reduction <maximumf>, %285, %cst_111 [1] : vector<16x8xf32> to vector<16xf32>
    %287 = vector.shape_cast %286 : vector<16xf32> to vector<16x1xf32>
    %288 = vector.broadcast %287 : vector<16x1xf32> to vector<16x8xf32>
    %289 = arith.subf %285, %288 : vector<16x8xf32>
    %290 = math.exp %289 : vector<16x8xf32>
    %cst_112 = arith.constant dense<0.000000e+00> : vector<16xf32>
    %291 = vector.multi_reduction <add>, %290, %cst_112 [1] : vector<16x8xf32> to vector<16xf32>
    %292 = vector.shape_cast %291 : vector<16xf32> to vector<16x1xf32>
    %293 = tpu.reciprocal %292 {approx = true} : vector<16x1xf32> -> vector<16x1xf32>
    %294 = vector.broadcast %293 : vector<16x1xf32> to vector<16x8xf32>
    %295 = arith.mulf %290, %294 : vector<16x8xf32>
    %cst_113 = arith.constant dense<0.000000e+00> : vector<16x4xf32>
    %296 = tpu.matmul %295, %282, %cst_113 {dimension_numbers = #tpu.dot_dimension_numbers<[1], [0], [0], [1], [0, 0, 1, 1], [], []>} : vector<16x8xf32>, vector<8x4xf32>, vector<16x4xf32> -> vector<16x4xf32>
    %297 = vector.extract_strided_slice %222 {offsets = [8, 0], sizes = [4, 32], strides = [1, 1]} : vector<32x32xf32> to vector<4x32xf32>
    %cst_114 = arith.constant dense<0.000000e+00> : vector<16x32xf32>
    %298 = tpu.matmul %296, %297, %cst_114 {dimension_numbers = #tpu.dot_dimension_numbers<[1], [0], [0], [1], [0, 0, 1, 1], [], []>} : vector<16x4xf32>, vector<4x32xf32>, vector<16x32xf32> -> vector<16x32xf32>
    %299 = arith.addf %279, %298 : vector<16x32xf32>
    %300 = vector.extract_strided_slice %228 {offsets = [0, 12], sizes = [16, 4], strides = [1, 1]} : vector<16x32xf32> to vector<16x4xf32>
    %301 = vector.extract_strided_slice %233 {offsets = [0, 12], sizes = [8, 4], strides = [1, 1]} : vector<8x32xf32> to vector<8x4xf32>
    %302 = vector.extract_strided_slice %238 {offsets = [0, 12], sizes = [8, 4], strides = [1, 1]} : vector<8x32xf32> to vector<8x4xf32>
    %cst_115 = arith.constant dense<0.000000e+00> : vector<16x8xf32>
    %303 = tpu.matmul %300, %301, %cst_115 {dimension_numbers = #tpu.dot_dimension_numbers<[1], [1], [0], [0], [0, 0, 1, 0], [], []>} : vector<16x4xf32>, vector<8x4xf32>, vector<16x8xf32> -> vector<16x8xf32>
    %cst_116 = arith.constant 5.000000e-01 : f32
    %304 = vector.broadcast %cst_116 : f32 to vector<16x8xf32>
    %305 = arith.mulf %303, %304 : vector<16x8xf32>
    %cst_117 = arith.constant dense<0xFF800000> : vector<16xf32>
    %306 = vector.multi_reduction <maximumf>, %305, %cst_117 [1] : vector<16x8xf32> to vector<16xf32>
    %307 = vector.shape_cast %306 : vector<16xf32> to vector<16x1xf32>
    %308 = vector.broadcast %307 : vector<16x1xf32> to vector<16x8xf32>
    %309 = arith.subf %305, %308 : vector<16x8xf32>
    %310 = math.exp %309 : vector<16x8xf32>
    %cst_118 = arith.constant dense<0.000000e+00> : vector<16xf32>
    %311 = vector.multi_reduction <add>, %310, %cst_118 [1] : vector<16x8xf32> to vector<16xf32>
    %312 = vector.shape_cast %311 : vector<16xf32> to vector<16x1xf32>
    %313 = tpu.reciprocal %312 {approx = true} : vector<16x1xf32> -> vector<16x1xf32>
    %314 = vector.broadcast %313 : vector<16x1xf32> to vector<16x8xf32>
    %315 = arith.mulf %310, %314 : vector<16x8xf32>
    %cst_119 = arith.constant dense<0.000000e+00> : vector<16x4xf32>
    %316 = tpu.matmul %315, %302, %cst_119 {dimension_numbers = #tpu.dot_dimension_numbers<[1], [0], [0], [1], [0, 0, 1, 1], [], []>} : vector<16x8xf32>, vector<8x4xf32>, vector<16x4xf32> -> vector<16x4xf32>
    %317 = vector.extract_strided_slice %222 {offsets = [12, 0], sizes = [4, 32], strides = [1, 1]} : vector<32x32xf32> to vector<4x32xf32>
    %cst_120 = arith.constant dense<0.000000e+00> : vector<16x32xf32>
    %318 = tpu.matmul %316, %317, %cst_120 {dimension_numbers = #tpu.dot_dimension_numbers<[1], [0], [0], [1], [0, 0, 1, 1], [], []>} : vector<16x4xf32>, vector<4x32xf32>, vector<16x32xf32> -> vector<16x32xf32>
    %319 = arith.addf %299, %318 : vector<16x32xf32>
    %320 = vector.extract_strided_slice %228 {offsets = [0, 16], sizes = [16, 4], strides = [1, 1]} : vector<16x32xf32> to vector<16x4xf32>
    %321 = vector.extract_strided_slice %233 {offsets = [0, 16], sizes = [8, 4], strides = [1, 1]} : vector<8x32xf32> to vector<8x4xf32>
    %322 = vector.extract_strided_slice %238 {offsets = [0, 16], sizes = [8, 4], strides = [1, 1]} : vector<8x32xf32> to vector<8x4xf32>
    %cst_121 = arith.constant dense<0.000000e+00> : vector<16x8xf32>
    %323 = tpu.matmul %320, %321, %cst_121 {dimension_numbers = #tpu.dot_dimension_numbers<[1], [1], [0], [0], [0, 0, 1, 0], [], []>} : vector<16x4xf32>, vector<8x4xf32>, vector<16x8xf32> -> vector<16x8xf32>
    %cst_122 = arith.constant 5.000000e-01 : f32
    %324 = vector.broadcast %cst_122 : f32 to vector<16x8xf32>
    %325 = arith.mulf %323, %324 : vector<16x8xf32>
    %cst_123 = arith.constant dense<0xFF800000> : vector<16xf32>
    %326 = vector.multi_reduction <maximumf>, %325, %cst_123 [1] : vector<16x8xf32> to vector<16xf32>
    %327 = vector.shape_cast %326 : vector<16xf32> to vector<16x1xf32>
    %328 = vector.broadcast %327 : vector<16x1xf32> to vector<16x8xf32>
    %329 = arith.subf %325, %328 : vector<16x8xf32>
    %330 = math.exp %329 : vector<16x8xf32>
    %cst_124 = arith.constant dense<0.000000e+00> : vector<16xf32>
    %331 = vector.multi_reduction <add>, %330, %cst_124 [1] : vector<16x8xf32> to vector<16xf32>
    %332 = vector.shape_cast %331 : vector<16xf32> to vector<16x1xf32>
    %333 = tpu.reciprocal %332 {approx = true} : vector<16x1xf32> -> vector<16x1xf32>
    %334 = vector.broadcast %333 : vector<16x1xf32> to vector<16x8xf32>
    %335 = arith.mulf %330, %334 : vector<16x8xf32>
    %cst_125 = arith.constant dense<0.000000e+00> : vector<16x4xf32>
    %336 = tpu.matmul %335, %322, %cst_125 {dimension_numbers = #tpu.dot_dimension_numbers<[1], [0], [0], [1], [0, 0, 1, 1], [], []>} : vector<16x8xf32>, vector<8x4xf32>, vector<16x4xf32> -> vector<16x4xf32>
    %337 = vector.extract_strided_slice %222 {offsets = [16, 0], sizes = [4, 32], strides = [1, 1]} : vector<32x32xf32> to vector<4x32xf32>
    %cst_126 = arith.constant dense<0.000000e+00> : vector<16x32xf32>
    %338 = tpu.matmul %336, %337, %cst_126 {dimension_numbers = #tpu.dot_dimension_numbers<[1], [0], [0], [1], [0, 0, 1, 1], [], []>} : vector<16x4xf32>, vector<4x32xf32>, vector<16x32xf32> -> vector<16x32xf32>
    %339 = arith.addf %319, %338 : vector<16x32xf32>
    %340 = vector.extract_strided_slice %228 {offsets = [0, 20], sizes = [16, 4], strides = [1, 1]} : vector<16x32xf32> to vector<16x4xf32>
    %341 = vector.extract_strided_slice %233 {offsets = [0, 20], sizes = [8, 4], strides = [1, 1]} : vector<8x32xf32> to vector<8x4xf32>
    %342 = vector.extract_strided_slice %238 {offsets = [0, 20], sizes = [8, 4], strides = [1, 1]} : vector<8x32xf32> to vector<8x4xf32>
    %cst_127 = arith.constant dense<0.000000e+00> : vector<16x8xf32>
    %343 = tpu.matmul %340, %341, %cst_127 {dimension_numbers = #tpu.dot_dimension_numbers<[1], [1], [0], [0], [0, 0, 1, 0], [], []>} : vector<16x4xf32>, vector<8x4xf32>, vector<16x8xf32> -> vector<16x8xf32>
    %cst_128 = arith.constant 5.000000e-01 : f32
    %344 = vector.broadcast %cst_128 : f32 to vector<16x8xf32>
    %345 = arith.mulf %343, %344 : vector<16x8xf32>
    %cst_129 = arith.constant dense<0xFF800000> : vector<16xf32>
    %346 = vector.multi_reduction <maximumf>, %345, %cst_129 [1] : vector<16x8xf32> to vector<16xf32>
    %347 = vector.shape_cast %346 : vector<16xf32> to vector<16x1xf32>
    %348 = vector.broadcast %347 : vector<16x1xf32> to vector<16x8xf32>
    %349 = arith.subf %345, %348 : vector<16x8xf32>
    %350 = math.exp %349 : vector<16x8xf32>
    %cst_130 = arith.constant dense<0.000000e+00> : vector<16xf32>
    %351 = vector.multi_reduction <add>, %350, %cst_130 [1] : vector<16x8xf32> to vector<16xf32>
    %352 = vector.shape_cast %351 : vector<16xf32> to vector<16x1xf32>
    %353 = tpu.reciprocal %352 {approx = true} : vector<16x1xf32> -> vector<16x1xf32>
    %354 = vector.broadcast %353 : vector<16x1xf32> to vector<16x8xf32>
    %355 = arith.mulf %350, %354 : vector<16x8xf32>
    %cst_131 = arith.constant dense<0.000000e+00> : vector<16x4xf32>
    %356 = tpu.matmul %355, %342, %cst_131 {dimension_numbers = #tpu.dot_dimension_numbers<[1], [0], [0], [1], [0, 0, 1, 1], [], []>} : vector<16x8xf32>, vector<8x4xf32>, vector<16x4xf32> -> vector<16x4xf32>
    %357 = vector.extract_strided_slice %222 {offsets = [20, 0], sizes = [4, 32], strides = [1, 1]} : vector<32x32xf32> to vector<4x32xf32>
    %cst_132 = arith.constant dense<0.000000e+00> : vector<16x32xf32>
    %358 = tpu.matmul %356, %357, %cst_132 {dimension_numbers = #tpu.dot_dimension_numbers<[1], [0], [0], [1], [0, 0, 1, 1], [], []>} : vector<16x4xf32>, vector<4x32xf32>, vector<16x32xf32> -> vector<16x32xf32>
    %359 = arith.addf %339, %358 : vector<16x32xf32>
    %360 = vector.extract_strided_slice %228 {offsets = [0, 24], sizes = [16, 4], strides = [1, 1]} : vector<16x32xf32> to vector<16x4xf32>
    %361 = vector.extract_strided_slice %233 {offsets = [0, 24], sizes = [8, 4], strides = [1, 1]} : vector<8x32xf32> to vector<8x4xf32>
    %362 = vector.extract_strided_slice %238 {offsets = [0, 24], sizes = [8, 4], strides = [1, 1]} : vector<8x32xf32> to vector<8x4xf32>
    %cst_133 = arith.constant dense<0.000000e+00> : vector<16x8xf32>
    %363 = tpu.matmul %360, %361, %cst_133 {dimension_numbers = #tpu.dot_dimension_numbers<[1], [1], [0], [0], [0, 0, 1, 0], [], []>} : vector<16x4xf32>, vector<8x4xf32>, vector<16x8xf32> -> vector<16x8xf32>
    %cst_134 = arith.constant 5.000000e-01 : f32
    %364 = vector.broadcast %cst_134 : f32 to vector<16x8xf32>
    %365 = arith.mulf %363, %364 : vector<16x8xf32>
    %cst_135 = arith.constant dense<0xFF800000> : vector<16xf32>
    %366 = vector.multi_reduction <maximumf>, %365, %cst_135 [1] : vector<16x8xf32> to vector<16xf32>
    %367 = vector.shape_cast %366 : vector<16xf32> to vector<16x1xf32>
    %368 = vector.broadcast %367 : vector<16x1xf32> to vector<16x8xf32>
    %369 = arith.subf %365, %368 : vector<16x8xf32>
    %370 = math.exp %369 : vector<16x8xf32>
    %cst_136 = arith.constant dense<0.000000e+00> : vector<16xf32>
    %371 = vector.multi_reduction <add>, %370, %cst_136 [1] : vector<16x8xf32> to vector<16xf32>
    %372 = vector.shape_cast %371 : vector<16xf32> to vector<16x1xf32>
    %373 = tpu.reciprocal %372 {approx = true} : vector<16x1xf32> -> vector<16x1xf32>
    %374 = vector.broadcast %373 : vector<16x1xf32> to vector<16x8xf32>
    %375 = arith.mulf %370, %374 : vector<16x8xf32>
    %cst_137 = arith.constant dense<0.000000e+00> : vector<16x4xf32>
    %376 = tpu.matmul %375, %362, %cst_137 {dimension_numbers = #tpu.dot_dimension_numbers<[1], [0], [0], [1], [0, 0, 1, 1], [], []>} : vector<16x8xf32>, vector<8x4xf32>, vector<16x4xf32> -> vector<16x4xf32>
    %377 = vector.extract_strided_slice %222 {offsets = [24, 0], sizes = [4, 32], strides = [1, 1]} : vector<32x32xf32> to vector<4x32xf32>
    %cst_138 = arith.constant dense<0.000000e+00> : vector<16x32xf32>
    %378 = tpu.matmul %376, %377, %cst_138 {dimension_numbers = #tpu.dot_dimension_numbers<[1], [0], [0], [1], [0, 0, 1, 1], [], []>} : vector<16x4xf32>, vector<4x32xf32>, vector<16x32xf32> -> vector<16x32xf32>
    %379 = arith.addf %359, %378 : vector<16x32xf32>
    %380 = vector.extract_strided_slice %228 {offsets = [0, 28], sizes = [16, 4], strides = [1, 1]} : vector<16x32xf32> to vector<16x4xf32>
    %381 = vector.extract_strided_slice %233 {offsets = [0, 28], sizes = [8, 4], strides = [1, 1]} : vector<8x32xf32> to vector<8x4xf32>
    %382 = vector.extract_strided_slice %238 {offsets = [0, 28], sizes = [8, 4], strides = [1, 1]} : vector<8x32xf32> to vector<8x4xf32>
    %cst_139 = arith.constant dense<0.000000e+00> : vector<16x8xf32>
    %383 = tpu.matmul %380, %381, %cst_139 {dimension_numbers = #tpu.dot_dimension_numbers<[1], [1], [0], [0], [0, 0, 1, 0], [], []>} : vector<16x4xf32>, vector<8x4xf32>, vector<16x8xf32> -> vector<16x8xf32>
    %cst_140 = arith.constant 5.000000e-01 : f32
    %384 = vector.broadcast %cst_140 : f32 to vector<16x8xf32>
    %385 = arith.mulf %383, %384 : vector<16x8xf32>
    %cst_141 = arith.constant dense<0xFF800000> : vector<16xf32>
    %386 = vector.multi_reduction <maximumf>, %385, %cst_141 [1] : vector<16x8xf32> to vector<16xf32>
    %387 = vector.shape_cast %386 : vector<16xf32> to vector<16x1xf32>
    %388 = vector.broadcast %387 : vector<16x1xf32> to vector<16x8xf32>
    %389 = arith.subf %385, %388 : vector<16x8xf32>
    %390 = math.exp %389 : vector<16x8xf32>
    %cst_142 = arith.constant dense<0.000000e+00> : vector<16xf32>
    %391 = vector.multi_reduction <add>, %390, %cst_142 [1] : vector<16x8xf32> to vector<16xf32>
    %392 = vector.shape_cast %391 : vector<16xf32> to vector<16x1xf32>
    %393 = tpu.reciprocal %392 {approx = true} : vector<16x1xf32> -> vector<16x1xf32>
    %394 = vector.broadcast %393 : vector<16x1xf32> to vector<16x8xf32>
    %395 = arith.mulf %390, %394 : vector<16x8xf32>
    %cst_143 = arith.constant dense<0.000000e+00> : vector<16x4xf32>
    %396 = tpu.matmul %395, %382, %cst_143 {dimension_numbers = #tpu.dot_dimension_numbers<[1], [0], [0], [1], [0, 0, 1, 1], [], []>} : vector<16x8xf32>, vector<8x4xf32>, vector<16x4xf32> -> vector<16x4xf32>
    %397 = vector.extract_strided_slice %222 {offsets = [28, 0], sizes = [4, 32], strides = [1, 1]} : vector<32x32xf32> to vector<4x32xf32>
    %cst_144 = arith.constant dense<0.000000e+00> : vector<16x32xf32>
    %398 = tpu.matmul %396, %397, %cst_144 {dimension_numbers = #tpu.dot_dimension_numbers<[1], [0], [0], [1], [0, 0, 1, 1], [], []>} : vector<16x4xf32>, vector<4x32xf32>, vector<16x32xf32> -> vector<16x32xf32>
    %399 = arith.addf %379, %398 : vector<16x32xf32>
    %400 = arith.addf %217, %399 : vector<16x32xf32>
    %401 = vector.broadcast %223 : vector<1x32xf32> to vector<16x32xf32>
    %402 = arith.addf %400, %401 : vector<16x32xf32>
    %c1 = arith.constant 1 : index
    %c0_145 = arith.constant 0 : index
    %403 = vector.load %arg19[%c1, %c0_145] : memref<3x32xf32, #tpu.memory_space<vmem>>, vector<1x32xf32>
    %c1_146 = arith.constant 1 : index
    %c0_147 = arith.constant 0 : index
    %404 = vector.load %arg20[%c1_146, %c0_147] : memref<3x32xf32, #tpu.memory_space<vmem>>, vector<1x32xf32>
    %cst_148 = arith.constant dense<0.000000e+00> : vector<16xf32>
    %405 = vector.multi_reduction <add>, %402, %cst_148 [1] : vector<16x32xf32> to vector<16xf32>
    %406 = vector.shape_cast %405 : vector<16xf32> to vector<16x1xf32>
    %cst_149 = arith.constant 3.200000e+01 : f32
    %407 = vector.broadcast %cst_149 : f32 to vector<16x1xf32>
    %408 = arith.divf %406, %407 : vector<16x1xf32>
    %409 = vector.broadcast %408 : vector<16x1xf32> to vector<16x32xf32>
    %410 = arith.subf %402, %409 : vector<16x32xf32>
    %411 = arith.mulf %410, %410 : vector<16x32xf32>
    %cst_150 = arith.constant dense<0.000000e+00> : vector<16xf32>
    %412 = vector.multi_reduction <add>, %411, %cst_150 [1] : vector<16x32xf32> to vector<16xf32>
    %413 = vector.shape_cast %412 : vector<16xf32> to vector<16x1xf32>
    %cst_151 = arith.constant 3.200000e+01 : f32
    %414 = vector.broadcast %cst_151 : f32 to vector<16x1xf32>
    %415 = arith.divf %413, %414 : vector<16x1xf32>
    %cst_152 = arith.constant 9.99999974E-6 : f32
    %416 = vector.broadcast %cst_152 : f32 to vector<16x1xf32>
    %417 = arith.addf %415, %416 : vector<16x1xf32>
    %418 = math.rsqrt %417 : vector<16x1xf32>
    %419 = vector.broadcast %418 : vector<16x1xf32> to vector<16x32xf32>
    %420 = arith.mulf %410, %419 : vector<16x32xf32>
    %421 = vector.broadcast %403 : vector<1x32xf32> to vector<16x32xf32>
    %422 = arith.mulf %420, %421 : vector<16x32xf32>
    %423 = vector.broadcast %404 : vector<1x32xf32> to vector<16x32xf32>
    %424 = arith.addf %422, %423 : vector<16x32xf32>
    %c0_153 = arith.constant 0 : index
    %c0_154 = arith.constant 0 : index
    %425 = vector.load %arg15[%c0_153, %c0_154] : memref<32x64xf32, #tpu.memory_space<vmem>>, vector<32x64xf32>
    %cst_155 = arith.constant dense<0.000000e+00> : vector<16x64xf32>
    %426 = tpu.matmul %424, %425, %cst_155 {dimension_numbers = #tpu.dot_dimension_numbers<[1], [0], [0], [1], [0, 0, 1, 1], [], []>} : vector<16x32xf32>, vector<32x64xf32>, vector<16x64xf32> -> vector<16x64xf32>
    %c0_156 = arith.constant 0 : index
    %c0_157 = arith.constant 0 : index
    %427 = vector.load %arg16[%c0_156, %c0_157] : memref<1x64xf32, #tpu.memory_space<vmem>>, vector<1x64xf32>
    %428 = vector.broadcast %427 : vector<1x64xf32> to vector<16x64xf32>
    %429 = arith.addf %426, %428 : vector<16x64xf32>
    %cst_158 = arith.constant 0.000000e+00 : f32
    %430 = vector.broadcast %cst_158 : f32 to vector<16x64xf32>
    %431 = arith.maximumf %429, %430 : vector<16x64xf32>
    %c0_159 = arith.constant 0 : index
    %c0_160 = arith.constant 0 : index
    %432 = vector.load %arg17[%c0_159, %c0_160] : memref<64x32xf32, #tpu.memory_space<vmem>>, vector<64x32xf32>
    %cst_161 = arith.constant dense<0.000000e+00> : vector<16x32xf32>
    %433 = tpu.matmul %431, %432, %cst_161 {dimension_numbers = #tpu.dot_dimension_numbers<[1], [0], [0], [1], [0, 0, 1, 1], [], []>} : vector<16x64xf32>, vector<64x32xf32>, vector<16x32xf32> -> vector<16x32xf32>
    %434 = arith.addf %424, %433 : vector<16x32xf32>
    %c0_162 = arith.constant 0 : index
    %c0_163 = arith.constant 0 : index
    %435 = vector.load %arg18[%c0_162, %c0_163] : memref<1x32xf32, #tpu.memory_space<vmem>>, vector<1x32xf32>
    %436 = vector.broadcast %435 : vector<1x32xf32> to vector<16x32xf32>
    %437 = arith.addf %434, %436 : vector<16x32xf32>
    %c2 = arith.constant 2 : index
    %c0_164 = arith.constant 0 : index
    %438 = vector.load %arg19[%c2, %c0_164] : memref<3x32xf32, #tpu.memory_space<vmem>>, vector<1x32xf32>
    %c2_165 = arith.constant 2 : index
    %c0_166 = arith.constant 0 : index
    %439 = vector.load %arg20[%c2_165, %c0_166] : memref<3x32xf32, #tpu.memory_space<vmem>>, vector<1x32xf32>
    %cst_167 = arith.constant dense<0.000000e+00> : vector<16xf32>
    %440 = vector.multi_reduction <add>, %437, %cst_167 [1] : vector<16x32xf32> to vector<16xf32>
    %441 = vector.shape_cast %440 : vector<16xf32> to vector<16x1xf32>
    %cst_168 = arith.constant 3.200000e+01 : f32
    %442 = vector.broadcast %cst_168 : f32 to vector<16x1xf32>
    %443 = arith.divf %441, %442 : vector<16x1xf32>
    %444 = vector.broadcast %443 : vector<16x1xf32> to vector<16x32xf32>
    %445 = arith.subf %437, %444 : vector<16x32xf32>
    %446 = arith.mulf %445, %445 : vector<16x32xf32>
    %cst_169 = arith.constant dense<0.000000e+00> : vector<16xf32>
    %447 = vector.multi_reduction <add>, %446, %cst_169 [1] : vector<16x32xf32> to vector<16xf32>
    %448 = vector.shape_cast %447 : vector<16xf32> to vector<16x1xf32>
    %cst_170 = arith.constant 3.200000e+01 : f32
    %449 = vector.broadcast %cst_170 : f32 to vector<16x1xf32>
    %450 = arith.divf %448, %449 : vector<16x1xf32>
    %cst_171 = arith.constant 9.99999974E-6 : f32
    %451 = vector.broadcast %cst_171 : f32 to vector<16x1xf32>
    %452 = arith.addf %450, %451 : vector<16x1xf32>
    %453 = math.rsqrt %452 : vector<16x1xf32>
    %454 = vector.broadcast %453 : vector<16x1xf32> to vector<16x32xf32>
    %455 = arith.mulf %445, %454 : vector<16x32xf32>
    %456 = vector.broadcast %438 : vector<1x32xf32> to vector<16x32xf32>
    %457 = arith.mulf %455, %456 : vector<16x32xf32>
    %458 = vector.broadcast %439 : vector<1x32xf32> to vector<16x32xf32>
    %459 = arith.addf %457, %458 : vector<16x32xf32>
    %c0_172 = arith.constant 0 : index
    %c0_173 = arith.constant 0 : index
    %c0_174 = arith.constant 0 : index
    %460 = vector.load %arg21[%c0_172, %c0_173, %c0_174] : memref<1x16x32xf32, #tpu.memory_space<vmem>>, vector<1x16x32xf32>
    %461 = vector.shape_cast %460 : vector<1x16x32xf32> to vector<16x32xf32>
    %462 = vector.shape_cast %459 : vector<16x32xf32> to vector<1x16x32xf32>
    tpu.vector_store %arg21[%c0_172, %c0_173, %c0_174], %462 {strides = array<i32>} : memref<1x16x32xf32, #tpu.memory_space<vmem>>, vector<1x16x32xf32>,
    return
  }
  func.func @transform_0(%arg0: i32) -> (i32, i32, i32) {
    %c0_i32 = arith.constant 0 : i32
    %c0_i32_0 = arith.constant 0 : i32
    %c0_i32_1 = arith.constant 0 : i32
    return %arg0, %c0_i32, %c0_i32_0 : i32, i32, i32
  }
  func.func @transform_1(%arg0: i32) -> (i32, i32, i32) {
    %c0_i32 = arith.constant 0 : i32
    %c0_i32_0 = arith.constant 0 : i32
    %c0_i32_1 = arith.constant 0 : i32
    return %arg0, %c0_i32, %c0_i32_0 : i32, i32, i32
  }
  func.func @transform_2(%arg0: i32) -> (i32, i32, i32) {
    %c0_i32 = arith.constant 0 : i32
    %c0_i32_0 = arith.constant 0 : i32
    %c0_i32_1 = arith.constant 0 : i32
    return %arg0, %c0_i32, %c0_i32_0 : i32, i32, i32
  }
  func.func @transform_3(%arg0: i32) -> (i32, i32, i32) {
    %c0_i32 = arith.constant 0 : i32
    %c0_i32_0 = arith.constant 0 : i32
    %c0_i32_1 = arith.constant 0 : i32
    return %arg0, %c0_i32, %c0_i32_0 : i32, i32, i32
  }
  func.func @transform_4(%arg0: i32) -> (i32, i32, i32) {
    %c0_i32 = arith.constant 0 : i32
    %c0_i32_0 = arith.constant 0 : i32
    %c0_i32_1 = arith.constant 0 : i32
    return %arg0, %c0_i32, %c0_i32_0 : i32, i32, i32
  }
  func.func @transform_5(%arg0: i32) -> (i32, i32, i32) {
    %c0_i32 = arith.constant 0 : i32
    %c0_i32_0 = arith.constant 0 : i32
    %c0_i32_1 = arith.constant 0 : i32
    return %arg0, %c0_i32, %c0_i32_0 : i32, i32, i32
  }
  func.func @transform_6(%arg0: i32) -> (i32, i32) {
    %c0_i32 = arith.constant 0 : i32
    %c0_i32_0 = arith.constant 0 : i32
    %c0_i32_1 = arith.constant 0 : i32
    return %c0_i32, %c0_i32_0 : i32, i32
  }
  func.func @transform_7(%arg0: i32) -> (i32, i32) {
    %c0_i32 = arith.constant 0 : i32
    %c0_i32_0 = arith.constant 0 : i32
    %c0_i32_1 = arith.constant 0 : i32
    return %c0_i32, %c0_i32_0 : i32, i32
  }
  func.func @transform_8(%arg0: i32) -> (i32, i32) {
    %c0_i32 = arith.constant 0 : i32
    %c0_i32_0 = arith.constant 0 : i32
    %c0_i32_1 = arith.constant 0 : i32
    return %c0_i32, %c0_i32_0 : i32, i32
  }
  func.func @transform_9(%arg0: i32) -> (i32, i32) {
    %c0_i32 = arith.constant 0 : i32
    %c0_i32_0 = arith.constant 0 : i32
    %c0_i32_1 = arith.constant 0 : i32
    return %c0_i32, %c0_i32_0 : i32, i32
  }
  func.func @transform_10(%arg0: i32) -> (i32, i32) {
    %c0_i32 = arith.constant 0 : i32
    %c0_i32_0 = arith.constant 0 : i32
    %c0_i32_1 = arith.constant 0 : i32
    return %c0_i32, %c0_i32_0 : i32, i32
  }
  func.func @transform_11(%arg0: i32) -> (i32, i32) {
    %c0_i32 = arith.constant 0 : i32
    %c0_i32_0 = arith.constant 0 : i32
    %c0_i32_1 = arith.constant 0 : i32
    return %c0_i32, %c0_i32_0 : i32, i32
  }
  func.func @transform_12(%arg0: i32) -> (i32, i32) {
    %c0_i32 = arith.constant 0 : i32
    %c0_i32_0 = arith.constant 0 : i32
    %c0_i32_1 = arith.constant 0 : i32
    return %c0_i32, %c0_i32_0 : i32, i32
  }
  func.func @transform_13(%arg0: i32) -> (i32, i32) {
    %c0_i32 = arith.constant 0 : i32
    %c0_i32_0 = arith.constant 0 : i32
    %c0_i32_1 = arith.constant 0 : i32
    return %c0_i32, %c0_i32_0 : i32, i32
  }
  func.func @transform_14(%arg0: i32) -> (i32, i32) {
    %c0_i32 = arith.constant 0 : i32
    %c0_i32_0 = arith.constant 0 : i32
    %c0_i32_1 = arith.constant 0 : i32
    return %c0_i32, %c0_i32_0 : i32, i32
  }
  func.func @transform_15(%arg0: i32) -> (i32, i32) {
    %c0_i32 = arith.constant 0 : i32
    %c0_i32_0 = arith.constant 0 : i32
    %c0_i32_1 = arith.constant 0 : i32
    return %c0_i32, %c0_i32_0 : i32, i32
  }
  func.func @transform_16(%arg0: i32) -> (i32, i32) {
    %c0_i32 = arith.constant 0 : i32
    %c0_i32_0 = arith.constant 0 : i32
    %c0_i32_1 = arith.constant 0 : i32
    return %c0_i32, %c0_i32_0 : i32, i32
  }
  func.func @transform_17(%arg0: i32) -> (i32, i32) {
    %c0_i32 = arith.constant 0 : i32
    %c0_i32_0 = arith.constant 0 : i32
    %c0_i32_1 = arith.constant 0 : i32
    return %c0_i32, %c0_i32_0 : i32, i32
  }
  func.func @transform_18(%arg0: i32) -> (i32, i32) {
    %c0_i32 = arith.constant 0 : i32
    %c0_i32_0 = arith.constant 0 : i32
    %c0_i32_1 = arith.constant 0 : i32
    return %c0_i32, %c0_i32_0 : i32, i32
  }
  func.func @transform_19(%arg0: i32) -> (i32, i32) {
    %c0_i32 = arith.constant 0 : i32
    %c0_i32_0 = arith.constant 0 : i32
    %c0_i32_1 = arith.constant 0 : i32
    return %c0_i32, %c0_i32_0 : i32, i32
  }
  func.func @transform_20(%arg0: i32) -> (i32, i32, i32) {
    %c0_i32 = arith.constant 0 : i32
    %c0_i32_0 = arith.constant 0 : i32
    %c0_i32_1 = arith.constant 0 : i32
    return %arg0, %c0_i32, %c0_i32_0 : i32, i32, i32
  }
}

</mosaic_0001>

<llo_original>
// kernel: uv_transformer_encoder_layer.1
$region0: #{uv_transformer_encoder_layer.1}
  #allocation0 [shape = 'u32[]', space=smem, size = 0x4, offset = 0x4, fixed_abs, tag = 'smem constant byte address 0x4 - core index']
  #allocation1 [shape = 'u32[144,128]{1,0:T(1,128)}', space=vmem, size = 0x12000, scoped, tag = 'internal scratch']
  %s0 = inlined_call_operand.vmem [shape: f32[2,16,32], index: 0, kind: input, shape index: {}]
  %s1 = inlined_call_operand.vmem [shape: f32[2,8,32], index: 1, kind: input, shape index: {}]
  %s2 = inlined_call_operand.vmem [shape: f32[2,8,32], index: 2, kind: input, shape index: {}]
  %s3 = inlined_call_operand.vmem [shape: f32[2,16,32], index: 3, kind: input, shape index: {}]
  %s4 = inlined_call_operand.vmem [shape: f32[2,16,32], index: 4, kind: input, shape index: {}]
  %s5 = inlined_call_operand.vmem [shape: f32[2,8,32], index: 5, kind: input, shape index: {}]
  %s6 = inlined_call_operand.vmem [shape: f32[32,96], index: 6, kind: input, shape index: {}]
  %s7 = inlined_call_operand.vmem [shape: f32[1,96], index: 7, kind: input, shape index: {}]
  %s8 = inlined_call_operand.vmem [shape: f32[32,32], index: 8, kind: input, shape index: {}]
  %s9 = inlined_call_operand.vmem [shape: f32[1,32], index: 9, kind: input, shape index: {}]
  %s10 = inlined_call_operand.vmem [shape: f32[32,96], index: 10, kind: input, shape index: {}]
  %s11 = inlined_call_operand.vmem [shape: f32[1,96], index: 11, kind: input, shape index: {}]
  %s12 = inlined_call_operand.vmem [shape: f32[32,32], index: 12, kind: input, shape index: {}]
  %s13 = inlined_call_operand.vmem [shape: f32[1,32], index: 13, kind: input, shape index: {}]
  %s14 = inlined_call_operand.vmem [shape: f32[32,64], index: 14, kind: input, shape index: {}]
  %s15 = inlined_call_operand.vmem [shape: f32[1,64], index: 15, kind: input, shape index: {}]
  %s16 = inlined_call_operand.vmem [shape: f32[64,32], index: 16, kind: input, shape index: {}]
  %s17 = inlined_call_operand.vmem [shape: f32[1,32], index: 17, kind: input, shape index: {}]
  %s18 = inlined_call_operand.vmem [shape: f32[3,32], index: 18, kind: input, shape index: {}]
  %s19 = inlined_call_operand.vmem [shape: f32[3,32], index: 19, kind: input, shape index: {}]
  %s20 = inlined_call_operand.vmem [shape: f32[2,16,32], index: 20, kind: output, shape index: {}]
  %s21 = sld [smem:[#allocation0]]
  $region113: #{uv_transformer_encoder_layer.1} parent=0
    _
  %s23 = ssub.s32 1, %s21
  %s24 = scalar_select 0, %s23, %s21
  loop: start=0, step=1, limit=4
  $region2: #{uv_transformer_encoder_layer.1} parent=0 // loop_pre_header
    _
  $region3: #{uv_transformer_encoder_layer.1} parent=0 // loop_header
    %s26 = sphi 0, %s30
    %p27 = scmp.ge.s32.totalorder %s26, 4
    %s36 = sphi 0, %s38
    %s39 = sphi 0, %s36
    %s40 = sphi 0, %s39
    %s56 = sphi 0, %s40
    %s62 = sphi 0, %s64
    %s65 = sphi 0, %s62
    %s66 = sphi 0, %s65
    %s82 = sphi 0, %s66
    %s88 = sphi 0, %s90
    %s91 = sphi 0, %s88
    %s92 = sphi 0, %s91
    %s108 = sphi 0, %s92
    %s114 = sphi 0, %s116
    %s117 = sphi 0, %s114
    %s118 = sphi 0, %s117
    %s134 = sphi 0, %s118
    %s140 = sphi 0, %s142
    %s143 = sphi 0, %s140
    %s144 = sphi 0, %s143
    %s160 = sphi 0, %s144
    %s166 = sphi 0, %s168
    %s169 = sphi 0, %s166
    %s170 = sphi 0, %s169
    %s186 = sphi 0, %s170
    %s190 = sphi 0, %s190
    %s192 = sphi 0, %s190
    %s193 = sphi 0, %s192
    %s207 = sphi 0, %s193
    %s211 = sphi 0, %s211
    %s213 = sphi 0, %s211
    %s214 = sphi 0, %s213
    %s228 = sphi 0, %s214
    %s232 = sphi 0, %s232
    %s234 = sphi 0, %s232
    %s235 = sphi 0, %s234
    %s249 = sphi 0, %s235
    %s253 = sphi 0, %s253
    %s255 = sphi 0, %s253
    %s256 = sphi 0, %s255
    %s270 = sphi 0, %s256
    %s274 = sphi 0, %s274
    %s276 = sphi 0, %s274
    %s277 = sphi 0, %s276
    %s291 = sphi 0, %s277
    %s295 = sphi 0, %s295
    %s297 = sphi 0, %s295
    %s298 = sphi 0, %s297
    %s312 = sphi 0, %s298
    %s316 = sphi 0, %s316
    %s318 = sphi 0, %s316
    %s319 = sphi 0, %s318
    %s333 = sphi 0, %s319
    %s337 = sphi 0, %s337
    %s339 = sphi 0, %s337
    %s340 = sphi 0, %s339
    %s354 = sphi 0, %s340
    %s358 = sphi 0, %s358
    %s360 = sphi 0, %s358
    %s361 = sphi 0, %s360
    %s375 = sphi 0, %s361
    %s379 = sphi 0, %s379
    %s381 = sphi 0, %s379
    %s382 = sphi 0, %s381
    %s396 = sphi 0, %s382
    %s400 = sphi 0, %s400
    %s402 = sphi 0, %s400
    %s403 = sphi 0, %s402
    %s417 = sphi 0, %s403
    %s421 = sphi 0, %s421
    %s423 = sphi 0, %s421
    %s424 = sphi 0, %s423
    %s438 = sphi 0, %s424
    %s442 = sphi 0, %s442
    %s444 = sphi 0, %s442
    %s445 = sphi 0, %s444
    %s459 = sphi 0, %s445
    %s463 = sphi 0, %s463
    %s465 = sphi 0, %s463
    %s466 = sphi 0, %s465
    %s480 = sphi 0, %s466
    %s486 = sphi 0, %s488
    %s489 = sphi 0, %s486
    %s490 = sphi 0, %s489
    %s506 = sphi 0, %s490
  $region4: #{uv_transformer_encoder_layer.1} parent=0 // loop_header_branch
    %29 = sbr.rel (%p27) target = $region8
  $region5: #{uv_transformer_encoder_layer.1} parent=0 // loop_body
    %s31 = ssub.s32 %s26, 1
    %s32 = ssub.s32 %s26, 2
    %s33 = sadd.s32 %s26, 1
    %s34 = ssub.s32 %s26, %s33
    %p35 = scmp.eq.s32.totalorder %s34, 0
    %s37 = sadd.s32 %s36, 1
    %s38 = scalar_select %p35, %s36, %s37
    %p41 = pneg %p35
    %p42 = scmp.eq.s32.totalorder %s26, 1
    %p43 = por %p41, %p42
    %p44 = scmp.ne.s32.totalorder %s36, %s39
    %p45 = scmp.eq.s32.totalorder %s26, 0
    %p46 = por %p44, %p45
    %p47 = scmp.ne.s32.totalorder %s36, %s39
    %p48 = scmp.eq.s32.totalorder %s31, 1
    %p49 = por %p47, %p48
    %p50 = scmp.ne.s32.totalorder %s39, %s40
    %p51 = scmp.eq.s32.totalorder %s31, 0
    %p52 = por %p50, %p51
    %p53 = scmp.ne.s32.totalorder %s39, %s40
    %p54 = scmp.eq.s32.totalorder %s32, 1
    %p55 = por %p53, %p54
    %p57 = scmp.ne.s32.totalorder %s40, %s56
    %p58 = scmp.eq.s32.totalorder %s32, 0
    %p59 = por %p57, %p58
    %s60 = ssub.s32 %s26, %s33
    %p61 = scmp.eq.s32.totalorder %s60, 0
    %s63 = sadd.s32 %s62, 1
    %s64 = scalar_select %p61, %s62, %s63
    %p67 = pneg %p61
    %p68 = scmp.eq.s32.totalorder %s26, 1
    %p69 = por %p67, %p68
    %p70 = scmp.ne.s32.totalorder %s62, %s65
    %p71 = scmp.eq.s32.totalorder %s26, 0
    %p72 = por %p70, %p71
    %p73 = scmp.ne.s32.totalorder %s62, %s65
    %p74 = scmp.eq.s32.totalorder %s31, 1
    %p75 = por %p73, %p74
    %p76 = scmp.ne.s32.totalorder %s65, %s66
    %p77 = scmp.eq.s32.totalorder %s31, 0
    %p78 = por %p76, %p77
    %p79 = scmp.ne.s32.totalorder %s65, %s66
    %p80 = scmp.eq.s32.totalorder %s32, 1
    %p81 = por %p79, %p80
    %p83 = scmp.ne.s32.totalorder %s66, %s82
    %p84 = scmp.eq.s32.totalorder %s32, 0
    %p85 = por %p83, %p84
    %s86 = ssub.s32 %s26, %s33
    %p87 = scmp.eq.s32.totalorder %s86, 0
    %s89 = sadd.s32 %s88, 1
    %s90 = scalar_select %p87, %s88, %s89
    %p93 = pneg %p87
    %p94 = scmp.eq.s32.totalorder %s26, 1
    %p95 = por %p93, %p94
    %p96 = scmp.ne.s32.totalorder %s88, %s91
    %p97 = scmp.eq.s32.totalorder %s26, 0
    %p98 = por %p96, %p97
    %p99 = scmp.ne.s32.totalorder %s88, %s91
    %p100 = scmp.eq.s32.totalorder %s31, 1
    %p101 = por %p99, %p100
    %p102 = scmp.ne.s32.totalorder %s91, %s92
    %p103 = scmp.eq.s32.totalorder %s31, 0
    %p104 = por %p102, %p103
    %p105 = scmp.ne.s32.totalorder %s91, %s92
    %p106 = scmp.eq.s32.totalorder %s32, 1
    %p107 = por %p105, %p106
    %p109 = scmp.ne.s32.totalorder %s92, %s108
    %p110 = scmp.eq.s32.totalorder %s32, 0
    %p111 = por %p109, %p110
    %s112 = ssub.s32 %s26, %s33
    %p113 = scmp.eq.s32.totalorder %s112, 0
    %s115 = sadd.s32 %s114, 1
    %s116 = scalar_select %p113, %s114, %s115
    %p119 = pneg %p113
    %p120 = scmp.eq.s32.totalorder %s26, 1
    %p121 = por %p119, %p120
    %p122 = scmp.ne.s32.totalorder %s114, %s117
    %p123 = scmp.eq.s32.totalorder %s26, 0
    %p124 = por %p122, %p123
    %p125 = scmp.ne.s32.totalorder %s114, %s117
    %p126 = scmp.eq.s32.totalorder %s31, 1
    %p127 = por %p125, %p126
    %p128 = scmp.ne.s32.totalorder %s117, %s118
    %p129 = scmp.eq.s32.totalorder %s31, 0
    %p130 = por %p128, %p129
    %p131 = scmp.ne.s32.totalorder %s117, %s118
    %p132 = scmp.eq.s32.totalorder %s32, 1
    %p133 = por %p131, %p132
    %p135 = scmp.ne.s32.totalorder %s118, %s134
    %p136 = scmp.eq.s32.totalorder %s32, 0
    %p137 = por %p135, %p136
    %s138 = ssub.s32 %s26, %s33
    %p139 = scmp.eq.s32.totalorder %s138, 0
    %s141 = sadd.s32 %s140, 1
    %s142 = scalar_select %p139, %s140, %s141
    %p145 = pneg %p139
    %p146 = scmp.eq.s32.totalorder %s26, 1
    %p147 = por %p145, %p146
    %p148 = scmp.ne.s32.totalorder %s140, %s143
    %p149 = scmp.eq.s32.totalorder %s26, 0
    %p150 = por %p148, %p149
    %p151 = scmp.ne.s32.totalorder %s140, %s143
    %p152 = scmp.eq.s32.totalorder %s31, 1
    %p153 = por %p151, %p152
    %p154 = scmp.ne.s32.totalorder %s143, %s144
    %p155 = scmp.eq.s32.totalorder %s31, 0
    %p156 = por %p154, %p155
    %p157 = scmp.ne.s32.totalorder %s143, %s144
    %p158 = scmp.eq.s32.totalorder %s32, 1
    %p159 = por %p157, %p158
    %p161 = scmp.ne.s32.totalorder %s144, %s160
    %p162 = scmp.eq.s32.totalorder %s32, 0
    %p163 = por %p161, %p162
    %s164 = ssub.s32 %s26, %s33
    %p165 = scmp.eq.s32.totalorder %s164, 0
    %s167 = sadd.s32 %s166, 1
    %s168 = scalar_select %p165, %s166, %s167
    %p171 = pneg %p165
    %p172 = scmp.eq.s32.totalorder %s26, 1
    %p173 = por %p171, %p172
    %p174 = scmp.ne.s32.totalorder %s166, %s169
    %p175 = scmp.eq.s32.totalorder %s26, 0
    %p176 = por %p174, %p175
    %p177 = scmp.ne.s32.totalorder %s166, %s169
    %p178 = scmp.eq.s32.totalorder %s31, 1
    %p179 = por %p177, %p178
    %p180 = scmp.ne.s32.totalorder %s169, %s170
    %p181 = scmp.eq.s32.totalorder %s31, 0
    %p182 = por %p180, %p181
    %p183 = scmp.ne.s32.totalorder %s169, %s170
    %p184 = scmp.eq.s32.totalorder %s32, 1
    %p185 = por %p183, %p184
    %p187 = scmp.ne.s32.totalorder %s170, %s186
    %p188 = scmp.eq.s32.totalorder %s32, 0
    %p189 = por %p187, %p188
    %s191 = sadd.s32 %s190, 1
    %p194 = scmp.eq.s32.totalorder %s26, 1
    %p195 = scmp.ne.s32.totalorder %s190, %s192
    %p196 = scmp.eq.s32.totalorder %s26, 0
    %p197 = por %p195, %p196
    %p198 = scmp.ne.s32.totalorder %s190, %s192
    %p199 = scmp.eq.s32.totalorder %s31, 1
    %p200 = por %p198, %p199
    %p201 = scmp.ne.s32.totalorder %s192, %s193
    %p202 = scmp.eq.s32.totalorder %s31, 0
    %p203 = por %p201, %p202
    %p204 = scmp.ne.s32.totalorder %s192, %s193
    %p205 = scmp.eq.s32.totalorder %s32, 1
    %p206 = por %p204, %p205
    %p208 = scmp.ne.s32.totalorder %s193, %s207
    %p209 = scmp.eq.s32.totalorder %s32, 0
    %p210 = por %p208, %p209
    %s212 = sadd.s32 %s211, 1
    %p215 = scmp.eq.s32.totalorder %s26, 1
    %p216 = scmp.ne.s32.totalorder %s211, %s213
    %p217 = scmp.eq.s32.totalorder %s26, 0
    %p218 = por %p216, %p217
    %p219 = scmp.ne.s32.totalorder %s211, %s213
    %p220 = scmp.eq.s32.totalorder %s31, 1
    %p221 = por %p219, %p220
    %p222 = scmp.ne.s32.totalorder %s213, %s214
    %p223 = scmp.eq.s32.totalorder %s31, 0
    %p224 = por %p222, %p223
    %p225 = scmp.ne.s32.totalorder %s213, %s214
    %p226 = scmp.eq.s32.totalorder %s32, 1
    %p227 = por %p225, %p226
    %p229 = scmp.ne.s32.totalorder %s214, %s228
    %p230 = scmp.eq.s32.totalorder %s32, 0
    %p231 = por %p229, %p230
    %s233 = sadd.s32 %s232, 1
    %p236 = scmp.eq.s32.totalorder %s26, 1
    %p237 = scmp.ne.s32.totalorder %s232, %s234
    %p238 = scmp.eq.s32.totalorder %s26, 0
    %p239 = por %p237, %p238
    %p240 = scmp.ne.s32.totalorder %s232, %s234
    %p241 = scmp.eq.s32.totalorder %s31, 1
    %p242 = por %p240, %p241
    %p243 = scmp.ne.s32.totalorder %s234, %s235
    %p244 = scmp.eq.s32.totalorder %s31, 0
    %p245 = por %p243, %p244
    %p246 = scmp.ne.s32.totalorder %s234, %s235
    %p247 = scmp.eq.s32.totalorder %s32, 1
    %p248 = por %p246, %p247
    %p250 = scmp.ne.s32.totalorder %s235, %s249
    %p251 = scmp.eq.s32.totalorder %s32, 0
    %p252 = por %p250, %p251
    %s254 = sadd.s32 %s253, 1
    %p257 = scmp.eq.s32.totalorder %s26, 1
    %p258 = scmp.ne.s32.totalorder %s253, %s255
    %p259 = scmp.eq.s32.totalorder %s26, 0
    %p260 = por %p258, %p259
    %p261 = scmp.ne.s32.totalorder %s253, %s255
    %p262 = scmp.eq.s32.totalorder %s31, 1
    %p263 = por %p261, %p262
    %p264 = scmp.ne.s32.totalorder %s255, %s256
    %p265 = scmp.eq.s32.totalorder %s31, 0
    %p266 = por %p264, %p265
    %p267 = scmp.ne.s32.totalorder %s255, %s256
    %p268 = scmp.eq.s32.totalorder %s32, 1
    %p269 = por %p267, %p268
    %p271 = scmp.ne.s32.totalorder %s256, %s270
    %p272 = scmp.eq.s32.totalorder %s32, 0
    %p273 = por %p271, %p272
    %s275 = sadd.s32 %s274, 1
    %p278 = scmp.eq.s32.totalorder %s26, 1
    %p279 = scmp.ne.s32.totalorder %s274, %s276
    %p280 = scmp.eq.s32.totalorder %s26, 0
    %p281 = por %p279, %p280
    %p282 = scmp.ne.s32.totalorder %s274, %s276
    %p283 = scmp.eq.s32.totalorder %s31, 1
    %p284 = por %p282, %p283
    %p285 = scmp.ne.s32.totalorder %s276, %s277
    %p286 = scmp.eq.s32.totalorder %s31, 0
    %p287 = por %p285, %p286
    %p288 = scmp.ne.s32.totalorder %s276, %s277
    %p289 = scmp.eq.s32.totalorder %s32, 1
    %p290 = por %p288, %p289
    %p292 = scmp.ne.s32.totalorder %s277, %s291
    %p293 = scmp.eq.s32.totalorder %s32, 0
    %p294 = por %p292, %p293
    %s296 = sadd.s32 %s295, 1
    %p299 = scmp.eq.s32.totalorder %s26, 1
    %p300 = scmp.ne.s32.totalorder %s295, %s297
    %p301 = scmp.eq.s32.totalorder %s26, 0
    %p302 = por %p300, %p301
    %p303 = scmp.ne.s32.totalorder %s295, %s297
    %p304 = scmp.eq.s32.totalorder %s31, 1
    %p305 = por %p303, %p304
    %p306 = scmp.ne.s32.totalorder %s297, %s298
    %p307 = scmp.eq.s32.totalorder %s31, 0
    %p308 = por %p306, %p307
    %p309 = scmp.ne.s32.totalorder %s297, %s298
    %p310 = scmp.eq.s32.totalorder %s32, 1
    %p311 = por %p309, %p310
    %p313 = scmp.ne.s32.totalorder %s298, %s312
    %p314 = scmp.eq.s32.totalorder %s32, 0
    %p315 = por %p313, %p314
    %s317 = sadd.s32 %s316, 1
    %p320 = scmp.eq.s32.totalorder %s26, 1
    %p321 = scmp.ne.s32.totalorder %s316, %s318
    %p322 = scmp.eq.s32.totalorder %s26, 0
    %p323 = por %p321, %p322
    %p324 = scmp.ne.s32.totalorder %s316, %s318
    %p325 = scmp.eq.s32.totalorder %s31, 1
    %p326 = por %p324, %p325
    %p327 = scmp.ne.s32.totalorder %s318, %s319
    %p328 = scmp.eq.s32.totalorder %s31, 0
    %p329 = por %p327, %p328
    %p330 = scmp.ne.s32.totalorder %s318, %s319
    %p331 = scmp.eq.s32.totalorder %s32, 1
    %p332 = por %p330, %p331
    %p334 = scmp.ne.s32.totalorder %s319, %s333
    %p335 = scmp.eq.s32.totalorder %s32, 0
    %p336 = por %p334, %p335
    %s338 = sadd.s32 %s337, 1
    %p341 = scmp.eq.s32.totalorder %s26, 1
    %p342 = scmp.ne.s32.totalorder %s337, %s339
    %p343 = scmp.eq.s32.totalorder %s26, 0
    %p344 = por %p342, %p343
    %p345 = scmp.ne.s32.totalorder %s337, %s339
    %p346 = scmp.eq.s32.totalorder %s31, 1
    %p347 = por %p345, %p346
    %p348 = scmp.ne.s32.totalorder %s339, %s340
    %p349 = scmp.eq.s32.totalorder %s31, 0
    %p350 = por %p348, %p349
    %p351 = scmp.ne.s32.totalorder %s339, %s340
    %p352 = scmp.eq.s32.totalorder %s32, 1
    %p353 = por %p351, %p352
    %p355 = scmp.ne.s32.totalorder %s340, %s354
    %p356 = scmp.eq.s32.totalorder %s32, 0
    %p357 = por %p355, %p356
    %s359 = sadd.s32 %s358, 1
    %p362 = scmp.eq.s32.totalorder %s26, 1
    %p363 = scmp.ne.s32.totalorder %s358, %s360
    %p364 = scmp.eq.s32.totalorder %s26, 0
    %p365 = por %p363, %p364
    %p366 = scmp.ne.s32.totalorder %s358, %s360
    %p367 = scmp.eq.s32.totalorder %s31, 1
    %p368 = por %p366, %p367
    %p369 = scmp.ne.s32.totalorder %s360, %s361
    %p370 = scmp.eq.s32.totalorder %s31, 0
    %p371 = por %p369, %p370
    %p372 = scmp.ne.s32.totalorder %s360, %s361
    %p373 = scmp.eq.s32.totalorder %s32, 1
    %p374 = por %p372, %p373
    %p376 = scmp.ne.s32.totalorder %s361, %s375
    %p377 = scmp.eq.s32.totalorder %s32, 0
    %p378 = por %p376, %p377
    %s380 = sadd.s32 %s379, 1
    %p383 = scmp.eq.s32.totalorder %s26, 1
    %p384 = scmp.ne.s32.totalorder %s379, %s381
    %p385 = scmp.eq.s32.totalorder %s26, 0
    %p386 = por %p384, %p385
    %p387 = scmp.ne.s32.totalorder %s379, %s381
    %p388 = scmp.eq.s32.totalorder %s31, 1
    %p389 = por %p387, %p388
    %p390 = scmp.ne.s32.totalorder %s381, %s382
    %p391 = scmp.eq.s32.totalorder %s31, 0
    %p392 = por %p390, %p391
    %p393 = scmp.ne.s32.totalorder %s381, %s382
    %p394 = scmp.eq.s32.totalorder %s32, 1
    %p395 = por %p393, %p394
    %p397 = scmp.ne.s32.totalorder %s382, %s396
    %p398 = scmp.eq.s32.totalorder %s32, 0
    %p399 = por %p397, %p398
    %s401 = sadd.s32 %s400, 1
    %p404 = scmp.eq.s32.totalorder %s26, 1
    %p405 = scmp.ne.s32.totalorder %s400, %s402
    %p406 = scmp.eq.s32.totalorder %s26, 0
    %p407 = por %p405, %p406
    %p408 = scmp.ne.s32.totalorder %s400, %s402
    %p409 = scmp.eq.s32.totalorder %s31, 1
    %p410 = por %p408, %p409
    %p411 = scmp.ne.s32.totalorder %s402, %s403
    %p412 = scmp.eq.s32.totalorder %s31, 0
    %p413 = por %p411, %p412
    %p414 = scmp.ne.s32.totalorder %s402, %s403
    %p415 = scmp.eq.s32.totalorder %s32, 1
    %p416 = por %p414, %p415
    %p418 = scmp.ne.s32.totalorder %s403, %s417
    %p419 = scmp.eq.s32.totalorder %s32, 0
    %p420 = por %p418, %p419
    %s422 = sadd.s32 %s421, 1
    %p425 = scmp.eq.s32.totalorder %s26, 1
    %p426 = scmp.ne.s32.totalorder %s421, %s423
    %p427 = scmp.eq.s32.totalorder %s26, 0
    %p428 = por %p426, %p427
    %p429 = scmp.ne.s32.totalorder %s421, %s423
    %p430 = scmp.eq.s32.totalorder %s31, 1
    %p431 = por %p429, %p430
    %p432 = scmp.ne.s32.totalorder %s423, %s424
    %p433 = scmp.eq.s32.totalorder %s31, 0
    %p434 = por %p432, %p433
    %p435 = scmp.ne.s32.totalorder %s423, %s424
    %p436 = scmp.eq.s32.totalorder %s32, 1
    %p437 = por %p435, %p436
    %p439 = scmp.ne.s32.totalorder %s424, %s438
    %p440 = scmp.eq.s32.totalorder %s32, 0
    %p441 = por %p439, %p440
    %s443 = sadd.s32 %s442, 1
    %p446 = scmp.eq.s32.totalorder %s26, 1
    %p447 = scmp.ne.s32.totalorder %s442, %s444
    %p448 = scmp.eq.s32.totalorder %s26, 0
    %p449 = por %p447, %p448
    %p450 = scmp.ne.s32.totalorder %s442, %s444
    %p451 = scmp.eq.s32.totalorder %s31, 1
    %p452 = por %p450, %p451
    %p453 = scmp.ne.s32.totalorder %s444, %s445
    %p454 = scmp.eq.s32.totalorder %s31, 0
    %p455 = por %p453, %p454
    %p456 = scmp.ne.s32.totalorder %s444, %s445
    %p457 = scmp.eq.s32.totalorder %s32, 1
    %p458 = por %p456, %p457
    %p460 = scmp.ne.s32.totalorder %s445, %s459
    %p461 = scmp.eq.s32.totalorder %s32, 0
    %p462 = por %p460, %p461
    %s464 = sadd.s32 %s463, 1
    %p467 = scmp.eq.s32.totalorder %s26, 1
    %p468 = scmp.ne.s32.totalorder %s463, %s465
    %p469 = scmp.eq.s32.totalorder %s26, 0
    %p470 = por %p468, %p469
    %p471 = scmp.ne.s32.totalorder %s463, %s465
    %p472 = scmp.eq.s32.totalorder %s31, 1
    %p473 = por %p471, %p472
    %p474 = scmp.ne.s32.totalorder %s465, %s466
    %p475 = scmp.eq.s32.totalorder %s31, 0
    %p476 = por %p474, %p475
    %p477 = scmp.ne.s32.totalorder %s465, %s466
    %p478 = scmp.eq.s32.totalorder %s32, 1
    %p479 = por %p477, %p478
    %p481 = scmp.ne.s32.totalorder %s466, %s480
    %p482 = scmp.eq.s32.totalorder %s32, 0
    %p483 = por %p481, %p482
    %s484 = ssub.s32 %s26, %s33
    %p485 = scmp.eq.s32.totalorder %s484, 0
    %s487 = sadd.s32 %s486, 1
    %s488 = scalar_select %p485, %s486, %s487
    %p491 = pneg %p485
    %p492 = scmp.eq.s32.totalorder %s26, 1
    %p493 = por %p491, %p492
    %p494 = scmp.ne.s32.totalorder %s486, %s489
    %p495 = scmp.eq.s32.totalorder %s26, 0
    %p496 = por %p494, %p495
    %p497 = scmp.ne.s32.totalorder %s486, %s489
    %p498 = scmp.eq.s32.totalorder %s31, 1
    %p499 = por %p497, %p498
    %p500 = scmp.ne.s32.totalorder %s489, %s490
    %p501 = scmp.eq.s32.totalorder %s31, 0
    %p502 = por %p500, %p501
    %p503 = scmp.ne.s32.totalorder %s489, %s490
    %p504 = scmp.eq.s32.totalorder %s32, 1
    %p505 = por %p503, %p504
    %p507 = scmp.ne.s32.totalorder %s490, %s506
    %p508 = scmp.eq.s32.totalorder %s32, 0
    %p509 = por %p507, %p508
    %p510 = scmp.le.s32.totalorder 1, %s26
    %p511 = scmp.lt.s32.totalorder %s26, 3
    %p512 = pnand %p510, %p511
    %p513 = pneg %p512
    // Predicated region
    $region9: #{uv_transformer_encoder_layer.1} parent=5 // pred_check
      _
    $region10: #{uv_transformer_encoder_layer.1} parent=5 // pred_check_branch
      %515 = sbr.rel (%p512) target = $region12
    $region11: #{uv_transformer_encoder_layer.1} parent=5 // pred_region
      %s516 = ssub.s32 %s26, 1
      // Predicated region
      $region13: #{uv_transformer_encoder_layer.1} parent=11 // pred_check
        %p517 = pneg %p203
      $region14: #{uv_transformer_encoder_layer.1} parent=11 // pred_check_branch
        %519 = sbr.rel (%p517) target = $region16
      $region15: #{uv_transformer_encoder_layer.1} parent=11 // pred_region
        _
      $region16: #{uv_transformer_encoder_layer.1} parent=11 // pred_fallthru
        _
      // Predicated region
      $region17: #{uv_transformer_encoder_layer.1} parent=11 // pred_check
        %p520 = pneg %p224
      $region18: #{uv_transformer_encoder_layer.1} parent=11 // pred_check_branch
        %522 = sbr.rel (%p520) target = $region20
      $region19: #{uv_transformer_encoder_layer.1} parent=11 // pred_region
        _
      $region20: #{uv_transformer_encoder_layer.1} parent=11 // pred_fallthru
        _
      // Predicated region
      $region21: #{uv_transformer_encoder_layer.1} parent=11 // pred_check
        %p523 = pneg %p245
      $region22: #{uv_transformer_encoder_layer.1} parent=11 // pred_check_branch
        %525 = sbr.rel (%p523) target = $region24
      $region23: #{uv_transformer_encoder_layer.1} parent=11 // pred_region
        _
      $region24: #{uv_transformer_encoder_layer.1} parent=11 // pred_fallthru
        _
      // Predicated region
      $region25: #{uv_transformer_encoder_layer.1} parent=11 // pred_check
        %p526 = pneg %p266
      $region26: #{uv_transformer_encoder_layer.1} parent=11 // pred_check_branch
        %528 = sbr.rel (%p526) target = $region28
      $region27: #{uv_transformer_encoder_layer.1} parent=11 // pred_region
        _
      $region28: #{uv_transformer_encoder_layer.1} parent=11 // pred_fallthru
        _
      // Predicated region
      $region29: #{uv_transformer_encoder_layer.1} parent=11 // pred_check
        %p529 = pneg %p287
      $region30: #{uv_transformer_encoder_layer.1} parent=11 // pred_check_branch
        %531 = sbr.rel (%p529) target = $region32
      $region31: #{uv_transformer_encoder_layer.1} parent=11 // pred_region
        _
      $region32: #{uv_transformer_encoder_layer.1} parent=11 // pred_fallthru
        _
      // Predicated region
      $region33: #{uv_transformer_encoder_layer.1} parent=11 // pred_check
        %p532 = pneg %p308
      $region34: #{uv_transformer_encoder_layer.1} parent=11 // pred_check_branch
        %534 = sbr.rel (%p532) target = $region36
      $region35: #{uv_transformer_encoder_layer.1} parent=11 // pred_region
        _
      $region36: #{uv_transformer_encoder_layer.1} parent=11 // pred_fallthru
        _
      // Predicated region
      $region37: #{uv_transformer_encoder_layer.1} parent=11 // pred_check
        %p535 = pneg %p329
      $region38: #{uv_transformer_encoder_layer.1} parent=11 // pred_check_branch
        %537 = sbr.rel (%p535) target = $region40
      $region39: #{uv_transformer_encoder_layer.1} parent=11 // pred_region
        _
      $region40: #{uv_transformer_encoder_layer.1} parent=11 // pred_fallthru
        _
      // Predicated region
      $region41: #{uv_transformer_encoder_layer.1} parent=11 // pred_check
        %p538 = pneg %p350
      $region42: #{uv_transformer_encoder_layer.1} parent=11 // pred_check_branch
        %540 = sbr.rel (%p538) target = $region44
      $region43: #{uv_transformer_encoder_layer.1} parent=11 // pred_region
        _
      $region44: #{uv_transformer_encoder_layer.1} parent=11 // pred_fallthru
        _
      // Predicated region
      $region45: #{uv_transformer_encoder_layer.1} parent=11 // pred_check
        %p541 = pneg %p371
      $region46: #{uv_transformer_encoder_layer.1} parent=11 // pred_check_branch
        %543 = sbr.rel (%p541) target = $region48
      $region47: #{uv_transformer_encoder_layer.1} parent=11 // pred_region
        _
      $region48: #{uv_transformer_encoder_layer.1} parent=11 // pred_fallthru
        _
      // Predicated region
      $region49: #{uv_transformer_encoder_layer.1} parent=11 // pred_check
        %p544 = pneg %p392
      $region50: #{uv_transformer_encoder_layer.1} parent=11 // pred_check_branch
        %546 = sbr.rel (%p544) target = $region52
      $region51: #{uv_transformer_encoder_layer.1} parent=11 // pred_region
        _
      $region52: #{uv_transformer_encoder_layer.1} parent=11 // pred_fallthru
        _
      // Predicated region
      $region53: #{uv_transformer_encoder_layer.1} parent=11 // pred_check
        %p547 = pneg %p413
      $region54: #{uv_transformer_encoder_layer.1} parent=11 // pred_check_branch
        %549 = sbr.rel (%p547) target = $region56
      $region55: #{uv_transformer_encoder_layer.1} parent=11 // pred_region
        _
      $region56: #{uv_transformer_encoder_layer.1} parent=11 // pred_fallthru
        _
      // Predicated region
      $region57: #{uv_transformer_encoder_layer.1} parent=11 // pred_check
        %p550 = pneg %p434
      $region58: #{uv_transformer_encoder_layer.1} parent=11 // pred_check_branch
        %552 = sbr.rel (%p550) target = $region60
      $region59: #{uv_transformer_encoder_layer.1} parent=11 // pred_region
        _
      $region60: #{uv_transformer_encoder_layer.1} parent=11 // pred_fallthru
        _
      // Predicated region
      $region61: #{uv_transformer_encoder_layer.1} parent=11 // pred_check
        %p553 = pneg %p455
      $region62: #{uv_transformer_encoder_layer.1} parent=11 // pred_check_branch
        %555 = sbr.rel (%p553) target = $region64
      $region63: #{uv_transformer_encoder_layer.1} parent=11 // pred_region
        _
      $region64: #{uv_transformer_encoder_layer.1} parent=11 // pred_fallthru
        _
      // Predicated region
      $region65: #{uv_transformer_encoder_layer.1} parent=11 // pred_check
        %p556 = pneg %p476
      $region66: #{uv_transformer_encoder_layer.1} parent=11 // pred_check_branch
        %558 = sbr.rel (%p556) target = $region68
      $region67: #{uv_transformer_encoder_layer.1} parent=11 // pred_region
        _
      $region68: #{uv_transformer_encoder_layer.1} parent=11 // pred_fallthru
        _
    $region12: #{uv_transformer_encoder_layer.1} parent=5 // pred_fallthru
      _
    %p559 = scmp.lt.s32.totalorder %s26, 2
    // Predicated region
    $region69: #{uv_transformer_encoder_layer.1} parent=5 // pred_check
      %p560 = pneg %p559
    $region70: #{uv_transformer_encoder_layer.1} parent=5 // pred_check_branch
      %562 = sbr.rel (%p560) target = $region72
    $region71: #{uv_transformer_encoder_layer.1} parent=5 // pred_region
      // Predicated region
      $region73: #{uv_transformer_encoder_layer.1} parent=71 // pred_check
        %p563 = pneg %p46
      $region74: #{uv_transformer_encoder_layer.1} parent=71 // pred_check_branch
        %565 = sbr.rel (%p563) target = $region76
      $region75: #{uv_transformer_encoder_layer.1} parent=71 // pred_region
        %p566 = scmp.lt.s32.totalorder %s26, 1
        %s567 = scalar_select %p566, %s26, 1
        %s568 = smul.addr %s567, 2
        %s569 = smul.addr %s568, 8
        %s570 = scalar_lea.vmem %s0, %s569
      $region76: #{uv_transformer_encoder_layer.1} parent=71 // pred_fallthru
        _
      // Predicated region
      $region77: #{uv_transformer_encoder_layer.1} parent=71 // pred_check
        %p571 = pneg %p72
      $region78: #{uv_transformer_encoder_layer.1} parent=71 // pred_check_branch
        %573 = sbr.rel (%p571) target = $region80
      $region79: #{uv_transformer_encoder_layer.1} parent=71 // pred_region
        %p574 = scmp.lt.s32.totalorder %s26, 1
        %s575 = scalar_select %p574, %s26, 1
        %s576 = smul.addr %s575, 8
        %s577 = scalar_lea.vmem %s1, %s576
      $region80: #{uv_transformer_encoder_layer.1} parent=71 // pred_fallthru
        _
      // Predicated region
      $region81: #{uv_transformer_encoder_layer.1} parent=71 // pred_check
        %p578 = pneg %p98
      $region82: #{uv_transformer_encoder_layer.1} parent=71 // pred_check_branch
        %580 = sbr.rel (%p578) target = $region84
      $region83: #{uv_transformer_encoder_layer.1} parent=71 // pred_region
        %p581 = scmp.lt.s32.totalorder %s26, 1
        %s582 = scalar_select %p581, %s26, 1
        %s583 = smul.addr %s582, 8
        %s584 = scalar_lea.vmem %s2, %s583
      $region84: #{uv_transformer_encoder_layer.1} parent=71 // pred_fallthru
        _
      // Predicated region
      $region85: #{uv_transformer_encoder_layer.1} parent=71 // pred_check
        %p585 = pneg %p124
      $region86: #{uv_transformer_encoder_layer.1} parent=71 // pred_check_branch
        %587 = sbr.rel (%p585) target = $region88
      $region87: #{uv_transformer_encoder_layer.1} parent=71 // pred_region
        %p588 = scmp.lt.s32.totalorder %s26, 1
        %s589 = scalar_select %p588, %s26, 1
        %s590 = smul.addr %s589, 2
        %s591 = smul.addr %s590, 8
        %s592 = scalar_lea.vmem %s3, %s591
      $region88: #{uv_transformer_encoder_layer.1} parent=71 // pred_fallthru
        _
      // Predicated region
      $region89: #{uv_transformer_encoder_layer.1} parent=71 // pred_check
        %p593 = pneg %p150
      $region90: #{uv_transformer_encoder_layer.1} parent=71 // pred_check_branch
        %595 = sbr.rel (%p593) target = $region92
      $region91: #{uv_transformer_encoder_layer.1} parent=71 // pred_region
        %p596 = scmp.lt.s32.totalorder %s26, 1
        %s597 = scalar_select %p596, %s26, 1
        %s598 = smul.addr %s597, 2
        %s599 = smul.addr %s598, 8
        %s600 = scalar_lea.vmem %s4, %s599
      $region92: #{uv_transformer_encoder_layer.1} parent=71 // pred_fallthru
        _
      // Predicated region
      $region93: #{uv_transformer_encoder_layer.1} parent=71 // pred_check
        %p601 = pneg %p176
      $region94: #{uv_transformer_encoder_layer.1} parent=71 // pred_check_branch
        %603 = sbr.rel (%p601) target = $region96
      $region95: #{uv_transformer_encoder_layer.1} parent=71 // pred_region
        %p604 = scmp.lt.s32.totalorder %s26, 1
        %s605 = scalar_select %p604, %s26, 1
        %s606 = smul.addr %s605, 8
        %s607 = scalar_lea.vmem %s5, %s606
      $region96: #{uv_transformer_encoder_layer.1} parent=71 // pred_fallthru
        _
    $region72: #{uv_transformer_encoder_layer.1} parent=5 // pred_fallthru
      _
    %p608 = scmp.le.s32.totalorder 1, %s26
    %p609 = scmp.lt.s32.totalorder %s26, 3
    %p610 = pnand %p608, %p609
    %p611 = pneg %p610
    // Predicated region
    $region97: #{uv_transformer_encoder_layer.1} parent=5 // pred_check
      _
    $region98: #{uv_transformer_encoder_layer.1} parent=5 // pred_check_branch
      %613 = sbr.rel (%p610) target = $region100
    $region99: #{uv_transformer_encoder_layer.1} parent=5 // pred_region
      %s614 = ssub.s32 %s26, 1
      %p615 = scmp.lt.s32.totalorder %s31, 1
      %s616 = scalar_select %p615, %s31, 1
      %s617 = smul.addr %s616, 2
      %s618 = smul.addr %s617, 8
      %s619 = scalar_lea.vmem %s0, %s618
      %p620 = pneg %p52
      %p621 = pneg %p49
      %p622 = scmp.lt.s32.totalorder %s31, 1
      %s623 = scalar_select %p622, %s31, 1
      %s624 = smul.addr %s623, 8
      %s625 = scalar_lea.vmem %s1, %s624
      %p626 = pneg %p78
      %p627 = pneg %p75
      %p628 = scmp.lt.s32.totalorder %s31, 1
      %s629 = scalar_select %p628, %s31, 1
      %s630 = smul.addr %s629, 8
      %s631 = scalar_lea.vmem %s2, %s630
      %p632 = pneg %p104
      %p633 = pneg %p101
      %p634 = scmp.lt.s32.totalorder %s31, 1
      %s635 = scalar_select %p634, %s31, 1
      %s636 = smul.addr %s635, 2
      %s637 = smul.addr %s636, 8
      %s638 = scalar_lea.vmem %s3, %s637
      %p639 = pneg %p130
      %p640 = pneg %p127
      %p641 = scmp.lt.s32.totalorder %s31, 1
      %s642 = scalar_select %p641, %s31, 1
      %s643 = smul.addr %s642, 2
      %s644 = smul.addr %s643, 8
      %s645 = scalar_lea.vmem %s4, %s644
      %p646 = pneg %p156
      %p647 = pneg %p153
      %p648 = scmp.lt.s32.totalorder %s31, 1
      %s649 = scalar_select %p648, %s31, 1
      %s650 = smul.addr %s649, 8
      %s651 = scalar_lea.vmem %s5, %s650
      %p652 = pneg %p182
      %p653 = pneg %p179
      %p654 = pneg %p203
      %p655 = pneg %p200
      %p656 = pneg %p224
      %p657 = pneg %p221
      %p658 = pneg %p245
      %p659 = pneg %p242
      %p660 = pneg %p266
      %p661 = pneg %p263
      %p662 = pneg %p287
      %p663 = pneg %p284
      %p664 = pneg %p308
      %p665 = pneg %p305
      %p666 = pneg %p329
      %p667 = pneg %p326
      %p668 = pneg %p350
      %p669 = pneg %p347
      %p670 = pneg %p371
      %p671 = pneg %p368
      %p672 = pneg %p392
      %p673 = pneg %p389
      %p674 = pneg %p413
      %p675 = pneg %p410
      %p676 = pneg %p434
      %p677 = pneg %p431
      %p678 = pneg %p455
      %p679 = pneg %p452
      %p680 = pneg %p476
      %p681 = pneg %p473
      %p682 = pneg %p502
      %p683 = pneg %p499
      %p684 = scmp.lt.s32.totalorder %s31, 1
      %s685 = scalar_select %p684, %s31, 1
      %s686 = smul.addr %s685, 2
      %s687 = smul.addr %s686, 8
      %s688 = scalar_lea.vmem %s20, %s687
      %p689 = scmp.lt.s32.totalorder %s31, 1
      %s690 = scalar_select %p689, %s31, 1
      %s691 = smul.addr %s690, 2
      %s692 = smul.addr %s691, 8
      %s693 = scalar_lea.vmem %s0, %s692
      %p694 = scmp.lt.s32.totalorder %s31, 1
      %s695 = scalar_select %p694, %s31, 1
      %s696 = smul.addr %s695, 8
      %s697 = scalar_lea.vmem %s1, %s696
      %p698 = scmp.lt.s32.totalorder %s31, 1
      %s699 = scalar_select %p698, %s31, 1
      %s700 = smul.addr %s699, 8
      %s701 = scalar_lea.vmem %s2, %s700
      %p702 = scmp.lt.s32.totalorder %s31, 1
      %s703 = scalar_select %p702, %s31, 1
      %s704 = smul.addr %s703, 2
      %s705 = smul.addr %s704, 8
      %s706 = scalar_lea.vmem %s3, %s705
      %p707 = scmp.lt.s32.totalorder %s31, 1
      %s708 = scalar_select %p707, %s31, 1
      %s709 = smul.addr %s708, 2
      %s710 = smul.addr %s709, 8
      %s711 = scalar_lea.vmem %s4, %s710
      %p712 = scmp.lt.s32.totalorder %s31, 1
      %s713 = scalar_select %p712, %s31, 1
      %s714 = smul.addr %s713, 8
      %s715 = scalar_lea.vmem %s5, %s714
      %p716 = scmp.lt.s32.totalorder %s31, 1
      %s717 = scalar_select %p716, %s31, 1
      %s718 = smul.addr %s717, 2
      %s719 = smul.addr %s718, 8
      %s720 = scalar_lea.vmem %s20, %s719
      %v721 = vld [vmem:[%s693] sm:$0xff]
      %v722 = vld [vmem:[%s693 + $0x8] sm:$0xff]
      %v723 = vld [vmem:[%s697] sm:$0xff]
      %v724 = vld [vmem:[%s701] sm:$0xff]
      %v725 = vld [vmem:[%s706] sm:$0xff]
      %v726 = vld [vmem:[%s706 + $0x8] sm:$0xff]
      %v727 = vld [vmem:[%s711] sm:$0xff]
      %v728 = vld [vmem:[%s711 + $0x8] sm:$0xff]
      %v729 = vld [vmem:[%s715] sm:$0xff]
      %v730 = vadd.f32 %v721, %v725
      %v731 = vadd.f32 %v722, %v726
      %v732 = vld [vmem:[%s6] sm:$0xff]
      %v733 = vld [vmem:[%s6 + $0x8] sm:$0xff]
      %v734 = vld [vmem:[%s6 + $0x10] sm:$0xff]
      %v735 = vld [vmem:[%s6 + $0x18] sm:$0xff]
      %v736 = vld [vmem:[%s7] sm:$0x1]
      %v737 = vld [vmem:[%s8] sm:$0xff]
      %v738 = vld [vmem:[%s8 + $0x8] sm:$0xff]
      %v739 = vld [vmem:[%s8 + $0x10] sm:$0xff]
      %v740 = vld [vmem:[%s8 + $0x18] sm:$0xff]
      %v741 = vld [vmem:[%s9] sm:$0x1]
      %v743 = vlaneseq
      %v744 = vshrl.u32 %v743, 7
      %v745 = vsub.s32 0, %v744
      %v746 = vrot.slane %v736, %v745
      %vm748 = vcmask 261120
      %v750 = vsel %vm748, %v730, 0
      %v753 = vsel %vm748, %v731, 0
      %755 = vmatprep.subr.mxu0 0.0
      %756 = vmatpush1.msra.mxu0 0.0
      %757 = vmatprep.subr.mxu0 0.0
      %758 = vmatpush1.msra.mxu0 0.0
      %759 = vmatprep.subr.mxu0 0.0
      %760 = vmatpush1.msra.mxu0 0.0
      %761 = vmatprep.subr.mxu0 0.0
      %762 = vmatpush1.msra.mxu0 0.0
      %763 = vmatprep.subr.mxu0 0.0
      %764 = vmatpush1.msra.mxu0 0.0
      %765 = vmatprep.subr.mxu0 0.0
      %766 = vmatpush1.msra.mxu0 0.0
      %767 = vmatprep.subr.mxu0 0.0
      %768 = vmatpush1.msra.mxu0 0.0
      %769 = vmatprep.subr.mxu0 0.0
      %770 = vmatpush1.msra.mxu0 0.0
      %771 = vmatprep.subr.mxu0 0.0
      %772 = vmatpush1.msra.mxu0 0.0
      %773 = vmatprep.subr.mxu0 0.0
      %774 = vmatpush1.msra.mxu0 0.0
      %775 = vmatprep.subr.mxu0 0.0
      %776 = vmatpush1.msra.mxu0 0.0
      %777 = vmatprep.subr.mxu0 0.0
      %778 = vmatpush1.msra.mxu0 0.0
      %779 = vmatprep.subr.mxu0 0.0
      %780 = vmatpush1.msra.mxu0 %v735
      %781 = vmatprep.subr.mxu0 0.0
      %782 = vmatpush1.msra.mxu0 %v734
      %783 = vmatprep.subr.mxu0 0.0
      %784 = vmatpush1.msra.mxu0 %v733
      %785 = vmatprep.subr.mxu0 0.0
      %786 = vmatpush1.msra.mxu0 %v732
      %787 = vmatprep.subr.mxu0 0.0
      %788 = vmatpush2.msra.mxu0 0.0
      %789 = vmatprep.subr.mxu0 0.0
      %790 = vmatpush2.msra.mxu0 0.0
      %791 = vmatprep.subr.mxu0 0.0
      %792 = vmatpush2.msra.mxu0 0.0
      %793 = vmatprep.subr.mxu0 0.0
      %794 = vmatpush2.msra.mxu0 0.0
      %795 = vmatprep.subr.mxu0 0.0
      %796 = vmatpush2.msra.mxu0 0.0
      %797 = vmatprep.subr.mxu0 0.0
      %798 = vmatpush2.msra.mxu0 0.0
      %799 = vmatprep.subr.mxu0 0.0
      %800 = vmatpush2.msra.mxu0 0.0
      %801 = vmatprep.subr.mxu0 0.0
      %802 = vmatpush2.msra.mxu0 0.0
      %803 = vmatprep.subr.mxu0 0.0
      %804 = vmatpush2.msra.mxu0 0.0
      %805 = vmatprep.subr.mxu0 0.0
      %806 = vmatpush2.msra.mxu0 0.0
      %807 = vmatprep.subr.mxu0 0.0
      %808 = vmatpush2.msra.mxu0 0.0
      %809 = vmatprep.subr.mxu0 0.0
      %810 = vmatpush2.msra.mxu0 0.0
      %811 = vmatprep.subr.mxu0 0.0
      %812 = vmatpush2.msra.mxu0 0.0
      %813 = vmatprep.subr.mxu0 0.0
      %814 = vmatpush2.msra.mxu0 0.0
      %815 = vmatprep.subr.mxu0 0.0
      %816 = vmatpush2.msra.mxu0 0.0
      %817 = vmatprep.subr.mxu0 0.0
      %818 = vmatpush2.msra.mxu0 0.0
      %819 = vmatprep.mubr.f32.mxu0 0.0
      %820 = vmatmul.mubr.f32.gmra.mxu0 %v750
      %v821 = vpop.f32.mrf.mxu0
      %v822 = vadd.f32 %v746, %v821
      %v823 = vpop.f32.mrf.mxu0
      %824 = vmatprep.mubr.f32.mxu0 0.0
      %825 = vmatmul.mubr.f32.gmra.mxu0 %v753
      %v826 = vpop.f32.mrf.mxu0
      %v827 = vadd.f32 %v746, %v826
      %v828 = vpop.f32.mrf.mxu0
      %829 = vdwg.mxu0
      %834 = vrot.lane.b32.xlu0 %v732, 96
      %v835 = vpop.permute.xlu0 %834
      %836 = vrot.lane.b32.xlu0 %v733, 96
      %v837 = vpop.permute.xlu0 %836
      %838 = vrot.lane.b32.xlu0 %v734, 96
      %v839 = vpop.permute.xlu0 %838
      %840 = vrot.lane.b32.xlu0 %v735, 96
      %v841 = vpop.permute.xlu0 %840
      %846 = vrot.lane.b32.xlu0 %v746, 96
      %v847 = vpop.permute.xlu0 %846
      %849 = vmatprep.subr.mxu0 0.0
      %850 = vmatpush1.msra.mxu0 0.0
      %851 = vmatprep.subr.mxu0 0.0
      %852 = vmatpush1.msra.mxu0 0.0
      %853 = vmatprep.subr.mxu0 0.0
      %854 = vmatpush1.msra.mxu0 0.0
      %855 = vmatprep.subr.mxu0 0.0
      %856 = vmatpush1.msra.mxu0 0.0
      %857 = vmatprep.subr.mxu0 0.0
      %858 = vmatpush1.msra.mxu0 0.0
      %859 = vmatprep.subr.mxu0 0.0
      %860 = vmatpush1.msra.mxu0 0.0
      %861 = vmatprep.subr.mxu0 0.0
      %862 = vmatpush1.msra.mxu0 0.0
      %863 = vmatprep.subr.mxu0 0.0
      %864 = vmatpush1.msra.mxu0 0.0
      %865 = vmatprep.subr.mxu0 0.0
      %866 = vmatpush1.msra.mxu0 0.0
      %867 = vmatprep.subr.mxu0 0.0
      %868 = vmatpush1.msra.mxu0 0.0
      %869 = vmatprep.subr.mxu0 0.0
      %870 = vmatpush1.msra.mxu0 0.0
      %871 = vmatprep.subr.mxu0 0.0
      %872 = vmatpush1.msra.mxu0 0.0
      %873 = vmatprep.subr.mxu0 0.0
      %874 = vmatpush1.msra.mxu0 %v841
      %875 = vmatprep.subr.mxu0 0.0
      %876 = vmatpush1.msra.mxu0 %v839
      %877 = vmatprep.subr.mxu0 0.0
      %878 = vmatpush1.msra.mxu0 %v837
      %879 = vmatprep.subr.mxu0 0.0
      %880 = vmatpush1.msra.mxu0 %v835
      %881 = vmatprep.subr.mxu0 0.0
      %882 = vmatpush2.msra.mxu0 0.0
      %883 = vmatprep.subr.mxu0 0.0
      %884 = vmatpush2.msra.mxu0 0.0
      %885 = vmatprep.subr.mxu0 0.0
      %886 = vmatpush2.msra.mxu0 0.0
      %887 = vmatprep.subr.mxu0 0.0
      %888 = vmatpush2.msra.mxu0 0.0
      %889 = vmatprep.subr.mxu0 0.0
      %890 = vmatpush2.msra.mxu0 0.0
      %891 = vmatprep.subr.mxu0 0.0
      %892 = vmatpush2.msra.mxu0 0.0
      %893 = vmatprep.subr.mxu0 0.0
      %894 = vmatpush2.msra.mxu0 0.0
      %895 = vmatprep.subr.mxu0 0.0
      %896 = vmatpush2.msra.mxu0 0.0
      %897 = vmatprep.subr.mxu0 0.0
      %898 = vmatpush2.msra.mxu0 0.0
      %899 = vmatprep.subr.mxu0 0.0
      %900 = vmatpush2.msra.mxu0 0.0
      %901 = vmatprep.subr.mxu0 0.0
      %902 = vmatpush2.msra.mxu0 0.0
      %903 = vmatprep.subr.mxu0 0.0
      %904 = vmatpush2.msra.mxu0 0.0
      %905 = vmatprep.subr.mxu0 0.0
      %906 = vmatpush2.msra.mxu0 0.0
      %907 = vmatprep.subr.mxu0 0.0
      %908 = vmatpush2.msra.mxu0 0.0
      %909 = vmatprep.subr.mxu0 0.0
      %910 = vmatpush2.msra.mxu0 0.0
      %911 = vmatprep.subr.mxu0 0.0
      %912 = vmatpush2.msra.mxu0 0.0
      %913 = vmatprep.mubr.f32.mxu0 0.0
      %914 = vmatmul.mubr.f32.gmra.mxu0 %v750
      %v915 = vpop.f32.mrf.mxu0
      %v916 = vadd.f32 %v847, %v915
      %v917 = vpop.f32.mrf.mxu0
      %918 = vmatprep.mubr.f32.mxu0 0.0
      %919 = vmatmul.mubr.f32.gmra.mxu0 %v753
      %v920 = vpop.f32.mrf.mxu0
      %v921 = vadd.f32 %v847, %v920
      %v922 = vpop.f32.mrf.mxu0
      %923 = vdwg.mxu0
      %924 = vrot.lane.b32.xlu0 %v732, 64
      %v925 = vpop.permute.xlu0 %924
      %926 = vrot.lane.b32.xlu0 %v733, 64
      %v927 = vpop.permute.xlu0 %926
      %928 = vrot.lane.b32.xlu0 %v734, 64
      %v929 = vpop.permute.xlu0 %928
      %930 = vrot.lane.b32.xlu0 %v735, 64
      %v931 = vpop.permute.xlu0 %930
      %936 = vrot.lane.b32.xlu0 %v746, 64
      %v937 = vpop.permute.xlu0 %936
      %v940 = vsel %vm748, %v721, 0
      %v943 = vsel %vm748, %v722, 0
      %945 = vmatprep.subr.mxu0 0.0
      %946 = vmatpush1.msra.mxu0 0.0
      %947 = vmatprep.subr.mxu0 0.0
      %948 = vmatpush1.msra.mxu0 0.0
      %949 = vmatprep.subr.mxu0 0.0
      %950 = vmatpush1.msra.mxu0 0.0
      %951 = vmatprep.subr.mxu0 0.0
      %952 = vmatpush1.msra.mxu0 0.0
      %953 = vmatprep.subr.mxu0 0.0
      %954 = vmatpush1.msra.mxu0 0.0
      %955 = vmatprep.subr.mxu0 0.0
      %956 = vmatpush1.msra.mxu0 0.0
      %957 = vmatprep.subr.mxu0 0.0
      %958 = vmatpush1.msra.mxu0 0.0
      %959 = vmatprep.subr.mxu0 0.0
      %960 = vmatpush1.msra.mxu0 0.0
      %961 = vmatprep.subr.mxu0 0.0
      %962 = vmatpush1.msra.mxu0 0.0
      %963 = vmatprep.subr.mxu0 0.0
      %964 = vmatpush1.msra.mxu0 0.0
      %965 = vmatprep.subr.mxu0 0.0
      %966 = vmatpush1.msra.mxu0 0.0
      %967 = vmatprep.subr.mxu0 0.0
      %968 = vmatpush1.msra.mxu0 0.0
      %969 = vmatprep.subr.mxu0 0.0
      %970 = vmatpush1.msra.mxu0 %v931
      %971 = vmatprep.subr.mxu0 0.0
      %972 = vmatpush1.msra.mxu0 %v929
      %973 = vmatprep.subr.mxu0 0.0
      %974 = vmatpush1.msra.mxu0 %v927
      %975 = vmatprep.subr.mxu0 0.0
      %976 = vmatpush1.msra.mxu0 %v925
      %977 = vmatprep.subr.mxu0 0.0
      %978 = vmatpush2.msra.mxu0 0.0
      %979 = vmatprep.subr.mxu0 0.0
      %980 = vmatpush2.msra.mxu0 0.0
      %981 = vmatprep.subr.mxu0 0.0
      %982 = vmatpush2.msra.mxu0 0.0
      %983 = vmatprep.subr.mxu0 0.0
      %984 = vmatpush2.msra.mxu0 0.0
      %985 = vmatprep.subr.mxu0 0.0
      %986 = vmatpush2.msra.mxu0 0.0
      %987 = vmatprep.subr.mxu0 0.0
      %988 = vmatpush2.msra.mxu0 0.0
      %989 = vmatprep.subr.mxu0 0.0
      %990 = vmatpush2.msra.mxu0 0.0
      %991 = vmatprep.subr.mxu0 0.0
      %992 = vmatpush2.msra.mxu0 0.0
      %993 = vmatprep.subr.mxu0 0.0
      %994 = vmatpush2.msra.mxu0 0.0
      %995 = vmatprep.subr.mxu0 0.0
      %996 = vmatpush2.msra.mxu0 0.0
      %997 = vmatprep.subr.mxu0 0.0
      %998 = vmatpush2.msra.mxu0 0.0
      %999 = vmatprep.subr.mxu0 0.0
      %1000 = vmatpush2.msra.mxu0 0.0
      %1001 = vmatprep.subr.mxu0 0.0
      %1002 = vmatpush2.msra.mxu0 0.0
      %1003 = vmatprep.subr.mxu0 0.0
      %1004 = vmatpush2.msra.mxu0 0.0
      %1005 = vmatprep.subr.mxu0 0.0
      %1006 = vmatpush2.msra.mxu0 0.0
      %1007 = vmatprep.subr.mxu0 0.0
      %1008 = vmatpush2.msra.mxu0 0.0
      %1009 = vmatprep.mubr.f32.mxu0 0.0
      %1010 = vmatmul.mubr.f32.gmra.mxu0 %v940
      %v1011 = vpop.f32.mrf.mxu0
      %v1012 = vadd.f32 %v937, %v1011
      %v1013 = vpop.f32.mrf.mxu0
      %1014 = vmatprep.mubr.f32.mxu0 0.0
      %1015 = vmatmul.mubr.f32.gmra.mxu0 %v943
      %v1016 = vpop.f32.mrf.mxu0
      %v1017 = vadd.f32 %v937, %v1016
      %v1018 = vpop.f32.mrf.mxu0
      %1019 = vdwg.mxu0
      %vm1020 = vcmask 31744
      %v1022 = vsel %vm1020, %v822, 0
      %v1025 = vsel %vm1020, %v827, 0
      %v1028 = vsel %vm1020, %v916, 0
      %v1031 = vsel %vm1020, %v921, 0
      %1033 = vmatprep.subr.mxu0 0.0
      %1034 = vmatpush1.xpose.msra.mxu0 0.0
      %1035 = vmatprep.subr.mxu0 0.0
      %1036 = vmatpush1.xpose.msra.mxu0 0.0
      %1037 = vmatprep.subr.mxu0 0.0
      %1038 = vmatpush1.xpose.msra.mxu0 0.0
      %1039 = vmatprep.subr.mxu0 0.0
      %1040 = vmatpush1.xpose.msra.mxu0 0.0
      %1041 = vmatprep.subr.mxu0 0.0
      %1042 = vmatpush1.xpose.msra.mxu0 0.0
      %1043 = vmatprep.subr.mxu0 0.0
      %1044 = vmatpush1.xpose.msra.mxu0 0.0
      %1045 = vmatprep.subr.mxu0 0.0
      %1046 = vmatpush1.xpose.msra.mxu0 0.0
      %1047 = vmatprep.subr.mxu0 0.0
      %1048 = vmatpush1.xpose.msra.mxu0 0.0
      %1049 = vmatprep.subr.mxu0 0.0
      %1050 = vmatpush1.xpose.msra.mxu0 0.0
      %1051 = vmatprep.subr.mxu0 0.0
      %1052 = vmatpush1.xpose.msra.mxu0 0.0
      %1053 = vmatprep.subr.mxu0 0.0
      %1054 = vmatpush1.xpose.msra.mxu0 0.0
      %1055 = vmatprep.subr.mxu0 0.0
      %1056 = vmatpush1.xpose.msra.mxu0 0.0
      %1057 = vmatprep.subr.mxu0 0.0
      %1058 = vmatpush1.xpose.msra.mxu0 0.0
      %1059 = vmatprep.subr.mxu0 0.0
      %1060 = vmatpush1.xpose.msra.mxu0 0.0
      %1061 = vmatprep.subr.mxu0 0.0
      %1062 = vmatpush1.xpose.msra.mxu0 %v1031
      %1063 = vmatprep.subr.mxu0 0.0
      %1064 = vmatpush1.xpose.msra.mxu0 %v1028
      %1065 = vmatprep.subr.mxu0 0.0
      %1066 = vmatpush2.xpose.msra.mxu0 0.0
      %1067 = vmatprep.subr.mxu0 0.0
      %1068 = vmatpush2.xpose.msra.mxu0 0.0
      %1069 = vmatprep.subr.mxu0 0.0
      %1070 = vmatpush2.xpose.msra.mxu0 0.0
      %1071 = vmatprep.subr.mxu0 0.0
      %1072 = vmatpush2.xpose.msra.mxu0 0.0
      %1073 = vmatprep.subr.mxu0 0.0
      %1074 = vmatpush2.xpose.msra.mxu0 0.0
      %1075 = vmatprep.subr.mxu0 0.0
      %1076 = vmatpush2.xpose.msra.mxu0 0.0
      %1077 = vmatprep.subr.mxu0 0.0
      %1078 = vmatpush2.xpose.msra.mxu0 0.0
      %1079 = vmatprep.subr.mxu0 0.0
      %1080 = vmatpush2.xpose.msra.mxu0 0.0
      %1081 = vmatprep.subr.mxu0 0.0
      %1082 = vmatpush2.xpose.msra.mxu0 0.0
      %1083 = vmatprep.subr.mxu0 0.0
      %1084 = vmatpush2.xpose.msra.mxu0 0.0
      %1085 = vmatprep.subr.mxu0 0.0
      %1086 = vmatpush2.xpose.msra.mxu0 0.0
      %1087 = vmatprep.subr.mxu0 0.0
      %1088 = vmatpush2.xpose.msra.mxu0 0.0
      %1089 = vmatprep.subr.mxu0 0.0
      %1090 = vmatpush2.xpose.msra.mxu0 0.0
      %1091 = vmatprep.subr.mxu0 0.0
      %1092 = vmatpush2.xpose.msra.mxu0 0.0
      %1093 = vmatprep.subr.mxu0 0.0
      %1094 = vmatpush2.xpose.msra.mxu0 0.0
      %1095 = vmatprep.subr.mxu0 0.0
      %1096 = vmatpush2.xpose.msra.mxu0 0.0
      %1097 = vmatprep.mubr.f32.mxu0 0.0
      %1098 = vmatmul.mubr.f32.gmra.mxu0 %v1022
      %v1099 = vpop.f32.mrf.mxu0
      %v1100 = vadd.f32 0.0, %v1099
      %v1101 = vpop.f32.mrf.mxu0
      %1102 = vmatprep.mubr.f32.mxu0 0.0
      %1103 = vmatmul.mubr.f32.gmra.mxu0 %v1025
      %v1104 = vpop.f32.mrf.mxu0
      %v1105 = vadd.f32 0.0, %v1104
      %v1106 = vpop.f32.mrf.mxu0
      %1107 = vdwg.mxu0
      %v1108 = vmul.f32 %v1100, 0.5
      %v1109 = vmul.f32 %v1105, 0.5
      %vm1110 = vcmask 130048
      %v1111 = vsel %vm1110, %v1108, -inf
      %1112 = vmax.xlane.f32.xlu0 %v1111
      %v1113 = vpop.xlane.xlu0 %1112
      %v1114 = vsel %vm1110, %v1109, -inf
      %1115 = vmax.xlane.f32.xlu0 %v1114
      %v1116 = vpop.xlane.xlu0 %1115
      %v1117 = vsub.f32 %v1108, %v1113
      %v1118 = vsub.f32 %v1109, %v1116
      %v1119 = vmul.f32 %v1117, 1.442695
      %v1120 = vpow.pop %v1119
      %v1121 = vmul.f32 %v1118, 1.442695
      %v1122 = vpow.pop %v1121
      %v1123 = vsel %vm1110, %v1120, 0.0
      %1124 = vadd.xlane.f32.xlu0 %v1123
      %v1125 = vpop.xlane.xlu0 %1124
      %v1126 = vsel %vm1110, %v1122, 0.0
      %1127 = vadd.xlane.f32.xlu0 %v1126
      %v1128 = vpop.xlane.xlu0 %1127
      %v1129 = vrcp.pop %v1125
      %v1130 = vrcp.pop %v1128
      %v1131 = vmul.f32 %v1120, %v1129
      %v1132 = vmul.f32 %v1122, %v1130
      %v1134 = vsel %vm1110, %v1131, 0
      %v1137 = vsel %vm1110, %v1132, 0
      %1139 = vmatprep.subr.mxu0 0.0
      %1140 = vmatpush1.msra.mxu0 0.0
      %1141 = vmatprep.subr.mxu0 0.0
      %1142 = vmatpush1.msra.mxu0 0.0
      %1143 = vmatprep.subr.mxu0 0.0
      %1144 = vmatpush1.msra.mxu0 0.0
      %1145 = vmatprep.subr.mxu0 0.0
      %1146 = vmatpush1.msra.mxu0 0.0
      %1147 = vmatprep.subr.mxu0 0.0
      %1148 = vmatpush1.msra.mxu0 0.0
      %1149 = vmatprep.subr.mxu0 0.0
      %1150 = vmatpush1.msra.mxu0 0.0
      %1151 = vmatprep.subr.mxu0 0.0
      %1152 = vmatpush1.msra.mxu0 0.0
      %1153 = vmatprep.subr.mxu0 0.0
      %1154 = vmatpush1.msra.mxu0 0.0
      %1155 = vmatprep.subr.mxu0 0.0
      %1156 = vmatpush1.msra.mxu0 0.0
      %1157 = vmatprep.subr.mxu0 0.0
      %1158 = vmatpush1.msra.mxu0 0.0
      %1159 = vmatprep.subr.mxu0 0.0
      %1160 = vmatpush1.msra.mxu0 0.0
      %1161 = vmatprep.subr.mxu0 0.0
      %1162 = vmatpush1.msra.mxu0 0.0
      %1163 = vmatprep.subr.mxu0 0.0
      %1164 = vmatpush1.msra.mxu0 0.0
      %1165 = vmatprep.subr.mxu0 0.0
      %1166 = vmatpush1.msra.mxu0 0.0
      %1167 = vmatprep.subr.mxu0 0.0
      %1168 = vmatpush1.msra.mxu0 %v1017
      %1169 = vmatprep.subr.mxu0 0.0
      %1170 = vmatpush1.msra.mxu0 %v1012
      %1171 = vmatprep.subr.mxu0 0.0
      %1172 = vmatpush2.msra.mxu0 0.0
      %1173 = vmatprep.subr.mxu0 0.0
      %1174 = vmatpush2.msra.mxu0 0.0
      %1175 = vmatprep.subr.mxu0 0.0
      %1176 = vmatpush2.msra.mxu0 0.0
      %1177 = vmatprep.subr.mxu0 0.0
      %1178 = vmatpush2.msra.mxu0 0.0
      %1179 = vmatprep.subr.mxu0 0.0
      %1180 = vmatpush2.msra.mxu0 0.0
      %1181 = vmatprep.subr.mxu0 0.0
      %1182 = vmatpush2.msra.mxu0 0.0
      %1183 = vmatprep.subr.mxu0 0.0
      %1184 = vmatpush2.msra.mxu0 0.0
      %1185 = vmatprep.subr.mxu0 0.0
      %1186 = vmatpush2.msra.mxu0 0.0
      %1187 = vmatprep.subr.mxu0 0.0
      %1188 = vmatpush2.msra.mxu0 0.0
      %1189 = vmatprep.subr.mxu0 0.0
      %1190 = vmatpush2.msra.mxu0 0.0
      %1191 = vmatprep.subr.mxu0 0.0
      %1192 = vmatpush2.msra.mxu0 0.0
      %1193 = vmatprep.subr.mxu0 0.0
      %1194 = vmatpush2.msra.mxu0 0.0
      %1195 = vmatprep.subr.mxu0 0.0
      %1196 = vmatpush2.msra.mxu0 0.0
      %1197 = vmatprep.subr.mxu0 0.0
      %1198 = vmatpush2.msra.mxu0 0.0
      %1199 = vmatprep.subr.mxu0 0.0
      %1200 = vmatpush2.msra.mxu0 0.0
      %1201 = vmatprep.subr.mxu0 0.0
      %1202 = vmatpush2.msra.mxu0 0.0
      %1203 = vmatprep.mubr.f32.mxu0 0.0
      %1204 = vmatmul.mubr.f32.gmra.mxu0 %v1134
      %v1205 = vpop.f32.mrf.mxu0
      %v1206 = vadd.f32 0.0, %v1205
      %v1207 = vpop.f32.mrf.mxu0
      %1208 = vmatprep.mubr.f32.mxu0 0.0
      %1209 = vmatmul.mubr.f32.gmra.mxu0 %v1137
      %v1210 = vpop.f32.mrf.mxu0
      %v1211 = vadd.f32 0.0, %v1210
      %v1212 = vpop.f32.mrf.mxu0
      %1213 = vdwg.mxu0
      %1214 = vrot.lane.b32.xlu0 %v822, 124
      %v1215 = vpop.permute.xlu0 %1214
      %1216 = vrot.lane.b32.xlu0 %v827, 124
      %v1217 = vpop.permute.xlu0 %1216
      %1218 = vrot.lane.b32.xlu0 %v916, 124
      %v1219 = vpop.permute.xlu0 %1218
      %1220 = vrot.lane.b32.xlu0 %v921, 124
      %v1221 = vpop.permute.xlu0 %1220
      %v1222 = vsel %vm1020, %v1215, 0
      %v1224 = vsel %vm1020, %v1217, 0
      %v1226 = vsel %vm1020, %v1219, 0
      %v1228 = vsel %vm1020, %v1221, 0
      %1230 = vmatprep.subr.mxu0 0.0
      %1231 = vmatpush1.xpose.msra.mxu0 0.0
      %1232 = vmatprep.subr.mxu0 0.0
      %1233 = vmatpush1.xpose.msra.mxu0 0.0
      %1234 = vmatprep.subr.mxu0 0.0
      %1235 = vmatpush1.xpose.msra.mxu0 0.0
      %1236 = vmatprep.subr.mxu0 0.0
      %1237 = vmatpush1.xpose.msra.mxu0 0.0
      %1238 = vmatprep.subr.mxu0 0.0
      %1239 = vmatpush1.xpose.msra.mxu0 0.0
      %1240 = vmatprep.subr.mxu0 0.0
      %1241 = vmatpush1.xpose.msra.mxu0 0.0
      %1242 = vmatprep.subr.mxu0 0.0
      %1243 = vmatpush1.xpose.msra.mxu0 0.0
      %1244 = vmatprep.subr.mxu0 0.0
      %1245 = vmatpush1.xpose.msra.mxu0 0.0
      %1246 = vmatprep.subr.mxu0 0.0
      %1247 = vmatpush1.xpose.msra.mxu0 0.0
      %1248 = vmatprep.subr.mxu0 0.0
      %1249 = vmatpush1.xpose.msra.mxu0 0.0
      %1250 = vmatprep.subr.mxu0 0.0
      %1251 = vmatpush1.xpose.msra.mxu0 0.0
      %1252 = vmatprep.subr.mxu0 0.0
      %1253 = vmatpush1.xpose.msra.mxu0 0.0
      %1254 = vmatprep.subr.mxu0 0.0
      %1255 = vmatpush1.xpose.msra.mxu0 0.0
      %1256 = vmatprep.subr.mxu0 0.0
      %1257 = vmatpush1.xpose.msra.mxu0 0.0
      %1258 = vmatprep.subr.mxu0 0.0
      %1259 = vmatpush1.xpose.msra.mxu0 %v1228
      %1260 = vmatprep.subr.mxu0 0.0
      %1261 = vmatpush1.xpose.msra.mxu0 %v1226
      %1262 = vmatprep.subr.mxu0 0.0
      %1263 = vmatpush2.xpose.msra.mxu0 0.0
      %1264 = vmatprep.subr.mxu0 0.0
      %1265 = vmatpush2.xpose.msra.mxu0 0.0
      %1266 = vmatprep.subr.mxu0 0.0
      %1267 = vmatpush2.xpose.msra.mxu0 0.0
      %1268 = vmatprep.subr.mxu0 0.0
      %1269 = vmatpush2.xpose.msra.mxu0 0.0
      %1270 = vmatprep.subr.mxu0 0.0
      %1271 = vmatpush2.xpose.msra.mxu0 0.0
      %1272 = vmatprep.subr.mxu0 0.0
      %1273 = vmatpush2.xpose.msra.mxu0 0.0
      %1274 = vmatprep.subr.mxu0 0.0
      %1275 = vmatpush2.xpose.msra.mxu0 0.0
      %1276 = vmatprep.subr.mxu0 0.0
      %1277 = vmatpush2.xpose.msra.mxu0 0.0
      %1278 = vmatprep.subr.mxu0 0.0
      %1279 = vmatpush2.xpose.msra.mxu0 0.0
      %1280 = vmatprep.subr.mxu0 0.0
      %1281 = vmatpush2.xpose.msra.mxu0 0.0
      %1282 = vmatprep.subr.mxu0 0.0
      %1283 = vmatpush2.xpose.msra.mxu0 0.0
      %1284 = vmatprep.subr.mxu0 0.0
      %1285 = vmatpush2.xpose.msra.mxu0 0.0
      %1286 = vmatprep.subr.mxu0 0.0
      %1287 = vmatpush2.xpose.msra.mxu0 0.0
      %1288 = vmatprep.subr.mxu0 0.0
      %1289 = vmatpush2.xpose.msra.mxu0 0.0
      %1290 = vmatprep.subr.mxu0 0.0
      %1291 = vmatpush2.xpose.msra.mxu0 0.0
      %1292 = vmatprep.subr.mxu0 0.0
      %1293 = vmatpush2.xpose.msra.mxu0 0.0
      %1294 = vmatprep.mubr.f32.mxu0 0.0
      %1295 = vmatmul.mubr.f32.gmra.mxu0 %v1222
      %v1296 = vpop.f32.mrf.mxu0
      %v1297 = vadd.f32 0.0, %v1296
      %v1298 = vpop.f32.mrf.mxu0
      %1299 = vmatprep.mubr.f32.mxu0 0.0
      %1300 = vmatmul.mubr.f32.gmra.mxu0 %v1224
      %v1301 = vpop.f32.mrf.mxu0
      %v1302 = vadd.f32 0.0, %v1301
      %v1303 = vpop.f32.mrf.mxu0
      %1304 = vdwg.mxu0
      %v1305 = vmul.f32 %v1297, 0.5
      %v1306 = vmul.f32 %v1302, 0.5
      %v1307 = vsel %vm1110, %v1305, -inf
      %1308 = vmax.xlane.f32.xlu0 %v1307
      %v1309 = vpop.xlane.xlu0 %1308
      %v1310 = vsel %vm1110, %v1306, -inf
      %1311 = vmax.xlane.f32.xlu0 %v1310
      %v1312 = vpop.xlane.xlu0 %1311
      %v1313 = vsub.f32 %v1305, %v1309
      %v1314 = vsub.f32 %v1306, %v1312
      %v1315 = vmul.f32 %v1313, 1.442695
      %v1316 = vpow.pop %v1315
      %v1317 = vmul.f32 %v1314, 1.442695
      %v1318 = vpow.pop %v1317
      %v1319 = vsel %vm1110, %v1316, 0.0
      %1320 = vadd.xlane.f32.xlu0 %v1319
      %v1321 = vpop.xlane.xlu0 %1320
      %v1322 = vsel %vm1110, %v1318, 0.0
      %1323 = vadd.xlane.f32.xlu0 %v1322
      %v1324 = vpop.xlane.xlu0 %1323
      %v1325 = vrcp.pop %v1321
      %v1326 = vrcp.pop %v1324
      %v1327 = vmul.f32 %v1316, %v1325
      %v1328 = vmul.f32 %v1318, %v1326
      %1331 = vrot.lane.b32.xlu0 %v1012, 124
      %v1332 = vpop.permute.xlu0 %1331
      %1333 = vrot.lane.b32.xlu0 %v1017, 124
      %v1334 = vpop.permute.xlu0 %1333
      %v1338 = vsel %vm1110, %v1327, 0
      %v1341 = vsel %vm1110, %v1328, 0
      %1343 = vmatprep.subr.mxu0 0.0
      %1344 = vmatpush1.msra.mxu0 0.0
      %1345 = vmatprep.subr.mxu0 0.0
      %1346 = vmatpush1.msra.mxu0 0.0
      %1347 = vmatprep.subr.mxu0 0.0
      %1348 = vmatpush1.msra.mxu0 0.0
      %1349 = vmatprep.subr.mxu0 0.0
      %1350 = vmatpush1.msra.mxu0 0.0
      %1351 = vmatprep.subr.mxu0 0.0
      %1352 = vmatpush1.msra.mxu0 0.0
      %1353 = vmatprep.subr.mxu0 0.0
      %1354 = vmatpush1.msra.mxu0 0.0
      %1355 = vmatprep.subr.mxu0 0.0
      %1356 = vmatpush1.msra.mxu0 0.0
      %1357 = vmatprep.subr.mxu0 0.0
      %1358 = vmatpush1.msra.mxu0 0.0
      %1359 = vmatprep.subr.mxu0 0.0
      %1360 = vmatpush1.msra.mxu0 0.0
      %1361 = vmatprep.subr.mxu0 0.0
      %1362 = vmatpush1.msra.mxu0 0.0
      %1363 = vmatprep.subr.mxu0 0.0
      %1364 = vmatpush1.msra.mxu0 0.0
      %1365 = vmatprep.subr.mxu0 0.0
      %1366 = vmatpush1.msra.mxu0 0.0
      %1367 = vmatprep.subr.mxu0 0.0
      %1368 = vmatpush1.msra.mxu0 0.0
      %1369 = vmatprep.subr.mxu0 0.0
      %1370 = vmatpush1.msra.mxu0 0.0
      %1371 = vmatprep.subr.mxu0 0.0
      %1372 = vmatpush1.msra.mxu0 %v1334
      %1373 = vmatprep.subr.mxu0 0.0
      %1374 = vmatpush1.msra.mxu0 %v1332
      %1375 = vmatprep.subr.mxu0 0.0
      %1376 = vmatpush2.msra.mxu0 0.0
      %1377 = vmatprep.subr.mxu0 0.0
      %1378 = vmatpush2.msra.mxu0 0.0
      %1379 = vmatprep.subr.mxu0 0.0
      %1380 = vmatpush2.msra.mxu0 0.0
      %1381 = vmatprep.subr.mxu0 0.0
      %1382 = vmatpush2.msra.mxu0 0.0
      %1383 = vmatprep.subr.mxu0 0.0
      %1384 = vmatpush2.msra.mxu0 0.0
      %1385 = vmatprep.subr.mxu0 0.0
      %1386 = vmatpush2.msra.mxu0 0.0
      %1387 = vmatprep.subr.mxu0 0.0
      %1388 = vmatpush2.msra.mxu0 0.0
      %1389 = vmatprep.subr.mxu0 0.0
      %1390 = vmatpush2.msra.mxu0 0.0
      %1391 = vmatprep.subr.mxu0 0.0
      %1392 = vmatpush2.msra.mxu0 0.0
      %1393 = vmatprep.subr.mxu0 0.0
      %1394 = vmatpush2.msra.mxu0 0.0
      %1395 = vmatprep.subr.mxu0 0.0
      %1396 = vmatpush2.msra.mxu0 0.0
      %1397 = vmatprep.subr.mxu0 0.0
      %1398 = vmatpush2.msra.mxu0 0.0
      %1399 = vmatprep.subr.mxu0 0.0
      %1400 = vmatpush2.msra.mxu0 0.0
      %1401 = vmatprep.subr.mxu0 0.0
      %1402 = vmatpush2.msra.mxu0 0.0
      %1403 = vmatprep.subr.mxu0 0.0
      %1404 = vmatpush2.msra.mxu0 0.0
      %1405 = vmatprep.subr.mxu0 0.0
      %1406 = vmatpush2.msra.mxu0 0.0
      %1407 = vmatprep.mubr.f32.mxu0 0.0
      %1408 = vmatmul.mubr.f32.gmra.mxu0 %v1338
      %v1409 = vpop.f32.mrf.mxu0
      %v1410 = vadd.f32 0.0, %v1409
      %v1411 = vpop.f32.mrf.mxu0
      %1412 = vmatprep.mubr.f32.mxu0 0.0
      %1413 = vmatmul.mubr.f32.gmra.mxu0 %v1341
      %v1414 = vpop.f32.mrf.mxu0
      %v1415 = vadd.f32 0.0, %v1414
      %v1416 = vpop.f32.mrf.mxu0
      %1417 = vdwg.mxu0
      %v1419 = vrot.slane %v737, 4
      %v1421 = vsel %vm1020, %v1410, 0
      %v1424 = vsel %vm1020, %v1415, 0
      %vm1426 = vcmask 1043456
      %v1427 = vsel %vm1426, %v1419, 0
      %1429 = vmatprep.subr.mxu0 0.0
      %1430 = vmatpush1.msra.mxu0 0.0
      %1431 = vmatprep.subr.mxu0 0.0
      %1432 = vmatpush1.msra.mxu0 0.0
      %1433 = vmatprep.subr.mxu0 0.0
      %1434 = vmatpush1.msra.mxu0 0.0
      %1435 = vmatprep.subr.mxu0 0.0
      %1436 = vmatpush1.msra.mxu0 0.0
      %1437 = vmatprep.subr.mxu0 0.0
      %1438 = vmatpush1.msra.mxu0 0.0
      %1439 = vmatprep.subr.mxu0 0.0
      %1440 = vmatpush1.msra.mxu0 0.0
      %1441 = vmatprep.subr.mxu0 0.0
      %1442 = vmatpush1.msra.mxu0 0.0
      %1443 = vmatprep.subr.mxu0 0.0
      %1444 = vmatpush1.msra.mxu0 0.0
      %1445 = vmatprep.subr.mxu0 0.0
      %1446 = vmatpush1.msra.mxu0 0.0
      %1447 = vmatprep.subr.mxu0 0.0
      %1448 = vmatpush1.msra.mxu0 0.0
      %1449 = vmatprep.subr.mxu0 0.0
      %1450 = vmatpush1.msra.mxu0 0.0
      %1451 = vmatprep.subr.mxu0 0.0
      %1452 = vmatpush1.msra.mxu0 0.0
      %1453 = vmatprep.subr.mxu0 0.0
      %1454 = vmatpush1.msra.mxu0 0.0
      %1455 = vmatprep.subr.mxu0 0.0
      %1456 = vmatpush1.msra.mxu0 0.0
      %1457 = vmatprep.subr.mxu0 0.0
      %1458 = vmatpush1.msra.mxu0 0.0
      %1459 = vmatprep.subr.mxu0 0.0
      %1460 = vmatpush1.msra.mxu0 %v1427
      %1461 = vmatprep.subr.mxu0 0.0
      %1462 = vmatpush2.msra.mxu0 0.0
      %1463 = vmatprep.subr.mxu0 0.0
      %1464 = vmatpush2.msra.mxu0 0.0
      %1465 = vmatprep.subr.mxu0 0.0
      %1466 = vmatpush2.msra.mxu0 0.0
      %1467 = vmatprep.subr.mxu0 0.0
      %1468 = vmatpush2.msra.mxu0 0.0
      %1469 = vmatprep.subr.mxu0 0.0
      %1470 = vmatpush2.msra.mxu0 0.0
      %1471 = vmatprep.subr.mxu0 0.0
      %1472 = vmatpush2.msra.mxu0 0.0
      %1473 = vmatprep.subr.mxu0 0.0
      %1474 = vmatpush2.msra.mxu0 0.0
      %1475 = vmatprep.subr.mxu0 0.0
      %1476 = vmatpush2.msra.mxu0 0.0
      %1477 = vmatprep.subr.mxu0 0.0
      %1478 = vmatpush2.msra.mxu0 0.0
      %1479 = vmatprep.subr.mxu0 0.0
      %1480 = vmatpush2.msra.mxu0 0.0
      %1481 = vmatprep.subr.mxu0 0.0
      %1482 = vmatpush2.msra.mxu0 0.0
      %1483 = vmatprep.subr.mxu0 0.0
      %1484 = vmatpush2.msra.mxu0 0.0
      %1485 = vmatprep.subr.mxu0 0.0
      %1486 = vmatpush2.msra.mxu0 0.0
      %1487 = vmatprep.subr.mxu0 0.0
      %1488 = vmatpush2.msra.mxu0 0.0
      %1489 = vmatprep.subr.mxu0 0.0
      %1490 = vmatpush2.msra.mxu0 0.0
      %1491 = vmatprep.subr.mxu0 0.0
      %1492 = vmatpush2.msra.mxu0 0.0
      %1493 = vmatprep.mubr.f32.mxu0 0.0
      %1494 = vmatmul.mubr.f32.gmra.mxu0 %v1421
      %v1495 = vpop.f32.mrf.mxu0
      %v1496 = vadd.f32 0.0, %v1495
      %v1497 = vpop.f32.mrf.mxu0
      %1498 = vmatprep.mubr.f32.mxu0 0.0
      %1499 = vmatmul.mubr.f32.gmra.mxu0 %v1424
      %v1500 = vpop.f32.mrf.mxu0
      %v1501 = vadd.f32 0.0, %v1500
      %v1502 = vpop.f32.mrf.mxu0
      %1503 = vdwg.mxu0
      %v1505 = vsel %vm1020, %v1206, 0
      %v1508 = vsel %vm1020, %v1211, 0
      %v1510 = vsel %vm1426, %v737, 0
      %1512 = vmatprep.subr.mxu0 0.0
      %1513 = vmatpush1.msra.mxu0 0.0
      %1514 = vmatprep.subr.mxu0 0.0
      %1515 = vmatpush1.msra.mxu0 0.0
      %1516 = vmatprep.subr.mxu0 0.0
      %1517 = vmatpush1.msra.mxu0 0.0
      %1518 = vmatprep.subr.mxu0 0.0
      %1519 = vmatpush1.msra.mxu0 0.0
      %1520 = vmatprep.subr.mxu0 0.0
      %1521 = vmatpush1.msra.mxu0 0.0
      %1522 = vmatprep.subr.mxu0 0.0
      %1523 = vmatpush1.msra.mxu0 0.0
      %1524 = vmatprep.subr.mxu0 0.0
      %1525 = vmatpush1.msra.mxu0 0.0
      %1526 = vmatprep.subr.mxu0 0.0
      %1527 = vmatpush1.msra.mxu0 0.0
      %1528 = vmatprep.subr.mxu0 0.0
      %1529 = vmatpush1.msra.mxu0 0.0
      %1530 = vmatprep.subr.mxu0 0.0
      %1531 = vmatpush1.msra.mxu0 0.0
      %1532 = vmatprep.subr.mxu0 0.0
      %1533 = vmatpush1.msra.mxu0 0.0
      %1534 = vmatprep.subr.mxu0 0.0
      %1535 = vmatpush1.msra.mxu0 0.0
      %1536 = vmatprep.subr.mxu0 0.0
      %1537 = vmatpush1.msra.mxu0 0.0
      %1538 = vmatprep.subr.mxu0 0.0
      %1539 = vmatpush1.msra.mxu0 0.0
      %1540 = vmatprep.subr.mxu0 0.0
      %1541 = vmatpush1.msra.mxu0 0.0
      %1542 = vmatprep.subr.mxu0 0.0
      %1543 = vmatpush1.msra.mxu0 %v1510
      %1544 = vmatprep.subr.mxu0 0.0
      %1545 = vmatpush2.msra.mxu0 0.0
      %1546 = vmatprep.subr.mxu0 0.0
      %1547 = vmatpush2.msra.mxu0 0.0
      %1548 = vmatprep.subr.mxu0 0.0
      %1549 = vmatpush2.msra.mxu0 0.0
      %1550 = vmatprep.subr.mxu0 0.0
      %1551 = vmatpush2.msra.mxu0 0.0
      %1552 = vmatprep.subr.mxu0 0.0
      %1553 = vmatpush2.msra.mxu0 0.0
      %1554 = vmatprep.subr.mxu0 0.0
      %1555 = vmatpush2.msra.mxu0 0.0
      %1556 = vmatprep.subr.mxu0 0.0
      %1557 = vmatpush2.msra.mxu0 0.0
      %1558 = vmatprep.subr.mxu0 0.0
      %1559 = vmatpush2.msra.mxu0 0.0
      %1560 = vmatprep.subr.mxu0 0.0
      %1561 = vmatpush2.msra.mxu0 0.0
      %1562 = vmatprep.subr.mxu0 0.0
      %1563 = vmatpush2.msra.mxu0 0.0
      %1564 = vmatprep.subr.mxu0 0.0
      %1565 = vmatpush2.msra.mxu0 0.0
      %1566 = vmatprep.subr.mxu0 0.0
      %1567 = vmatpush2.msra.mxu0 0.0
      %1568 = vmatprep.subr.mxu0 0.0
      %1569 = vmatpush2.msra.mxu0 0.0
      %1570 = vmatprep.subr.mxu0 0.0
      %1571 = vmatpush2.msra.mxu0 0.0
      %1572 = vmatprep.subr.mxu0 0.0
      %1573 = vmatpush2.msra.mxu0 0.0
      %1574 = vmatprep.subr.mxu0 0.0
      %1575 = vmatpush2.msra.mxu0 0.0
      %1576 = vmatprep.mubr.f32.mxu0 0.0
      %1577 = vmatmul.mubr.f32.gmra.mxu0 %v1505
      %v1578 = vpop.f32.mrf.mxu0
      %v1579 = vadd.f32 %v1496, %v1578
      %v1580 = vpop.f32.mrf.mxu0
      %1581 = vmatprep.mubr.f32.mxu0 0.0
      %1582 = vmatmul.mubr.f32.gmra.mxu0 %v1508
      %v1583 = vpop.f32.mrf.mxu0
      %v1584 = vadd.f32 %v1501, %v1583
      %v1585 = vpop.f32.mrf.mxu0
      %1586 = vdwg.mxu0
      %1587 = vrot.lane.b32.xlu0 %v822, 120
      %v1588 = vpop.permute.xlu0 %1587
      %1589 = vrot.lane.b32.xlu0 %v827, 120
      %v1590 = vpop.permute.xlu0 %1589
      %1591 = vrot.lane.b32.xlu0 %v916, 120
      %v1592 = vpop.permute.xlu0 %1591
      %1593 = vrot.lane.b32.xlu0 %v921, 120
      %v1594 = vpop.permute.xlu0 %1593
      %v1595 = vsel %vm1020, %v1588, 0
      %v1597 = vsel %vm1020, %v1590, 0
      %v1599 = vsel %vm1020, %v1592, 0
      %v1601 = vsel %vm1020, %v1594, 0
      %1603 = vmatprep.subr.mxu0 0.0
      %1604 = vmatpush1.xpose.msra.mxu0 0.0
      %1605 = vmatprep.subr.mxu0 0.0
      %1606 = vmatpush1.xpose.msra.mxu0 0.0
      %1607 = vmatprep.subr.mxu0 0.0
      %1608 = vmatpush1.xpose.msra.mxu0 0.0
      %1609 = vmatprep.subr.mxu0 0.0
      %1610 = vmatpush1.xpose.msra.mxu0 0.0
      %1611 = vmatprep.subr.mxu0 0.0
      %1612 = vmatpush1.xpose.msra.mxu0 0.0
      %1613 = vmatprep.subr.mxu0 0.0
      %1614 = vmatpush1.xpose.msra.mxu0 0.0
      %1615 = vmatprep.subr.mxu0 0.0
      %1616 = vmatpush1.xpose.msra.mxu0 0.0
      %1617 = vmatprep.subr.mxu0 0.0
      %1618 = vmatpush1.xpose.msra.mxu0 0.0
      %1619 = vmatprep.subr.mxu0 0.0
      %1620 = vmatpush1.xpose.msra.mxu0 0.0
      %1621 = vmatprep.subr.mxu0 0.0
      %1622 = vmatpush1.xpose.msra.mxu0 0.0
      %1623 = vmatprep.subr.mxu0 0.0
      %1624 = vmatpush1.xpose.msra.mxu0 0.0
      %1625 = vmatprep.subr.mxu0 0.0
      %1626 = vmatpush1.xpose.msra.mxu0 0.0
      %1627 = vmatprep.subr.mxu0 0.0
      %1628 = vmatpush1.xpose.msra.mxu0 0.0
      %1629 = vmatprep.subr.mxu0 0.0
      %1630 = vmatpush1.xpose.msra.mxu0 0.0
      %1631 = vmatprep.subr.mxu0 0.0
      %1632 = vmatpush1.xpose.msra.mxu0 %v1601
      %1633 = vmatprep.subr.mxu0 0.0
      %1634 = vmatpush1.xpose.msra.mxu0 %v1599
      %1635 = vmatprep.subr.mxu0 0.0
      %1636 = vmatpush2.xpose.msra.mxu0 0.0
      %1637 = vmatprep.subr.mxu0 0.0
      %1638 = vmatpush2.xpose.msra.mxu0 0.0
      %1639 = vmatprep.subr.mxu0 0.0
      %1640 = vmatpush2.xpose.msra.mxu0 0.0
      %1641 = vmatprep.subr.mxu0 0.0
      %1642 = vmatpush2.xpose.msra.mxu0 0.0
      %1643 = vmatprep.subr.mxu0 0.0
      %1644 = vmatpush2.xpose.msra.mxu0 0.0
      %1645 = vmatprep.subr.mxu0 0.0
      %1646 = vmatpush2.xpose.msra.mxu0 0.0
      %1647 = vmatprep.subr.mxu0 0.0
      %1648 = vmatpush2.xpose.msra.mxu0 0.0
      %1649 = vmatprep.subr.mxu0 0.0
      %1650 = vmatpush2.xpose.msra.mxu0 0.0
      %1651 = vmatprep.subr.mxu0 0.0
      %1652 = vmatpush2.xpose.msra.mxu0 0.0
      %1653 = vmatprep.subr.mxu0 0.0
      %1654 = vmatpush2.xpose.msra.mxu0 0.0
      %1655 = vmatprep.subr.mxu0 0.0
      %1656 = vmatpush2.xpose.msra.mxu0 0.0
      %1657 = vmatprep.subr.mxu0 0.0
      %1658 = vmatpush2.xpose.msra.mxu0 0.0
      %1659 = vmatprep.subr.mxu0 0.0
      %1660 = vmatpush2.xpose.msra.mxu0 0.0
      %1661 = vmatprep.subr.mxu0 0.0
      %1662 = vmatpush2.xpose.msra.mxu0 0.0
      %1663 = vmatprep.subr.mxu0 0.0
      %1664 = vmatpush2.xpose.msra.mxu0 0.0
      %1665 = vmatprep.subr.mxu0 0.0
      %1666 = vmatpush2.xpose.msra.mxu0 0.0
      %1667 = vmatprep.mubr.f32.mxu0 0.0
      %1668 = vmatmul.mubr.f32.gmra.mxu0 %v1595
      %v1669 = vpop.f32.mrf.mxu0
      %v1670 = vadd.f32 0.0, %v1669
      %v1671 = vpop.f32.mrf.mxu0
      %1672 = vmatprep.mubr.f32.mxu0 0.0
      %1673 = vmatmul.mubr.f32.gmra.mxu0 %v1597
      %v1674 = vpop.f32.mrf.mxu0
      %v1675 = vadd.f32 0.0, %v1674
      %v1676 = vpop.f32.mrf.mxu0
      %1677 = vdwg.mxu0
      %v1678 = vmul.f32 %v1670, 0.5
      %v1679 = vmul.f32 %v1675, 0.5
      %v1680 = vsel %vm1110, %v1678, -inf
      %1681 = vmax.xlane.f32.xlu0 %v1680
      %v1682 = vpop.xlane.xlu0 %1681
      %v1683 = vsel %vm1110, %v1679, -inf
      %1684 = vmax.xlane.f32.xlu0 %v1683
      %v1685 = vpop.xlane.xlu0 %1684
      %v1686 = vsub.f32 %v1678, %v1682
      %v1687 = vsub.f32 %v1679, %v1685
      %v1688 = vmul.f32 %v1686, 1.442695
      %v1689 = vpow.pop %v1688
      %v1690 = vmul.f32 %v1687, 1.442695
      %v1691 = vpow.pop %v1690
      %v1692 = vsel %vm1110, %v1689, 0.0
      %1693 = vadd.xlane.f32.xlu0 %v1692
      %v1694 = vpop.xlane.xlu0 %1693
      %v1695 = vsel %vm1110, %v1691, 0.0
      %1696 = vadd.xlane.f32.xlu0 %v1695
      %v1697 = vpop.xlane.xlu0 %1696
      %v1698 = vrcp.pop %v1694
      %v1699 = vrcp.pop %v1697
      %v1700 = vmul.f32 %v1689, %v1698
      %v1701 = vmul.f32 %v1691, %v1699
      %1702 = vrot.lane.b32.xlu0 %v1012, 120
      %v1703 = vpop.permute.xlu0 %1702
      %1704 = vrot.lane.b32.xlu0 %v1017, 120
      %v1705 = vpop.permute.xlu0 %1704
      %v1709 = vsel %vm1110, %v1700, 0
      %v1712 = vsel %vm1110, %v1701, 0
      %1714 = vmatprep.subr.mxu0 0.0
      %1715 = vmatpush1.msra.mxu0 0.0
      %1716 = vmatprep.subr.mxu0 0.0
      %1717 = vmatpush1.msra.mxu0 0.0
      %1718 = vmatprep.subr.mxu0 0.0
      %1719 = vmatpush1.msra.mxu0 0.0
      %1720 = vmatprep.subr.mxu0 0.0
      %1721 = vmatpush1.msra.mxu0 0.0
      %1722 = vmatprep.subr.mxu0 0.0
      %1723 = vmatpush1.msra.mxu0 0.0
      %1724 = vmatprep.subr.mxu0 0.0
      %1725 = vmatpush1.msra.mxu0 0.0
      %1726 = vmatprep.subr.mxu0 0.0
      %1727 = vmatpush1.msra.mxu0 0.0
      %1728 = vmatprep.subr.mxu0 0.0
      %1729 = vmatpush1.msra.mxu0 0.0
      %1730 = vmatprep.subr.mxu0 0.0
      %1731 = vmatpush1.msra.mxu0 0.0
      %1732 = vmatprep.subr.mxu0 0.0
      %1733 = vmatpush1.msra.mxu0 0.0
      %1734 = vmatprep.subr.mxu0 0.0
      %1735 = vmatpush1.msra.mxu0 0.0
      %1736 = vmatprep.subr.mxu0 0.0
      %1737 = vmatpush1.msra.mxu0 0.0
      %1738 = vmatprep.subr.mxu0 0.0
      %1739 = vmatpush1.msra.mxu0 0.0
      %1740 = vmatprep.subr.mxu0 0.0
      %1741 = vmatpush1.msra.mxu0 0.0
      %1742 = vmatprep.subr.mxu0 0.0
      %1743 = vmatpush1.msra.mxu0 %v1705
      %1744 = vmatprep.subr.mxu0 0.0
      %1745 = vmatpush1.msra.mxu0 %v1703
      %1746 = vmatprep.subr.mxu0 0.0
      %1747 = vmatpush2.msra.mxu0 0.0
      %1748 = vmatprep.subr.mxu0 0.0
      %1749 = vmatpush2.msra.mxu0 0.0
      %1750 = vmatprep.subr.mxu0 0.0
      %1751 = vmatpush2.msra.mxu0 0.0
      %1752 = vmatprep.subr.mxu0 0.0
      %1753 = vmatpush2.msra.mxu0 0.0
      %1754 = vmatprep.subr.mxu0 0.0
      %1755 = vmatpush2.msra.mxu0 0.0
      %1756 = vmatprep.subr.mxu0 0.0
      %1757 = vmatpush2.msra.mxu0 0.0
      %1758 = vmatprep.subr.mxu0 0.0
      %1759 = vmatpush2.msra.mxu0 0.0
      %1760 = vmatprep.subr.mxu0 0.0
      %1761 = vmatpush2.msra.mxu0 0.0
      %1762 = vmatprep.subr.mxu0 0.0
      %1763 = vmatpush2.msra.mxu0 0.0
      %1764 = vmatprep.subr.mxu0 0.0
      %1765 = vmatpush2.msra.mxu0 0.0
      %1766 = vmatprep.subr.mxu0 0.0
      %1767 = vmatpush2.msra.mxu0 0.0
      %1768 = vmatprep.subr.mxu0 0.0
      %1769 = vmatpush2.msra.mxu0 0.0
      %1770 = vmatprep.subr.mxu0 0.0
      %1771 = vmatpush2.msra.mxu0 0.0
      %1772 = vmatprep.subr.mxu0 0.0
      %1773 = vmatpush2.msra.mxu0 0.0
      %1774 = vmatprep.subr.mxu0 0.0
      %1775 = vmatpush2.msra.mxu0 0.0
      %1776 = vmatprep.subr.mxu0 0.0
      %1777 = vmatpush2.msra.mxu0 0.0
      %1778 = vmatprep.mubr.f32.mxu0 0.0
      %1779 = vmatmul.mubr.f32.gmra.mxu0 %v1709
      %v1780 = vpop.f32.mrf.mxu0
      %v1781 = vadd.f32 0.0, %v1780
      %v1782 = vpop.f32.mrf.mxu0
      %1783 = vmatprep.mubr.f32.mxu0 0.0
      %1784 = vmatmul.mubr.f32.gmra.mxu0 %v1712
      %v1785 = vpop.f32.mrf.mxu0
      %v1786 = vadd.f32 0.0, %v1785
      %v1787 = vpop.f32.mrf.mxu0
      %1788 = vdwg.mxu0
      %v1790 = vsel %vm1020, %v1781, 0
      %v1793 = vsel %vm1020, %v1786, 0
      %v1796 = vsel %vm1426, %v738, 0
      %1798 = vmatprep.subr.mxu0 0.0
      %1799 = vmatpush1.msra.mxu0 0.0
      %1800 = vmatprep.subr.mxu0 0.0
      %1801 = vmatpush1.msra.mxu0 0.0
      %1802 = vmatprep.subr.mxu0 0.0
      %1803 = vmatpush1.msra.mxu0 0.0
      %1804 = vmatprep.subr.mxu0 0.0
      %1805 = vmatpush1.msra.mxu0 0.0
      %1806 = vmatprep.subr.mxu0 0.0
      %1807 = vmatpush1.msra.mxu0 0.0
      %1808 = vmatprep.subr.mxu0 0.0
      %1809 = vmatpush1.msra.mxu0 0.0
      %1810 = vmatprep.subr.mxu0 0.0
      %1811 = vmatpush1.msra.mxu0 0.0
      %1812 = vmatprep.subr.mxu0 0.0
      %1813 = vmatpush1.msra.mxu0 0.0
      %1814 = vmatprep.subr.mxu0 0.0
      %1815 = vmatpush1.msra.mxu0 0.0
      %1816 = vmatprep.subr.mxu0 0.0
      %1817 = vmatpush1.msra.mxu0 0.0
      %1818 = vmatprep.subr.mxu0 0.0
      %1819 = vmatpush1.msra.mxu0 0.0
      %1820 = vmatprep.subr.mxu0 0.0
      %1821 = vmatpush1.msra.mxu0 0.0
      %1822 = vmatprep.subr.mxu0 0.0
      %1823 = vmatpush1.msra.mxu0 0.0
      %1824 = vmatprep.subr.mxu0 0.0
      %1825 = vmatpush1.msra.mxu0 0.0
      %1826 = vmatprep.subr.mxu0 0.0
      %1827 = vmatpush1.msra.mxu0 0.0
      %1828 = vmatprep.subr.mxu0 0.0
      %1829 = vmatpush1.msra.mxu0 %v1796
      %1830 = vmatprep.subr.mxu0 0.0
      %1831 = vmatpush2.msra.mxu0 0.0
      %1832 = vmatprep.subr.mxu0 0.0
      %1833 = vmatpush2.msra.mxu0 0.0
      %1834 = vmatprep.subr.mxu0 0.0
      %1835 = vmatpush2.msra.mxu0 0.0
      %1836 = vmatprep.subr.mxu0 0.0
      %1837 = vmatpush2.msra.mxu0 0.0
      %1838 = vmatprep.subr.mxu0 0.0
      %1839 = vmatpush2.msra.mxu0 0.0
      %1840 = vmatprep.subr.mxu0 0.0
      %1841 = vmatpush2.msra.mxu0 0.0
      %1842 = vmatprep.subr.mxu0 0.0
      %1843 = vmatpush2.msra.mxu0 0.0
      %1844 = vmatprep.subr.mxu0 0.0
      %1845 = vmatpush2.msra.mxu0 0.0
      %1846 = vmatprep.subr.mxu0 0.0
      %1847 = vmatpush2.msra.mxu0 0.0
      %1848 = vmatprep.subr.mxu0 0.0
      %1849 = vmatpush2.msra.mxu0 0.0
      %1850 = vmatprep.subr.mxu0 0.0
      %1851 = vmatpush2.msra.mxu0 0.0
      %1852 = vmatprep.subr.mxu0 0.0
      %1853 = vmatpush2.msra.mxu0 0.0
      %1854 = vmatprep.subr.mxu0 0.0
      %1855 = vmatpush2.msra.mxu0 0.0
      %1856 = vmatprep.subr.mxu0 0.0
      %1857 = vmatpush2.msra.mxu0 0.0
      %1858 = vmatprep.subr.mxu0 0.0
      %1859 = vmatpush2.msra.mxu0 0.0
      %1860 = vmatprep.subr.mxu0 0.0
      %1861 = vmatpush2.msra.mxu0 0.0
      %1862 = vmatprep.mubr.f32.mxu0 0.0
      %1863 = vmatmul.mubr.f32.gmra.mxu0 %v1790
      %v1864 = vpop.f32.mrf.mxu0
      %v1865 = vadd.f32 0.0, %v1864
      %v1866 = vpop.f32.mrf.mxu0
      %1867 = vmatprep.mubr.f32.mxu0 0.0
      %1868 = vmatmul.mubr.f32.gmra.mxu0 %v1793
      %v1869 = vpop.f32.mrf.mxu0
      %v1870 = vadd.f32 0.0, %v1869
      %v1871 = vpop.f32.mrf.mxu0
      %1872 = vdwg.mxu0
      %v1873 = vadd.f32 %v1579, %v1865
      %v1874 = vadd.f32 %v1584, %v1870
      %1875 = vrot.lane.b32.xlu0 %v822, 116
      %v1876 = vpop.permute.xlu0 %1875
      %1877 = vrot.lane.b32.xlu0 %v827, 116
      %v1878 = vpop.permute.xlu0 %1877
      %1879 = vrot.lane.b32.xlu0 %v916, 116
      %v1880 = vpop.permute.xlu0 %1879
      %1881 = vrot.lane.b32.xlu0 %v921, 116
      %v1882 = vpop.permute.xlu0 %1881
      %v1883 = vsel %vm1020, %v1876, 0
      %v1885 = vsel %vm1020, %v1878, 0
      %v1887 = vsel %vm1020, %v1880, 0
      %v1889 = vsel %vm1020, %v1882, 0
      %1891 = vmatprep.subr.mxu0 0.0
      %1892 = vmatpush1.xpose.msra.mxu0 0.0
      %1893 = vmatprep.subr.mxu0 0.0
      %1894 = vmatpush1.xpose.msra.mxu0 0.0
      %1895 = vmatprep.subr.mxu0 0.0
      %1896 = vmatpush1.xpose.msra.mxu0 0.0
      %1897 = vmatprep.subr.mxu0 0.0
      %1898 = vmatpush1.xpose.msra.mxu0 0.0
      %1899 = vmatprep.subr.mxu0 0.0
      %1900 = vmatpush1.xpose.msra.mxu0 0.0
      %1901 = vmatprep.subr.mxu0 0.0
      %1902 = vmatpush1.xpose.msra.mxu0 0.0
      %1903 = vmatprep.subr.mxu0 0.0
      %1904 = vmatpush1.xpose.msra.mxu0 0.0
      %1905 = vmatprep.subr.mxu0 0.0
      %1906 = vmatpush1.xpose.msra.mxu0 0.0
      %1907 = vmatprep.subr.mxu0 0.0
      %1908 = vmatpush1.xpose.msra.mxu0 0.0
      %1909 = vmatprep.subr.mxu0 0.0
      %1910 = vmatpush1.xpose.msra.mxu0 0.0
      %1911 = vmatprep.subr.mxu0 0.0
      %1912 = vmatpush1.xpose.msra.mxu0 0.0
      %1913 = vmatprep.subr.mxu0 0.0
      %1914 = vmatpush1.xpose.msra.mxu0 0.0
      %1915 = vmatprep.subr.mxu0 0.0
      %1916 = vmatpush1.xpose.msra.mxu0 0.0
      %1917 = vmatprep.subr.mxu0 0.0
      %1918 = vmatpush1.xpose.msra.mxu0 0.0
      %1919 = vmatprep.subr.mxu0 0.0
      %1920 = vmatpush1.xpose.msra.mxu0 %v1889
      %1921 = vmatprep.subr.mxu0 0.0
      %1922 = vmatpush1.xpose.msra.mxu0 %v1887
      %1923 = vmatprep.subr.mxu0 0.0
      %1924 = vmatpush2.xpose.msra.mxu0 0.0
      %1925 = vmatprep.subr.mxu0 0.0
      %1926 = vmatpush2.xpose.msra.mxu0 0.0
      %1927 = vmatprep.subr.mxu0 0.0
      %1928 = vmatpush2.xpose.msra.mxu0 0.0
      %1929 = vmatprep.subr.mxu0 0.0
      %1930 = vmatpush2.xpose.msra.mxu0 0.0
      %1931 = vmatprep.subr.mxu0 0.0
      %1932 = vmatpush2.xpose.msra.mxu0 0.0
      %1933 = vmatprep.subr.mxu0 0.0
      %1934 = vmatpush2.xpose.msra.mxu0 0.0
      %1935 = vmatprep.subr.mxu0 0.0
      %1936 = vmatpush2.xpose.msra.mxu0 0.0
      %1937 = vmatprep.subr.mxu0 0.0
      %1938 = vmatpush2.xpose.msra.mxu0 0.0
      %1939 = vmatprep.subr.mxu0 0.0
      %1940 = vmatpush2.xpose.msra.mxu0 0.0
      %1941 = vmatprep.subr.mxu0 0.0
      %1942 = vmatpush2.xpose.msra.mxu0 0.0
      %1943 = vmatprep.subr.mxu0 0.0
      %1944 = vmatpush2.xpose.msra.mxu0 0.0
      %1945 = vmatprep.subr.mxu0 0.0
      %1946 = vmatpush2.xpose.msra.mxu0 0.0
      %1947 = vmatprep.subr.mxu0 0.0
      %1948 = vmatpush2.xpose.msra.mxu0 0.0
      %1949 = vmatprep.subr.mxu0 0.0
      %1950 = vmatpush2.xpose.msra.mxu0 0.0
      %1951 = vmatprep.subr.mxu0 0.0
      %1952 = vmatpush2.xpose.msra.mxu0 0.0
      %1953 = vmatprep.subr.mxu0 0.0
      %1954 = vmatpush2.xpose.msra.mxu0 0.0
      %1955 = vmatprep.mubr.f32.mxu0 0.0
      %1956 = vmatmul.mubr.f32.gmra.mxu0 %v1883
      %v1957 = vpop.f32.mrf.mxu0
      %v1958 = vadd.f32 0.0, %v1957
      %v1959 = vpop.f32.mrf.mxu0
      %1960 = vmatprep.mubr.f32.mxu0 0.0
      %1961 = vmatmul.mubr.f32.gmra.mxu0 %v1885
      %v1962 = vpop.f32.mrf.mxu0
      %v1963 = vadd.f32 0.0, %v1962
      %v1964 = vpop.f32.mrf.mxu0
      %1965 = vdwg.mxu0
      %v1966 = vmul.f32 %v1958, 0.5
      %v1967 = vmul.f32 %v1963, 0.5
      %v1968 = vsel %vm1110, %v1966, -inf
      %1969 = vmax.xlane.f32.xlu0 %v1968
      %v1970 = vpop.xlane.xlu0 %1969
      %v1971 = vsel %vm1110, %v1967, -inf
      %1972 = vmax.xlane.f32.xlu0 %v1971
      %v1973 = vpop.xlane.xlu0 %1972
      %v1974 = vsub.f32 %v1966, %v1970
      %v1975 = vsub.f32 %v1967, %v1973
      %v1976 = vmul.f32 %v1974, 1.442695
      %v1977 = vpow.pop %v1976
      %v1978 = vmul.f32 %v1975, 1.442695
      %v1979 = vpow.pop %v1978
      %v1980 = vsel %vm1110, %v1977, 0.0
      %1981 = vadd.xlane.f32.xlu0 %v1980
      %v1982 = vpop.xlane.xlu0 %1981
      %v1983 = vsel %vm1110, %v1979, 0.0
      %1984 = vadd.xlane.f32.xlu0 %v1983
      %v1985 = vpop.xlane.xlu0 %1984
      %v1986 = vrcp.pop %v1982
      %v1987 = vrcp.pop %v1985
      %v1988 = vmul.f32 %v1977, %v1986
      %v1989 = vmul.f32 %v1979, %v1987
      %1990 = vrot.lane.b32.xlu0 %v1012, 116
      %v1991 = vpop.permute.xlu0 %1990
      %1992 = vrot.lane.b32.xlu0 %v1017, 116
      %v1993 = vpop.permute.xlu0 %1992
      %v1997 = vsel %vm1110, %v1988, 0
      %v2000 = vsel %vm1110, %v1989, 0
      %2002 = vmatprep.subr.mxu0 0.0
      %2003 = vmatpush1.msra.mxu0 0.0
      %2004 = vmatprep.subr.mxu0 0.0
      %2005 = vmatpush1.msra.mxu0 0.0
      %2006 = vmatprep.subr.mxu0 0.0
      %2007 = vmatpush1.msra.mxu0 0.0
      %2008 = vmatprep.subr.mxu0 0.0
      %2009 = vmatpush1.msra.mxu0 0.0
      %2010 = vmatprep.subr.mxu0 0.0
      %2011 = vmatpush1.msra.mxu0 0.0
      %2012 = vmatprep.subr.mxu0 0.0
      %2013 = vmatpush1.msra.mxu0 0.0
      %2014 = vmatprep.subr.mxu0 0.0
      %2015 = vmatpush1.msra.mxu0 0.0
      %2016 = vmatprep.subr.mxu0 0.0
      %2017 = vmatpush1.msra.mxu0 0.0
      %2018 = vmatprep.subr.mxu0 0.0
      %2019 = vmatpush1.msra.mxu0 0.0
      %2020 = vmatprep.subr.mxu0 0.0
      %2021 = vmatpush1.msra.mxu0 0.0
      %2022 = vmatprep.subr.mxu0 0.0
      %2023 = vmatpush1.msra.mxu0 0.0
      %2024 = vmatprep.subr.mxu0 0.0
      %2025 = vmatpush1.msra.mxu0 0.0
      %2026 = vmatprep.subr.mxu0 0.0
      %2027 = vmatpush1.msra.mxu0 0.0
      %2028 = vmatprep.subr.mxu0 0.0
      %2029 = vmatpush1.msra.mxu0 0.0
      %2030 = vmatprep.subr.mxu0 0.0
      %2031 = vmatpush1.msra.mxu0 %v1993
      %2032 = vmatprep.subr.mxu0 0.0
      %2033 = vmatpush1.msra.mxu0 %v1991
      %2034 = vmatprep.subr.mxu0 0.0
      %2035 = vmatpush2.msra.mxu0 0.0
      %2036 = vmatprep.subr.mxu0 0.0
      %2037 = vmatpush2.msra.mxu0 0.0
      %2038 = vmatprep.subr.mxu0 0.0
      %2039 = vmatpush2.msra.mxu0 0.0
      %2040 = vmatprep.subr.mxu0 0.0
      %2041 = vmatpush2.msra.mxu0 0.0
      %2042 = vmatprep.subr.mxu0 0.0
      %2043 = vmatpush2.msra.mxu0 0.0
      %2044 = vmatprep.subr.mxu0 0.0
      %2045 = vmatpush2.msra.mxu0 0.0
      %2046 = vmatprep.subr.mxu0 0.0
      %2047 = vmatpush2.msra.mxu0 0.0
      %2048 = vmatprep.subr.mxu0 0.0
      %2049 = vmatpush2.msra.mxu0 0.0
      %2050 = vmatprep.subr.mxu0 0.0
      %2051 = vmatpush2.msra.mxu0 0.0
      %2052 = vmatprep.subr.mxu0 0.0
      %2053 = vmatpush2.msra.mxu0 0.0
      %2054 = vmatprep.subr.mxu0 0.0
      %2055 = vmatpush2.msra.mxu0 0.0
      %2056 = vmatprep.subr.mxu0 0.0
      %2057 = vmatpush2.msra.mxu0 0.0
      %2058 = vmatprep.subr.mxu0 0.0
      %2059 = vmatpush2.msra.mxu0 0.0
      %2060 = vmatprep.subr.mxu0 0.0
      %2061 = vmatpush2.msra.mxu0 0.0
      %2062 = vmatprep.subr.mxu0 0.0
      %2063 = vmatpush2.msra.mxu0 0.0
      %2064 = vmatprep.subr.mxu0 0.0
      %2065 = vmatpush2.msra.mxu0 0.0
      %2066 = vmatprep.mubr.f32.mxu0 0.0
      %2067 = vmatmul.mubr.f32.gmra.mxu0 %v1997
      %v2068 = vpop.f32.mrf.mxu0
      %v2069 = vadd.f32 0.0, %v2068
      %v2070 = vpop.f32.mrf.mxu0
      %2071 = vmatprep.mubr.f32.mxu0 0.0
      %2072 = vmatmul.mubr.f32.gmra.mxu0 %v2000
      %v2073 = vpop.f32.mrf.mxu0
      %v2074 = vadd.f32 0.0, %v2073
      %v2075 = vpop.f32.mrf.mxu0
      %2076 = vdwg.mxu0
      %v2077 = vrot.slane %v738, 4
      %v2079 = vsel %vm1020, %v2069, 0
      %v2082 = vsel %vm1020, %v2074, 0
      %v2084 = vsel %vm1426, %v2077, 0
      %2086 = vmatprep.subr.mxu0 0.0
      %2087 = vmatpush1.msra.mxu0 0.0
      %2088 = vmatprep.subr.mxu0 0.0
      %2089 = vmatpush1.msra.mxu0 0.0
      %2090 = vmatprep.subr.mxu0 0.0
      %2091 = vmatpush1.msra.mxu0 0.0
      %2092 = vmatprep.subr.mxu0 0.0
      %2093 = vmatpush1.msra.mxu0 0.0
      %2094 = vmatprep.subr.mxu0 0.0
      %2095 = vmatpush1.msra.mxu0 0.0
      %2096 = vmatprep.subr.mxu0 0.0
      %2097 = vmatpush1.msra.mxu0 0.0
      %2098 = vmatprep.subr.mxu0 0.0
      %2099 = vmatpush1.msra.mxu0 0.0
      %2100 = vmatprep.subr.mxu0 0.0
      %2101 = vmatpush1.msra.mxu0 0.0
      %2102 = vmatprep.subr.mxu0 0.0
      %2103 = vmatpush1.msra.mxu0 0.0
      %2104 = vmatprep.subr.mxu0 0.0
      %2105 = vmatpush1.msra.mxu0 0.0
      %2106 = vmatprep.subr.mxu0 0.0
      %2107 = vmatpush1.msra.mxu0 0.0
      %2108 = vmatprep.subr.mxu0 0.0
      %2109 = vmatpush1.msra.mxu0 0.0
      %2110 = vmatprep.subr.mxu0 0.0
      %2111 = vmatpush1.msra.mxu0 0.0
      %2112 = vmatprep.subr.mxu0 0.0
      %2113 = vmatpush1.msra.mxu0 0.0
      %2114 = vmatprep.subr.mxu0 0.0
      %2115 = vmatpush1.msra.mxu0 0.0
      %2116 = vmatprep.subr.mxu0 0.0
      %2117 = vmatpush1.msra.mxu0 %v2084
      %2118 = vmatprep.subr.mxu0 0.0
      %2119 = vmatpush2.msra.mxu0 0.0
      %2120 = vmatprep.subr.mxu0 0.0
      %2121 = vmatpush2.msra.mxu0 0.0
      %2122 = vmatprep.subr.mxu0 0.0
      %2123 = vmatpush2.msra.mxu0 0.0
      %2124 = vmatprep.subr.mxu0 0.0
      %2125 = vmatpush2.msra.mxu0 0.0
      %2126 = vmatprep.subr.mxu0 0.0
      %2127 = vmatpush2.msra.mxu0 0.0
      %2128 = vmatprep.subr.mxu0 0.0
      %2129 = vmatpush2.msra.mxu0 0.0
      %2130 = vmatprep.subr.mxu0 0.0
      %2131 = vmatpush2.msra.mxu0 0.0
      %2132 = vmatprep.subr.mxu0 0.0
      %2133 = vmatpush2.msra.mxu0 0.0
      %2134 = vmatprep.subr.mxu0 0.0
      %2135 = vmatpush2.msra.mxu0 0.0
      %2136 = vmatprep.subr.mxu0 0.0
      %2137 = vmatpush2.msra.mxu0 0.0
      %2138 = vmatprep.subr.mxu0 0.0
      %2139 = vmatpush2.msra.mxu0 0.0
      %2140 = vmatprep.subr.mxu0 0.0
      %2141 = vmatpush2.msra.mxu0 0.0
      %2142 = vmatprep.subr.mxu0 0.0
      %2143 = vmatpush2.msra.mxu0 0.0
      %2144 = vmatprep.subr.mxu0 0.0
      %2145 = vmatpush2.msra.mxu0 0.0
      %2146 = vmatprep.subr.mxu0 0.0
      %2147 = vmatpush2.msra.mxu0 0.0
      %2148 = vmatprep.subr.mxu0 0.0
      %2149 = vmatpush2.msra.mxu0 0.0
      %2150 = vmatprep.mubr.f32.mxu0 0.0
      %2151 = vmatmul.mubr.f32.gmra.mxu0 %v2079
      %v2152 = vpop.f32.mrf.mxu0
      %v2153 = vadd.f32 0.0, %v2152
      %v2154 = vpop.f32.mrf.mxu0
      %2155 = vmatprep.mubr.f32.mxu0 0.0
      %2156 = vmatmul.mubr.f32.gmra.mxu0 %v2082
      %v2157 = vpop.f32.mrf.mxu0
      %v2158 = vadd.f32 0.0, %v2157
      %v2159 = vpop.f32.mrf.mxu0
      %2160 = vdwg.mxu0
      %v2161 = vadd.f32 %v1873, %v2153
      %v2162 = vadd.f32 %v1874, %v2158
      %2163 = vrot.lane.b32.xlu0 %v822, 112
      %v2164 = vpop.permute.xlu0 %2163
      %2165 = vrot.lane.b32.xlu0 %v827, 112
      %v2166 = vpop.permute.xlu0 %2165
      %2167 = vrot.lane.b32.xlu0 %v916, 112
      %v2168 = vpop.permute.xlu0 %2167
      %2169 = vrot.lane.b32.xlu0 %v921, 112
      %v2170 = vpop.permute.xlu0 %2169
      %v2171 = vsel %vm1020, %v2164, 0
      %v2173 = vsel %vm1020, %v2166, 0
      %v2175 = vsel %vm1020, %v2168, 0
      %v2177 = vsel %vm1020, %v2170, 0
      %2179 = vmatprep.subr.mxu0 0.0
      %2180 = vmatpush1.xpose.msra.mxu0 0.0
      %2181 = vmatprep.subr.mxu0 0.0
      %2182 = vmatpush1.xpose.msra.mxu0 0.0
      %2183 = vmatprep.subr.mxu0 0.0
      %2184 = vmatpush1.xpose.msra.mxu0 0.0
      %2185 = vmatprep.subr.mxu0 0.0
      %2186 = vmatpush1.xpose.msra.mxu0 0.0
      %2187 = vmatprep.subr.mxu0 0.0
      %2188 = vmatpush1.xpose.msra.mxu0 0.0
      %2189 = vmatprep.subr.mxu0 0.0
      %2190 = vmatpush1.xpose.msra.mxu0 0.0
      %2191 = vmatprep.subr.mxu0 0.0
      %2192 = vmatpush1.xpose.msra.mxu0 0.0
      %2193 = vmatprep.subr.mxu0 0.0
      %2194 = vmatpush1.xpose.msra.mxu0 0.0
      %2195 = vmatprep.subr.mxu0 0.0
      %2196 = vmatpush1.xpose.msra.mxu0 0.0
      %2197 = vmatprep.subr.mxu0 0.0
      %2198 = vmatpush1.xpose.msra.mxu0 0.0
      %2199 = vmatprep.subr.mxu0 0.0
      %2200 = vmatpush1.xpose.msra.mxu0 0.0
      %2201 = vmatprep.subr.mxu0 0.0
      %2202 = vmatpush1.xpose.msra.mxu0 0.0
      %2203 = vmatprep.subr.mxu0 0.0
      %2204 = vmatpush1.xpose.msra.mxu0 0.0
      %2205 = vmatprep.subr.mxu0 0.0
      %2206 = vmatpush1.xpose.msra.mxu0 0.0
      %2207 = vmatprep.subr.mxu0 0.0
      %2208 = vmatpush1.xpose.msra.mxu0 %v2177
      %2209 = vmatprep.subr.mxu0 0.0
      %2210 = vmatpush1.xpose.msra.mxu0 %v2175
      %2211 = vmatprep.subr.mxu0 0.0
      %2212 = vmatpush2.xpose.msra.mxu0 0.0
      %2213 = vmatprep.subr.mxu0 0.0
      %2214 = vmatpush2.xpose.msra.mxu0 0.0
      %2215 = vmatprep.subr.mxu0 0.0
      %2216 = vmatpush2.xpose.msra.mxu0 0.0
      %2217 = vmatprep.subr.mxu0 0.0
      %2218 = vmatpush2.xpose.msra.mxu0 0.0
      %2219 = vmatprep.subr.mxu0 0.0
      %2220 = vmatpush2.xpose.msra.mxu0 0.0
      %2221 = vmatprep.subr.mxu0 0.0
      %2222 = vmatpush2.xpose.msra.mxu0 0.0
      %2223 = vmatprep.subr.mxu0 0.0
      %2224 = vmatpush2.xpose.msra.mxu0 0.0
      %2225 = vmatprep.subr.mxu0 0.0
      %2226 = vmatpush2.xpose.msra.mxu0 0.0
      %2227 = vmatprep.subr.mxu0 0.0
      %2228 = vmatpush2.xpose.msra.mxu0 0.0
      %2229 = vmatprep.subr.mxu0 0.0
      %2230 = vmatpush2.xpose.msra.mxu0 0.0
      %2231 = vmatprep.subr.mxu0 0.0
      %2232 = vmatpush2.xpose.msra.mxu0 0.0
      %2233 = vmatprep.subr.mxu0 0.0
      %2234 = vmatpush2.xpose.msra.mxu0 0.0
      %2235 = vmatprep.subr.mxu0 0.0
      %2236 = vmatpush2.xpose.msra.mxu0 0.0
      %2237 = vmatprep.subr.mxu0 0.0
      %2238 = vmatpush2.xpose.msra.mxu0 0.0
      %2239 = vmatprep.subr.mxu0 0.0
      %2240 = vmatpush2.xpose.msra.mxu0 0.0
      %2241 = vmatprep.subr.mxu0 0.0
      %2242 = vmatpush2.xpose.msra.mxu0 0.0
      %2243 = vmatprep.mubr.f32.mxu0 0.0
      %2244 = vmatmul.mubr.f32.gmra.mxu0 %v2171
      %v2245 = vpop.f32.mrf.mxu0
      %v2246 = vadd.f32 0.0, %v2245
      %v2247 = vpop.f32.mrf.mxu0
      %2248 = vmatprep.mubr.f32.mxu0 0.0
      %2249 = vmatmul.mubr.f32.gmra.mxu0 %v2173
      %v2250 = vpop.f32.mrf.mxu0
      %v2251 = vadd.f32 0.0, %v2250
      %v2252 = vpop.f32.mrf.mxu0
      %2253 = vdwg.mxu0
      %v2254 = vmul.f32 %v2246, 0.5
      %v2255 = vmul.f32 %v2251, 0.5
      %v2256 = vsel %vm1110, %v2254, -inf
      %2257 = vmax.xlane.f32.xlu0 %v2256
      %v2258 = vpop.xlane.xlu0 %2257
      %v2259 = vsel %vm1110, %v2255, -inf
      %2260 = vmax.xlane.f32.xlu0 %v2259
      %v2261 = vpop.xlane.xlu0 %2260
      %v2262 = vsub.f32 %v2254, %v2258
      %v2263 = vsub.f32 %v2255, %v2261
      %v2264 = vmul.f32 %v2262, 1.442695
      %v2265 = vpow.pop %v2264
      %v2266 = vmul.f32 %v2263, 1.442695
      %v2267 = vpow.pop %v2266
      %v2268 = vsel %vm1110, %v2265, 0.0
      %2269 = vadd.xlane.f32.xlu0 %v2268
      %v2270 = vpop.xlane.xlu0 %2269
      %v2271 = vsel %vm1110, %v2267, 0.0
      %2272 = vadd.xlane.f32.xlu0 %v2271
      %v2273 = vpop.xlane.xlu0 %2272
      %v2274 = vrcp.pop %v2270
      %v2275 = vrcp.pop %v2273
      %v2276 = vmul.f32 %v2265, %v2274
      %v2277 = vmul.f32 %v2267, %v2275
      %2278 = vrot.lane.b32.xlu0 %v1012, 112
      %v2279 = vpop.permute.xlu0 %2278
      %2280 = vrot.lane.b32.xlu0 %v1017, 112
      %v2281 = vpop.permute.xlu0 %2280
      %v2285 = vsel %vm1110, %v2276, 0
      %v2288 = vsel %vm1110, %v2277, 0
      %2290 = vmatprep.subr.mxu0 0.0
      %2291 = vmatpush1.msra.mxu0 0.0
      %2292 = vmatprep.subr.mxu0 0.0
      %2293 = vmatpush1.msra.mxu0 0.0
      %2294 = vmatprep.subr.mxu0 0.0
      %2295 = vmatpush1.msra.mxu0 0.0
      %2296 = vmatprep.subr.mxu0 0.0
      %2297 = vmatpush1.msra.mxu0 0.0
      %2298 = vmatprep.subr.mxu0 0.0
      %2299 = vmatpush1.msra.mxu0 0.0
      %2300 = vmatprep.subr.mxu0 0.0
      %2301 = vmatpush1.msra.mxu0 0.0
      %2302 = vmatprep.subr.mxu0 0.0
      %2303 = vmatpush1.msra.mxu0 0.0
      %2304 = vmatprep.subr.mxu0 0.0
      %2305 = vmatpush1.msra.mxu0 0.0
      %2306 = vmatprep.subr.mxu0 0.0
      %2307 = vmatpush1.msra.mxu0 0.0
      %2308 = vmatprep.subr.mxu0 0.0
      %2309 = vmatpush1.msra.mxu0 0.0
      %2310 = vmatprep.subr.mxu0 0.0
      %2311 = vmatpush1.msra.mxu0 0.0
      %2312 = vmatprep.subr.mxu0 0.0
      %2313 = vmatpush1.msra.mxu0 0.0
      %2314 = vmatprep.subr.mxu0 0.0
      %2315 = vmatpush1.msra.mxu0 0.0
      %2316 = vmatprep.subr.mxu0 0.0
      %2317 = vmatpush1.msra.mxu0 0.0
      %2318 = vmatprep.subr.mxu0 0.0
      %2319 = vmatpush1.msra.mxu0 %v2281
      %2320 = vmatprep.subr.mxu0 0.0
      %2321 = vmatpush1.msra.mxu0 %v2279
      %2322 = vmatprep.subr.mxu0 0.0
      %2323 = vmatpush2.msra.mxu0 0.0
      %2324 = vmatprep.subr.mxu0 0.0
      %2325 = vmatpush2.msra.mxu0 0.0
      %2326 = vmatprep.subr.mxu0 0.0
      %2327 = vmatpush2.msra.mxu0 0.0
      %2328 = vmatprep.subr.mxu0 0.0
      %2329 = vmatpush2.msra.mxu0 0.0
      %2330 = vmatprep.subr.mxu0 0.0
      %2331 = vmatpush2.msra.mxu0 0.0
      %2332 = vmatprep.subr.mxu0 0.0
      %2333 = vmatpush2.msra.mxu0 0.0
      %2334 = vmatprep.subr.mxu0 0.0
      %2335 = vmatpush2.msra.mxu0 0.0
      %2336 = vmatprep.subr.mxu0 0.0
      %2337 = vmatpush2.msra.mxu0 0.0
      %2338 = vmatprep.subr.mxu0 0.0
      %2339 = vmatpush2.msra.mxu0 0.0
      %2340 = vmatprep.subr.mxu0 0.0
      %2341 = vmatpush2.msra.mxu0 0.0
      %2342 = vmatprep.subr.mxu0 0.0
      %2343 = vmatpush2.msra.mxu0 0.0
      %2344 = vmatprep.subr.mxu0 0.0
      %2345 = vmatpush2.msra.mxu0 0.0
      %2346 = vmatprep.subr.mxu0 0.0
      %2347 = vmatpush2.msra.mxu0 0.0
      %2348 = vmatprep.subr.mxu0 0.0
      %2349 = vmatpush2.msra.mxu0 0.0
      %2350 = vmatprep.subr.mxu0 0.0
      %2351 = vmatpush2.msra.mxu0 0.0
      %2352 = vmatprep.subr.mxu0 0.0
      %2353 = vmatpush2.msra.mxu0 0.0
      %2354 = vmatprep.mubr.f32.mxu0 0.0
      %2355 = vmatmul.mubr.f32.gmra.mxu0 %v2285
      %v2356 = vpop.f32.mrf.mxu0
      %v2357 = vadd.f32 0.0, %v2356
      %v2358 = vpop.f32.mrf.mxu0
      %2359 = vmatprep.mubr.f32.mxu0 0.0
      %2360 = vmatmul.mubr.f32.gmra.mxu0 %v2288
      %v2361 = vpop.f32.mrf.mxu0
      %v2362 = vadd.f32 0.0, %v2361
      %v2363 = vpop.f32.mrf.mxu0
      %2364 = vdwg.mxu0
      %v2366 = vsel %vm1020, %v2357, 0
      %v2369 = vsel %vm1020, %v2362, 0
      %v2372 = vsel %vm1426, %v739, 0
      %2374 = vmatprep.subr.mxu0 0.0
      %2375 = vmatpush1.msra.mxu0 0.0
      %2376 = vmatprep.subr.mxu0 0.0
      %2377 = vmatpush1.msra.mxu0 0.0
      %2378 = vmatprep.subr.mxu0 0.0
      %2379 = vmatpush1.msra.mxu0 0.0
      %2380 = vmatprep.subr.mxu0 0.0
      %2381 = vmatpush1.msra.mxu0 0.0
      %2382 = vmatprep.subr.mxu0 0.0
      %2383 = vmatpush1.msra.mxu0 0.0
      %2384 = vmatprep.subr.mxu0 0.0
      %2385 = vmatpush1.msra.mxu0 0.0
      %2386 = vmatprep.subr.mxu0 0.0
      %2387 = vmatpush1.msra.mxu0 0.0
      %2388 = vmatprep.subr.mxu0 0.0
      %2389 = vmatpush1.msra.mxu0 0.0
      %2390 = vmatprep.subr.mxu0 0.0
      %2391 = vmatpush1.msra.mxu0 0.0
      %2392 = vmatprep.subr.mxu0 0.0
      %2393 = vmatpush1.msra.mxu0 0.0
      %2394 = vmatprep.subr.mxu0 0.0
      %2395 = vmatpush1.msra.mxu0 0.0
      %2396 = vmatprep.subr.mxu0 0.0
      %2397 = vmatpush1.msra.mxu0 0.0
      %2398 = vmatprep.subr.mxu0 0.0
      %2399 = vmatpush1.msra.mxu0 0.0
      %2400 = vmatprep.subr.mxu0 0.0
      %2401 = vmatpush1.msra.mxu0 0.0
      %2402 = vmatprep.subr.mxu0 0.0
      %2403 = vmatpush1.msra.mxu0 0.0
      %2404 = vmatprep.subr.mxu0 0.0
      %2405 = vmatpush1.msra.mxu0 %v2372
      %2406 = vmatprep.subr.mxu0 0.0
      %2407 = vmatpush2.msra.mxu0 0.0
      %2408 = vmatprep.subr.mxu0 0.0
      %2409 = vmatpush2.msra.mxu0 0.0
      %2410 = vmatprep.subr.mxu0 0.0
      %2411 = vmatpush2.msra.mxu0 0.0
      %2412 = vmatprep.subr.mxu0 0.0
      %2413 = vmatpush2.msra.mxu0 0.0
      %2414 = vmatprep.subr.mxu0 0.0
      %2415 = vmatpush2.msra.mxu0 0.0
      %2416 = vmatprep.subr.mxu0 0.0
      %2417 = vmatpush2.msra.mxu0 0.0
      %2418 = vmatprep.subr.mxu0 0.0
      %2419 = vmatpush2.msra.mxu0 0.0
      %2420 = vmatprep.subr.mxu0 0.0
      %2421 = vmatpush2.msra.mxu0 0.0
      %2422 = vmatprep.subr.mxu0 0.0
      %2423 = vmatpush2.msra.mxu0 0.0
      %2424 = vmatprep.subr.mxu0 0.0
      %2425 = vmatpush2.msra.mxu0 0.0
      %2426 = vmatprep.subr.mxu0 0.0
      %2427 = vmatpush2.msra.mxu0 0.0
      %2428 = vmatprep.subr.mxu0 0.0
      %2429 = vmatpush2.msra.mxu0 0.0
      %2430 = vmatprep.subr.mxu0 0.0
      %2431 = vmatpush2.msra.mxu0 0.0
      %2432 = vmatprep.subr.mxu0 0.0
      %2433 = vmatpush2.msra.mxu0 0.0
      %2434 = vmatprep.subr.mxu0 0.0
      %2435 = vmatpush2.msra.mxu0 0.0
      %2436 = vmatprep.subr.mxu0 0.0
      %2437 = vmatpush2.msra.mxu0 0.0
      %2438 = vmatprep.mubr.f32.mxu0 0.0
      %2439 = vmatmul.mubr.f32.gmra.mxu0 %v2366
      %v2440 = vpop.f32.mrf.mxu0
      %v2441 = vadd.f32 0.0, %v2440
      %v2442 = vpop.f32.mrf.mxu0
      %2443 = vmatprep.mubr.f32.mxu0 0.0
      %2444 = vmatmul.mubr.f32.gmra.mxu0 %v2369
      %v2445 = vpop.f32.mrf.mxu0
      %v2446 = vadd.f32 0.0, %v2445
      %v2447 = vpop.f32.mrf.mxu0
      %2448 = vdwg.mxu0
      %v2449 = vadd.f32 %v2161, %v2441
      %v2450 = vadd.f32 %v2162, %v2446
      %2451 = vrot.lane.b32.xlu0 %v822, 108
      %v2452 = vpop.permute.xlu0 %2451
      %2453 = vrot.lane.b32.xlu0 %v827, 108
      %v2454 = vpop.permute.xlu0 %2453
      %2455 = vrot.lane.b32.xlu0 %v916, 108
      %v2456 = vpop.permute.xlu0 %2455
      %2457 = vrot.lane.b32.xlu0 %v921, 108
      %v2458 = vpop.permute.xlu0 %2457
      %v2459 = vsel %vm1020, %v2452, 0
      %v2461 = vsel %vm1020, %v2454, 0
      %v2463 = vsel %vm1020, %v2456, 0
      %v2465 = vsel %vm1020, %v2458, 0
      %2467 = vmatprep.subr.mxu0 0.0
      %2468 = vmatpush1.xpose.msra.mxu0 0.0
      %2469 = vmatprep.subr.mxu0 0.0
      %2470 = vmatpush1.xpose.msra.mxu0 0.0
      %2471 = vmatprep.subr.mxu0 0.0
      %2472 = vmatpush1.xpose.msra.mxu0 0.0
      %2473 = vmatprep.subr.mxu0 0.0
      %2474 = vmatpush1.xpose.msra.mxu0 0.0
      %2475 = vmatprep.subr.mxu0 0.0
      %2476 = vmatpush1.xpose.msra.mxu0 0.0
      %2477 = vmatprep.subr.mxu0 0.0
      %2478 = vmatpush1.xpose.msra.mxu0 0.0
      %2479 = vmatprep.subr.mxu0 0.0
      %2480 = vmatpush1.xpose.msra.mxu0 0.0
      %2481 = vmatprep.subr.mxu0 0.0
      %2482 = vmatpush1.xpose.msra.mxu0 0.0
      %2483 = vmatprep.subr.mxu0 0.0
      %2484 = vmatpush1.xpose.msra.mxu0 0.0
      %2485 = vmatprep.subr.mxu0 0.0
      %2486 = vmatpush1.xpose.msra.mxu0 0.0
      %2487 = vmatprep.subr.mxu0 0.0
      %2488 = vmatpush1.xpose.msra.mxu0 0.0
      %2489 = vmatprep.subr.mxu0 0.0
      %2490 = vmatpush1.xpose.msra.mxu0 0.0
      %2491 = vmatprep.subr.mxu0 0.0
      %2492 = vmatpush1.xpose.msra.mxu0 0.0
      %2493 = vmatprep.subr.mxu0 0.0
      %2494 = vmatpush1.xpose.msra.mxu0 0.0
      %2495 = vmatprep.subr.mxu0 0.0
      %2496 = vmatpush1.xpose.msra.mxu0 %v2465
      %2497 = vmatprep.subr.mxu0 0.0
      %2498 = vmatpush1.xpose.msra.mxu0 %v2463
      %2499 = vmatprep.subr.mxu0 0.0
      %2500 = vmatpush2.xpose.msra.mxu0 0.0
      %2501 = vmatprep.subr.mxu0 0.0
      %2502 = vmatpush2.xpose.msra.mxu0 0.0
      %2503 = vmatprep.subr.mxu0 0.0
      %2504 = vmatpush2.xpose.msra.mxu0 0.0
      %2505 = vmatprep.subr.mxu0 0.0
      %2506 = vmatpush2.xpose.msra.mxu0 0.0
      %2507 = vmatprep.subr.mxu0 0.0
      %2508 = vmatpush2.xpose.msra.mxu0 0.0
      %2509 = vmatprep.subr.mxu0 0.0
      %2510 = vmatpush2.xpose.msra.mxu0 0.0
      %2511 = vmatprep.subr.mxu0 0.0
      %2512 = vmatpush2.xpose.msra.mxu0 0.0
      %2513 = vmatprep.subr.mxu0 0.0
      %2514 = vmatpush2.xpose.msra.mxu0 0.0
      %2515 = vmatprep.subr.mxu0 0.0
      %2516 = vmatpush2.xpose.msra.mxu0 0.0
      %2517 = vmatprep.subr.mxu0 0.0
      %2518 = vmatpush2.xpose.msra.mxu0 0.0
      %2519 = vmatprep.subr.mxu0 0.0
      %2520 = vmatpush2.xpose.msra.mxu0 0.0
      %2521 = vmatprep.subr.mxu0 0.0
      %2522 = vmatpush2.xpose.msra.mxu0 0.0
      %2523 = vmatprep.subr.mxu0 0.0
      %2524 = vmatpush2.xpose.msra.mxu0 0.0
      %2525 = vmatprep.subr.mxu0 0.0
      %2526 = vmatpush2.xpose.msra.mxu0 0.0
      %2527 = vmatprep.subr.mxu0 0.0
      %2528 = vmatpush2.xpose.msra.mxu0 0.0
      %2529 = vmatprep.subr.mxu0 0.0
      %2530 = vmatpush2.xpose.msra.mxu0 0.0
      %2531 = vmatprep.mubr.f32.mxu0 0.0
      %2532 = vmatmul.mubr.f32.gmra.mxu0 %v2459
      %v2533 = vpop.f32.mrf.mxu0
      %v2534 = vadd.f32 0.0, %v2533
      %v2535 = vpop.f32.mrf.mxu0
      %2536 = vmatprep.mubr.f32.mxu0 0.0
      %2537 = vmatmul.mubr.f32.gmra.mxu0 %v2461
      %v2538 = vpop.f32.mrf.mxu0
      %v2539 = vadd.f32 0.0, %v2538
      %v2540 = vpop.f32.mrf.mxu0
      %2541 = vdwg.mxu0
      %v2542 = vmul.f32 %v2534, 0.5
      %v2543 = vmul.f32 %v2539, 0.5
      %v2544 = vsel %vm1110, %v2542, -inf
      %2545 = vmax.xlane.f32.xlu0 %v2544
      %v2546 = vpop.xlane.xlu0 %2545
      %v2547 = vsel %vm1110, %v2543, -inf
      %2548 = vmax.xlane.f32.xlu0 %v2547
      %v2549 = vpop.xlane.xlu0 %2548
      %v2550 = vsub.f32 %v2542, %v2546
      %v2551 = vsub.f32 %v2543, %v2549
      %v2552 = vmul.f32 %v2550, 1.442695
      %v2553 = vpow.pop %v2552
      %v2554 = vmul.f32 %v2551, 1.442695
      %v2555 = vpow.pop %v2554
      %v2556 = vsel %vm1110, %v2553, 0.0
      %2557 = vadd.xlane.f32.xlu0 %v2556
      %v2558 = vpop.xlane.xlu0 %2557
      %v2559 = vsel %vm1110, %v2555, 0.0
      %2560 = vadd.xlane.f32.xlu0 %v2559
      %v2561 = vpop.xlane.xlu0 %2560
      %v2562 = vrcp.pop %v2558
      %v2563 = vrcp.pop %v2561
      %v2564 = vmul.f32 %v2553, %v2562
      %v2565 = vmul.f32 %v2555, %v2563
      %2566 = vrot.lane.b32.xlu0 %v1012, 108
      %v2567 = vpop.permute.xlu0 %2566
      %2568 = vrot.lane.b32.xlu0 %v1017, 108
      %v2569 = vpop.permute.xlu0 %2568
      %v2573 = vsel %vm1110, %v2564, 0
      %v2576 = vsel %vm1110, %v2565, 0
      %2578 = vmatprep.subr.mxu0 0.0
      %2579 = vmatpush1.msra.mxu0 0.0
      %2580 = vmatprep.subr.mxu0 0.0
      %2581 = vmatpush1.msra.mxu0 0.0
      %2582 = vmatprep.subr.mxu0 0.0
      %2583 = vmatpush1.msra.mxu0 0.0
      %2584 = vmatprep.subr.mxu0 0.0
      %2585 = vmatpush1.msra.mxu0 0.0
      %2586 = vmatprep.subr.mxu0 0.0
      %2587 = vmatpush1.msra.mxu0 0.0
      %2588 = vmatprep.subr.mxu0 0.0
      %2589 = vmatpush1.msra.mxu0 0.0
      %2590 = vmatprep.subr.mxu0 0.0
      %2591 = vmatpush1.msra.mxu0 0.0
      %2592 = vmatprep.subr.mxu0 0.0
      %2593 = vmatpush1.msra.mxu0 0.0
      %2594 = vmatprep.subr.mxu0 0.0
      %2595 = vmatpush1.msra.mxu0 0.0
      %2596 = vmatprep.subr.mxu0 0.0
      %2597 = vmatpush1.msra.mxu0 0.0
      %2598 = vmatprep.subr.mxu0 0.0
      %2599 = vmatpush1.msra.mxu0 0.0
      %2600 = vmatprep.subr.mxu0 0.0
      %2601 = vmatpush1.msra.mxu0 0.0
      %2602 = vmatprep.subr.mxu0 0.0
      %2603 = vmatpush1.msra.mxu0 0.0
      %2604 = vmatprep.subr.mxu0 0.0
      %2605 = vmatpush1.msra.mxu0 0.0
      %2606 = vmatprep.subr.mxu0 0.0
      %2607 = vmatpush1.msra.mxu0 %v2569
      %2608 = vmatprep.subr.mxu0 0.0
      %2609 = vmatpush1.msra.mxu0 %v2567
      %2610 = vmatprep.subr.mxu0 0.0
      %2611 = vmatpush2.msra.mxu0 0.0
      %2612 = vmatprep.subr.mxu0 0.0
      %2613 = vmatpush2.msra.mxu0 0.0
      %2614 = vmatprep.subr.mxu0 0.0
      %2615 = vmatpush2.msra.mxu0 0.0
      %2616 = vmatprep.subr.mxu0 0.0
      %2617 = vmatpush2.msra.mxu0 0.0
      %2618 = vmatprep.subr.mxu0 0.0
      %2619 = vmatpush2.msra.mxu0 0.0
      %2620 = vmatprep.subr.mxu0 0.0
      %2621 = vmatpush2.msra.mxu0 0.0
      %2622 = vmatprep.subr.mxu0 0.0
      %2623 = vmatpush2.msra.mxu0 0.0
      %2624 = vmatprep.subr.mxu0 0.0
      %2625 = vmatpush2.msra.mxu0 0.0
      %2626 = vmatprep.subr.mxu0 0.0
      %2627 = vmatpush2.msra.mxu0 0.0
      %2628 = vmatprep.subr.mxu0 0.0
      %2629 = vmatpush2.msra.mxu0 0.0
      %2630 = vmatprep.subr.mxu0 0.0
      %2631 = vmatpush2.msra.mxu0 0.0
      %2632 = vmatprep.subr.mxu0 0.0
      %2633 = vmatpush2.msra.mxu0 0.0
      %2634 = vmatprep.subr.mxu0 0.0
      %2635 = vmatpush2.msra.mxu0 0.0
      %2636 = vmatprep.subr.mxu0 0.0
      %2637 = vmatpush2.msra.mxu0 0.0
      %2638 = vmatprep.subr.mxu0 0.0
      %2639 = vmatpush2.msra.mxu0 0.0
      %2640 = vmatprep.subr.mxu0 0.0
      %2641 = vmatpush2.msra.mxu0 0.0
      %2642 = vmatprep.mubr.f32.mxu0 0.0
      %2643 = vmatmul.mubr.f32.gmra.mxu0 %v2573
      %v2644 = vpop.f32.mrf.mxu0
      %v2645 = vadd.f32 0.0, %v2644
      %v2646 = vpop.f32.mrf.mxu0
      %2647 = vmatprep.mubr.f32.mxu0 0.0
      %2648 = vmatmul.mubr.f32.gmra.mxu0 %v2576
      %v2649 = vpop.f32.mrf.mxu0
      %v2650 = vadd.f32 0.0, %v2649
      %v2651 = vpop.f32.mrf.mxu0
      %2652 = vdwg.mxu0
      %v2653 = vrot.slane %v739, 4
      %v2655 = vsel %vm1020, %v2645, 0
      %v2658 = vsel %vm1020, %v2650, 0
      %v2660 = vsel %vm1426, %v2653, 0
      %2662 = vmatprep.subr.mxu0 0.0
      %2663 = vmatpush1.msra.mxu0 0.0
      %2664 = vmatprep.subr.mxu0 0.0
      %2665 = vmatpush1.msra.mxu0 0.0
      %2666 = vmatprep.subr.mxu0 0.0
      %2667 = vmatpush1.msra.mxu0 0.0
      %2668 = vmatprep.subr.mxu0 0.0
      %2669 = vmatpush1.msra.mxu0 0.0
      %2670 = vmatprep.subr.mxu0 0.0
      %2671 = vmatpush1.msra.mxu0 0.0
      %2672 = vmatprep.subr.mxu0 0.0
      %2673 = vmatpush1.msra.mxu0 0.0
      %2674 = vmatprep.subr.mxu0 0.0
      %2675 = vmatpush1.msra.mxu0 0.0
      %2676 = vmatprep.subr.mxu0 0.0
      %2677 = vmatpush1.msra.mxu0 0.0
      %2678 = vmatprep.subr.mxu0 0.0
      %2679 = vmatpush1.msra.mxu0 0.0
      %2680 = vmatprep.subr.mxu0 0.0
      %2681 = vmatpush1.msra.mxu0 0.0
      %2682 = vmatprep.subr.mxu0 0.0
      %2683 = vmatpush1.msra.mxu0 0.0
      %2684 = vmatprep.subr.mxu0 0.0
      %2685 = vmatpush1.msra.mxu0 0.0
      %2686 = vmatprep.subr.mxu0 0.0
      %2687 = vmatpush1.msra.mxu0 0.0
      %2688 = vmatprep.subr.mxu0 0.0
      %2689 = vmatpush1.msra.mxu0 0.0
      %2690 = vmatprep.subr.mxu0 0.0
      %2691 = vmatpush1.msra.mxu0 0.0
      %2692 = vmatprep.subr.mxu0 0.0
      %2693 = vmatpush1.msra.mxu0 %v2660
      %2694 = vmatprep.subr.mxu0 0.0
      %2695 = vmatpush2.msra.mxu0 0.0
      %2696 = vmatprep.subr.mxu0 0.0
      %2697 = vmatpush2.msra.mxu0 0.0
      %2698 = vmatprep.subr.mxu0 0.0
      %2699 = vmatpush2.msra.mxu0 0.0
      %2700 = vmatprep.subr.mxu0 0.0
      %2701 = vmatpush2.msra.mxu0 0.0
      %2702 = vmatprep.subr.mxu0 0.0
      %2703 = vmatpush2.msra.mxu0 0.0
      %2704 = vmatprep.subr.mxu0 0.0
      %2705 = vmatpush2.msra.mxu0 0.0
      %2706 = vmatprep.subr.mxu0 0.0
      %2707 = vmatpush2.msra.mxu0 0.0
      %2708 = vmatprep.subr.mxu0 0.0
      %2709 = vmatpush2.msra.mxu0 0.0
      %2710 = vmatprep.subr.mxu0 0.0
      %2711 = vmatpush2.msra.mxu0 0.0
      %2712 = vmatprep.subr.mxu0 0.0
      %2713 = vmatpush2.msra.mxu0 0.0
      %2714 = vmatprep.subr.mxu0 0.0
      %2715 = vmatpush2.msra.mxu0 0.0
      %2716 = vmatprep.subr.mxu0 0.0
      %2717 = vmatpush2.msra.mxu0 0.0
      %2718 = vmatprep.subr.mxu0 0.0
      %2719 = vmatpush2.msra.mxu0 0.0
      %2720 = vmatprep.subr.mxu0 0.0
      %2721 = vmatpush2.msra.mxu0 0.0
      %2722 = vmatprep.subr.mxu0 0.0
      %2723 = vmatpush2.msra.mxu0 0.0
      %2724 = vmatprep.subr.mxu0 0.0
      %2725 = vmatpush2.msra.mxu0 0.0
      %2726 = vmatprep.mubr.f32.mxu0 0.0
      %2727 = vmatmul.mubr.f32.gmra.mxu0 %v2655
      %v2728 = vpop.f32.mrf.mxu0
      %v2729 = vadd.f32 0.0, %v2728
      %v2730 = vpop.f32.mrf.mxu0
      %2731 = vmatprep.mubr.f32.mxu0 0.0
      %2732 = vmatmul.mubr.f32.gmra.mxu0 %v2658
      %v2733 = vpop.f32.mrf.mxu0
      %v2734 = vadd.f32 0.0, %v2733
      %v2735 = vpop.f32.mrf.mxu0
      %2736 = vdwg.mxu0
      %v2737 = vadd.f32 %v2449, %v2729
      %v2738 = vadd.f32 %v2450, %v2734
      %2739 = vrot.lane.b32.xlu0 %v822, 104
      %v2740 = vpop.permute.xlu0 %2739
      %2741 = vrot.lane.b32.xlu0 %v827, 104
      %v2742 = vpop.permute.xlu0 %2741
      %2743 = vrot.lane.b32.xlu0 %v916, 104
      %v2744 = vpop.permute.xlu0 %2743
      %2745 = vrot.lane.b32.xlu0 %v921, 104
      %v2746 = vpop.permute.xlu0 %2745
      %v2747 = vsel %vm1020, %v2740, 0
      %v2749 = vsel %vm1020, %v2742, 0
      %v2751 = vsel %vm1020, %v2744, 0
      %v2753 = vsel %vm1020, %v2746, 0
      %2755 = vmatprep.subr.mxu0 0.0
      %2756 = vmatpush1.xpose.msra.mxu0 0.0
      %2757 = vmatprep.subr.mxu0 0.0
      %2758 = vmatpush1.xpose.msra.mxu0 0.0
      %2759 = vmatprep.subr.mxu0 0.0
      %2760 = vmatpush1.xpose.msra.mxu0 0.0
      %2761 = vmatprep.subr.mxu0 0.0
      %2762 = vmatpush1.xpose.msra.mxu0 0.0
      %2763 = vmatprep.subr.mxu0 0.0
      %2764 = vmatpush1.xpose.msra.mxu0 0.0
      %2765 = vmatprep.subr.mxu0 0.0
      %2766 = vmatpush1.xpose.msra.mxu0 0.0
      %2767 = vmatprep.subr.mxu0 0.0
      %2768 = vmatpush1.xpose.msra.mxu0 0.0
      %2769 = vmatprep.subr.mxu0 0.0
      %2770 = vmatpush1.xpose.msra.mxu0 0.0
      %2771 = vmatprep.subr.mxu0 0.0
      %2772 = vmatpush1.xpose.msra.mxu0 0.0
      %2773 = vmatprep.subr.mxu0 0.0
      %2774 = vmatpush1.xpose.msra.mxu0 0.0
      %2775 = vmatprep.subr.mxu0 0.0
      %2776 = vmatpush1.xpose.msra.mxu0 0.0
      %2777 = vmatprep.subr.mxu0 0.0
      %2778 = vmatpush1.xpose.msra.mxu0 0.0
      %2779 = vmatprep.subr.mxu0 0.0
      %2780 = vmatpush1.xpose.msra.mxu0 0.0
      %2781 = vmatprep.subr.mxu0 0.0
      %2782 = vmatpush1.xpose.msra.mxu0 0.0
      %2783 = vmatprep.subr.mxu0 0.0
      %2784 = vmatpush1.xpose.msra.mxu0 %v2753
      %2785 = vmatprep.subr.mxu0 0.0
      %2786 = vmatpush1.xpose.msra.mxu0 %v2751
      %2787 = vmatprep.subr.mxu0 0.0
      %2788 = vmatpush2.xpose.msra.mxu0 0.0
      %2789 = vmatprep.subr.mxu0 0.0
      %2790 = vmatpush2.xpose.msra.mxu0 0.0
      %2791 = vmatprep.subr.mxu0 0.0
      %2792 = vmatpush2.xpose.msra.mxu0 0.0
      %2793 = vmatprep.subr.mxu0 0.0
      %2794 = vmatpush2.xpose.msra.mxu0 0.0
      %2795 = vmatprep.subr.mxu0 0.0
      %2796 = vmatpush2.xpose.msra.mxu0 0.0
      %2797 = vmatprep.subr.mxu0 0.0
      %2798 = vmatpush2.xpose.msra.mxu0 0.0
      %2799 = vmatprep.subr.mxu0 0.0
      %2800 = vmatpush2.xpose.msra.mxu0 0.0
      %2801 = vmatprep.subr.mxu0 0.0
      %2802 = vmatpush2.xpose.msra.mxu0 0.0
      %2803 = vmatprep.subr.mxu0 0.0
      %2804 = vmatpush2.xpose.msra.mxu0 0.0
      %2805 = vmatprep.subr.mxu0 0.0
      %2806 = vmatpush2.xpose.msra.mxu0 0.0
      %2807 = vmatprep.subr.mxu0 0.0
      %2808 = vmatpush2.xpose.msra.mxu0 0.0
      %2809 = vmatprep.subr.mxu0 0.0
      %2810 = vmatpush2.xpose.msra.mxu0 0.0
      %2811 = vmatprep.subr.mxu0 0.0
      %2812 = vmatpush2.xpose.msra.mxu0 0.0
      %2813 = vmatprep.subr.mxu0 0.0
      %2814 = vmatpush2.xpose.msra.mxu0 0.0
      %2815 = vmatprep.subr.mxu0 0.0
      %2816 = vmatpush2.xpose.msra.mxu0 0.0
      %2817 = vmatprep.subr.mxu0 0.0
      %2818 = vmatpush2.xpose.msra.mxu0 0.0
      %2819 = vmatprep.mubr.f32.mxu0 0.0
      %2820 = vmatmul.mubr.f32.gmra.mxu0 %v2747
      %v2821 = vpop.f32.mrf.mxu0
      %v2822 = vadd.f32 0.0, %v2821
      %v2823 = vpop.f32.mrf.mxu0
      %2824 = vmatprep.mubr.f32.mxu0 0.0
      %2825 = vmatmul.mubr.f32.gmra.mxu0 %v2749
      %v2826 = vpop.f32.mrf.mxu0
      %v2827 = vadd.f32 0.0, %v2826
      %v2828 = vpop.f32.mrf.mxu0
      %2829 = vdwg.mxu0
      %v2830 = vmul.f32 %v2822, 0.5
      %v2831 = vmul.f32 %v2827, 0.5
      %v2832 = vsel %vm1110, %v2830, -inf
      %2833 = vmax.xlane.f32.xlu0 %v2832
      %v2834 = vpop.xlane.xlu0 %2833
      %v2835 = vsel %vm1110, %v2831, -inf
      %2836 = vmax.xlane.f32.xlu0 %v2835
      %v2837 = vpop.xlane.xlu0 %2836
      %v2838 = vsub.f32 %v2830, %v2834
      %v2839 = vsub.f32 %v2831, %v2837
      %v2840 = vmul.f32 %v2838, 1.442695
      %v2841 = vpow.pop %v2840
      %v2842 = vmul.f32 %v2839, 1.442695
      %v2843 = vpow.pop %v2842
      %v2844 = vsel %vm1110, %v2841, 0.0
      %2845 = vadd.xlane.f32.xlu0 %v2844
      %v2846 = vpop.xlane.xlu0 %2845
      %v2847 = vsel %vm1110, %v2843, 0.0
      %2848 = vadd.xlane.f32.xlu0 %v2847
      %v2849 = vpop.xlane.xlu0 %2848
      %v2850 = vrcp.pop %v2846
      %v2851 = vrcp.pop %v2849
      %v2852 = vmul.f32 %v2841, %v2850
      %v2853 = vmul.f32 %v2843, %v2851
      %2854 = vrot.lane.b32.xlu0 %v1012, 104
      %v2855 = vpop.permute.xlu0 %2854
      %2856 = vrot.lane.b32.xlu0 %v1017, 104
      %v2857 = vpop.permute.xlu0 %2856
      %v2861 = vsel %vm1110, %v2852, 0
      %v2864 = vsel %vm1110, %v2853, 0
      %2866 = vmatprep.subr.mxu0 0.0
      %2867 = vmatpush1.msra.mxu0 0.0
      %2868 = vmatprep.subr.mxu0 0.0
      %2869 = vmatpush1.msra.mxu0 0.0
      %2870 = vmatprep.subr.mxu0 0.0
      %2871 = vmatpush1.msra.mxu0 0.0
      %2872 = vmatprep.subr.mxu0 0.0
      %2873 = vmatpush1.msra.mxu0 0.0
      %2874 = vmatprep.subr.mxu0 0.0
      %2875 = vmatpush1.msra.mxu0 0.0
      %2876 = vmatprep.subr.mxu0 0.0
      %2877 = vmatpush1.msra.mxu0 0.0
      %2878 = vmatprep.subr.mxu0 0.0
      %2879 = vmatpush1.msra.mxu0 0.0
      %2880 = vmatprep.subr.mxu0 0.0
      %2881 = vmatpush1.msra.mxu0 0.0
      %2882 = vmatprep.subr.mxu0 0.0
      %2883 = vmatpush1.msra.mxu0 0.0
      %2884 = vmatprep.subr.mxu0 0.0
      %2885 = vmatpush1.msra.mxu0 0.0
      %2886 = vmatprep.subr.mxu0 0.0
      %2887 = vmatpush1.msra.mxu0 0.0
      %2888 = vmatprep.subr.mxu0 0.0
      %2889 = vmatpush1.msra.mxu0 0.0
      %2890 = vmatprep.subr.mxu0 0.0
      %2891 = vmatpush1.msra.mxu0 0.0
      %2892 = vmatprep.subr.mxu0 0.0
      %2893 = vmatpush1.msra.mxu0 0.0
      %2894 = vmatprep.subr.mxu0 0.0
      %2895 = vmatpush1.msra.mxu0 %v2857
      %2896 = vmatprep.subr.mxu0 0.0
      %2897 = vmatpush1.msra.mxu0 %v2855
      %2898 = vmatprep.subr.mxu0 0.0
      %2899 = vmatpush2.msra.mxu0 0.0
      %2900 = vmatprep.subr.mxu0 0.0
      %2901 = vmatpush2.msra.mxu0 0.0
      %2902 = vmatprep.subr.mxu0 0.0
      %2903 = vmatpush2.msra.mxu0 0.0
      %2904 = vmatprep.subr.mxu0 0.0
      %2905 = vmatpush2.msra.mxu0 0.0
      %2906 = vmatprep.subr.mxu0 0.0
      %2907 = vmatpush2.msra.mxu0 0.0
      %2908 = vmatprep.subr.mxu0 0.0
      %2909 = vmatpush2.msra.mxu0 0.0
      %2910 = vmatprep.subr.mxu0 0.0
      %2911 = vmatpush2.msra.mxu0 0.0
      %2912 = vmatprep.subr.mxu0 0.0
      %2913 = vmatpush2.msra.mxu0 0.0
      %2914 = vmatprep.subr.mxu0 0.0
      %2915 = vmatpush2.msra.mxu0 0.0
      %2916 = vmatprep.subr.mxu0 0.0
      %2917 = vmatpush2.msra.mxu0 0.0
      %2918 = vmatprep.subr.mxu0 0.0
      %2919 = vmatpush2.msra.mxu0 0.0
      %2920 = vmatprep.subr.mxu0 0.0
      %2921 = vmatpush2.msra.mxu0 0.0
      %2922 = vmatprep.subr.mxu0 0.0
      %2923 = vmatpush2.msra.mxu0 0.0
      %2924 = vmatprep.subr.mxu0 0.0
      %2925 = vmatpush2.msra.mxu0 0.0
      %2926 = vmatprep.subr.mxu0 0.0
      %2927 = vmatpush2.msra.mxu0 0.0
      %2928 = vmatprep.subr.mxu0 0.0
      %2929 = vmatpush2.msra.mxu0 0.0
      %2930 = vmatprep.mubr.f32.mxu0 0.0
      %2931 = vmatmul.mubr.f32.gmra.mxu0 %v2861
      %v2932 = vpop.f32.mrf.mxu0
      %v2933 = vadd.f32 0.0, %v2932
      %v2934 = vpop.f32.mrf.mxu0
      %2935 = vmatprep.mubr.f32.mxu0 0.0
      %2936 = vmatmul.mubr.f32.gmra.mxu0 %v2864
      %v2937 = vpop.f32.mrf.mxu0
      %v2938 = vadd.f32 0.0, %v2937
      %v2939 = vpop.f32.mrf.mxu0
      %2940 = vdwg.mxu0
      %v2942 = vsel %vm1020, %v2933, 0
      %v2945 = vsel %vm1020, %v2938, 0
      %v2948 = vsel %vm1426, %v740, 0
      %2950 = vmatprep.subr.mxu0 0.0
      %2951 = vmatpush1.msra.mxu0 0.0
      %2952 = vmatprep.subr.mxu0 0.0
      %2953 = vmatpush1.msra.mxu0 0.0
      %2954 = vmatprep.subr.mxu0 0.0
      %2955 = vmatpush1.msra.mxu0 0.0
      %2956 = vmatprep.subr.mxu0 0.0
      %2957 = vmatpush1.msra.mxu0 0.0
      %2958 = vmatprep.subr.mxu0 0.0
      %2959 = vmatpush1.msra.mxu0 0.0
      %2960 = vmatprep.subr.mxu0 0.0
      %2961 = vmatpush1.msra.mxu0 0.0
      %2962 = vmatprep.subr.mxu0 0.0
      %2963 = vmatpush1.msra.mxu0 0.0
      %2964 = vmatprep.subr.mxu0 0.0
      %2965 = vmatpush1.msra.mxu0 0.0
      %2966 = vmatprep.subr.mxu0 0.0
      %2967 = vmatpush1.msra.mxu0 0.0
      %2968 = vmatprep.subr.mxu0 0.0
      %2969 = vmatpush1.msra.mxu0 0.0
      %2970 = vmatprep.subr.mxu0 0.0
      %2971 = vmatpush1.msra.mxu0 0.0
      %2972 = vmatprep.subr.mxu0 0.0
      %2973 = vmatpush1.msra.mxu0 0.0
      %2974 = vmatprep.subr.mxu0 0.0
      %2975 = vmatpush1.msra.mxu0 0.0
      %2976 = vmatprep.subr.mxu0 0.0
      %2977 = vmatpush1.msra.mxu0 0.0
      %2978 = vmatprep.subr.mxu0 0.0
      %2979 = vmatpush1.msra.mxu0 0.0
      %2980 = vmatprep.subr.mxu0 0.0
      %2981 = vmatpush1.msra.mxu0 %v2948
      %2982 = vmatprep.subr.mxu0 0.0
      %2983 = vmatpush2.msra.mxu0 0.0
      %2984 = vmatprep.subr.mxu0 0.0
      %2985 = vmatpush2.msra.mxu0 0.0
      %2986 = vmatprep.subr.mxu0 0.0
      %2987 = vmatpush2.msra.mxu0 0.0
      %2988 = vmatprep.subr.mxu0 0.0
      %2989 = vmatpush2.msra.mxu0 0.0
      %2990 = vmatprep.subr.mxu0 0.0
      %2991 = vmatpush2.msra.mxu0 0.0
      %2992 = vmatprep.subr.mxu0 0.0
      %2993 = vmatpush2.msra.mxu0 0.0
      %2994 = vmatprep.subr.mxu0 0.0
      %2995 = vmatpush2.msra.mxu0 0.0
      %2996 = vmatprep.subr.mxu0 0.0
      %2997 = vmatpush2.msra.mxu0 0.0
      %2998 = vmatprep.subr.mxu0 0.0
      %2999 = vmatpush2.msra.mxu0 0.0
      %3000 = vmatprep.subr.mxu0 0.0
      %3001 = vmatpush2.msra.mxu0 0.0
      %3002 = vmatprep.subr.mxu0 0.0
      %3003 = vmatpush2.msra.mxu0 0.0
      %3004 = vmatprep.subr.mxu0 0.0
      %3005 = vmatpush2.msra.mxu0 0.0
      %3006 = vmatprep.subr.mxu0 0.0
      %3007 = vmatpush2.msra.mxu0 0.0
      %3008 = vmatprep.subr.mxu0 0.0
      %3009 = vmatpush2.msra.mxu0 0.0
      %3010 = vmatprep.subr.mxu0 0.0
      %3011 = vmatpush2.msra.mxu0 0.0
      %3012 = vmatprep.subr.mxu0 0.0
      %3013 = vmatpush2.msra.mxu0 0.0
      %3014 = vmatprep.mubr.f32.mxu0 0.0
      %3015 = vmatmul.mubr.f32.gmra.mxu0 %v2942
      %v3016 = vpop.f32.mrf.mxu0
      %v3017 = vadd.f32 0.0, %v3016
      %v3018 = vpop.f32.mrf.mxu0
      %3019 = vmatprep.mubr.f32.mxu0 0.0
      %3020 = vmatmul.mubr.f32.gmra.mxu0 %v2945
      %v3021 = vpop.f32.mrf.mxu0
      %v3022 = vadd.f32 0.0, %v3021
      %v3023 = vpop.f32.mrf.mxu0
      %3024 = vdwg.mxu0
      %v3025 = vadd.f32 %v2737, %v3017
      %v3026 = vadd.f32 %v2738, %v3022
      %3027 = vrot.lane.b32.xlu0 %v822, 100
      %v3028 = vpop.permute.xlu0 %3027
      %3029 = vrot.lane.b32.xlu0 %v827, 100
      %v3030 = vpop.permute.xlu0 %3029
      %3031 = vrot.lane.b32.xlu0 %v916, 100
      %v3032 = vpop.permute.xlu0 %3031
      %3033 = vrot.lane.b32.xlu0 %v921, 100
      %v3034 = vpop.permute.xlu0 %3033
      %v3035 = vsel %vm1020, %v3028, 0
      %v3037 = vsel %vm1020, %v3030, 0
      %v3039 = vsel %vm1020, %v3032, 0
      %v3041 = vsel %vm1020, %v3034, 0
      %3043 = vmatprep.subr.mxu0 0.0
      %3044 = vmatpush1.xpose.msra.mxu0 0.0
      %3045 = vmatprep.subr.mxu0 0.0
      %3046 = vmatpush1.xpose.msra.mxu0 0.0
      %3047 = vmatprep.subr.mxu0 0.0
      %3048 = vmatpush1.xpose.msra.mxu0 0.0
      %3049 = vmatprep.subr.mxu0 0.0
      %3050 = vmatpush1.xpose.msra.mxu0 0.0
      %3051 = vmatprep.subr.mxu0 0.0
      %3052 = vmatpush1.xpose.msra.mxu0 0.0
      %3053 = vmatprep.subr.mxu0 0.0
      %3054 = vmatpush1.xpose.msra.mxu0 0.0
      %3055 = vmatprep.subr.mxu0 0.0
      %3056 = vmatpush1.xpose.msra.mxu0 0.0
      %3057 = vmatprep.subr.mxu0 0.0
      %3058 = vmatpush1.xpose.msra.mxu0 0.0
      %3059 = vmatprep.subr.mxu0 0.0
      %3060 = vmatpush1.xpose.msra.mxu0 0.0
      %3061 = vmatprep.subr.mxu0 0.0
      %3062 = vmatpush1.xpose.msra.mxu0 0.0
      %3063 = vmatprep.subr.mxu0 0.0
      %3064 = vmatpush1.xpose.msra.mxu0 0.0
      %3065 = vmatprep.subr.mxu0 0.0
      %3066 = vmatpush1.xpose.msra.mxu0 0.0
      %3067 = vmatprep.subr.mxu0 0.0
      %3068 = vmatpush1.xpose.msra.mxu0 0.0
      %3069 = vmatprep.subr.mxu0 0.0
      %3070 = vmatpush1.xpose.msra.mxu0 0.0
      %3071 = vmatprep.subr.mxu0 0.0
      %3072 = vmatpush1.xpose.msra.mxu0 %v3041
      %3073 = vmatprep.subr.mxu0 0.0
      %3074 = vmatpush1.xpose.msra.mxu0 %v3039
      %3075 = vmatprep.subr.mxu0 0.0
      %3076 = vmatpush2.xpose.msra.mxu0 0.0
      %3077 = vmatprep.subr.mxu0 0.0
      %3078 = vmatpush2.xpose.msra.mxu0 0.0
      %3079 = vmatprep.subr.mxu0 0.0
      %3080 = vmatpush2.xpose.msra.mxu0 0.0
      %3081 = vmatprep.subr.mxu0 0.0
      %3082 = vmatpush2.xpose.msra.mxu0 0.0
      %3083 = vmatprep.subr.mxu0 0.0
      %3084 = vmatpush2.xpose.msra.mxu0 0.0
      %3085 = vmatprep.subr.mxu0 0.0
      %3086 = vmatpush2.xpose.msra.mxu0 0.0
      %3087 = vmatprep.subr.mxu0 0.0
      %3088 = vmatpush2.xpose.msra.mxu0 0.0
      %3089 = vmatprep.subr.mxu0 0.0
      %3090 = vmatpush2.xpose.msra.mxu0 0.0
      %3091 = vmatprep.subr.mxu0 0.0
      %3092 = vmatpush2.xpose.msra.mxu0 0.0
      %3093 = vmatprep.subr.mxu0 0.0
      %3094 = vmatpush2.xpose.msra.mxu0 0.0
      %3095 = vmatprep.subr.mxu0 0.0
      %3096 = vmatpush2.xpose.msra.mxu0 0.0
      %3097 = vmatprep.subr.mxu0 0.0
      %3098 = vmatpush2.xpose.msra.mxu0 0.0
      %3099 = vmatprep.subr.mxu0 0.0
      %3100 = vmatpush2.xpose.msra.mxu0 0.0
      %3101 = vmatprep.subr.mxu0 0.0
      %3102 = vmatpush2.xpose.msra.mxu0 0.0
      %3103 = vmatprep.subr.mxu0 0.0
      %3104 = vmatpush2.xpose.msra.mxu0 0.0
      %3105 = vmatprep.subr.mxu0 0.0
      %3106 = vmatpush2.xpose.msra.mxu0 0.0
      %3107 = vmatprep.mubr.f32.mxu0 0.0
      %3108 = vmatmul.mubr.f32.gmra.mxu0 %v3035
      %v3109 = vpop.f32.mrf.mxu0
      %v3110 = vadd.f32 0.0, %v3109
      %v3111 = vpop.f32.mrf.mxu0
      %3112 = vmatprep.mubr.f32.mxu0 0.0
      %3113 = vmatmul.mubr.f32.gmra.mxu0 %v3037
      %v3114 = vpop.f32.mrf.mxu0
      %v3115 = vadd.f32 0.0, %v3114
      %v3116 = vpop.f32.mrf.mxu0
      %3117 = vdwg.mxu0
      %v3118 = vmul.f32 %v3110, 0.5
      %v3119 = vmul.f32 %v3115, 0.5
      %v3120 = vsel %vm1110, %v3118, -inf
      %3121 = vmax.xlane.f32.xlu0 %v3120
      %v3122 = vpop.xlane.xlu0 %3121
      %v3123 = vsel %vm1110, %v3119, -inf
      %3124 = vmax.xlane.f32.xlu0 %v3123
      %v3125 = vpop.xlane.xlu0 %3124
      %v3126 = vsub.f32 %v3118, %v3122
      %v3127 = vsub.f32 %v3119, %v3125
      %v3128 = vmul.f32 %v3126, 1.442695
      %v3129 = vpow.pop %v3128
      %v3130 = vmul.f32 %v3127, 1.442695
      %v3131 = vpow.pop %v3130
      %v3132 = vsel %vm1110, %v3129, 0.0
      %3133 = vadd.xlane.f32.xlu0 %v3132
      %v3134 = vpop.xlane.xlu0 %3133
      %v3135 = vsel %vm1110, %v3131, 0.0
      %3136 = vadd.xlane.f32.xlu0 %v3135
      %v3137 = vpop.xlane.xlu0 %3136
      %v3138 = vrcp.pop %v3134
      %v3139 = vrcp.pop %v3137
      %v3140 = vmul.f32 %v3129, %v3138
      %v3141 = vmul.f32 %v3131, %v3139
      %3142 = vrot.lane.b32.xlu0 %v1012, 100
      %v3143 = vpop.permute.xlu0 %3142
      %3144 = vrot.lane.b32.xlu0 %v1017, 100
      %v3145 = vpop.permute.xlu0 %3144
      %v3149 = vsel %vm1110, %v3140, 0
      %v3152 = vsel %vm1110, %v3141, 0
      %3154 = vmatprep.subr.mxu0 0.0
      %3155 = vmatpush1.msra.mxu0 0.0
      %3156 = vmatprep.subr.mxu0 0.0
      %3157 = vmatpush1.msra.mxu0 0.0
      %3158 = vmatprep.subr.mxu0 0.0
      %3159 = vmatpush1.msra.mxu0 0.0
      %3160 = vmatprep.subr.mxu0 0.0
      %3161 = vmatpush1.msra.mxu0 0.0
      %3162 = vmatprep.subr.mxu0 0.0
      %3163 = vmatpush1.msra.mxu0 0.0
      %3164 = vmatprep.subr.mxu0 0.0
      %3165 = vmatpush1.msra.mxu0 0.0
      %3166 = vmatprep.subr.mxu0 0.0
      %3167 = vmatpush1.msra.mxu0 0.0
      %3168 = vmatprep.subr.mxu0 0.0
      %3169 = vmatpush1.msra.mxu0 0.0
      %3170 = vmatprep.subr.mxu0 0.0
      %3171 = vmatpush1.msra.mxu0 0.0
      %3172 = vmatprep.subr.mxu0 0.0
      %3173 = vmatpush1.msra.mxu0 0.0
      %3174 = vmatprep.subr.mxu0 0.0
      %3175 = vmatpush1.msra.mxu0 0.0
      %3176 = vmatprep.subr.mxu0 0.0
      %3177 = vmatpush1.msra.mxu0 0.0
      %3178 = vmatprep.subr.mxu0 0.0
      %3179 = vmatpush1.msra.mxu0 0.0
      %3180 = vmatprep.subr.mxu0 0.0
      %3181 = vmatpush1.msra.mxu0 0.0
      %3182 = vmatprep.subr.mxu0 0.0
      %3183 = vmatpush1.msra.mxu0 %v3145
      %3184 = vmatprep.subr.mxu0 0.0
      %3185 = vmatpush1.msra.mxu0 %v3143
      %3186 = vmatprep.subr.mxu0 0.0
      %3187 = vmatpush2.msra.mxu0 0.0
      %3188 = vmatprep.subr.mxu0 0.0
      %3189 = vmatpush2.msra.mxu0 0.0
      %3190 = vmatprep.subr.mxu0 0.0
      %3191 = vmatpush2.msra.mxu0 0.0
      %3192 = vmatprep.subr.mxu0 0.0
      %3193 = vmatpush2.msra.mxu0 0.0
      %3194 = vmatprep.subr.mxu0 0.0
      %3195 = vmatpush2.msra.mxu0 0.0
      %3196 = vmatprep.subr.mxu0 0.0
      %3197 = vmatpush2.msra.mxu0 0.0
      %3198 = vmatprep.subr.mxu0 0.0
      %3199 = vmatpush2.msra.mxu0 0.0
      %3200 = vmatprep.subr.mxu0 0.0
      %3201 = vmatpush2.msra.mxu0 0.0
      %3202 = vmatprep.subr.mxu0 0.0
      %3203 = vmatpush2.msra.mxu0 0.0
      %3204 = vmatprep.subr.mxu0 0.0
      %3205 = vmatpush2.msra.mxu0 0.0
      %3206 = vmatprep.subr.mxu0 0.0
      %3207 = vmatpush2.msra.mxu0 0.0
      %3208 = vmatprep.subr.mxu0 0.0
      %3209 = vmatpush2.msra.mxu0 0.0
      %3210 = vmatprep.subr.mxu0 0.0
      %3211 = vmatpush2.msra.mxu0 0.0
      %3212 = vmatprep.subr.mxu0 0.0
      %3213 = vmatpush2.msra.mxu0 0.0
      %3214 = vmatprep.subr.mxu0 0.0
      %3215 = vmatpush2.msra.mxu0 0.0
      %3216 = vmatprep.subr.mxu0 0.0
      %3217 = vmatpush2.msra.mxu0 0.0
      %3218 = vmatprep.mubr.f32.mxu0 0.0
      %3219 = vmatmul.mubr.f32.gmra.mxu0 %v3149
      %v3220 = vpop.f32.mrf.mxu0
      %v3221 = vadd.f32 0.0, %v3220
      %v3222 = vpop.f32.mrf.mxu0
      %3223 = vmatprep.mubr.f32.mxu0 0.0
      %3224 = vmatmul.mubr.f32.gmra.mxu0 %v3152
      %v3225 = vpop.f32.mrf.mxu0
      %v3226 = vadd.f32 0.0, %v3225
      %v3227 = vpop.f32.mrf.mxu0
      %3228 = vdwg.mxu0
      %v3229 = vrot.slane %v740, 4
      %v3231 = vsel %vm1020, %v3221, 0
      %v3234 = vsel %vm1020, %v3226, 0
      %v3236 = vsel %vm1426, %v3229, 0
      %3238 = vmatprep.subr.mxu0 0.0
      %3239 = vmatpush1.msra.mxu0 0.0
      %3240 = vmatprep.subr.mxu0 0.0
      %3241 = vmatpush1.msra.mxu0 0.0
      %3242 = vmatprep.subr.mxu0 0.0
      %3243 = vmatpush1.msra.mxu0 0.0
      %3244 = vmatprep.subr.mxu0 0.0
      %3245 = vmatpush1.msra.mxu0 0.0
      %3246 = vmatprep.subr.mxu0 0.0
      %3247 = vmatpush1.msra.mxu0 0.0
      %3248 = vmatprep.subr.mxu0 0.0
      %3249 = vmatpush1.msra.mxu0 0.0
      %3250 = vmatprep.subr.mxu0 0.0
      %3251 = vmatpush1.msra.mxu0 0.0
      %3252 = vmatprep.subr.mxu0 0.0
      %3253 = vmatpush1.msra.mxu0 0.0
      %3254 = vmatprep.subr.mxu0 0.0
      %3255 = vmatpush1.msra.mxu0 0.0
      %3256 = vmatprep.subr.mxu0 0.0
      %3257 = vmatpush1.msra.mxu0 0.0
      %3258 = vmatprep.subr.mxu0 0.0
      %3259 = vmatpush1.msra.mxu0 0.0
      %3260 = vmatprep.subr.mxu0 0.0
      %3261 = vmatpush1.msra.mxu0 0.0
      %3262 = vmatprep.subr.mxu0 0.0
      %3263 = vmatpush1.msra.mxu0 0.0
      %3264 = vmatprep.subr.mxu0 0.0
      %3265 = vmatpush1.msra.mxu0 0.0
      %3266 = vmatprep.subr.mxu0 0.0
      %3267 = vmatpush1.msra.mxu0 0.0
      %3268 = vmatprep.subr.mxu0 0.0
      %3269 = vmatpush1.msra.mxu0 %v3236
      %3270 = vmatprep.subr.mxu0 0.0
      %3271 = vmatpush2.msra.mxu0 0.0
      %3272 = vmatprep.subr.mxu0 0.0
      %3273 = vmatpush2.msra.mxu0 0.0
      %3274 = vmatprep.subr.mxu0 0.0
      %3275 = vmatpush2.msra.mxu0 0.0
      %3276 = vmatprep.subr.mxu0 0.0
      %3277 = vmatpush2.msra.mxu0 0.0
      %3278 = vmatprep.subr.mxu0 0.0
      %3279 = vmatpush2.msra.mxu0 0.0
      %3280 = vmatprep.subr.mxu0 0.0
      %3281 = vmatpush2.msra.mxu0 0.0
      %3282 = vmatprep.subr.mxu0 0.0
      %3283 = vmatpush2.msra.mxu0 0.0
      %3284 = vmatprep.subr.mxu0 0.0
      %3285 = vmatpush2.msra.mxu0 0.0
      %3286 = vmatprep.subr.mxu0 0.0
      %3287 = vmatpush2.msra.mxu0 0.0
      %3288 = vmatprep.subr.mxu0 0.0
      %3289 = vmatpush2.msra.mxu0 0.0
      %3290 = vmatprep.subr.mxu0 0.0
      %3291 = vmatpush2.msra.mxu0 0.0
      %3292 = vmatprep.subr.mxu0 0.0
      %3293 = vmatpush2.msra.mxu0 0.0
      %3294 = vmatprep.subr.mxu0 0.0
      %3295 = vmatpush2.msra.mxu0 0.0
      %3296 = vmatprep.subr.mxu0 0.0
      %3297 = vmatpush2.msra.mxu0 0.0
      %3298 = vmatprep.subr.mxu0 0.0
      %3299 = vmatpush2.msra.mxu0 0.0
      %3300 = vmatprep.subr.mxu0 0.0
      %3301 = vmatpush2.msra.mxu0 0.0
      %3302 = vmatprep.mubr.f32.mxu0 0.0
      %3303 = vmatmul.mubr.f32.gmra.mxu0 %v3231
      %v3304 = vpop.f32.mrf.mxu0
      %v3305 = vadd.f32 0.0, %v3304
      %v3306 = vpop.f32.mrf.mxu0
      %3307 = vmatprep.mubr.f32.mxu0 0.0
      %3308 = vmatmul.mubr.f32.gmra.mxu0 %v3234
      %v3309 = vpop.f32.mrf.mxu0
      %v3310 = vadd.f32 0.0, %v3309
      %v3311 = vpop.f32.mrf.mxu0
      %3312 = vdwg.mxu0
      %v3313 = vadd.f32 %v3025, %v3305
      %v3314 = vadd.f32 %v3026, %v3310
      %v3315 = vadd.f32 %v721, %v3313
      %v3316 = vadd.f32 %v722, %v3314
      %v3318 = vlaneseq
      %v3319 = vshrl.u32 %v3318, 7
      %v3320 = vsub.s32 0, %v3319
      %v3321 = vrot.slane %v741, %v3320
      %v3323 = vadd.f32 %v3315, %v3321
      %v3324 = vadd.f32 %v3316, %v3321
      %v3325 = vld [vmem:[%s18] sm:$0x1]
      %v3326 = vld [vmem:[%s19] sm:$0x1]
      %v3327 = vsel %vm748, %v3323, 0.0
      %3328 = vadd.xlane.f32.xlu0 %v3327
      %v3329 = vpop.xlane.xlu0 %3328
      %v3330 = vsel %vm748, %v3324, 0.0
      %3331 = vadd.xlane.f32.xlu0 %v3330
      %v3332 = vpop.xlane.xlu0 %3331
      %v3333 = vrcp.pop 32.0
      %v3334 = vmul.f32 %v3329, %v3333
      %v3335 = vmul.f32 %v3332, %v3333
      %v3336 = vsub.f32 %v3323, %v3334
      %v3337 = vsub.f32 %v3324, %v3335
      %v3338 = vmul.f32 %v3336, %v3336
      %v3339 = vmul.f32 %v3337, %v3337
      %v3340 = vsel %vm748, %v3338, 0.0
      %3341 = vadd.xlane.f32.xlu0 %v3340
      %v3342 = vpop.xlane.xlu0 %3341
      %v3343 = vsel %vm748, %v3339, 0.0
      %3344 = vadd.xlane.f32.xlu0 %v3343
      %v3345 = vpop.xlane.xlu0 %3344
      %v3346 = vmul.f32 %v3342, %v3333
      %v3347 = vmul.f32 %v3345, %v3333
      %v3348 = vadd.f32 %v3346, 1e-05
      %v3349 = vadd.f32 %v3347, 1e-05
      %v3350 = vrsqrt.pop %v3348
      %v3351 = vrsqrt.pop %v3349
      %v3352 = vmul.f32 %v3336, %v3350
      %v3353 = vmul.f32 %v3337, %v3351
      %v3354 = vlaneseq
      %v3355 = vshrl.u32 %v3354, 7
      %v3356 = vsub.s32 0, %v3355
      %v3357 = vrot.slane %v3325, %v3356
      %v3358 = vmul.f32 %v3352, %v3357
      %v3359 = vmul.f32 %v3353, %v3357
      %v3360 = vlaneseq
      %v3361 = vshrl.u32 %v3360, 7
      %v3362 = vsub.s32 0, %v3361
      %v3363 = vrot.slane %v3326, %v3362
      %v3364 = vadd.f32 %v3358, %v3363
      %v3365 = vadd.f32 %v3359, %v3363
      %v3366 = vadd.f32 %v3364, %v727
      %v3367 = vadd.f32 %v3365, %v728
      %v3368 = vadd.f32 %v723, %v729
      %v3369 = vld [vmem:[%s10] sm:$0xff]
      %v3370 = vld [vmem:[%s10 + $0x8] sm:$0xff]
      %v3371 = vld [vmem:[%s10 + $0x10] sm:$0xff]
      %v3372 = vld [vmem:[%s10 + $0x18] sm:$0xff]
      %v3373 = vld [vmem:[%s11] sm:$0x1]
      %v3374 = vld [vmem:[%s12] sm:$0xff]
      %v3375 = vld [vmem:[%s12 + $0x8] sm:$0xff]
      %v3376 = vld [vmem:[%s12 + $0x10] sm:$0xff]
      %v3377 = vld [vmem:[%s12 + $0x18] sm:$0xff]
      %v3378 = vld [vmem:[%s13] sm:$0x1]
      %v3380 = vlaneseq
      %v3381 = vshrl.u32 %v3380, 7
      %v3382 = vsub.s32 0, %v3381
      %v3383 = vrot.slane %v3373, %v3382
      %v3386 = vsel %vm748, %v3366, 0
      %v3389 = vsel %vm748, %v3367, 0
      %3391 = vmatprep.subr.mxu0 0.0
      %3392 = vmatpush1.msra.mxu0 0.0
      %3393 = vmatprep.subr.mxu0 0.0
      %3394 = vmatpush1.msra.mxu0 0.0
      %3395 = vmatprep.subr.mxu0 0.0
      %3396 = vmatpush1.msra.mxu0 0.0
      %3397 = vmatprep.subr.mxu0 0.0
      %3398 = vmatpush1.msra.mxu0 0.0
      %3399 = vmatprep.subr.mxu0 0.0
      %3400 = vmatpush1.msra.mxu0 0.0
      %3401 = vmatprep.subr.mxu0 0.0
      %3402 = vmatpush1.msra.mxu0 0.0
      %3403 = vmatprep.subr.mxu0 0.0
      %3404 = vmatpush1.msra.mxu0 0.0
      %3405 = vmatprep.subr.mxu0 0.0
      %3406 = vmatpush1.msra.mxu0 0.0
      %3407 = vmatprep.subr.mxu0 0.0
      %3408 = vmatpush1.msra.mxu0 0.0
      %3409 = vmatprep.subr.mxu0 0.0
      %3410 = vmatpush1.msra.mxu0 0.0
      %3411 = vmatprep.subr.mxu0 0.0
      %3412 = vmatpush1.msra.mxu0 0.0
      %3413 = vmatprep.subr.mxu0 0.0
      %3414 = vmatpush1.msra.mxu0 0.0
      %3415 = vmatprep.subr.mxu0 0.0
      %3416 = vmatpush1.msra.mxu0 %v3372
      %3417 = vmatprep.subr.mxu0 0.0
      %3418 = vmatpush1.msra.mxu0 %v3371
      %3419 = vmatprep.subr.mxu0 0.0
      %3420 = vmatpush1.msra.mxu0 %v3370
      %3421 = vmatprep.subr.mxu0 0.0
      %3422 = vmatpush1.msra.mxu0 %v3369
      %3423 = vmatprep.subr.mxu0 0.0
      %3424 = vmatpush2.msra.mxu0 0.0
      %3425 = vmatprep.subr.mxu0 0.0
      %3426 = vmatpush2.msra.mxu0 0.0
      %3427 = vmatprep.subr.mxu0 0.0
      %3428 = vmatpush2.msra.mxu0 0.0
      %3429 = vmatprep.subr.mxu0 0.0
      %3430 = vmatpush2.msra.mxu0 0.0
      %3431 = vmatprep.subr.mxu0 0.0
      %3432 = vmatpush2.msra.mxu0 0.0
      %3433 = vmatprep.subr.mxu0 0.0
      %3434 = vmatpush2.msra.mxu0 0.0
      %3435 = vmatprep.subr.mxu0 0.0
      %3436 = vmatpush2.msra.mxu0 0.0
      %3437 = vmatprep.subr.mxu0 0.0
      %3438 = vmatpush2.msra.mxu0 0.0
      %3439 = vmatprep.subr.mxu0 0.0
      %3440 = vmatpush2.msra.mxu0 0.0
      %3441 = vmatprep.subr.mxu0 0.0
      %3442 = vmatpush2.msra.mxu0 0.0
      %3443 = vmatprep.subr.mxu0 0.0
      %3444 = vmatpush2.msra.mxu0 0.0
      %3445 = vmatprep.subr.mxu0 0.0
      %3446 = vmatpush2.msra.mxu0 0.0
      %3447 = vmatprep.subr.mxu0 0.0
      %3448 = vmatpush2.msra.mxu0 0.0
      %3449 = vmatprep.subr.mxu0 0.0
      %3450 = vmatpush2.msra.mxu0 0.0
      %3451 = vmatprep.subr.mxu0 0.0
      %3452 = vmatpush2.msra.mxu0 0.0
      %3453 = vmatprep.subr.mxu0 0.0
      %3454 = vmatpush2.msra.mxu0 0.0
      %3455 = vmatprep.mubr.f32.mxu0 0.0
      %3456 = vmatmul.mubr.f32.gmra.mxu0 %v3386
      %v3457 = vpop.f32.mrf.mxu0
      %v3458 = vadd.f32 %v3383, %v3457
      %v3459 = vpop.f32.mrf.mxu0
      %3460 = vmatprep.mubr.f32.mxu0 0.0
      %3461 = vmatmul.mubr.f32.gmra.mxu0 %v3389
      %v3462 = vpop.f32.mrf.mxu0
      %v3463 = vadd.f32 %v3383, %v3462
      %v3464 = vpop.f32.mrf.mxu0
      %3465 = vdwg.mxu0
      %3470 = vrot.lane.b32.xlu0 %v3369, 96
      %v3471 = vpop.permute.xlu0 %3470
      %3472 = vrot.lane.b32.xlu0 %v3370, 96
      %v3473 = vpop.permute.xlu0 %3472
      %3474 = vrot.lane.b32.xlu0 %v3371, 96
      %v3475 = vpop.permute.xlu0 %3474
      %3476 = vrot.lane.b32.xlu0 %v3372, 96
      %v3477 = vpop.permute.xlu0 %3476
      %3482 = vrot.lane.b32.xlu0 %v3383, 96
      %v3483 = vpop.permute.xlu0 %3482
      %v3486 = vsel %vm748, %v3368, 0
      %3488 = vmatprep.subr.mxu0 0.0
      %3489 = vmatpush1.msra.mxu0 0.0
      %3490 = vmatprep.subr.mxu0 0.0
      %3491 = vmatpush1.msra.mxu0 0.0
      %3492 = vmatprep.subr.mxu0 0.0
      %3493 = vmatpush1.msra.mxu0 0.0
      %3494 = vmatprep.subr.mxu0 0.0
      %3495 = vmatpush1.msra.mxu0 0.0
      %3496 = vmatprep.subr.mxu0 0.0
      %3497 = vmatpush1.msra.mxu0 0.0
      %3498 = vmatprep.subr.mxu0 0.0
      %3499 = vmatpush1.msra.mxu0 0.0
      %3500 = vmatprep.subr.mxu0 0.0
      %3501 = vmatpush1.msra.mxu0 0.0
      %3502 = vmatprep.subr.mxu0 0.0
      %3503 = vmatpush1.msra.mxu0 0.0
      %3504 = vmatprep.subr.mxu0 0.0
      %3505 = vmatpush1.msra.mxu0 0.0
      %3506 = vmatprep.subr.mxu0 0.0
      %3507 = vmatpush1.msra.mxu0 0.0
      %3508 = vmatprep.subr.mxu0 0.0
      %3509 = vmatpush1.msra.mxu0 0.0
      %3510 = vmatprep.subr.mxu0 0.0
      %3511 = vmatpush1.msra.mxu0 0.0
      %3512 = vmatprep.subr.mxu0 0.0
      %3513 = vmatpush1.msra.mxu0 %v3477
      %3514 = vmatprep.subr.mxu0 0.0
      %3515 = vmatpush1.msra.mxu0 %v3475
      %3516 = vmatprep.subr.mxu0 0.0
      %3517 = vmatpush1.msra.mxu0 %v3473
      %3518 = vmatprep.subr.mxu0 0.0
      %3519 = vmatpush1.msra.mxu0 %v3471
      %3520 = vmatprep.subr.mxu0 0.0
      %3521 = vmatpush2.msra.mxu0 0.0
      %3522 = vmatprep.subr.mxu0 0.0
      %3523 = vmatpush2.msra.mxu0 0.0
      %3524 = vmatprep.subr.mxu0 0.0
      %3525 = vmatpush2.msra.mxu0 0.0
      %3526 = vmatprep.subr.mxu0 0.0
      %3527 = vmatpush2.msra.mxu0 0.0
      %3528 = vmatprep.subr.mxu0 0.0
      %3529 = vmatpush2.msra.mxu0 0.0
      %3530 = vmatprep.subr.mxu0 0.0
      %3531 = vmatpush2.msra.mxu0 0.0
      %3532 = vmatprep.subr.mxu0 0.0
      %3533 = vmatpush2.msra.mxu0 0.0
      %3534 = vmatprep.subr.mxu0 0.0
      %3535 = vmatpush2.msra.mxu0 0.0
      %3536 = vmatprep.subr.mxu0 0.0
      %3537 = vmatpush2.msra.mxu0 0.0
      %3538 = vmatprep.subr.mxu0 0.0
      %3539 = vmatpush2.msra.mxu0 0.0
      %3540 = vmatprep.subr.mxu0 0.0
      %3541 = vmatpush2.msra.mxu0 0.0
      %3542 = vmatprep.subr.mxu0 0.0
      %3543 = vmatpush2.msra.mxu0 0.0
      %3544 = vmatprep.subr.mxu0 0.0
      %3545 = vmatpush2.msra.mxu0 0.0
      %3546 = vmatprep.subr.mxu0 0.0
      %3547 = vmatpush2.msra.mxu0 0.0
      %3548 = vmatprep.subr.mxu0 0.0
      %3549 = vmatpush2.msra.mxu0 0.0
      %3550 = vmatprep.subr.mxu0 0.0
      %3551 = vmatpush2.msra.mxu0 0.0
      %3552 = vmatprep.mubr.f32.mxu0 0.0
      %3553 = vmatmul.mubr.f32.gmra.mxu0 %v3486
      %v3554 = vpop.f32.mrf.mxu0
      %v3555 = vadd.f32 %v3483, %v3554
      %v3556 = vpop.f32.mrf.mxu0
      %3557 = vdwg.mxu0
      %3558 = vrot.lane.b32.xlu0 %v3369, 64
      %v3559 = vpop.permute.xlu0 %3558
      %3560 = vrot.lane.b32.xlu0 %v3370, 64
      %v3561 = vpop.permute.xlu0 %3560
      %3562 = vrot.lane.b32.xlu0 %v3371, 64
      %v3563 = vpop.permute.xlu0 %3562
      %3564 = vrot.lane.b32.xlu0 %v3372, 64
      %v3565 = vpop.permute.xlu0 %3564
      %3570 = vrot.lane.b32.xlu0 %v3383, 64
      %v3571 = vpop.permute.xlu0 %3570
      %v3574 = vsel %vm748, %v724, 0
      %3576 = vmatprep.subr.mxu0 0.0
      %3577 = vmatpush1.msra.mxu0 0.0
      %3578 = vmatprep.subr.mxu0 0.0
      %3579 = vmatpush1.msra.mxu0 0.0
      %3580 = vmatprep.subr.mxu0 0.0
      %3581 = vmatpush1.msra.mxu0 0.0
      %3582 = vmatprep.subr.mxu0 0.0
      %3583 = vmatpush1.msra.mxu0 0.0
      %3584 = vmatprep.subr.mxu0 0.0
      %3585 = vmatpush1.msra.mxu0 0.0
      %3586 = vmatprep.subr.mxu0 0.0
      %3587 = vmatpush1.msra.mxu0 0.0
      %3588 = vmatprep.subr.mxu0 0.0
      %3589 = vmatpush1.msra.mxu0 0.0
      %3590 = vmatprep.subr.mxu0 0.0
      %3591 = vmatpush1.msra.mxu0 0.0
      %3592 = vmatprep.subr.mxu0 0.0
      %3593 = vmatpush1.msra.mxu0 0.0
      %3594 = vmatprep.subr.mxu0 0.0
      %3595 = vmatpush1.msra.mxu0 0.0
      %3596 = vmatprep.subr.mxu0 0.0
      %3597 = vmatpush1.msra.mxu0 0.0
      %3598 = vmatprep.subr.mxu0 0.0
      %3599 = vmatpush1.msra.mxu0 0.0
      %3600 = vmatprep.subr.mxu0 0.0
      %3601 = vmatpush1.msra.mxu0 %v3565
      %3602 = vmatprep.subr.mxu0 0.0
      %3603 = vmatpush1.msra.mxu0 %v3563
      %3604 = vmatprep.subr.mxu0 0.0
      %3605 = vmatpush1.msra.mxu0 %v3561
      %3606 = vmatprep.subr.mxu0 0.0
      %3607 = vmatpush1.msra.mxu0 %v3559
      %3608 = vmatprep.subr.mxu0 0.0
      %3609 = vmatpush2.msra.mxu0 0.0
      %3610 = vmatprep.subr.mxu0 0.0
      %3611 = vmatpush2.msra.mxu0 0.0
      %3612 = vmatprep.subr.mxu0 0.0
      %3613 = vmatpush2.msra.mxu0 0.0
      %3614 = vmatprep.subr.mxu0 0.0
      %3615 = vmatpush2.msra.mxu0 0.0
      %3616 = vmatprep.subr.mxu0 0.0
      %3617 = vmatpush2.msra.mxu0 0.0
      %3618 = vmatprep.subr.mxu0 0.0
      %3619 = vmatpush2.msra.mxu0 0.0
      %3620 = vmatprep.subr.mxu0 0.0
      %3621 = vmatpush2.msra.mxu0 0.0
      %3622 = vmatprep.subr.mxu0 0.0
      %3623 = vmatpush2.msra.mxu0 0.0
      %3624 = vmatprep.subr.mxu0 0.0
      %3625 = vmatpush2.msra.mxu0 0.0
      %3626 = vmatprep.subr.mxu0 0.0
      %3627 = vmatpush2.msra.mxu0 0.0
      %3628 = vmatprep.subr.mxu0 0.0
      %3629 = vmatpush2.msra.mxu0 0.0
      %3630 = vmatprep.subr.mxu0 0.0
      %3631 = vmatpush2.msra.mxu0 0.0
      %3632 = vmatprep.subr.mxu0 0.0
      %3633 = vmatpush2.msra.mxu0 0.0
      %3634 = vmatprep.subr.mxu0 0.0
      %3635 = vmatpush2.msra.mxu0 0.0
      %3636 = vmatprep.subr.mxu0 0.0
      %3637 = vmatpush2.msra.mxu0 0.0
      %3638 = vmatprep.subr.mxu0 0.0
      %3639 = vmatpush2.msra.mxu0 0.0
      %3640 = vmatprep.mubr.f32.mxu0 0.0
      %3641 = vmatmul.mubr.f32.gmra.mxu0 %v3574
      %v3642 = vpop.f32.mrf.mxu0
      %v3643 = vadd.f32 %v3571, %v3642
      %v3644 = vpop.f32.mrf.mxu0
      %3645 = vdwg.mxu0
      %v3647 = vsel %vm1020, %v3458, 0
      %v3650 = vsel %vm1020, %v3463, 0
      %v3653 = vsel %vm1020, %v3555, 0
      %3655 = vmatprep.subr.mxu0 0.0
      %3656 = vmatpush1.xpose.msra.mxu0 0.0
      %3657 = vmatprep.subr.mxu0 0.0
      %3658 = vmatpush1.xpose.msra.mxu0 0.0
      %3659 = vmatprep.subr.mxu0 0.0
      %3660 = vmatpush1.xpose.msra.mxu0 0.0
      %3661 = vmatprep.subr.mxu0 0.0
      %3662 = vmatpush1.xpose.msra.mxu0 0.0
      %3663 = vmatprep.subr.mxu0 0.0
      %3664 = vmatpush1.xpose.msra.mxu0 0.0
      %3665 = vmatprep.subr.mxu0 0.0
      %3666 = vmatpush1.xpose.msra.mxu0 0.0
      %3667 = vmatprep.subr.mxu0 0.0
      %3668 = vmatpush1.xpose.msra.mxu0 0.0
      %3669 = vmatprep.subr.mxu0 0.0
      %3670 = vmatpush1.xpose.msra.mxu0 0.0
      %3671 = vmatprep.subr.mxu0 0.0
      %3672 = vmatpush1.xpose.msra.mxu0 0.0
      %3673 = vmatprep.subr.mxu0 0.0
      %3674 = vmatpush1.xpose.msra.mxu0 0.0
      %3675 = vmatprep.subr.mxu0 0.0
      %3676 = vmatpush1.xpose.msra.mxu0 0.0
      %3677 = vmatprep.subr.mxu0 0.0
      %3678 = vmatpush1.xpose.msra.mxu0 0.0
      %3679 = vmatprep.subr.mxu0 0.0
      %3680 = vmatpush1.xpose.msra.mxu0 0.0
      %3681 = vmatprep.subr.mxu0 0.0
      %3682 = vmatpush1.xpose.msra.mxu0 0.0
      %3683 = vmatprep.subr.mxu0 0.0
      %3684 = vmatpush1.xpose.msra.mxu0 0.0
      %3685 = vmatprep.subr.mxu0 0.0
      %3686 = vmatpush1.xpose.msra.mxu0 %v3653
      %3687 = vmatprep.subr.mxu0 0.0
      %3688 = vmatpush2.xpose.msra.mxu0 0.0
      %3689 = vmatprep.subr.mxu0 0.0
      %3690 = vmatpush2.xpose.msra.mxu0 0.0
      %3691 = vmatprep.subr.mxu0 0.0
      %3692 = vmatpush2.xpose.msra.mxu0 0.0
      %3693 = vmatprep.subr.mxu0 0.0
      %3694 = vmatpush2.xpose.msra.mxu0 0.0
      %3695 = vmatprep.subr.mxu0 0.0
      %3696 = vmatpush2.xpose.msra.mxu0 0.0
      %3697 = vmatprep.subr.mxu0 0.0
      %3698 = vmatpush2.xpose.msra.mxu0 0.0
      %3699 = vmatprep.subr.mxu0 0.0
      %3700 = vmatpush2.xpose.msra.mxu0 0.0
      %3701 = vmatprep.subr.mxu0 0.0
      %3702 = vmatpush2.xpose.msra.mxu0 0.0
      %3703 = vmatprep.subr.mxu0 0.0
      %3704 = vmatpush2.xpose.msra.mxu0 0.0
      %3705 = vmatprep.subr.mxu0 0.0
      %3706 = vmatpush2.xpose.msra.mxu0 0.0
      %3707 = vmatprep.subr.mxu0 0.0
      %3708 = vmatpush2.xpose.msra.mxu0 0.0
      %3709 = vmatprep.subr.mxu0 0.0
      %3710 = vmatpush2.xpose.msra.mxu0 0.0
      %3711 = vmatprep.subr.mxu0 0.0
      %3712 = vmatpush2.xpose.msra.mxu0 0.0
      %3713 = vmatprep.subr.mxu0 0.0
      %3714 = vmatpush2.xpose.msra.mxu0 0.0
      %3715 = vmatprep.subr.mxu0 0.0
      %3716 = vmatpush2.xpose.msra.mxu0 0.0
      %3717 = vmatprep.subr.mxu0 0.0
      %3718 = vmatpush2.xpose.msra.mxu0 0.0
      %3719 = vmatprep.mubr.f32.mxu0 0.0
      %3720 = vmatmul.mubr.f32.gmra.mxu0 %v3647
      %v3721 = vpop.f32.mrf.mxu0
      %v3722 = vadd.f32 0.0, %v3721
      %v3723 = vpop.f32.mrf.mxu0
      %3724 = vmatprep.mubr.f32.mxu0 0.0
      %3725 = vmatmul.mubr.f32.gmra.mxu0 %v3650
      %v3726 = vpop.f32.mrf.mxu0
      %v3727 = vadd.f32 0.0, %v3726
      %v3728 = vpop.f32.mrf.mxu0
      %3729 = vdwg.mxu0
      %v3730 = vmul.f32 %v3722, 0.5
      %v3731 = vmul.f32 %v3727, 0.5
      %vm3732 = vcmask 64512
      %v3733 = vsel %vm3732, %v3730, -inf
      %3734 = vmax.xlane.f32.xlu0 %v3733
      %v3735 = vpop.xlane.xlu0 %3734
      %v3736 = vsel %vm3732, %v3731, -inf
      %3737 = vmax.xlane.f32.xlu0 %v3736
      %v3738 = vpop.xlane.xlu0 %3737
      %v3739 = vsub.f32 %v3730, %v3735
      %v3740 = vsub.f32 %v3731, %v3738
      %v3741 = vmul.f32 %v3739, 1.442695
      %v3742 = vpow.pop %v3741
      %v3743 = vmul.f32 %v3740, 1.442695
      %v3744 = vpow.pop %v3743
      %v3745 = vsel %vm3732, %v3742, 0.0
      %3746 = vadd.xlane.f32.xlu0 %v3745
      %v3747 = vpop.xlane.xlu0 %3746
      %v3748 = vsel %vm3732, %v3744, 0.0
      %3749 = vadd.xlane.f32.xlu0 %v3748
      %v3750 = vpop.xlane.xlu0 %3749
      %v3751 = vrcp.pop %v3747
      %v3752 = vrcp.pop %v3750
      %v3753 = vmul.f32 %v3742, %v3751
      %v3754 = vmul.f32 %v3744, %v3752
      %v3756 = vsel %vm3732, %v3753, 0
      %v3759 = vsel %vm3732, %v3754, 0
      %3761 = vmatprep.subr.mxu0 0.0
      %3762 = vmatpush1.msra.mxu0 0.0
      %3763 = vmatprep.subr.mxu0 0.0
      %3764 = vmatpush1.msra.mxu0 0.0
      %3765 = vmatprep.subr.mxu0 0.0
      %3766 = vmatpush1.msra.mxu0 0.0
      %3767 = vmatprep.subr.mxu0 0.0
      %3768 = vmatpush1.msra.mxu0 0.0
      %3769 = vmatprep.subr.mxu0 0.0
      %3770 = vmatpush1.msra.mxu0 0.0
      %3771 = vmatprep.subr.mxu0 0.0
      %3772 = vmatpush1.msra.mxu0 0.0
      %3773 = vmatprep.subr.mxu0 0.0
      %3774 = vmatpush1.msra.mxu0 0.0
      %3775 = vmatprep.subr.mxu0 0.0
      %3776 = vmatpush1.msra.mxu0 0.0
      %3777 = vmatprep.subr.mxu0 0.0
      %3778 = vmatpush1.msra.mxu0 0.0
      %3779 = vmatprep.subr.mxu0 0.0
      %3780 = vmatpush1.msra.mxu0 0.0
      %3781 = vmatprep.subr.mxu0 0.0
      %3782 = vmatpush1.msra.mxu0 0.0
      %3783 = vmatprep.subr.mxu0 0.0
      %3784 = vmatpush1.msra.mxu0 0.0
      %3785 = vmatprep.subr.mxu0 0.0
      %3786 = vmatpush1.msra.mxu0 0.0
      %3787 = vmatprep.subr.mxu0 0.0
      %3788 = vmatpush1.msra.mxu0 0.0
      %3789 = vmatprep.subr.mxu0 0.0
      %3790 = vmatpush1.msra.mxu0 0.0
      %3791 = vmatprep.subr.mxu0 0.0
      %3792 = vmatpush1.msra.mxu0 %v3643
      %3793 = vmatprep.subr.mxu0 0.0
      %3794 = vmatpush2.msra.mxu0 0.0
      %3795 = vmatprep.subr.mxu0 0.0
      %3796 = vmatpush2.msra.mxu0 0.0
      %3797 = vmatprep.subr.mxu0 0.0
      %3798 = vmatpush2.msra.mxu0 0.0
      %3799 = vmatprep.subr.mxu0 0.0
      %3800 = vmatpush2.msra.mxu0 0.0
      %3801 = vmatprep.subr.mxu0 0.0
      %3802 = vmatpush2.msra.mxu0 0.0
      %3803 = vmatprep.subr.mxu0 0.0
      %3804 = vmatpush2.msra.mxu0 0.0
      %3805 = vmatprep.subr.mxu0 0.0
      %3806 = vmatpush2.msra.mxu0 0.0
      %3807 = vmatprep.subr.mxu0 0.0
      %3808 = vmatpush2.msra.mxu0 0.0
      %3809 = vmatprep.subr.mxu0 0.0
      %3810 = vmatpush2.msra.mxu0 0.0
      %3811 = vmatprep.subr.mxu0 0.0
      %3812 = vmatpush2.msra.mxu0 0.0
      %3813 = vmatprep.subr.mxu0 0.0
      %3814 = vmatpush2.msra.mxu0 0.0
      %3815 = vmatprep.subr.mxu0 0.0
      %3816 = vmatpush2.msra.mxu0 0.0
      %3817 = vmatprep.subr.mxu0 0.0
      %3818 = vmatpush2.msra.mxu0 0.0
      %3819 = vmatprep.subr.mxu0 0.0
      %3820 = vmatpush2.msra.mxu0 0.0
      %3821 = vmatprep.subr.mxu0 0.0
      %3822 = vmatpush2.msra.mxu0 0.0
      %3823 = vmatprep.subr.mxu0 0.0
      %3824 = vmatpush2.msra.mxu0 0.0
      %3825 = vmatprep.mubr.f32.mxu0 0.0
      %3826 = vmatmul.mubr.f32.gmra.mxu0 %v3756
      %v3827 = vpop.f32.mrf.mxu0
      %v3828 = vadd.f32 0.0, %v3827
      %v3829 = vpop.f32.mrf.mxu0
      %3830 = vmatprep.mubr.f32.mxu0 0.0
      %3831 = vmatmul.mubr.f32.gmra.mxu0 %v3759
      %v3832 = vpop.f32.mrf.mxu0
      %v3833 = vadd.f32 0.0, %v3832
      %v3834 = vpop.f32.mrf.mxu0
      %3835 = vdwg.mxu0
      %3836 = vrot.lane.b32.xlu0 %v3458, 124
      %v3837 = vpop.permute.xlu0 %3836
      %3838 = vrot.lane.b32.xlu0 %v3463, 124
      %v3839 = vpop.permute.xlu0 %3838
      %3840 = vrot.lane.b32.xlu0 %v3555, 124
      %v3841 = vpop.permute.xlu0 %3840
      %v3842 = vsel %vm1020, %v3837, 0
      %v3844 = vsel %vm1020, %v3839, 0
      %v3846 = vsel %vm1020, %v3841, 0
      %3848 = vmatprep.subr.mxu0 0.0
      %3849 = vmatpush1.xpose.msra.mxu0 0.0
      %3850 = vmatprep.subr.mxu0 0.0
      %3851 = vmatpush1.xpose.msra.mxu0 0.0
      %3852 = vmatprep.subr.mxu0 0.0
      %3853 = vmatpush1.xpose.msra.mxu0 0.0
      %3854 = vmatprep.subr.mxu0 0.0
      %3855 = vmatpush1.xpose.msra.mxu0 0.0
      %3856 = vmatprep.subr.mxu0 0.0
      %3857 = vmatpush1.xpose.msra.mxu0 0.0
      %3858 = vmatprep.subr.mxu0 0.0
      %3859 = vmatpush1.xpose.msra.mxu0 0.0
      %3860 = vmatprep.subr.mxu0 0.0
      %3861 = vmatpush1.xpose.msra.mxu0 0.0
      %3862 = vmatprep.subr.mxu0 0.0
      %3863 = vmatpush1.xpose.msra.mxu0 0.0
      %3864 = vmatprep.subr.mxu0 0.0
      %3865 = vmatpush1.xpose.msra.mxu0 0.0
      %3866 = vmatprep.subr.mxu0 0.0
      %3867 = vmatpush1.xpose.msra.mxu0 0.0
      %3868 = vmatprep.subr.mxu0 0.0
      %3869 = vmatpush1.xpose.msra.mxu0 0.0
      %3870 = vmatprep.subr.mxu0 0.0
      %3871 = vmatpush1.xpose.msra.mxu0 0.0
      %3872 = vmatprep.subr.mxu0 0.0
      %3873 = vmatpush1.xpose.msra.mxu0 0.0
      %3874 = vmatprep.subr.mxu0 0.0
      %3875 = vmatpush1.xpose.msra.mxu0 0.0
      %3876 = vmatprep.subr.mxu0 0.0
      %3877 = vmatpush1.xpose.msra.mxu0 0.0
      %3878 = vmatprep.subr.mxu0 0.0
      %3879 = vmatpush1.xpose.msra.mxu0 %v3846
      %3880 = vmatprep.subr.mxu0 0.0
      %3881 = vmatpush2.xpose.msra.mxu0 0.0
      %3882 = vmatprep.subr.mxu0 0.0
      %3883 = vmatpush2.xpose.msra.mxu0 0.0
      %3884 = vmatprep.subr.mxu0 0.0
      %3885 = vmatpush2.xpose.msra.mxu0 0.0
      %3886 = vmatprep.subr.mxu0 0.0
      %3887 = vmatpush2.xpose.msra.mxu0 0.0
      %3888 = vmatprep.subr.mxu0 0.0
      %3889 = vmatpush2.xpose.msra.mxu0 0.0
      %3890 = vmatprep.subr.mxu0 0.0
      %3891 = vmatpush2.xpose.msra.mxu0 0.0
      %3892 = vmatprep.subr.mxu0 0.0
      %3893 = vmatpush2.xpose.msra.mxu0 0.0
      %3894 = vmatprep.subr.mxu0 0.0
      %3895 = vmatpush2.xpose.msra.mxu0 0.0
      %3896 = vmatprep.subr.mxu0 0.0
      %3897 = vmatpush2.xpose.msra.mxu0 0.0
      %3898 = vmatprep.subr.mxu0 0.0
      %3899 = vmatpush2.xpose.msra.mxu0 0.0
      %3900 = vmatprep.subr.mxu0 0.0
      %3901 = vmatpush2.xpose.msra.mxu0 0.0
      %3902 = vmatprep.subr.mxu0 0.0
      %3903 = vmatpush2.xpose.msra.mxu0 0.0
      %3904 = vmatprep.subr.mxu0 0.0
      %3905 = vmatpush2.xpose.msra.mxu0 0.0
      %3906 = vmatprep.subr.mxu0 0.0
      %3907 = vmatpush2.xpose.msra.mxu0 0.0
      %3908 = vmatprep.subr.mxu0 0.0
      %3909 = vmatpush2.xpose.msra.mxu0 0.0
      %3910 = vmatprep.subr.mxu0 0.0
      %3911 = vmatpush2.xpose.msra.mxu0 0.0
      %3912 = vmatprep.mubr.f32.mxu0 0.0
      %3913 = vmatmul.mubr.f32.gmra.mxu0 %v3842
      %v3914 = vpop.f32.mrf.mxu0
      %v3915 = vadd.f32 0.0, %v3914
      %v3916 = vpop.f32.mrf.mxu0
      %3917 = vmatprep.mubr.f32.mxu0 0.0
      %3918 = vmatmul.mubr.f32.gmra.mxu0 %v3844
      %v3919 = vpop.f32.mrf.mxu0
      %v3920 = vadd.f32 0.0, %v3919
      %v3921 = vpop.f32.mrf.mxu0
      %3922 = vdwg.mxu0
      %v3923 = vmul.f32 %v3915, 0.5
      %v3924 = vmul.f32 %v3920, 0.5
      %v3925 = vsel %vm3732, %v3923, -inf
      %3926 = vmax.xlane.f32.xlu0 %v3925
      %v3927 = vpop.xlane.xlu0 %3926
      %v3928 = vsel %vm3732, %v3924, -inf
      %3929 = vmax.xlane.f32.xlu0 %v3928
      %v3930 = vpop.xlane.xlu0 %3929
      %v3931 = vsub.f32 %v3923, %v3927
      %v3932 = vsub.f32 %v3924, %v3930
      %v3933 = vmul.f32 %v3931, 1.442695
      %v3934 = vpow.pop %v3933
      %v3935 = vmul.f32 %v3932, 1.442695
      %v3936 = vpow.pop %v3935
      %v3937 = vsel %vm3732, %v3934, 0.0
      %3938 = vadd.xlane.f32.xlu0 %v3937
      %v3939 = vpop.xlane.xlu0 %3938
      %v3940 = vsel %vm3732, %v3936, 0.0
      %3941 = vadd.xlane.f32.xlu0 %v3940
      %v3942 = vpop.xlane.xlu0 %3941
      %v3943 = vrcp.pop %v3939
      %v3944 = vrcp.pop %v3942
      %v3945 = vmul.f32 %v3934, %v3943
      %v3946 = vmul.f32 %v3936, %v3944
      %3948 = vrot.lane.b32.xlu0 %v3643, 124
      %v3949 = vpop.permute.xlu0 %3948
      %v3952 = vsel %vm3732, %v3945, 0
      %v3955 = vsel %vm3732, %v3946, 0
      %3957 = vmatprep.subr.mxu0 0.0
      %3958 = vmatpush1.msra.mxu0 0.0
      %3959 = vmatprep.subr.mxu0 0.0
      %3960 = vmatpush1.msra.mxu0 0.0
      %3961 = vmatprep.subr.mxu0 0.0
      %3962 = vmatpush1.msra.mxu0 0.0
      %3963 = vmatprep.subr.mxu0 0.0
      %3964 = vmatpush1.msra.mxu0 0.0
      %3965 = vmatprep.subr.mxu0 0.0
      %3966 = vmatpush1.msra.mxu0 0.0
      %3967 = vmatprep.subr.mxu0 0.0
      %3968 = vmatpush1.msra.mxu0 0.0
      %3969 = vmatprep.subr.mxu0 0.0
      %3970 = vmatpush1.msra.mxu0 0.0
      %3971 = vmatprep.subr.mxu0 0.0
      %3972 = vmatpush1.msra.mxu0 0.0
      %3973 = vmatprep.subr.mxu0 0.0
      %3974 = vmatpush1.msra.mxu0 0.0
      %3975 = vmatprep.subr.mxu0 0.0
      %3976 = vmatpush1.msra.mxu0 0.0
      %3977 = vmatprep.subr.mxu0 0.0
      %3978 = vmatpush1.msra.mxu0 0.0
      %3979 = vmatprep.subr.mxu0 0.0
      %3980 = vmatpush1.msra.mxu0 0.0
      %3981 = vmatprep.subr.mxu0 0.0
      %3982 = vmatpush1.msra.mxu0 0.0
      %3983 = vmatprep.subr.mxu0 0.0
      %3984 = vmatpush1.msra.mxu0 0.0
      %3985 = vmatprep.subr.mxu0 0.0
      %3986 = vmatpush1.msra.mxu0 0.0
      %3987 = vmatprep.subr.mxu0 0.0
      %3988 = vmatpush1.msra.mxu0 %v3949
      %3989 = vmatprep.subr.mxu0 0.0
      %3990 = vmatpush2.msra.mxu0 0.0
      %3991 = vmatprep.subr.mxu0 0.0
      %3992 = vmatpush2.msra.mxu0 0.0
      %3993 = vmatprep.subr.mxu0 0.0
      %3994 = vmatpush2.msra.mxu0 0.0
      %3995 = vmatprep.subr.mxu0 0.0
      %3996 = vmatpush2.msra.mxu0 0.0
      %3997 = vmatprep.subr.mxu0 0.0
      %3998 = vmatpush2.msra.mxu0 0.0
      %3999 = vmatprep.subr.mxu0 0.0
      %4000 = vmatpush2.msra.mxu0 0.0
      %4001 = vmatprep.subr.mxu0 0.0
      %4002 = vmatpush2.msra.mxu0 0.0
      %4003 = vmatprep.subr.mxu0 0.0
      %4004 = vmatpush2.msra.mxu0 0.0
      %4005 = vmatprep.subr.mxu0 0.0
      %4006 = vmatpush2.msra.mxu0 0.0
      %4007 = vmatprep.subr.mxu0 0.0
      %4008 = vmatpush2.msra.mxu0 0.0
      %4009 = vmatprep.subr.mxu0 0.0
      %4010 = vmatpush2.msra.mxu0 0.0
      %4011 = vmatprep.subr.mxu0 0.0
      %4012 = vmatpush2.msra.mxu0 0.0
      %4013 = vmatprep.subr.mxu0 0.0
      %4014 = vmatpush2.msra.mxu0 0.0
      %4015 = vmatprep.subr.mxu0 0.0
      %4016 = vmatpush2.msra.mxu0 0.0
      %4017 = vmatprep.subr.mxu0 0.0
      %4018 = vmatpush2.msra.mxu0 0.0
      %4019 = vmatprep.subr.mxu0 0.0
      %4020 = vmatpush2.msra.mxu0 0.0
      %4021 = vmatprep.mubr.f32.mxu0 0.0
      %4022 = vmatmul.mubr.f32.gmra.mxu0 %v3952
      %v4023 = vpop.f32.mrf.mxu0
      %v4024 = vadd.f32 0.0, %v4023
      %v4025 = vpop.f32.mrf.mxu0
      %4026 = vmatprep.mubr.f32.mxu0 0.0
      %4027 = vmatmul.mubr.f32.gmra.mxu0 %v3955
      %v4028 = vpop.f32.mrf.mxu0
      %v4029 = vadd.f32 0.0, %v4028
      %v4030 = vpop.f32.mrf.mxu0
      %4031 = vdwg.mxu0
      %v4033 = vrot.slane %v3374, 4
      %v4035 = vsel %vm1020, %v4024, 0
      %v4038 = vsel %vm1020, %v4029, 0
      %v4040 = vsel %vm1426, %v4033, 0
      %4042 = vmatprep.subr.mxu0 0.0
      %4043 = vmatpush1.msra.mxu0 0.0
      %4044 = vmatprep.subr.mxu0 0.0
      %4045 = vmatpush1.msra.mxu0 0.0
      %4046 = vmatprep.subr.mxu0 0.0
      %4047 = vmatpush1.msra.mxu0 0.0
      %4048 = vmatprep.subr.mxu0 0.0
      %4049 = vmatpush1.msra.mxu0 0.0
      %4050 = vmatprep.subr.mxu0 0.0
      %4051 = vmatpush1.msra.mxu0 0.0
      %4052 = vmatprep.subr.mxu0 0.0
      %4053 = vmatpush1.msra.mxu0 0.0
      %4054 = vmatprep.subr.mxu0 0.0
      %4055 = vmatpush1.msra.mxu0 0.0
      %4056 = vmatprep.subr.mxu0 0.0
      %4057 = vmatpush1.msra.mxu0 0.0
      %4058 = vmatprep.subr.mxu0 0.0
      %4059 = vmatpush1.msra.mxu0 0.0
      %4060 = vmatprep.subr.mxu0 0.0
      %4061 = vmatpush1.msra.mxu0 0.0
      %4062 = vmatprep.subr.mxu0 0.0
      %4063 = vmatpush1.msra.mxu0 0.0
      %4064 = vmatprep.subr.mxu0 0.0
      %4065 = vmatpush1.msra.mxu0 0.0
      %4066 = vmatprep.subr.mxu0 0.0
      %4067 = vmatpush1.msra.mxu0 0.0
      %4068 = vmatprep.subr.mxu0 0.0
      %4069 = vmatpush1.msra.mxu0 0.0
      %4070 = vmatprep.subr.mxu0 0.0
      %4071 = vmatpush1.msra.mxu0 0.0
      %4072 = vmatprep.subr.mxu0 0.0
      %4073 = vmatpush1.msra.mxu0 %v4040
      %4074 = vmatprep.subr.mxu0 0.0
      %4075 = vmatpush2.msra.mxu0 0.0
      %4076 = vmatprep.subr.mxu0 0.0
      %4077 = vmatpush2.msra.mxu0 0.0
      %4078 = vmatprep.subr.mxu0 0.0
      %4079 = vmatpush2.msra.mxu0 0.0
      %4080 = vmatprep.subr.mxu0 0.0
      %4081 = vmatpush2.msra.mxu0 0.0
      %4082 = vmatprep.subr.mxu0 0.0
      %4083 = vmatpush2.msra.mxu0 0.0
      %4084 = vmatprep.subr.mxu0 0.0
      %4085 = vmatpush2.msra.mxu0 0.0
      %4086 = vmatprep.subr.mxu0 0.0
      %4087 = vmatpush2.msra.mxu0 0.0
      %4088 = vmatprep.subr.mxu0 0.0
      %4089 = vmatpush2.msra.mxu0 0.0
      %4090 = vmatprep.subr.mxu0 0.0
      %4091 = vmatpush2.msra.mxu0 0.0
      %4092 = vmatprep.subr.mxu0 0.0
      %4093 = vmatpush2.msra.mxu0 0.0
      %4094 = vmatprep.subr.mxu0 0.0
      %4095 = vmatpush2.msra.mxu0 0.0
      %4096 = vmatprep.subr.mxu0 0.0
      %4097 = vmatpush2.msra.mxu0 0.0
      %4098 = vmatprep.subr.mxu0 0.0
      %4099 = vmatpush2.msra.mxu0 0.0
      %4100 = vmatprep.subr.mxu0 0.0
      %4101 = vmatpush2.msra.mxu0 0.0
      %4102 = vmatprep.subr.mxu0 0.0
      %4103 = vmatpush2.msra.mxu0 0.0
      %4104 = vmatprep.subr.mxu0 0.0
      %4105 = vmatpush2.msra.mxu0 0.0
      %4106 = vmatprep.mubr.f32.mxu0 0.0
      %4107 = vmatmul.mubr.f32.gmra.mxu0 %v4035
      %v4108 = vpop.f32.mrf.mxu0
      %v4109 = vadd.f32 0.0, %v4108
      %v4110 = vpop.f32.mrf.mxu0
      %4111 = vmatprep.mubr.f32.mxu0 0.0
      %4112 = vmatmul.mubr.f32.gmra.mxu0 %v4038
      %v4113 = vpop.f32.mrf.mxu0
      %v4114 = vadd.f32 0.0, %v4113
      %v4115 = vpop.f32.mrf.mxu0
      %4116 = vdwg.mxu0
      %v4118 = vsel %vm1020, %v3828, 0
      %v4121 = vsel %vm1020, %v3833, 0
      %v4123 = vsel %vm1426, %v3374, 0
      %4125 = vmatprep.subr.mxu0 0.0
      %4126 = vmatpush1.msra.mxu0 0.0
      %4127 = vmatprep.subr.mxu0 0.0
      %4128 = vmatpush1.msra.mxu0 0.0
      %4129 = vmatprep.subr.mxu0 0.0
      %4130 = vmatpush1.msra.mxu0 0.0
      %4131 = vmatprep.subr.mxu0 0.0
      %4132 = vmatpush1.msra.mxu0 0.0
      %4133 = vmatprep.subr.mxu0 0.0
      %4134 = vmatpush1.msra.mxu0 0.0
      %4135 = vmatprep.subr.mxu0 0.0
      %4136 = vmatpush1.msra.mxu0 0.0
      %4137 = vmatprep.subr.mxu0 0.0
      %4138 = vmatpush1.msra.mxu0 0.0
      %4139 = vmatprep.subr.mxu0 0.0
      %4140 = vmatpush1.msra.mxu0 0.0
      %4141 = vmatprep.subr.mxu0 0.0
      %4142 = vmatpush1.msra.mxu0 0.0
      %4143 = vmatprep.subr.mxu0 0.0
      %4144 = vmatpush1.msra.mxu0 0.0
      %4145 = vmatprep.subr.mxu0 0.0
      %4146 = vmatpush1.msra.mxu0 0.0
      %4147 = vmatprep.subr.mxu0 0.0
      %4148 = vmatpush1.msra.mxu0 0.0
      %4149 = vmatprep.subr.mxu0 0.0
      %4150 = vmatpush1.msra.mxu0 0.0
      %4151 = vmatprep.subr.mxu0 0.0
      %4152 = vmatpush1.msra.mxu0 0.0
      %4153 = vmatprep.subr.mxu0 0.0
      %4154 = vmatpush1.msra.mxu0 0.0
      %4155 = vmatprep.subr.mxu0 0.0
      %4156 = vmatpush1.msra.mxu0 %v4123
      %4157 = vmatprep.subr.mxu0 0.0
      %4158 = vmatpush2.msra.mxu0 0.0
      %4159 = vmatprep.subr.mxu0 0.0
      %4160 = vmatpush2.msra.mxu0 0.0
      %4161 = vmatprep.subr.mxu0 0.0
      %4162 = vmatpush2.msra.mxu0 0.0
      %4163 = vmatprep.subr.mxu0 0.0
      %4164 = vmatpush2.msra.mxu0 0.0
      %4165 = vmatprep.subr.mxu0 0.0
      %4166 = vmatpush2.msra.mxu0 0.0
      %4167 = vmatprep.subr.mxu0 0.0
      %4168 = vmatpush2.msra.mxu0 0.0
      %4169 = vmatprep.subr.mxu0 0.0
      %4170 = vmatpush2.msra.mxu0 0.0
      %4171 = vmatprep.subr.mxu0 0.0
      %4172 = vmatpush2.msra.mxu0 0.0
      %4173 = vmatprep.subr.mxu0 0.0
      %4174 = vmatpush2.msra.mxu0 0.0
      %4175 = vmatprep.subr.mxu0 0.0
      %4176 = vmatpush2.msra.mxu0 0.0
      %4177 = vmatprep.subr.mxu0 0.0
      %4178 = vmatpush2.msra.mxu0 0.0
      %4179 = vmatprep.subr.mxu0 0.0
      %4180 = vmatpush2.msra.mxu0 0.0
      %4181 = vmatprep.subr.mxu0 0.0
      %4182 = vmatpush2.msra.mxu0 0.0
      %4183 = vmatprep.subr.mxu0 0.0
      %4184 = vmatpush2.msra.mxu0 0.0
      %4185 = vmatprep.subr.mxu0 0.0
      %4186 = vmatpush2.msra.mxu0 0.0
      %4187 = vmatprep.subr.mxu0 0.0
      %4188 = vmatpush2.msra.mxu0 0.0
      %4189 = vmatprep.mubr.f32.mxu0 0.0
      %4190 = vmatmul.mubr.f32.gmra.mxu0 %v4118
      %v4191 = vpop.f32.mrf.mxu0
      %v4192 = vadd.f32 %v4109, %v4191
      %v4193 = vpop.f32.mrf.mxu0
      %4194 = vmatprep.mubr.f32.mxu0 0.0
      %4195 = vmatmul.mubr.f32.gmra.mxu0 %v4121
      %v4196 = vpop.f32.mrf.mxu0
      %v4197 = vadd.f32 %v4114, %v4196
      %v4198 = vpop.f32.mrf.mxu0
      %4199 = vdwg.mxu0
      %4200 = vrot.lane.b32.xlu0 %v3458, 120
      %v4201 = vpop.permute.xlu0 %4200
      %4202 = vrot.lane.b32.xlu0 %v3463, 120
      %v4203 = vpop.permute.xlu0 %4202
      %4204 = vrot.lane.b32.xlu0 %v3555, 120
      %v4205 = vpop.permute.xlu0 %4204
      %v4206 = vsel %vm1020, %v4201, 0
      %v4208 = vsel %vm1020, %v4203, 0
      %v4210 = vsel %vm1020, %v4205, 0
      %4212 = vmatprep.subr.mxu0 0.0
      %4213 = vmatpush1.xpose.msra.mxu0 0.0
      %4214 = vmatprep.subr.mxu0 0.0
      %4215 = vmatpush1.xpose.msra.mxu0 0.0
      %4216 = vmatprep.subr.mxu0 0.0
      %4217 = vmatpush1.xpose.msra.mxu0 0.0
      %4218 = vmatprep.subr.mxu0 0.0
      %4219 = vmatpush1.xpose.msra.mxu0 0.0
      %4220 = vmatprep.subr.mxu0 0.0
      %4221 = vmatpush1.xpose.msra.mxu0 0.0
      %4222 = vmatprep.subr.mxu0 0.0
      %4223 = vmatpush1.xpose.msra.mxu0 0.0
      %4224 = vmatprep.subr.mxu0 0.0
      %4225 = vmatpush1.xpose.msra.mxu0 0.0
      %4226 = vmatprep.subr.mxu0 0.0
      %4227 = vmatpush1.xpose.msra.mxu0 0.0
      %4228 = vmatprep.subr.mxu0 0.0
      %4229 = vmatpush1.xpose.msra.mxu0 0.0
      %4230 = vmatprep.subr.mxu0 0.0
      %4231 = vmatpush1.xpose.msra.mxu0 0.0
      %4232 = vmatprep.subr.mxu0 0.0
      %4233 = vmatpush1.xpose.msra.mxu0 0.0
      %4234 = vmatprep.subr.mxu0 0.0
      %4235 = vmatpush1.xpose.msra.mxu0 0.0
      %4236 = vmatprep.subr.mxu0 0.0
      %4237 = vmatpush1.xpose.msra.mxu0 0.0
      %4238 = vmatprep.subr.mxu0 0.0
      %4239 = vmatpush1.xpose.msra.mxu0 0.0
      %4240 = vmatprep.subr.mxu0 0.0
      %4241 = vmatpush1.xpose.msra.mxu0 0.0
      %4242 = vmatprep.subr.mxu0 0.0
      %4243 = vmatpush1.xpose.msra.mxu0 %v4210
      %4244 = vmatprep.subr.mxu0 0.0
      %4245 = vmatpush2.xpose.msra.mxu0 0.0
      %4246 = vmatprep.subr.mxu0 0.0
      %4247 = vmatpush2.xpose.msra.mxu0 0.0
      %4248 = vmatprep.subr.mxu0 0.0
      %4249 = vmatpush2.xpose.msra.mxu0 0.0
      %4250 = vmatprep.subr.mxu0 0.0
      %4251 = vmatpush2.xpose.msra.mxu0 0.0
      %4252 = vmatprep.subr.mxu0 0.0
      %4253 = vmatpush2.xpose.msra.mxu0 0.0
      %4254 = vmatprep.subr.mxu0 0.0
      %4255 = vmatpush2.xpose.msra.mxu0 0.0
      %4256 = vmatprep.subr.mxu0 0.0
      %4257 = vmatpush2.xpose.msra.mxu0 0.0
      %4258 = vmatprep.subr.mxu0 0.0
      %4259 = vmatpush2.xpose.msra.mxu0 0.0
      %4260 = vmatprep.subr.mxu0 0.0
      %4261 = vmatpush2.xpose.msra.mxu0 0.0
      %4262 = vmatprep.subr.mxu0 0.0
      %4263 = vmatpush2.xpose.msra.mxu0 0.0
      %4264 = vmatprep.subr.mxu0 0.0
      %4265 = vmatpush2.xpose.msra.mxu0 0.0
      %4266 = vmatprep.subr.mxu0 0.0
      %4267 = vmatpush2.xpose.msra.mxu0 0.0
      %4268 = vmatprep.subr.mxu0 0.0
      %4269 = vmatpush2.xpose.msra.mxu0 0.0
      %4270 = vmatprep.subr.mxu0 0.0
      %4271 = vmatpush2.xpose.msra.mxu0 0.0
      %4272 = vmatprep.subr.mxu0 0.0
      %4273 = vmatpush2.xpose.msra.mxu0 0.0
      %4274 = vmatprep.subr.mxu0 0.0
      %4275 = vmatpush2.xpose.msra.mxu0 0.0
      %4276 = vmatprep.mubr.f32.mxu0 0.0
      %4277 = vmatmul.mubr.f32.gmra.mxu0 %v4206
      %v4278 = vpop.f32.mrf.mxu0
      %v4279 = vadd.f32 0.0, %v4278
      %v4280 = vpop.f32.mrf.mxu0
      %4281 = vmatprep.mubr.f32.mxu0 0.0
      %4282 = vmatmul.mubr.f32.gmra.mxu0 %v4208
      %v4283 = vpop.f32.mrf.mxu0
      %v4284 = vadd.f32 0.0, %v4283
      %v4285 = vpop.f32.mrf.mxu0
      %4286 = vdwg.mxu0
      %v4287 = vmul.f32 %v4279, 0.5
      %v4288 = vmul.f32 %v4284, 0.5
      %v4289 = vsel %vm3732, %v4287, -inf
      %4290 = vmax.xlane.f32.xlu0 %v4289
      %v4291 = vpop.xlane.xlu0 %4290
      %v4292 = vsel %vm3732, %v4288, -inf
      %4293 = vmax.xlane.f32.xlu0 %v4292
      %v4294 = vpop.xlane.xlu0 %4293
      %v4295 = vsub.f32 %v4287, %v4291
      %v4296 = vsub.f32 %v4288, %v4294
      %v4297 = vmul.f32 %v4295, 1.442695
      %v4298 = vpow.pop %v4297
      %v4299 = vmul.f32 %v4296, 1.442695
      %v4300 = vpow.pop %v4299
      %v4301 = vsel %vm3732, %v4298, 0.0
      %4302 = vadd.xlane.f32.xlu0 %v4301
      %v4303 = vpop.xlane.xlu0 %4302
      %v4304 = vsel %vm3732, %v4300, 0.0
      %4305 = vadd.xlane.f32.xlu0 %v4304
      %v4306 = vpop.xlane.xlu0 %4305
      %v4307 = vrcp.pop %v4303
      %v4308 = vrcp.pop %v4306
      %v4309 = vmul.f32 %v4298, %v4307
      %v4310 = vmul.f32 %v4300, %v4308
      %4311 = vrot.lane.b32.xlu0 %v3643, 120
      %v4312 = vpop.permute.xlu0 %4311
      %v4315 = vsel %vm3732, %v4309, 0
      %v4318 = vsel %vm3732, %v4310, 0
      %4320 = vmatprep.subr.mxu0 0.0
      %4321 = vmatpush1.msra.mxu0 0.0
      %4322 = vmatprep.subr.mxu0 0.0
      %4323 = vmatpush1.msra.mxu0 0.0
      %4324 = vmatprep.subr.mxu0 0.0
      %4325 = vmatpush1.msra.mxu0 0.0
      %4326 = vmatprep.subr.mxu0 0.0
      %4327 = vmatpush1.msra.mxu0 0.0
      %4328 = vmatprep.subr.mxu0 0.0
      %4329 = vmatpush1.msra.mxu0 0.0
      %4330 = vmatprep.subr.mxu0 0.0
      %4331 = vmatpush1.msra.mxu0 0.0
      %4332 = vmatprep.subr.mxu0 0.0
      %4333 = vmatpush1.msra.mxu0 0.0
      %4334 = vmatprep.subr.mxu0 0.0
      %4335 = vmatpush1.msra.mxu0 0.0
      %4336 = vmatprep.subr.mxu0 0.0
      %4337 = vmatpush1.msra.mxu0 0.0
      %4338 = vmatprep.subr.mxu0 0.0
      %4339 = vmatpush1.msra.mxu0 0.0
      %4340 = vmatprep.subr.mxu0 0.0
      %4341 = vmatpush1.msra.mxu0 0.0
      %4342 = vmatprep.subr.mxu0 0.0
      %4343 = vmatpush1.msra.mxu0 0.0
      %4344 = vmatprep.subr.mxu0 0.0
      %4345 = vmatpush1.msra.mxu0 0.0
      %4346 = vmatprep.subr.mxu0 0.0
      %4347 = vmatpush1.msra.mxu0 0.0
      %4348 = vmatprep.subr.mxu0 0.0
      %4349 = vmatpush1.msra.mxu0 0.0
      %4350 = vmatprep.subr.mxu0 0.0
      %4351 = vmatpush1.msra.mxu0 %v4312
      %4352 = vmatprep.subr.mxu0 0.0
      %4353 = vmatpush2.msra.mxu0 0.0
      %4354 = vmatprep.subr.mxu0 0.0
      %4355 = vmatpush2.msra.mxu0 0.0
      %4356 = vmatprep.subr.mxu0 0.0
      %4357 = vmatpush2.msra.mxu0 0.0
      %4358 = vmatprep.subr.mxu0 0.0
      %4359 = vmatpush2.msra.mxu0 0.0
      %4360 = vmatprep.subr.mxu0 0.0
      %4361 = vmatpush2.msra.mxu0 0.0
      %4362 = vmatprep.subr.mxu0 0.0
      %4363 = vmatpush2.msra.mxu0 0.0
      %4364 = vmatprep.subr.mxu0 0.0
      %4365 = vmatpush2.msra.mxu0 0.0
      %4366 = vmatprep.subr.mxu0 0.0
      %4367 = vmatpush2.msra.mxu0 0.0
      %4368 = vmatprep.subr.mxu0 0.0
      %4369 = vmatpush2.msra.mxu0 0.0
      %4370 = vmatprep.subr.mxu0 0.0
      %4371 = vmatpush2.msra.mxu0 0.0
      %4372 = vmatprep.subr.mxu0 0.0
      %4373 = vmatpush2.msra.mxu0 0.0
      %4374 = vmatprep.subr.mxu0 0.0
      %4375 = vmatpush2.msra.mxu0 0.0
      %4376 = vmatprep.subr.mxu0 0.0
      %4377 = vmatpush2.msra.mxu0 0.0
      %4378 = vmatprep.subr.mxu0 0.0
      %4379 = vmatpush2.msra.mxu0 0.0
      %4380 = vmatprep.subr.mxu0 0.0
      %4381 = vmatpush2.msra.mxu0 0.0
      %4382 = vmatprep.subr.mxu0 0.0
      %4383 = vmatpush2.msra.mxu0 0.0
      %4384 = vmatprep.mubr.f32.mxu0 0.0
      %4385 = vmatmul.mubr.f32.gmra.mxu0 %v4315
      %v4386 = vpop.f32.mrf.mxu0
      %v4387 = vadd.f32 0.0, %v4386
      %v4388 = vpop.f32.mrf.mxu0
      %4389 = vmatprep.mubr.f32.mxu0 0.0
      %4390 = vmatmul.mubr.f32.gmra.mxu0 %v4318
      %v4391 = vpop.f32.mrf.mxu0
      %v4392 = vadd.f32 0.0, %v4391
      %v4393 = vpop.f32.mrf.mxu0
      %4394 = vdwg.mxu0
      %v4396 = vsel %vm1020, %v4387, 0
      %v4399 = vsel %vm1020, %v4392, 0
      %v4402 = vsel %vm1426, %v3375, 0
      %4404 = vmatprep.subr.mxu0 0.0
      %4405 = vmatpush1.msra.mxu0 0.0
      %4406 = vmatprep.subr.mxu0 0.0
      %4407 = vmatpush1.msra.mxu0 0.0
      %4408 = vmatprep.subr.mxu0 0.0
      %4409 = vmatpush1.msra.mxu0 0.0
      %4410 = vmatprep.subr.mxu0 0.0
      %4411 = vmatpush1.msra.mxu0 0.0
      %4412 = vmatprep.subr.mxu0 0.0
      %4413 = vmatpush1.msra.mxu0 0.0
      %4414 = vmatprep.subr.mxu0 0.0
      %4415 = vmatpush1.msra.mxu0 0.0
      %4416 = vmatprep.subr.mxu0 0.0
      %4417 = vmatpush1.msra.mxu0 0.0
      %4418 = vmatprep.subr.mxu0 0.0
      %4419 = vmatpush1.msra.mxu0 0.0
      %4420 = vmatprep.subr.mxu0 0.0
      %4421 = vmatpush1.msra.mxu0 0.0
      %4422 = vmatprep.subr.mxu0 0.0
      %4423 = vmatpush1.msra.mxu0 0.0
      %4424 = vmatprep.subr.mxu0 0.0
      %4425 = vmatpush1.msra.mxu0 0.0
      %4426 = vmatprep.subr.mxu0 0.0
      %4427 = vmatpush1.msra.mxu0 0.0
      %4428 = vmatprep.subr.mxu0 0.0
      %4429 = vmatpush1.msra.mxu0 0.0
      %4430 = vmatprep.subr.mxu0 0.0
      %4431 = vmatpush1.msra.mxu0 0.0
      %4432 = vmatprep.subr.mxu0 0.0
      %4433 = vmatpush1.msra.mxu0 0.0
      %4434 = vmatprep.subr.mxu0 0.0
      %4435 = vmatpush1.msra.mxu0 %v4402
      %4436 = vmatprep.subr.mxu0 0.0
      %4437 = vmatpush2.msra.mxu0 0.0
      %4438 = vmatprep.subr.mxu0 0.0
      %4439 = vmatpush2.msra.mxu0 0.0
      %4440 = vmatprep.subr.mxu0 0.0
      %4441 = vmatpush2.msra.mxu0 0.0
      %4442 = vmatprep.subr.mxu0 0.0
      %4443 = vmatpush2.msra.mxu0 0.0
      %4444 = vmatprep.subr.mxu0 0.0
      %4445 = vmatpush2.msra.mxu0 0.0
      %4446 = vmatprep.subr.mxu0 0.0
      %4447 = vmatpush2.msra.mxu0 0.0
      %4448 = vmatprep.subr.mxu0 0.0
      %4449 = vmatpush2.msra.mxu0 0.0
      %4450 = vmatprep.subr.mxu0 0.0
      %4451 = vmatpush2.msra.mxu0 0.0
      %4452 = vmatprep.subr.mxu0 0.0
      %4453 = vmatpush2.msra.mxu0 0.0
      %4454 = vmatprep.subr.mxu0 0.0
      %4455 = vmatpush2.msra.mxu0 0.0
      %4456 = vmatprep.subr.mxu0 0.0
      %4457 = vmatpush2.msra.mxu0 0.0
      %4458 = vmatprep.subr.mxu0 0.0
      %4459 = vmatpush2.msra.mxu0 0.0
      %4460 = vmatprep.subr.mxu0 0.0
      %4461 = vmatpush2.msra.mxu0 0.0
      %4462 = vmatprep.subr.mxu0 0.0
      %4463 = vmatpush2.msra.mxu0 0.0
      %4464 = vmatprep.subr.mxu0 0.0
      %4465 = vmatpush2.msra.mxu0 0.0
      %4466 = vmatprep.subr.mxu0 0.0
      %4467 = vmatpush2.msra.mxu0 0.0
      %4468 = vmatprep.mubr.f32.mxu0 0.0
      %4469 = vmatmul.mubr.f32.gmra.mxu0 %v4396
      %v4470 = vpop.f32.mrf.mxu0
      %v4471 = vadd.f32 0.0, %v4470
      %v4472 = vpop.f32.mrf.mxu0
      %4473 = vmatprep.mubr.f32.mxu0 0.0
      %4474 = vmatmul.mubr.f32.gmra.mxu0 %v4399
      %v4475 = vpop.f32.mrf.mxu0
      %v4476 = vadd.f32 0.0, %v4475
      %v4477 = vpop.f32.mrf.mxu0
      %4478 = vdwg.mxu0
      %v4479 = vadd.f32 %v4192, %v4471
      %v4480 = vadd.f32 %v4197, %v4476
      %4481 = vrot.lane.b32.xlu0 %v3458, 116
      %v4482 = vpop.permute.xlu0 %4481
      %4483 = vrot.lane.b32.xlu0 %v3463, 116
      %v4484 = vpop.permute.xlu0 %4483
      %4485 = vrot.lane.b32.xlu0 %v3555, 116
      %v4486 = vpop.permute.xlu0 %4485
      %v4487 = vsel %vm1020, %v4482, 0
      %v4489 = vsel %vm1020, %v4484, 0
      %v4491 = vsel %vm1020, %v4486, 0
      %4493 = vmatprep.subr.mxu0 0.0
      %4494 = vmatpush1.xpose.msra.mxu0 0.0
      %4495 = vmatprep.subr.mxu0 0.0
      %4496 = vmatpush1.xpose.msra.mxu0 0.0
      %4497 = vmatprep.subr.mxu0 0.0
      %4498 = vmatpush1.xpose.msra.mxu0 0.0
      %4499 = vmatprep.subr.mxu0 0.0
      %4500 = vmatpush1.xpose.msra.mxu0 0.0
      %4501 = vmatprep.subr.mxu0 0.0
      %4502 = vmatpush1.xpose.msra.mxu0 0.0
      %4503 = vmatprep.subr.mxu0 0.0
      %4504 = vmatpush1.xpose.msra.mxu0 0.0
      %4505 = vmatprep.subr.mxu0 0.0
      %4506 = vmatpush1.xpose.msra.mxu0 0.0
      %4507 = vmatprep.subr.mxu0 0.0
      %4508 = vmatpush1.xpose.msra.mxu0 0.0
      %4509 = vmatprep.subr.mxu0 0.0
      %4510 = vmatpush1.xpose.msra.mxu0 0.0
      %4511 = vmatprep.subr.mxu0 0.0
      %4512 = vmatpush1.xpose.msra.mxu0 0.0
      %4513 = vmatprep.subr.mxu0 0.0
      %4514 = vmatpush1.xpose.msra.mxu0 0.0
      %4515 = vmatprep.subr.mxu0 0.0
      %4516 = vmatpush1.xpose.msra.mxu0 0.0
      %4517 = vmatprep.subr.mxu0 0.0
      %4518 = vmatpush1.xpose.msra.mxu0 0.0
      %4519 = vmatprep.subr.mxu0 0.0
      %4520 = vmatpush1.xpose.msra.mxu0 0.0
      %4521 = vmatprep.subr.mxu0 0.0
      %4522 = vmatpush1.xpose.msra.mxu0 0.0
      %4523 = vmatprep.subr.mxu0 0.0
      %4524 = vmatpush1.xpose.msra.mxu0 %v4491
      %4525 = vmatprep.subr.mxu0 0.0
      %4526 = vmatpush2.xpose.msra.mxu0 0.0
      %4527 = vmatprep.subr.mxu0 0.0
      %4528 = vmatpush2.xpose.msra.mxu0 0.0
      %4529 = vmatprep.subr.mxu0 0.0
      %4530 = vmatpush2.xpose.msra.mxu0 0.0
      %4531 = vmatprep.subr.mxu0 0.0
      %4532 = vmatpush2.xpose.msra.mxu0 0.0
      %4533 = vmatprep.subr.mxu0 0.0
      %4534 = vmatpush2.xpose.msra.mxu0 0.0
      %4535 = vmatprep.subr.mxu0 0.0
      %4536 = vmatpush2.xpose.msra.mxu0 0.0
      %4537 = vmatprep.subr.mxu0 0.0
      %4538 = vmatpush2.xpose.msra.mxu0 0.0
      %4539 = vmatprep.subr.mxu0 0.0
      %4540 = vmatpush2.xpose.msra.mxu0 0.0
      %4541 = vmatprep.subr.mxu0 0.0
      %4542 = vmatpush2.xpose.msra.mxu0 0.0
      %4543 = vmatprep.subr.mxu0 0.0
      %4544 = vmatpush2.xpose.msra.mxu0 0.0
      %4545 = vmatprep.subr.mxu0 0.0
      %4546 = vmatpush2.xpose.msra.mxu0 0.0
      %4547 = vmatprep.subr.mxu0 0.0
      %4548 = vmatpush2.xpose.msra.mxu0 0.0
      %4549 = vmatprep.subr.mxu0 0.0
      %4550 = vmatpush2.xpose.msra.mxu0 0.0
      %4551 = vmatprep.subr.mxu0 0.0
      %4552 = vmatpush2.xpose.msra.mxu0 0.0
      %4553 = vmatprep.subr.mxu0 0.0
      %4554 = vmatpush2.xpose.msra.mxu0 0.0
      %4555 = vmatprep.subr.mxu0 0.0
      %4556 = vmatpush2.xpose.msra.mxu0 0.0
      %4557 = vmatprep.mubr.f32.mxu0 0.0
      %4558 = vmatmul.mubr.f32.gmra.mxu0 %v4487
      %v4559 = vpop.f32.mrf.mxu0
      %v4560 = vadd.f32 0.0, %v4559
      %v4561 = vpop.f32.mrf.mxu0
      %4562 = vmatprep.mubr.f32.mxu0 0.0
      %4563 = vmatmul.mubr.f32.gmra.mxu0 %v4489
      %v4564 = vpop.f32.mrf.mxu0
      %v4565 = vadd.f32 0.0, %v4564
      %v4566 = vpop.f32.mrf.mxu0
      %4567 = vdwg.mxu0
      %v4568 = vmul.f32 %v4560, 0.5
      %v4569 = vmul.f32 %v4565, 0.5
      %v4570 = vsel %vm3732, %v4568, -inf
      %4571 = vmax.xlane.f32.xlu0 %v4570
      %v4572 = vpop.xlane.xlu0 %4571
      %v4573 = vsel %vm3732, %v4569, -inf
      %4574 = vmax.xlane.f32.xlu0 %v4573
      %v4575 = vpop.xlane.xlu0 %4574
      %v4576 = vsub.f32 %v4568, %v4572
      %v4577 = vsub.f32 %v4569, %v4575
      %v4578 = vmul.f32 %v4576, 1.442695
      %v4579 = vpow.pop %v4578
      %v4580 = vmul.f32 %v4577, 1.442695
      %v4581 = vpow.pop %v4580
      %v4582 = vsel %vm3732, %v4579, 0.0
      %4583 = vadd.xlane.f32.xlu0 %v4582
      %v4584 = vpop.xlane.xlu0 %4583
      %v4585 = vsel %vm3732, %v4581, 0.0
      %4586 = vadd.xlane.f32.xlu0 %v4585
      %v4587 = vpop.xlane.xlu0 %4586
      %v4588 = vrcp.pop %v4584
      %v4589 = vrcp.pop %v4587
      %v4590 = vmul.f32 %v4579, %v4588
      %v4591 = vmul.f32 %v4581, %v4589
      %4592 = vrot.lane.b32.xlu0 %v3643, 116
      %v4593 = vpop.permute.xlu0 %4592
      %v4596 = vsel %vm3732, %v4590, 0
      %v4599 = vsel %vm3732, %v4591, 0
      %4601 = vmatprep.subr.mxu0 0.0
      %4602 = vmatpush1.msra.mxu0 0.0
      %4603 = vmatprep.subr.mxu0 0.0
      %4604 = vmatpush1.msra.mxu0 0.0
      %4605 = vmatprep.subr.mxu0 0.0
      %4606 = vmatpush1.msra.mxu0 0.0
      %4607 = vmatprep.subr.mxu0 0.0
      %4608 = vmatpush1.msra.mxu0 0.0
      %4609 = vmatprep.subr.mxu0 0.0
      %4610 = vmatpush1.msra.mxu0 0.0
      %4611 = vmatprep.subr.mxu0 0.0
      %4612 = vmatpush1.msra.mxu0 0.0
      %4613 = vmatprep.subr.mxu0 0.0
      %4614 = vmatpush1.msra.mxu0 0.0
      %4615 = vmatprep.subr.mxu0 0.0
      %4616 = vmatpush1.msra.mxu0 0.0
      %4617 = vmatprep.subr.mxu0 0.0
      %4618 = vmatpush1.msra.mxu0 0.0
      %4619 = vmatprep.subr.mxu0 0.0
      %4620 = vmatpush1.msra.mxu0 0.0
      %4621 = vmatprep.subr.mxu0 0.0
      %4622 = vmatpush1.msra.mxu0 0.0
      %4623 = vmatprep.subr.mxu0 0.0
      %4624 = vmatpush1.msra.mxu0 0.0
      %4625 = vmatprep.subr.mxu0 0.0
      %4626 = vmatpush1.msra.mxu0 0.0
      %4627 = vmatprep.subr.mxu0 0.0
      %4628 = vmatpush1.msra.mxu0 0.0
      %4629 = vmatprep.subr.mxu0 0.0
      %4630 = vmatpush1.msra.mxu0 0.0
      %4631 = vmatprep.subr.mxu0 0.0
      %4632 = vmatpush1.msra.mxu0 %v4593
      %4633 = vmatprep.subr.mxu0 0.0
      %4634 = vmatpush2.msra.mxu0 0.0
      %4635 = vmatprep.subr.mxu0 0.0
      %4636 = vmatpush2.msra.mxu0 0.0
      %4637 = vmatprep.subr.mxu0 0.0
      %4638 = vmatpush2.msra.mxu0 0.0
      %4639 = vmatprep.subr.mxu0 0.0
      %4640 = vmatpush2.msra.mxu0 0.0
      %4641 = vmatprep.subr.mxu0 0.0
      %4642 = vmatpush2.msra.mxu0 0.0
      %4643 = vmatprep.subr.mxu0 0.0
      %4644 = vmatpush2.msra.mxu0 0.0
      %4645 = vmatprep.subr.mxu0 0.0
      %4646 = vmatpush2.msra.mxu0 0.0
      %4647 = vmatprep.subr.mxu0 0.0
      %4648 = vmatpush2.msra.mxu0 0.0
      %4649 = vmatprep.subr.mxu0 0.0
      %4650 = vmatpush2.msra.mxu0 0.0
      %4651 = vmatprep.subr.mxu0 0.0
      %4652 = vmatpush2.msra.mxu0 0.0
      %4653 = vmatprep.subr.mxu0 0.0
      %4654 = vmatpush2.msra.mxu0 0.0
      %4655 = vmatprep.subr.mxu0 0.0
      %4656 = vmatpush2.msra.mxu0 0.0
      %4657 = vmatprep.subr.mxu0 0.0
      %4658 = vmatpush2.msra.mxu0 0.0
      %4659 = vmatprep.subr.mxu0 0.0
      %4660 = vmatpush2.msra.mxu0 0.0
      %4661 = vmatprep.subr.mxu0 0.0
      %4662 = vmatpush2.msra.mxu0 0.0
      %4663 = vmatprep.subr.mxu0 0.0
      %4664 = vmatpush2.msra.mxu0 0.0
      %4665 = vmatprep.mubr.f32.mxu0 0.0
      %4666 = vmatmul.mubr.f32.gmra.mxu0 %v4596
      %v4667 = vpop.f32.mrf.mxu0
      %v4668 = vadd.f32 0.0, %v4667
      %v4669 = vpop.f32.mrf.mxu0
      %4670 = vmatprep.mubr.f32.mxu0 0.0
      %4671 = vmatmul.mubr.f32.gmra.mxu0 %v4599
      %v4672 = vpop.f32.mrf.mxu0
      %v4673 = vadd.f32 0.0, %v4672
      %v4674 = vpop.f32.mrf.mxu0
      %4675 = vdwg.mxu0
      %v4676 = vrot.slane %v3375, 4
      %v4678 = vsel %vm1020, %v4668, 0
      %v4681 = vsel %vm1020, %v4673, 0
      %v4683 = vsel %vm1426, %v4676, 0
      %4685 = vmatprep.subr.mxu0 0.0
      %4686 = vmatpush1.msra.mxu0 0.0
      %4687 = vmatprep.subr.mxu0 0.0
      %4688 = vmatpush1.msra.mxu0 0.0
      %4689 = vmatprep.subr.mxu0 0.0
      %4690 = vmatpush1.msra.mxu0 0.0
      %4691 = vmatprep.subr.mxu0 0.0
      %4692 = vmatpush1.msra.mxu0 0.0
      %4693 = vmatprep.subr.mxu0 0.0
      %4694 = vmatpush1.msra.mxu0 0.0
      %4695 = vmatprep.subr.mxu0 0.0
      %4696 = vmatpush1.msra.mxu0 0.0
      %4697 = vmatprep.subr.mxu0 0.0
      %4698 = vmatpush1.msra.mxu0 0.0
      %4699 = vmatprep.subr.mxu0 0.0
      %4700 = vmatpush1.msra.mxu0 0.0
      %4701 = vmatprep.subr.mxu0 0.0
      %4702 = vmatpush1.msra.mxu0 0.0
      %4703 = vmatprep.subr.mxu0 0.0
      %4704 = vmatpush1.msra.mxu0 0.0
      %4705 = vmatprep.subr.mxu0 0.0
      %4706 = vmatpush1.msra.mxu0 0.0
      %4707 = vmatprep.subr.mxu0 0.0
      %4708 = vmatpush1.msra.mxu0 0.0
      %4709 = vmatprep.subr.mxu0 0.0
      %4710 = vmatpush1.msra.mxu0 0.0
      %4711 = vmatprep.subr.mxu0 0.0
      %4712 = vmatpush1.msra.mxu0 0.0
      %4713 = vmatprep.subr.mxu0 0.0
      %4714 = vmatpush1.msra.mxu0 0.0
      %4715 = vmatprep.subr.mxu0 0.0
      %4716 = vmatpush1.msra.mxu0 %v4683
      %4717 = vmatprep.subr.mxu0 0.0
      %4718 = vmatpush2.msra.mxu0 0.0
      %4719 = vmatprep.subr.mxu0 0.0
      %4720 = vmatpush2.msra.mxu0 0.0
      %4721 = vmatprep.subr.mxu0 0.0
      %4722 = vmatpush2.msra.mxu0 0.0
      %4723 = vmatprep.subr.mxu0 0.0
      %4724 = vmatpush2.msra.mxu0 0.0
      %4725 = vmatprep.subr.mxu0 0.0
      %4726 = vmatpush2.msra.mxu0 0.0
      %4727 = vmatprep.subr.mxu0 0.0
      %4728 = vmatpush2.msra.mxu0 0.0
      %4729 = vmatprep.subr.mxu0 0.0
      %4730 = vmatpush2.msra.mxu0 0.0
      %4731 = vmatprep.subr.mxu0 0.0
      %4732 = vmatpush2.msra.mxu0 0.0
      %4733 = vmatprep.subr.mxu0 0.0
      %4734 = vmatpush2.msra.mxu0 0.0
      %4735 = vmatprep.subr.mxu0 0.0
      %4736 = vmatpush2.msra.mxu0 0.0
      %4737 = vmatprep.subr.mxu0 0.0
      %4738 = vmatpush2.msra.mxu0 0.0
      %4739 = vmatprep.subr.mxu0 0.0
      %4740 = vmatpush2.msra.mxu0 0.0
      %4741 = vmatprep.subr.mxu0 0.0
      %4742 = vmatpush2.msra.mxu0 0.0
      %4743 = vmatprep.subr.mxu0 0.0
      %4744 = vmatpush2.msra.mxu0 0.0
      %4745 = vmatprep.subr.mxu0 0.0
      %4746 = vmatpush2.msra.mxu0 0.0
      %4747 = vmatprep.subr.mxu0 0.0
      %4748 = vmatpush2.msra.mxu0 0.0
      %4749 = vmatprep.mubr.f32.mxu0 0.0
      %4750 = vmatmul.mubr.f32.gmra.mxu0 %v4678
      %v4751 = vpop.f32.mrf.mxu0
      %v4752 = vadd.f32 0.0, %v4751
      %v4753 = vpop.f32.mrf.mxu0
      %4754 = vmatprep.mubr.f32.mxu0 0.0
      %4755 = vmatmul.mubr.f32.gmra.mxu0 %v4681
      %v4756 = vpop.f32.mrf.mxu0
      %v4757 = vadd.f32 0.0, %v4756
      %v4758 = vpop.f32.mrf.mxu0
      %4759 = vdwg.mxu0
      %v4760 = vadd.f32 %v4479, %v4752
      %v4761 = vadd.f32 %v4480, %v4757
      %4762 = vrot.lane.b32.xlu0 %v3458, 112
      %v4763 = vpop.permute.xlu0 %4762
      %4764 = vrot.lane.b32.xlu0 %v3463, 112
      %v4765 = vpop.permute.xlu0 %4764
      %4766 = vrot.lane.b32.xlu0 %v3555, 112
      %v4767 = vpop.permute.xlu0 %4766
      %v4768 = vsel %vm1020, %v4763, 0
      %v4770 = vsel %vm1020, %v4765, 0
      %v4772 = vsel %vm1020, %v4767, 0
      %4774 = vmatprep.subr.mxu0 0.0
      %4775 = vmatpush1.xpose.msra.mxu0 0.0
      %4776 = vmatprep.subr.mxu0 0.0
      %4777 = vmatpush1.xpose.msra.mxu0 0.0
      %4778 = vmatprep.subr.mxu0 0.0
      %4779 = vmatpush1.xpose.msra.mxu0 0.0
      %4780 = vmatprep.subr.mxu0 0.0
      %4781 = vmatpush1.xpose.msra.mxu0 0.0
      %4782 = vmatprep.subr.mxu0 0.0
      %4783 = vmatpush1.xpose.msra.mxu0 0.0
      %4784 = vmatprep.subr.mxu0 0.0
      %4785 = vmatpush1.xpose.msra.mxu0 0.0
      %4786 = vmatprep.subr.mxu0 0.0
      %4787 = vmatpush1.xpose.msra.mxu0 0.0
      %4788 = vmatprep.subr.mxu0 0.0
      %4789 = vmatpush1.xpose.msra.mxu0 0.0
      %4790 = vmatprep.subr.mxu0 0.0
      %4791 = vmatpush1.xpose.msra.mxu0 0.0
      %4792 = vmatprep.subr.mxu0 0.0
      %4793 = vmatpush1.xpose.msra.mxu0 0.0
      %4794 = vmatprep.subr.mxu0 0.0
      %4795 = vmatpush1.xpose.msra.mxu0 0.0
      %4796 = vmatprep.subr.mxu0 0.0
      %4797 = vmatpush1.xpose.msra.mxu0 0.0
      %4798 = vmatprep.subr.mxu0 0.0
      %4799 = vmatpush1.xpose.msra.mxu0 0.0
      %4800 = vmatprep.subr.mxu0 0.0
      %4801 = vmatpush1.xpose.msra.mxu0 0.0
      %4802 = vmatprep.subr.mxu0 0.0
      %4803 = vmatpush1.xpose.msra.mxu0 0.0
      %4804 = vmatprep.subr.mxu0 0.0
      %4805 = vmatpush1.xpose.msra.mxu0 %v4772
      %4806 = vmatprep.subr.mxu0 0.0
      %4807 = vmatpush2.xpose.msra.mxu0 0.0
      %4808 = vmatprep.subr.mxu0 0.0
      %4809 = vmatpush2.xpose.msra.mxu0 0.0
      %4810 = vmatprep.subr.mxu0 0.0
      %4811 = vmatpush2.xpose.msra.mxu0 0.0
      %4812 = vmatprep.subr.mxu0 0.0
      %4813 = vmatpush2.xpose.msra.mxu0 0.0
      %4814 = vmatprep.subr.mxu0 0.0
      %4815 = vmatpush2.xpose.msra.mxu0 0.0
      %4816 = vmatprep.subr.mxu0 0.0
      %4817 = vmatpush2.xpose.msra.mxu0 0.0
      %4818 = vmatprep.subr.mxu0 0.0
      %4819 = vmatpush2.xpose.msra.mxu0 0.0
      %4820 = vmatprep.subr.mxu0 0.0
      %4821 = vmatpush2.xpose.msra.mxu0 0.0
      %4822 = vmatprep.subr.mxu0 0.0
      %4823 = vmatpush2.xpose.msra.mxu0 0.0
      %4824 = vmatprep.subr.mxu0 0.0
      %4825 = vmatpush2.xpose.msra.mxu0 0.0
      %4826 = vmatprep.subr.mxu0 0.0
      %4827 = vmatpush2.xpose.msra.mxu0 0.0
      %4828 = vmatprep.subr.mxu0 0.0
      %4829 = vmatpush2.xpose.msra.mxu0 0.0
      %4830 = vmatprep.subr.mxu0 0.0
      %4831 = vmatpush2.xpose.msra.mxu0 0.0
      %4832 = vmatprep.subr.mxu0 0.0
      %4833 = vmatpush2.xpose.msra.mxu0 0.0
      %4834 = vmatprep.subr.mxu0 0.0
      %4835 = vmatpush2.xpose.msra.mxu0 0.0
      %4836 = vmatprep.subr.mxu0 0.0
      %4837 = vmatpush2.xpose.msra.mxu0 0.0
      %4838 = vmatprep.mubr.f32.mxu0 0.0
      %4839 = vmatmul.mubr.f32.gmra.mxu0 %v4768
      %v4840 = vpop.f32.mrf.mxu0
      %v4841 = vadd.f32 0.0, %v4840
      %v4842 = vpop.f32.mrf.mxu0
      %4843 = vmatprep.mubr.f32.mxu0 0.0
      %4844 = vmatmul.mubr.f32.gmra.mxu0 %v4770
      %v4845 = vpop.f32.mrf.mxu0
      %v4846 = vadd.f32 0.0, %v4845
      %v4847 = vpop.f32.mrf.mxu0
      %4848 = vdwg.mxu0
      %v4849 = vmul.f32 %v4841, 0.5
      %v4850 = vmul.f32 %v4846, 0.5
      %v4851 = vsel %vm3732, %v4849, -inf
      %4852 = vmax.xlane.f32.xlu0 %v4851
      %v4853 = vpop.xlane.xlu0 %4852
      %v4854 = vsel %vm3732, %v4850, -inf
      %4855 = vmax.xlane.f32.xlu0 %v4854
      %v4856 = vpop.xlane.xlu0 %4855
      %v4857 = vsub.f32 %v4849, %v4853
      %v4858 = vsub.f32 %v4850, %v4856
      %v4859 = vmul.f32 %v4857, 1.442695
      %v4860 = vpow.pop %v4859
      %v4861 = vmul.f32 %v4858, 1.442695
      %v4862 = vpow.pop %v4861
      %v4863 = vsel %vm3732, %v4860, 0.0
      %4864 = vadd.xlane.f32.xlu0 %v4863
      %v4865 = vpop.xlane.xlu0 %4864
      %v4866 = vsel %vm3732, %v4862, 0.0
      %4867 = vadd.xlane.f32.xlu0 %v4866
      %v4868 = vpop.xlane.xlu0 %4867
      %v4869 = vrcp.pop %v4865
      %v4870 = vrcp.pop %v4868
      %v4871 = vmul.f32 %v4860, %v4869
      %v4872 = vmul.f32 %v4862, %v4870
      %4873 = vrot.lane.b32.xlu0 %v3643, 112
      %v4874 = vpop.permute.xlu0 %4873
      %v4877 = vsel %vm3732, %v4871, 0
      %v4880 = vsel %vm3732, %v4872, 0
      %4882 = vmatprep.subr.mxu0 0.0
      %4883 = vmatpush1.msra.mxu0 0.0
      %4884 = vmatprep.subr.mxu0 0.0
      %4885 = vmatpush1.msra.mxu0 0.0
      %4886 = vmatprep.subr.mxu0 0.0
      %4887 = vmatpush1.msra.mxu0 0.0
      %4888 = vmatprep.subr.mxu0 0.0
      %4889 = vmatpush1.msra.mxu0 0.0
      %4890 = vmatprep.subr.mxu0 0.0
      %4891 = vmatpush1.msra.mxu0 0.0
      %4892 = vmatprep.subr.mxu0 0.0
      %4893 = vmatpush1.msra.mxu0 0.0
      %4894 = vmatprep.subr.mxu0 0.0
      %4895 = vmatpush1.msra.mxu0 0.0
      %4896 = vmatprep.subr.mxu0 0.0
      %4897 = vmatpush1.msra.mxu0 0.0
      %4898 = vmatprep.subr.mxu0 0.0
      %4899 = vmatpush1.msra.mxu0 0.0
      %4900 = vmatprep.subr.mxu0 0.0
      %4901 = vmatpush1.msra.mxu0 0.0
      %4902 = vmatprep.subr.mxu0 0.0
      %4903 = vmatpush1.msra.mxu0 0.0
      %4904 = vmatprep.subr.mxu0 0.0
      %4905 = vmatpush1.msra.mxu0 0.0
      %4906 = vmatprep.subr.mxu0 0.0
      %4907 = vmatpush1.msra.mxu0 0.0
      %4908 = vmatprep.subr.mxu0 0.0
      %4909 = vmatpush1.msra.mxu0 0.0
      %4910 = vmatprep.subr.mxu0 0.0
      %4911 = vmatpush1.msra.mxu0 0.0
      %4912 = vmatprep.subr.mxu0 0.0
      %4913 = vmatpush1.msra.mxu0 %v4874
      %4914 = vmatprep.subr.mxu0 0.0
      %4915 = vmatpush2.msra.mxu0 0.0
      %4916 = vmatprep.subr.mxu0 0.0
      %4917 = vmatpush2.msra.mxu0 0.0
      %4918 = vmatprep.subr.mxu0 0.0
      %4919 = vmatpush2.msra.mxu0 0.0
      %4920 = vmatprep.subr.mxu0 0.0
      %4921 = vmatpush2.msra.mxu0 0.0
      %4922 = vmatprep.subr.mxu0 0.0
      %4923 = vmatpush2.msra.mxu0 0.0
      %4924 = vmatprep.subr.mxu0 0.0
      %4925 = vmatpush2.msra.mxu0 0.0
      %4926 = vmatprep.subr.mxu0 0.0
      %4927 = vmatpush2.msra.mxu0 0.0
      %4928 = vmatprep.subr.mxu0 0.0
      %4929 = vmatpush2.msra.mxu0 0.0
      %4930 = vmatprep.subr.mxu0 0.0
      %4931 = vmatpush2.msra.mxu0 0.0
      %4932 = vmatprep.subr.mxu0 0.0
      %4933 = vmatpush2.msra.mxu0 0.0
      %4934 = vmatprep.subr.mxu0 0.0
      %4935 = vmatpush2.msra.mxu0 0.0
      %4936 = vmatprep.subr.mxu0 0.0
      %4937 = vmatpush2.msra.mxu0 0.0
      %4938 = vmatprep.subr.mxu0 0.0
      %4939 = vmatpush2.msra.mxu0 0.0
      %4940 = vmatprep.subr.mxu0 0.0
      %4941 = vmatpush2.msra.mxu0 0.0
      %4942 = vmatprep.subr.mxu0 0.0
      %4943 = vmatpush2.msra.mxu0 0.0
      %4944 = vmatprep.subr.mxu0 0.0
      %4945 = vmatpush2.msra.mxu0 0.0
      %4946 = vmatprep.mubr.f32.mxu0 0.0
      %4947 = vmatmul.mubr.f32.gmra.mxu0 %v4877
      %v4948 = vpop.f32.mrf.mxu0
      %v4949 = vadd.f32 0.0, %v4948
      %v4950 = vpop.f32.mrf.mxu0
      %4951 = vmatprep.mubr.f32.mxu0 0.0
      %4952 = vmatmul.mubr.f32.gmra.mxu0 %v4880
      %v4953 = vpop.f32.mrf.mxu0
      %v4954 = vadd.f32 0.0, %v4953
      %v4955 = vpop.f32.mrf.mxu0
      %4956 = vdwg.mxu0
      %v4958 = vsel %vm1020, %v4949, 0
      %v4961 = vsel %vm1020, %v4954, 0
      %v4964 = vsel %vm1426, %v3376, 0
      %4966 = vmatprep.subr.mxu0 0.0
      %4967 = vmatpush1.msra.mxu0 0.0
      %4968 = vmatprep.subr.mxu0 0.0
      %4969 = vmatpush1.msra.mxu0 0.0
      %4970 = vmatprep.subr.mxu0 0.0
      %4971 = vmatpush1.msra.mxu0 0.0
      %4972 = vmatprep.subr.mxu0 0.0
      %4973 = vmatpush1.msra.mxu0 0.0
      %4974 = vmatprep.subr.mxu0 0.0
      %4975 = vmatpush1.msra.mxu0 0.0
      %4976 = vmatprep.subr.mxu0 0.0
      %4977 = vmatpush1.msra.mxu0 0.0
      %4978 = vmatprep.subr.mxu0 0.0
      %4979 = vmatpush1.msra.mxu0 0.0
      %4980 = vmatprep.subr.mxu0 0.0
      %4981 = vmatpush1.msra.mxu0 0.0
      %4982 = vmatprep.subr.mxu0 0.0
      %4983 = vmatpush1.msra.mxu0 0.0
      %4984 = vmatprep.subr.mxu0 0.0
      %4985 = vmatpush1.msra.mxu0 0.0
      %4986 = vmatprep.subr.mxu0 0.0
      %4987 = vmatpush1.msra.mxu0 0.0
      %4988 = vmatprep.subr.mxu0 0.0
      %4989 = vmatpush1.msra.mxu0 0.0
      %4990 = vmatprep.subr.mxu0 0.0
      %4991 = vmatpush1.msra.mxu0 0.0
      %4992 = vmatprep.subr.mxu0 0.0
      %4993 = vmatpush1.msra.mxu0 0.0
      %4994 = vmatprep.subr.mxu0 0.0
      %4995 = vmatpush1.msra.mxu0 0.0
      %4996 = vmatprep.subr.mxu0 0.0
      %4997 = vmatpush1.msra.mxu0 %v4964
      %4998 = vmatprep.subr.mxu0 0.0
      %4999 = vmatpush2.msra.mxu0 0.0
      %5000 = vmatprep.subr.mxu0 0.0
      %5001 = vmatpush2.msra.mxu0 0.0
      %5002 = vmatprep.subr.mxu0 0.0
      %5003 = vmatpush2.msra.mxu0 0.0
      %5004 = vmatprep.subr.mxu0 0.0
      %5005 = vmatpush2.msra.mxu0 0.0
      %5006 = vmatprep.subr.mxu0 0.0
      %5007 = vmatpush2.msra.mxu0 0.0
      %5008 = vmatprep.subr.mxu0 0.0
      %5009 = vmatpush2.msra.mxu0 0.0
      %5010 = vmatprep.subr.mxu0 0.0
      %5011 = vmatpush2.msra.mxu0 0.0
      %5012 = vmatprep.subr.mxu0 0.0
      %5013 = vmatpush2.msra.mxu0 0.0
      %5014 = vmatprep.subr.mxu0 0.0
      %5015 = vmatpush2.msra.mxu0 0.0
      %5016 = vmatprep.subr.mxu0 0.0
      %5017 = vmatpush2.msra.mxu0 0.0
      %5018 = vmatprep.subr.mxu0 0.0
      %5019 = vmatpush2.msra.mxu0 0.0
      %5020 = vmatprep.subr.mxu0 0.0
      %5021 = vmatpush2.msra.mxu0 0.0
      %5022 = vmatprep.subr.mxu0 0.0
      %5023 = vmatpush2.msra.mxu0 0.0
      %5024 = vmatprep.subr.mxu0 0.0
      %5025 = vmatpush2.msra.mxu0 0.0
      %5026 = vmatprep.subr.mxu0 0.0
      %5027 = vmatpush2.msra.mxu0 0.0
      %5028 = vmatprep.subr.mxu0 0.0
      %5029 = vmatpush2.msra.mxu0 0.0
      %5030 = vmatprep.mubr.f32.mxu0 0.0
      %5031 = vmatmul.mubr.f32.gmra.mxu0 %v4958
      %v5032 = vpop.f32.mrf.mxu0
      %v5033 = vadd.f32 0.0, %v5032
      %v5034 = vpop.f32.mrf.mxu0
      %5035 = vmatprep.mubr.f32.mxu0 0.0
      %5036 = vmatmul.mubr.f32.gmra.mxu0 %v4961
      %v5037 = vpop.f32.mrf.mxu0
      %v5038 = vadd.f32 0.0, %v5037
      %v5039 = vpop.f32.mrf.mxu0
      %5040 = vdwg.mxu0
      %v5041 = vadd.f32 %v4760, %v5033
      %v5042 = vadd.f32 %v4761, %v5038
      %5043 = vrot.lane.b32.xlu0 %v3458, 108
      %v5044 = vpop.permute.xlu0 %5043
      %5045 = vrot.lane.b32.xlu0 %v3463, 108
      %v5046 = vpop.permute.xlu0 %5045
      %5047 = vrot.lane.b32.xlu0 %v3555, 108
      %v5048 = vpop.permute.xlu0 %5047
      %v5049 = vsel %vm1020, %v5044, 0
      %v5051 = vsel %vm1020, %v5046, 0
      %v5053 = vsel %vm1020, %v5048, 0
      %5055 = vmatprep.subr.mxu0 0.0
      %5056 = vmatpush1.xpose.msra.mxu0 0.0
      %5057 = vmatprep.subr.mxu0 0.0
      %5058 = vmatpush1.xpose.msra.mxu0 0.0
      %5059 = vmatprep.subr.mxu0 0.0
      %5060 = vmatpush1.xpose.msra.mxu0 0.0
      %5061 = vmatprep.subr.mxu0 0.0
      %5062 = vmatpush1.xpose.msra.mxu0 0.0
      %5063 = vmatprep.subr.mxu0 0.0
      %5064 = vmatpush1.xpose.msra.mxu0 0.0
      %5065 = vmatprep.subr.mxu0 0.0
      %5066 = vmatpush1.xpose.msra.mxu0 0.0
      %5067 = vmatprep.subr.mxu0 0.0
      %5068 = vmatpush1.xpose.msra.mxu0 0.0
      %5069 = vmatprep.subr.mxu0 0.0
      %5070 = vmatpush1.xpose.msra.mxu0 0.0
      %5071 = vmatprep.subr.mxu0 0.0
      %5072 = vmatpush1.xpose.msra.mxu0 0.0
      %5073 = vmatprep.subr.mxu0 0.0
      %5074 = vmatpush1.xpose.msra.mxu0 0.0
      %5075 = vmatprep.subr.mxu0 0.0
      %5076 = vmatpush1.xpose.msra.mxu0 0.0
      %5077 = vmatprep.subr.mxu0 0.0
      %5078 = vmatpush1.xpose.msra.mxu0 0.0
      %5079 = vmatprep.subr.mxu0 0.0
      %5080 = vmatpush1.xpose.msra.mxu0 0.0
      %5081 = vmatprep.subr.mxu0 0.0
      %5082 = vmatpush1.xpose.msra.mxu0 0.0
      %5083 = vmatprep.subr.mxu0 0.0
      %5084 = vmatpush1.xpose.msra.mxu0 0.0
      %5085 = vmatprep.subr.mxu0 0.0
      %5086 = vmatpush1.xpose.msra.mxu0 %v5053
      %5087 = vmatprep.subr.mxu0 0.0
      %5088 = vmatpush2.xpose.msra.mxu0 0.0
      %5089 = vmatprep.subr.mxu0 0.0
      %5090 = vmatpush2.xpose.msra.mxu0 0.0
      %5091 = vmatprep.subr.mxu0 0.0
      %5092 = vmatpush2.xpose.msra.mxu0 0.0
      %5093 = vmatprep.subr.mxu0 0.0
      %5094 = vmatpush2.xpose.msra.mxu0 0.0
      %5095 = vmatprep.subr.mxu0 0.0
      %5096 = vmatpush2.xpose.msra.mxu0 0.0
      %5097 = vmatprep.subr.mxu0 0.0
      %5098 = vmatpush2.xpose.msra.mxu0 0.0
      %5099 = vmatprep.subr.mxu0 0.0
      %5100 = vmatpush2.xpose.msra.mxu0 0.0
      %5101 = vmatprep.subr.mxu0 0.0
      %5102 = vmatpush2.xpose.msra.mxu0 0.0
      %5103 = vmatprep.subr.mxu0 0.0
      %5104 = vmatpush2.xpose.msra.mxu0 0.0
      %5105 = vmatprep.subr.mxu0 0.0
      %5106 = vmatpush2.xpose.msra.mxu0 0.0
      %5107 = vmatprep.subr.mxu0 0.0
      %5108 = vmatpush2.xpose.msra.mxu0 0.0
      %5109 = vmatprep.subr.mxu0 0.0
      %5110 = vmatpush2.xpose.msra.mxu0 0.0
      %5111 = vmatprep.subr.mxu0 0.0
      %5112 = vmatpush2.xpose.msra.mxu0 0.0
      %5113 = vmatprep.subr.mxu0 0.0
      %5114 = vmatpush2.xpose.msra.mxu0 0.0
      %5115 = vmatprep.subr.mxu0 0.0
      %5116 = vmatpush2.xpose.msra.mxu0 0.0
      %5117 = vmatprep.subr.mxu0 0.0
      %5118 = vmatpush2.xpose.msra.mxu0 0.0
      %5119 = vmatprep.mubr.f32.mxu0 0.0
      %5120 = vmatmul.mubr.f32.gmra.mxu0 %v5049
      %v5121 = vpop.f32.mrf.mxu0
      %v5122 = vadd.f32 0.0, %v5121
      %v5123 = vpop.f32.mrf.mxu0
      %5124 = vmatprep.mubr.f32.mxu0 0.0
      %5125 = vmatmul.mubr.f32.gmra.mxu0 %v5051
      %v5126 = vpop.f32.mrf.mxu0
      %v5127 = vadd.f32 0.0, %v5126
      %v5128 = vpop.f32.mrf.mxu0
      %5129 = vdwg.mxu0
      %v5130 = vmul.f32 %v5122, 0.5
      %v5131 = vmul.f32 %v5127, 0.5
      %v5132 = vsel %vm3732, %v5130, -inf
      %5133 = vmax.xlane.f32.xlu0 %v5132
      %v5134 = vpop.xlane.xlu0 %5133
      %v5135 = vsel %vm3732, %v5131, -inf
      %5136 = vmax.xlane.f32.xlu0 %v5135
      %v5137 = vpop.xlane.xlu0 %5136
      %v5138 = vsub.f32 %v5130, %v5134
      %v5139 = vsub.f32 %v5131, %v5137
      %v5140 = vmul.f32 %v5138, 1.442695
      %v5141 = vpow.pop %v5140
      %v5142 = vmul.f32 %v5139, 1.442695
      %v5143 = vpow.pop %v5142
      %v5144 = vsel %vm3732, %v5141, 0.0
      %5145 = vadd.xlane.f32.xlu0 %v5144
      %v5146 = vpop.xlane.xlu0 %5145
      %v5147 = vsel %vm3732, %v5143, 0.0
      %5148 = vadd.xlane.f32.xlu0 %v5147
      %v5149 = vpop.xlane.xlu0 %5148
      %v5150 = vrcp.pop %v5146
      %v5151 = vrcp.pop %v5149
      %v5152 = vmul.f32 %v5141, %v5150
      %v5153 = vmul.f32 %v5143, %v5151
      %5154 = vrot.lane.b32.xlu0 %v3643, 108
      %v5155 = vpop.permute.xlu0 %5154
      %v5158 = vsel %vm3732, %v5152, 0
      %v5161 = vsel %vm3732, %v5153, 0
      %5163 = vmatprep.subr.mxu0 0.0
      %5164 = vmatpush1.msra.mxu0 0.0
      %5165 = vmatprep.subr.mxu0 0.0
      %5166 = vmatpush1.msra.mxu0 0.0
      %5167 = vmatprep.subr.mxu0 0.0
      %5168 = vmatpush1.msra.mxu0 0.0
      %5169 = vmatprep.subr.mxu0 0.0
      %5170 = vmatpush1.msra.mxu0 0.0
      %5171 = vmatprep.subr.mxu0 0.0
      %5172 = vmatpush1.msra.mxu0 0.0
      %5173 = vmatprep.subr.mxu0 0.0
      %5174 = vmatpush1.msra.mxu0 0.0
      %5175 = vmatprep.subr.mxu0 0.0
      %5176 = vmatpush1.msra.mxu0 0.0
      %5177 = vmatprep.subr.mxu0 0.0
      %5178 = vmatpush1.msra.mxu0 0.0
      %5179 = vmatprep.subr.mxu0 0.0
      %5180 = vmatpush1.msra.mxu0 0.0
      %5181 = vmatprep.subr.mxu0 0.0
      %5182 = vmatpush1.msra.mxu0 0.0
      %5183 = vmatprep.subr.mxu0 0.0
      %5184 = vmatpush1.msra.mxu0 0.0
      %5185 = vmatprep.subr.mxu0 0.0
      %5186 = vmatpush1.msra.mxu0 0.0
      %5187 = vmatprep.subr.mxu0 0.0
      %5188 = vmatpush1.msra.mxu0 0.0
      %5189 = vmatprep.subr.mxu0 0.0
      %5190 = vmatpush1.msra.mxu0 0.0
      %5191 = vmatprep.subr.mxu0 0.0
      %5192 = vmatpush1.msra.mxu0 0.0
      %5193 = vmatprep.subr.mxu0 0.0
      %5194 = vmatpush1.msra.mxu0 %v5155
      %5195 = vmatprep.subr.mxu0 0.0
      %5196 = vmatpush2.msra.mxu0 0.0
      %5197 = vmatprep.subr.mxu0 0.0
      %5198 = vmatpush2.msra.mxu0 0.0
      %5199 = vmatprep.subr.mxu0 0.0
      %5200 = vmatpush2.msra.mxu0 0.0
      %5201 = vmatprep.subr.mxu0 0.0
      %5202 = vmatpush2.msra.mxu0 0.0
      %5203 = vmatprep.subr.mxu0 0.0
      %5204 = vmatpush2.msra.mxu0 0.0
      %5205 = vmatprep.subr.mxu0 0.0
      %5206 = vmatpush2.msra.mxu0 0.0
      %5207 = vmatprep.subr.mxu0 0.0
      %5208 = vmatpush2.msra.mxu0 0.0
      %5209 = vmatprep.subr.mxu0 0.0
      %5210 = vmatpush2.msra.mxu0 0.0
      %5211 = vmatprep.subr.mxu0 0.0
      %5212 = vmatpush2.msra.mxu0 0.0
      %5213 = vmatprep.subr.mxu0 0.0
      %5214 = vmatpush2.msra.mxu0 0.0
      %5215 = vmatprep.subr.mxu0 0.0
      %5216 = vmatpush2.msra.mxu0 0.0
      %5217 = vmatprep.subr.mxu0 0.0
      %5218 = vmatpush2.msra.mxu0 0.0
      %5219 = vmatprep.subr.mxu0 0.0
      %5220 = vmatpush2.msra.mxu0 0.0
      %5221 = vmatprep.subr.mxu0 0.0
      %5222 = vmatpush2.msra.mxu0 0.0
      %5223 = vmatprep.subr.mxu0 0.0
      %5224 = vmatpush2.msra.mxu0 0.0
      %5225 = vmatprep.subr.mxu0 0.0
      %5226 = vmatpush2.msra.mxu0 0.0
      %5227 = vmatprep.mubr.f32.mxu0 0.0
      %5228 = vmatmul.mubr.f32.gmra.mxu0 %v5158
      %v5229 = vpop.f32.mrf.mxu0
      %v5230 = vadd.f32 0.0, %v5229
      %v5231 = vpop.f32.mrf.mxu0
      %5232 = vmatprep.mubr.f32.mxu0 0.0
      %5233 = vmatmul.mubr.f32.gmra.mxu0 %v5161
      %v5234 = vpop.f32.mrf.mxu0
      %v5235 = vadd.f32 0.0, %v5234
      %v5236 = vpop.f32.mrf.mxu0
      %5237 = vdwg.mxu0
      %v5238 = vrot.slane %v3376, 4
      %v5240 = vsel %vm1020, %v5230, 0
      %v5243 = vsel %vm1020, %v5235, 0
      %v5245 = vsel %vm1426, %v5238, 0
      %5247 = vmatprep.subr.mxu0 0.0
      %5248 = vmatpush1.msra.mxu0 0.0
      %5249 = vmatprep.subr.mxu0 0.0
      %5250 = vmatpush1.msra.mxu0 0.0
      %5251 = vmatprep.subr.mxu0 0.0
      %5252 = vmatpush1.msra.mxu0 0.0
      %5253 = vmatprep.subr.mxu0 0.0
      %5254 = vmatpush1.msra.mxu0 0.0
      %5255 = vmatprep.subr.mxu0 0.0
      %5256 = vmatpush1.msra.mxu0 0.0
      %5257 = vmatprep.subr.mxu0 0.0
      %5258 = vmatpush1.msra.mxu0 0.0
      %5259 = vmatprep.subr.mxu0 0.0
      %5260 = vmatpush1.msra.mxu0 0.0
      %5261 = vmatprep.subr.mxu0 0.0
      %5262 = vmatpush1.msra.mxu0 0.0
      %5263 = vmatprep.subr.mxu0 0.0
      %5264 = vmatpush1.msra.mxu0 0.0
      %5265 = vmatprep.subr.mxu0 0.0
      %5266 = vmatpush1.msra.mxu0 0.0
      %5267 = vmatprep.subr.mxu0 0.0
      %5268 = vmatpush1.msra.mxu0 0.0
      %5269 = vmatprep.subr.mxu0 0.0
      %5270 = vmatpush1.msra.mxu0 0.0
      %5271 = vmatprep.subr.mxu0 0.0
      %5272 = vmatpush1.msra.mxu0 0.0
      %5273 = vmatprep.subr.mxu0 0.0
      %5274 = vmatpush1.msra.mxu0 0.0
      %5275 = vmatprep.subr.mxu0 0.0
      %5276 = vmatpush1.msra.mxu0 0.0
      %5277 = vmatprep.subr.mxu0 0.0
      %5278 = vmatpush1.msra.mxu0 %v5245
      %5279 = vmatprep.subr.mxu0 0.0
      %5280 = vmatpush2.msra.mxu0 0.0
      %5281 = vmatprep.subr.mxu0 0.0
      %5282 = vmatpush2.msra.mxu0 0.0
      %5283 = vmatprep.subr.mxu0 0.0
      %5284 = vmatpush2.msra.mxu0 0.0
      %5285 = vmatprep.subr.mxu0 0.0
      %5286 = vmatpush2.msra.mxu0 0.0
      %5287 = vmatprep.subr.mxu0 0.0
      %5288 = vmatpush2.msra.mxu0 0.0
      %5289 = vmatprep.subr.mxu0 0.0
      %5290 = vmatpush2.msra.mxu0 0.0
      %5291 = vmatprep.subr.mxu0 0.0
      %5292 = vmatpush2.msra.mxu0 0.0
      %5293 = vmatprep.subr.mxu0 0.0
      %5294 = vmatpush2.msra.mxu0 0.0
      %5295 = vmatprep.subr.mxu0 0.0
      %5296 = vmatpush2.msra.mxu0 0.0
      %5297 = vmatprep.subr.mxu0 0.0
      %5298 = vmatpush2.msra.mxu0 0.0
      %5299 = vmatprep.subr.mxu0 0.0
      %5300 = vmatpush2.msra.mxu0 0.0
      %5301 = vmatprep.subr.mxu0 0.0
      %5302 = vmatpush2.msra.mxu0 0.0
      %5303 = vmatprep.subr.mxu0 0.0
      %5304 = vmatpush2.msra.mxu0 0.0
      %5305 = vmatprep.subr.mxu0 0.0
      %5306 = vmatpush2.msra.mxu0 0.0
      %5307 = vmatprep.subr.mxu0 0.0
      %5308 = vmatpush2.msra.mxu0 0.0
      %5309 = vmatprep.subr.mxu0 0.0
      %5310 = vmatpush2.msra.mxu0 0.0
      %5311 = vmatprep.mubr.f32.mxu0 0.0
      %5312 = vmatmul.mubr.f32.gmra.mxu0 %v5240
      %v5313 = vpop.f32.mrf.mxu0
      %v5314 = vadd.f32 0.0, %v5313
      %v5315 = vpop.f32.mrf.mxu0
      %5316 = vmatprep.mubr.f32.mxu0 0.0
      %5317 = vmatmul.mubr.f32.gmra.mxu0 %v5243
      %v5318 = vpop.f32.mrf.mxu0
      %v5319 = vadd.f32 0.0, %v5318
      %v5320 = vpop.f32.mrf.mxu0
      %5321 = vdwg.mxu0
      %v5322 = vadd.f32 %v5041, %v5314
      %v5323 = vadd.f32 %v5042, %v5319
      %5324 = vrot.lane.b32.xlu0 %v3458, 104
      %v5325 = vpop.permute.xlu0 %5324
      %5326 = vrot.lane.b32.xlu0 %v3463, 104
      %v5327 = vpop.permute.xlu0 %5326
      %5328 = vrot.lane.b32.xlu0 %v3555, 104
      %v5329 = vpop.permute.xlu0 %5328
      %v5330 = vsel %vm1020, %v5325, 0
      %v5332 = vsel %vm1020, %v5327, 0
      %v5334 = vsel %vm1020, %v5329, 0
      %5336 = vmatprep.subr.mxu0 0.0
      %5337 = vmatpush1.xpose.msra.mxu0 0.0
      %5338 = vmatprep.subr.mxu0 0.0
      %5339 = vmatpush1.xpose.msra.mxu0 0.0
      %5340 = vmatprep.subr.mxu0 0.0
      %5341 = vmatpush1.xpose.msra.mxu0 0.0
      %5342 = vmatprep.subr.mxu0 0.0
      %5343 = vmatpush1.xpose.msra.mxu0 0.0
      %5344 = vmatprep.subr.mxu0 0.0
      %5345 = vmatpush1.xpose.msra.mxu0 0.0
      %5346 = vmatprep.subr.mxu0 0.0
      %5347 = vmatpush1.xpose.msra.mxu0 0.0
      %5348 = vmatprep.subr.mxu0 0.0
      %5349 = vmatpush1.xpose.msra.mxu0 0.0
      %5350 = vmatprep.subr.mxu0 0.0
      %5351 = vmatpush1.xpose.msra.mxu0 0.0
      %5352 = vmatprep.subr.mxu0 0.0
      %5353 = vmatpush1.xpose.msra.mxu0 0.0
      %5354 = vmatprep.subr.mxu0 0.0
      %5355 = vmatpush1.xpose.msra.mxu0 0.0
      %5356 = vmatprep.subr.mxu0 0.0
      %5357 = vmatpush1.xpose.msra.mxu0 0.0
      %5358 = vmatprep.subr.mxu0 0.0
      %5359 = vmatpush1.xpose.msra.mxu0 0.0
      %5360 = vmatprep.subr.mxu0 0.0
      %5361 = vmatpush1.xpose.msra.mxu0 0.0
      %5362 = vmatprep.subr.mxu0 0.0
      %5363 = vmatpush1.xpose.msra.mxu0 0.0
      %5364 = vmatprep.subr.mxu0 0.0
      %5365 = vmatpush1.xpose.msra.mxu0 0.0
      %5366 = vmatprep.subr.mxu0 0.0
      %5367 = vmatpush1.xpose.msra.mxu0 %v5334
      %5368 = vmatprep.subr.mxu0 0.0
      %5369 = vmatpush2.xpose.msra.mxu0 0.0
      %5370 = vmatprep.subr.mxu0 0.0
      %5371 = vmatpush2.xpose.msra.mxu0 0.0
      %5372 = vmatprep.subr.mxu0 0.0
      %5373 = vmatpush2.xpose.msra.mxu0 0.0
      %5374 = vmatprep.subr.mxu0 0.0
      %5375 = vmatpush2.xpose.msra.mxu0 0.0
      %5376 = vmatprep.subr.mxu0 0.0
      %5377 = vmatpush2.xpose.msra.mxu0 0.0
      %5378 = vmatprep.subr.mxu0 0.0
      %5379 = vmatpush2.xpose.msra.mxu0 0.0
      %5380 = vmatprep.subr.mxu0 0.0
      %5381 = vmatpush2.xpose.msra.mxu0 0.0
      %5382 = vmatprep.subr.mxu0 0.0
      %5383 = vmatpush2.xpose.msra.mxu0 0.0
      %5384 = vmatprep.subr.mxu0 0.0
      %5385 = vmatpush2.xpose.msra.mxu0 0.0
      %5386 = vmatprep.subr.mxu0 0.0
      %5387 = vmatpush2.xpose.msra.mxu0 0.0
      %5388 = vmatprep.subr.mxu0 0.0
      %5389 = vmatpush2.xpose.msra.mxu0 0.0
      %5390 = vmatprep.subr.mxu0 0.0
      %5391 = vmatpush2.xpose.msra.mxu0 0.0
      %5392 = vmatprep.subr.mxu0 0.0
      %5393 = vmatpush2.xpose.msra.mxu0 0.0
      %5394 = vmatprep.subr.mxu0 0.0
      %5395 = vmatpush2.xpose.msra.mxu0 0.0
      %5396 = vmatprep.subr.mxu0 0.0
      %5397 = vmatpush2.xpose.msra.mxu0 0.0
      %5398 = vmatprep.subr.mxu0 0.0
      %5399 = vmatpush2.xpose.msra.mxu0 0.0
      %5400 = vmatprep.mubr.f32.mxu0 0.0
      %5401 = vmatmul.mubr.f32.gmra.mxu0 %v5330
      %v5402 = vpop.f32.mrf.mxu0
      %v5403 = vadd.f32 0.0, %v5402
      %v5404 = vpop.f32.mrf.mxu0
      %5405 = vmatprep.mubr.f32.mxu0 0.0
      %5406 = vmatmul.mubr.f32.gmra.mxu0 %v5332
      %v5407 = vpop.f32.mrf.mxu0
      %v5408 = vadd.f32 0.0, %v5407
      %v5409 = vpop.f32.mrf.mxu0
      %5410 = vdwg.mxu0
      %v5411 = vmul.f32 %v5403, 0.5
      %v5412 = vmul.f32 %v5408, 0.5
      %v5413 = vsel %vm3732, %v5411, -inf
      %5414 = vmax.xlane.f32.xlu0 %v5413
      %v5415 = vpop.xlane.xlu0 %5414
      %v5416 = vsel %vm3732, %v5412, -inf
      %5417 = vmax.xlane.f32.xlu0 %v5416
      %v5418 = vpop.xlane.xlu0 %5417
      %v5419 = vsub.f32 %v5411, %v5415
      %v5420 = vsub.f32 %v5412, %v5418
      %v5421 = vmul.f32 %v5419, 1.442695
      %v5422 = vpow.pop %v5421
      %v5423 = vmul.f32 %v5420, 1.442695
      %v5424 = vpow.pop %v5423
      %v5425 = vsel %vm3732, %v5422, 0.0
      %5426 = vadd.xlane.f32.xlu0 %v5425
      %v5427 = vpop.xlane.xlu0 %5426
      %v5428 = vsel %vm3732, %v5424, 0.0
      %5429 = vadd.xlane.f32.xlu0 %v5428
      %v5430 = vpop.xlane.xlu0 %5429
      %v5431 = vrcp.pop %v5427
      %v5432 = vrcp.pop %v5430
      %v5433 = vmul.f32 %v5422, %v5431
      %v5434 = vmul.f32 %v5424, %v5432
      %5435 = vrot.lane.b32.xlu0 %v3643, 104
      %v5436 = vpop.permute.xlu0 %5435
      %v5439 = vsel %vm3732, %v5433, 0
      %v5442 = vsel %vm3732, %v5434, 0
      %5444 = vmatprep.subr.mxu0 0.0
      %5445 = vmatpush1.msra.mxu0 0.0
      %5446 = vmatprep.subr.mxu0 0.0
      %5447 = vmatpush1.msra.mxu0 0.0
      %5448 = vmatprep.subr.mxu0 0.0
      %5449 = vmatpush1.msra.mxu0 0.0
      %5450 = vmatprep.subr.mxu0 0.0
      %5451 = vmatpush1.msra.mxu0 0.0
      %5452 = vmatprep.subr.mxu0 0.0
      %5453 = vmatpush1.msra.mxu0 0.0
      %5454 = vmatprep.subr.mxu0 0.0
      %5455 = vmatpush1.msra.mxu0 0.0
      %5456 = vmatprep.subr.mxu0 0.0
      %5457 = vmatpush1.msra.mxu0 0.0
      %5458 = vmatprep.subr.mxu0 0.0
      %5459 = vmatpush1.msra.mxu0 0.0
      %5460 = vmatprep.subr.mxu0 0.0
      %5461 = vmatpush1.msra.mxu0 0.0
      %5462 = vmatprep.subr.mxu0 0.0
      %5463 = vmatpush1.msra.mxu0 0.0
      %5464 = vmatprep.subr.mxu0 0.0
      %5465 = vmatpush1.msra.mxu0 0.0
      %5466 = vmatprep.subr.mxu0 0.0
      %5467 = vmatpush1.msra.mxu0 0.0
      %5468 = vmatprep.subr.mxu0 0.0
      %5469 = vmatpush1.msra.mxu0 0.0
      %5470 = vmatprep.subr.mxu0 0.0
      %5471 = vmatpush1.msra.mxu0 0.0
      %5472 = vmatprep.subr.mxu0 0.0
      %5473 = vmatpush1.msra.mxu0 0.0
      %5474 = vmatprep.subr.mxu0 0.0
      %5475 = vmatpush1.msra.mxu0 %v5436
      %5476 = vmatprep.subr.mxu0 0.0
      %5477 = vmatpush2.msra.mxu0 0.0
      %5478 = vmatprep.subr.mxu0 0.0
      %5479 = vmatpush2.msra.mxu0 0.0
      %5480 = vmatprep.subr.mxu0 0.0
      %5481 = vmatpush2.msra.mxu0 0.0
      %5482 = vmatprep.subr.mxu0 0.0
      %5483 = vmatpush2.msra.mxu0 0.0
      %5484 = vmatprep.subr.mxu0 0.0
      %5485 = vmatpush2.msra.mxu0 0.0
      %5486 = vmatprep.subr.mxu0 0.0
      %5487 = vmatpush2.msra.mxu0 0.0
      %5488 = vmatprep.subr.mxu0 0.0
      %5489 = vmatpush2.msra.mxu0 0.0
      %5490 = vmatprep.subr.mxu0 0.0
      %5491 = vmatpush2.msra.mxu0 0.0
      %5492 = vmatprep.subr.mxu0 0.0
      %5493 = vmatpush2.msra.mxu0 0.0
      %5494 = vmatprep.subr.mxu0 0.0
      %5495 = vmatpush2.msra.mxu0 0.0
      %5496 = vmatprep.subr.mxu0 0.0
      %5497 = vmatpush2.msra.mxu0 0.0
      %5498 = vmatprep.subr.mxu0 0.0
      %5499 = vmatpush2.msra.mxu0 0.0
      %5500 = vmatprep.subr.mxu0 0.0
      %5501 = vmatpush2.msra.mxu0 0.0
      %5502 = vmatprep.subr.mxu0 0.0
      %5503 = vmatpush2.msra.mxu0 0.0
      %5504 = vmatprep.subr.mxu0 0.0
      %5505 = vmatpush2.msra.mxu0 0.0
      %5506 = vmatprep.subr.mxu0 0.0
      %5507 = vmatpush2.msra.mxu0 0.0
      %5508 = vmatprep.mubr.f32.mxu0 0.0
      %5509 = vmatmul.mubr.f32.gmra.mxu0 %v5439
      %v5510 = vpop.f32.mrf.mxu0
      %v5511 = vadd.f32 0.0, %v5510
      %v5512 = vpop.f32.mrf.mxu0
      %5513 = vmatprep.mubr.f32.mxu0 0.0
      %5514 = vmatmul.mubr.f32.gmra.mxu0 %v5442
      %v5515 = vpop.f32.mrf.mxu0
      %v5516 = vadd.f32 0.0, %v5515
      %v5517 = vpop.f32.mrf.mxu0
      %5518 = vdwg.mxu0
      %v5520 = vsel %vm1020, %v5511, 0
      %v5523 = vsel %vm1020, %v5516, 0
      %v5526 = vsel %vm1426, %v3377, 0
      %5528 = vmatprep.subr.mxu0 0.0
      %5529 = vmatpush1.msra.mxu0 0.0
      %5530 = vmatprep.subr.mxu0 0.0
      %5531 = vmatpush1.msra.mxu0 0.0
      %5532 = vmatprep.subr.mxu0 0.0
      %5533 = vmatpush1.msra.mxu0 0.0
      %5534 = vmatprep.subr.mxu0 0.0
      %5535 = vmatpush1.msra.mxu0 0.0
      %5536 = vmatprep.subr.mxu0 0.0
      %5537 = vmatpush1.msra.mxu0 0.0
      %5538 = vmatprep.subr.mxu0 0.0
      %5539 = vmatpush1.msra.mxu0 0.0
      %5540 = vmatprep.subr.mxu0 0.0
      %5541 = vmatpush1.msra.mxu0 0.0
      %5542 = vmatprep.subr.mxu0 0.0
      %5543 = vmatpush1.msra.mxu0 0.0
      %5544 = vmatprep.subr.mxu0 0.0
      %5545 = vmatpush1.msra.mxu0 0.0
      %5546 = vmatprep.subr.mxu0 0.0
      %5547 = vmatpush1.msra.mxu0 0.0
      %5548 = vmatprep.subr.mxu0 0.0
      %5549 = vmatpush1.msra.mxu0 0.0
      %5550 = vmatprep.subr.mxu0 0.0
      %5551 = vmatpush1.msra.mxu0 0.0
      %5552 = vmatprep.subr.mxu0 0.0
      %5553 = vmatpush1.msra.mxu0 0.0
      %5554 = vmatprep.subr.mxu0 0.0
      %5555 = vmatpush1.msra.mxu0 0.0
      %5556 = vmatprep.subr.mxu0 0.0
      %5557 = vmatpush1.msra.mxu0 0.0
      %5558 = vmatprep.subr.mxu0 0.0
      %5559 = vmatpush1.msra.mxu0 %v5526
      %5560 = vmatprep.subr.mxu0 0.0
      %5561 = vmatpush2.msra.mxu0 0.0
      %5562 = vmatprep.subr.mxu0 0.0
      %5563 = vmatpush2.msra.mxu0 0.0
      %5564 = vmatprep.subr.mxu0 0.0
      %5565 = vmatpush2.msra.mxu0 0.0
      %5566 = vmatprep.subr.mxu0 0.0
      %5567 = vmatpush2.msra.mxu0 0.0
      %5568 = vmatprep.subr.mxu0 0.0
      %5569 = vmatpush2.msra.mxu0 0.0
      %5570 = vmatprep.subr.mxu0 0.0
      %5571 = vmatpush2.msra.mxu0 0.0
      %5572 = vmatprep.subr.mxu0 0.0
      %5573 = vmatpush2.msra.mxu0 0.0
      %5574 = vmatprep.subr.mxu0 0.0
      %5575 = vmatpush2.msra.mxu0 0.0
      %5576 = vmatprep.subr.mxu0 0.0
      %5577 = vmatpush2.msra.mxu0 0.0
      %5578 = vmatprep.subr.mxu0 0.0
      %5579 = vmatpush2.msra.mxu0 0.0
      %5580 = vmatprep.subr.mxu0 0.0
      %5581 = vmatpush2.msra.mxu0 0.0
      %5582 = vmatprep.subr.mxu0 0.0
      %5583 = vmatpush2.msra.mxu0 0.0
      %5584 = vmatprep.subr.mxu0 0.0
      %5585 = vmatpush2.msra.mxu0 0.0
      %5586 = vmatprep.subr.mxu0 0.0
      %5587 = vmatpush2.msra.mxu0 0.0
      %5588 = vmatprep.subr.mxu0 0.0
      %5589 = vmatpush2.msra.mxu0 0.0
      %5590 = vmatprep.subr.mxu0 0.0
      %5591 = vmatpush2.msra.mxu0 0.0
      %5592 = vmatprep.mubr.f32.mxu0 0.0
      %5593 = vmatmul.mubr.f32.gmra.mxu0 %v5520
      %v5594 = vpop.f32.mrf.mxu0
      %v5595 = vadd.f32 0.0, %v5594
      %v5596 = vpop.f32.mrf.mxu0
      %5597 = vmatprep.mubr.f32.mxu0 0.0
      %5598 = vmatmul.mubr.f32.gmra.mxu0 %v5523
      %v5599 = vpop.f32.mrf.mxu0
      %v5600 = vadd.f32 0.0, %v5599
      %v5601 = vpop.f32.mrf.mxu0
      %5602 = vdwg.mxu0
      %v5603 = vadd.f32 %v5322, %v5595
      %v5604 = vadd.f32 %v5323, %v5600
      %5605 = vrot.lane.b32.xlu0 %v3458, 100
      %v5606 = vpop.permute.xlu0 %5605
      %5607 = vrot.lane.b32.xlu0 %v3463, 100
      %v5608 = vpop.permute.xlu0 %5607
      %5609 = vrot.lane.b32.xlu0 %v3555, 100
      %v5610 = vpop.permute.xlu0 %5609
      %v5611 = vsel %vm1020, %v5606, 0
      %v5613 = vsel %vm1020, %v5608, 0
      %v5615 = vsel %vm1020, %v5610, 0
      %5617 = vmatprep.subr.mxu0 0.0
      %5618 = vmatpush1.xpose.msra.mxu0 0.0
      %5619 = vmatprep.subr.mxu0 0.0
      %5620 = vmatpush1.xpose.msra.mxu0 0.0
      %5621 = vmatprep.subr.mxu0 0.0
      %5622 = vmatpush1.xpose.msra.mxu0 0.0
      %5623 = vmatprep.subr.mxu0 0.0
      %5624 = vmatpush1.xpose.msra.mxu0 0.0
      %5625 = vmatprep.subr.mxu0 0.0
      %5626 = vmatpush1.xpose.msra.mxu0 0.0
      %5627 = vmatprep.subr.mxu0 0.0
      %5628 = vmatpush1.xpose.msra.mxu0 0.0
      %5629 = vmatprep.subr.mxu0 0.0
      %5630 = vmatpush1.xpose.msra.mxu0 0.0
      %5631 = vmatprep.subr.mxu0 0.0
      %5632 = vmatpush1.xpose.msra.mxu0 0.0
      %5633 = vmatprep.subr.mxu0 0.0
      %5634 = vmatpush1.xpose.msra.mxu0 0.0
      %5635 = vmatprep.subr.mxu0 0.0
      %5636 = vmatpush1.xpose.msra.mxu0 0.0
      %5637 = vmatprep.subr.mxu0 0.0
      %5638 = vmatpush1.xpose.msra.mxu0 0.0
      %5639 = vmatprep.subr.mxu0 0.0
      %5640 = vmatpush1.xpose.msra.mxu0 0.0
      %5641 = vmatprep.subr.mxu0 0.0
      %5642 = vmatpush1.xpose.msra.mxu0 0.0
      %5643 = vmatprep.subr.mxu0 0.0
      %5644 = vmatpush1.xpose.msra.mxu0 0.0
      %5645 = vmatprep.subr.mxu0 0.0
      %5646 = vmatpush1.xpose.msra.mxu0 0.0
      %5647 = vmatprep.subr.mxu0 0.0
      %5648 = vmatpush1.xpose.msra.mxu0 %v5615
      %5649 = vmatprep.subr.mxu0 0.0
      %5650 = vmatpush2.xpose.msra.mxu0 0.0
      %5651 = vmatprep.subr.mxu0 0.0
      %5652 = vmatpush2.xpose.msra.mxu0 0.0
      %5653 = vmatprep.subr.mxu0 0.0
      %5654 = vmatpush2.xpose.msra.mxu0 0.0
      %5655 = vmatprep.subr.mxu0 0.0
      %5656 = vmatpush2.xpose.msra.mxu0 0.0
      %5657 = vmatprep.subr.mxu0 0.0
      %5658 = vmatpush2.xpose.msra.mxu0 0.0
      %5659 = vmatprep.subr.mxu0 0.0
      %5660 = vmatpush2.xpose.msra.mxu0 0.0
      %5661 = vmatprep.subr.mxu0 0.0
      %5662 = vmatpush2.xpose.msra.mxu0 0.0
      %5663 = vmatprep.subr.mxu0 0.0
      %5664 = vmatpush2.xpose.msra.mxu0 0.0
      %5665 = vmatprep.subr.mxu0 0.0
      %5666 = vmatpush2.xpose.msra.mxu0 0.0
      %5667 = vmatprep.subr.mxu0 0.0
      %5668 = vmatpush2.xpose.msra.mxu0 0.0
      %5669 = vmatprep.subr.mxu0 0.0
      %5670 = vmatpush2.xpose.msra.mxu0 0.0
      %5671 = vmatprep.subr.mxu0 0.0
      %5672 = vmatpush2.xpose.msra.mxu0 0.0
      %5673 = vmatprep.subr.mxu0 0.0
      %5674 = vmatpush2.xpose.msra.mxu0 0.0
      %5675 = vmatprep.subr.mxu0 0.0
      %5676 = vmatpush2.xpose.msra.mxu0 0.0
      %5677 = vmatprep.subr.mxu0 0.0
      %5678 = vmatpush2.xpose.msra.mxu0 0.0
      %5679 = vmatprep.subr.mxu0 0.0
      %5680 = vmatpush2.xpose.msra.mxu0 0.0
      %5681 = vmatprep.mubr.f32.mxu0 0.0
      %5682 = vmatmul.mubr.f32.gmra.mxu0 %v5611
      %v5683 = vpop.f32.mrf.mxu0
      %v5684 = vadd.f32 0.0, %v5683
      %v5685 = vpop.f32.mrf.mxu0
      %5686 = vmatprep.mubr.f32.mxu0 0.0
      %5687 = vmatmul.mubr.f32.gmra.mxu0 %v5613
      %v5688 = vpop.f32.mrf.mxu0
      %v5689 = vadd.f32 0.0, %v5688
      %v5690 = vpop.f32.mrf.mxu0
      %5691 = vdwg.mxu0
      %v5692 = vmul.f32 %v5684, 0.5
      %v5693 = vmul.f32 %v5689, 0.5
      %v5694 = vsel %vm3732, %v5692, -inf
      %5695 = vmax.xlane.f32.xlu0 %v5694
      %v5696 = vpop.xlane.xlu0 %5695
      %v5697 = vsel %vm3732, %v5693, -inf
      %5698 = vmax.xlane.f32.xlu0 %v5697
      %v5699 = vpop.xlane.xlu0 %5698
      %v5700 = vsub.f32 %v5692, %v5696
      %v5701 = vsub.f32 %v5693, %v5699
      %v5702 = vmul.f32 %v5700, 1.442695
      %v5703 = vpow.pop %v5702
      %v5704 = vmul.f32 %v5701, 1.442695
      %v5705 = vpow.pop %v5704
      %v5706 = vsel %vm3732, %v5703, 0.0
      %5707 = vadd.xlane.f32.xlu0 %v5706
      %v5708 = vpop.xlane.xlu0 %5707
      %v5709 = vsel %vm3732, %v5705, 0.0
      %5710 = vadd.xlane.f32.xlu0 %v5709
      %v5711 = vpop.xlane.xlu0 %5710
      %v5712 = vrcp.pop %v5708
      %v5713 = vrcp.pop %v5711
      %v5714 = vmul.f32 %v5703, %v5712
      %v5715 = vmul.f32 %v5705, %v5713
      %5716 = vrot.lane.b32.xlu0 %v3643, 100
      %v5717 = vpop.permute.xlu0 %5716
      %v5720 = vsel %vm3732, %v5714, 0
      %v5723 = vsel %vm3732, %v5715, 0
      %5725 = vmatprep.subr.mxu0 0.0
      %5726 = vmatpush1.msra.mxu0 0.0
      %5727 = vmatprep.subr.mxu0 0.0
      %5728 = vmatpush1.msra.mxu0 0.0
      %5729 = vmatprep.subr.mxu0 0.0
      %5730 = vmatpush1.msra.mxu0 0.0
      %5731 = vmatprep.subr.mxu0 0.0
      %5732 = vmatpush1.msra.mxu0 0.0
      %5733 = vmatprep.subr.mxu0 0.0
      %5734 = vmatpush1.msra.mxu0 0.0
      %5735 = vmatprep.subr.mxu0 0.0
      %5736 = vmatpush1.msra.mxu0 0.0
      %5737 = vmatprep.subr.mxu0 0.0
      %5738 = vmatpush1.msra.mxu0 0.0
      %5739 = vmatprep.subr.mxu0 0.0
      %5740 = vmatpush1.msra.mxu0 0.0
      %5741 = vmatprep.subr.mxu0 0.0
      %5742 = vmatpush1.msra.mxu0 0.0
      %5743 = vmatprep.subr.mxu0 0.0
      %5744 = vmatpush1.msra.mxu0 0.0
      %5745 = vmatprep.subr.mxu0 0.0
      %5746 = vmatpush1.msra.mxu0 0.0
      %5747 = vmatprep.subr.mxu0 0.0
      %5748 = vmatpush1.msra.mxu0 0.0
      %5749 = vmatprep.subr.mxu0 0.0
      %5750 = vmatpush1.msra.mxu0 0.0
      %5751 = vmatprep.subr.mxu0 0.0
      %5752 = vmatpush1.msra.mxu0 0.0
      %5753 = vmatprep.subr.mxu0 0.0
      %5754 = vmatpush1.msra.mxu0 0.0
      %5755 = vmatprep.subr.mxu0 0.0
      %5756 = vmatpush1.msra.mxu0 %v5717
      %5757 = vmatprep.subr.mxu0 0.0
      %5758 = vmatpush2.msra.mxu0 0.0
      %5759 = vmatprep.subr.mxu0 0.0
      %5760 = vmatpush2.msra.mxu0 0.0
      %5761 = vmatprep.subr.mxu0 0.0
      %5762 = vmatpush2.msra.mxu0 0.0
      %5763 = vmatprep.subr.mxu0 0.0
      %5764 = vmatpush2.msra.mxu0 0.0
      %5765 = vmatprep.subr.mxu0 0.0
      %5766 = vmatpush2.msra.mxu0 0.0
      %5767 = vmatprep.subr.mxu0 0.0
      %5768 = vmatpush2.msra.mxu0 0.0
      %5769 = vmatprep.subr.mxu0 0.0
      %5770 = vmatpush2.msra.mxu0 0.0
      %5771 = vmatprep.subr.mxu0 0.0
      %5772 = vmatpush2.msra.mxu0 0.0
      %5773 = vmatprep.subr.mxu0 0.0
      %5774 = vmatpush2.msra.mxu0 0.0
      %5775 = vmatprep.subr.mxu0 0.0
      %5776 = vmatpush2.msra.mxu0 0.0
      %5777 = vmatprep.subr.mxu0 0.0
      %5778 = vmatpush2.msra.mxu0 0.0
      %5779 = vmatprep.subr.mxu0 0.0
      %5780 = vmatpush2.msra.mxu0 0.0
      %5781 = vmatprep.subr.mxu0 0.0
      %5782 = vmatpush2.msra.mxu0 0.0
      %5783 = vmatprep.subr.mxu0 0.0
      %5784 = vmatpush2.msra.mxu0 0.0
      %5785 = vmatprep.subr.mxu0 0.0
      %5786 = vmatpush2.msra.mxu0 0.0
      %5787 = vmatprep.subr.mxu0 0.0
      %5788 = vmatpush2.msra.mxu0 0.0
      %5789 = vmatprep.mubr.f32.mxu0 0.0
      %5790 = vmatmul.mubr.f32.gmra.mxu0 %v5720
      %v5791 = vpop.f32.mrf.mxu0
      %v5792 = vadd.f32 0.0, %v5791
      %v5793 = vpop.f32.mrf.mxu0
      %5794 = vmatprep.mubr.f32.mxu0 0.0
      %5795 = vmatmul.mubr.f32.gmra.mxu0 %v5723
      %v5796 = vpop.f32.mrf.mxu0
      %v5797 = vadd.f32 0.0, %v5796
      %v5798 = vpop.f32.mrf.mxu0
      %5799 = vdwg.mxu0
      %v5800 = vrot.slane %v3377, 4
      %v5802 = vsel %vm1020, %v5792, 0
      %v5805 = vsel %vm1020, %v5797, 0
      %v5807 = vsel %vm1426, %v5800, 0
      %5809 = vmatprep.subr.mxu0 0.0
      %5810 = vmatpush1.msra.mxu0 0.0
      %5811 = vmatprep.subr.mxu0 0.0
      %5812 = vmatpush1.msra.mxu0 0.0
      %5813 = vmatprep.subr.mxu0 0.0
      %5814 = vmatpush1.msra.mxu0 0.0
      %5815 = vmatprep.subr.mxu0 0.0
      %5816 = vmatpush1.msra.mxu0 0.0
      %5817 = vmatprep.subr.mxu0 0.0
      %5818 = vmatpush1.msra.mxu0 0.0
      %5819 = vmatprep.subr.mxu0 0.0
      %5820 = vmatpush1.msra.mxu0 0.0
      %5821 = vmatprep.subr.mxu0 0.0
      %5822 = vmatpush1.msra.mxu0 0.0
      %5823 = vmatprep.subr.mxu0 0.0
      %5824 = vmatpush1.msra.mxu0 0.0
      %5825 = vmatprep.subr.mxu0 0.0
      %5826 = vmatpush1.msra.mxu0 0.0
      %5827 = vmatprep.subr.mxu0 0.0
      %5828 = vmatpush1.msra.mxu0 0.0
      %5829 = vmatprep.subr.mxu0 0.0
      %5830 = vmatpush1.msra.mxu0 0.0
      %5831 = vmatprep.subr.mxu0 0.0
      %5832 = vmatpush1.msra.mxu0 0.0
      %5833 = vmatprep.subr.mxu0 0.0
      %5834 = vmatpush1.msra.mxu0 0.0
      %5835 = vmatprep.subr.mxu0 0.0
      %5836 = vmatpush1.msra.mxu0 0.0
      %5837 = vmatprep.subr.mxu0 0.0
      %5838 = vmatpush1.msra.mxu0 0.0
      %5839 = vmatprep.subr.mxu0 0.0
      %5840 = vmatpush1.msra.mxu0 %v5807
      %5841 = vmatprep.subr.mxu0 0.0
      %5842 = vmatpush2.msra.mxu0 0.0
      %5843 = vmatprep.subr.mxu0 0.0
      %5844 = vmatpush2.msra.mxu0 0.0
      %5845 = vmatprep.subr.mxu0 0.0
      %5846 = vmatpush2.msra.mxu0 0.0
      %5847 = vmatprep.subr.mxu0 0.0
      %5848 = vmatpush2.msra.mxu0 0.0
      %5849 = vmatprep.subr.mxu0 0.0
      %5850 = vmatpush2.msra.mxu0 0.0
      %5851 = vmatprep.subr.mxu0 0.0
      %5852 = vmatpush2.msra.mxu0 0.0
      %5853 = vmatprep.subr.mxu0 0.0
      %5854 = vmatpush2.msra.mxu0 0.0
      %5855 = vmatprep.subr.mxu0 0.0
      %5856 = vmatpush2.msra.mxu0 0.0
      %5857 = vmatprep.subr.mxu0 0.0
      %5858 = vmatpush2.msra.mxu0 0.0
      %5859 = vmatprep.subr.mxu0 0.0
      %5860 = vmatpush2.msra.mxu0 0.0
      %5861 = vmatprep.subr.mxu0 0.0
      %5862 = vmatpush2.msra.mxu0 0.0
      %5863 = vmatprep.subr.mxu0 0.0
      %5864 = vmatpush2.msra.mxu0 0.0
      %5865 = vmatprep.subr.mxu0 0.0
      %5866 = vmatpush2.msra.mxu0 0.0
      %5867 = vmatprep.subr.mxu0 0.0
      %5868 = vmatpush2.msra.mxu0 0.0
      %5869 = vmatprep.subr.mxu0 0.0
      %5870 = vmatpush2.msra.mxu0 0.0
      %5871 = vmatprep.subr.mxu0 0.0
      %5872 = vmatpush2.msra.mxu0 0.0
      %5873 = vmatprep.mubr.f32.mxu0 0.0
      %5874 = vmatmul.mubr.f32.gmra.mxu0 %v5802
      %v5875 = vpop.f32.mrf.mxu0
      %v5876 = vadd.f32 0.0, %v5875
      %v5877 = vpop.f32.mrf.mxu0
      %5878 = vmatprep.mubr.f32.mxu0 0.0
      %5879 = vmatmul.mubr.f32.gmra.mxu0 %v5805
      %v5880 = vpop.f32.mrf.mxu0
      %v5881 = vadd.f32 0.0, %v5880
      %v5882 = vpop.f32.mrf.mxu0
      %5883 = vdwg.mxu0
      %v5884 = vadd.f32 %v5603, %v5876
      %v5885 = vadd.f32 %v5604, %v5881
      %v5886 = vadd.f32 %v3364, %v5884
      %v5887 = vadd.f32 %v3365, %v5885
      %v5889 = vlaneseq
      %v5890 = vshrl.u32 %v5889, 7
      %v5891 = vsub.s32 0, %v5890
      %v5892 = vrot.slane %v3378, %v5891
      %v5894 = vadd.f32 %v5886, %v5892
      %v5895 = vadd.f32 %v5887, %v5892
      %v5896 = vld [vmem:[%s18 + $0x1] sm:$0x1]
      %v5897 = vld [vmem:[%s19 + $0x1] sm:$0x1]
      %v5898 = vsel %vm748, %v5894, 0.0
      %5899 = vadd.xlane.f32.xlu0 %v5898
      %v5900 = vpop.xlane.xlu0 %5899
      %v5901 = vsel %vm748, %v5895, 0.0
      %5902 = vadd.xlane.f32.xlu0 %v5901
      %v5903 = vpop.xlane.xlu0 %5902
      %v5904 = vmul.f32 %v5900, %v3333
      %v5905 = vmul.f32 %v5903, %v3333
      %v5906 = vsub.f32 %v5894, %v5904
      %v5907 = vsub.f32 %v5895, %v5905
      %v5908 = vmul.f32 %v5906, %v5906
      %v5909 = vmul.f32 %v5907, %v5907
      %v5910 = vsel %vm748, %v5908, 0.0
      %5911 = vadd.xlane.f32.xlu0 %v5910
      %v5912 = vpop.xlane.xlu0 %5911
      %v5913 = vsel %vm748, %v5909, 0.0
      %5914 = vadd.xlane.f32.xlu0 %v5913
      %v5915 = vpop.xlane.xlu0 %5914
      %v5916 = vmul.f32 %v5912, %v3333
      %v5917 = vmul.f32 %v5915, %v3333
      %v5918 = vadd.f32 %v5916, 1e-05
      %v5919 = vadd.f32 %v5917, 1e-05
      %v5920 = vrsqrt.pop %v5918
      %v5921 = vrsqrt.pop %v5919
      %v5922 = vmul.f32 %v5906, %v5920
      %v5923 = vmul.f32 %v5907, %v5921
      %v5924 = vlaneseq
      %v5925 = vshrl.u32 %v5924, 7
      %v5926 = vsub.s32 0, %v5925
      %v5927 = vrot.slane %v5896, %v5926
      %v5928 = vmul.f32 %v5922, %v5927
      %v5929 = vmul.f32 %v5923, %v5927
      %v5930 = vlaneseq
      %v5931 = vshrl.u32 %v5930, 7
      %v5932 = vsub.s32 0, %v5931
      %v5933 = vrot.slane %v5897, %v5932
      %v5934 = vadd.f32 %v5928, %v5933
      %v5935 = vadd.f32 %v5929, %v5933
      %v5936 = vld [vmem:[%s14] sm:$0xff]
      %v5937 = vld [vmem:[%s14 + $0x8] sm:$0xff]
      %v5938 = vld [vmem:[%s14 + $0x10] sm:$0xff]
      %v5939 = vld [vmem:[%s14 + $0x18] sm:$0xff]
      %v5940 = vld [vmem:[%s15] sm:$0x1]
      %v5942 = vlaneseq
      %v5943 = vshrl.u32 %v5942, 7
      %v5944 = vsub.s32 0, %v5943
      %v5945 = vrot.slane %v5940, %v5944
      %v5948 = vsel %vm748, %v5934, 0
      %v5951 = vsel %vm748, %v5935, 0
      %5953 = vmatprep.subr.mxu0 0.0
      %5954 = vmatpush1.msra.mxu0 0.0
      %5955 = vmatprep.subr.mxu0 0.0
      %5956 = vmatpush1.msra.mxu0 0.0
      %5957 = vmatprep.subr.mxu0 0.0
      %5958 = vmatpush1.msra.mxu0 0.0
      %5959 = vmatprep.subr.mxu0 0.0
      %5960 = vmatpush1.msra.mxu0 0.0
      %5961 = vmatprep.subr.mxu0 0.0
      %5962 = vmatpush1.msra.mxu0 0.0
      %5963 = vmatprep.subr.mxu0 0.0
      %5964 = vmatpush1.msra.mxu0 0.0
      %5965 = vmatprep.subr.mxu0 0.0
      %5966 = vmatpush1.msra.mxu0 0.0
      %5967 = vmatprep.subr.mxu0 0.0
      %5968 = vmatpush1.msra.mxu0 0.0
      %5969 = vmatprep.subr.mxu0 0.0
      %5970 = vmatpush1.msra.mxu0 0.0
      %5971 = vmatprep.subr.mxu0 0.0
      %5972 = vmatpush1.msra.mxu0 0.0
      %5973 = vmatprep.subr.mxu0 0.0
      %5974 = vmatpush1.msra.mxu0 0.0
      %5975 = vmatprep.subr.mxu0 0.0
      %5976 = vmatpush1.msra.mxu0 0.0
      %5977 = vmatprep.subr.mxu0 0.0
      %5978 = vmatpush1.msra.mxu0 %v5939
      %5979 = vmatprep.subr.mxu0 0.0
      %5980 = vmatpush1.msra.mxu0 %v5938
      %5981 = vmatprep.subr.mxu0 0.0
      %5982 = vmatpush1.msra.mxu0 %v5937
      %5983 = vmatprep.subr.mxu0 0.0
      %5984 = vmatpush1.msra.mxu0 %v5936
      %5985 = vmatprep.subr.mxu0 0.0
      %5986 = vmatpush2.msra.mxu0 0.0
      %5987 = vmatprep.subr.mxu0 0.0
      %5988 = vmatpush2.msra.mxu0 0.0
      %5989 = vmatprep.subr.mxu0 0.0
      %5990 = vmatpush2.msra.mxu0 0.0
      %5991 = vmatprep.subr.mxu0 0.0
      %5992 = vmatpush2.msra.mxu0 0.0
      %5993 = vmatprep.subr.mxu0 0.0
      %5994 = vmatpush2.msra.mxu0 0.0
      %5995 = vmatprep.subr.mxu0 0.0
      %5996 = vmatpush2.msra.mxu0 0.0
      %5997 = vmatprep.subr.mxu0 0.0
      %5998 = vmatpush2.msra.mxu0 0.0
      %5999 = vmatprep.subr.mxu0 0.0
      %6000 = vmatpush2.msra.mxu0 0.0
      %6001 = vmatprep.subr.mxu0 0.0
      %6002 = vmatpush2.msra.mxu0 0.0
      %6003 = vmatprep.subr.mxu0 0.0
      %6004 = vmatpush2.msra.mxu0 0.0
      %6005 = vmatprep.subr.mxu0 0.0
      %6006 = vmatpush2.msra.mxu0 0.0
      %6007 = vmatprep.subr.mxu0 0.0
      %6008 = vmatpush2.msra.mxu0 0.0
      %6009 = vmatprep.subr.mxu0 0.0
      %6010 = vmatpush2.msra.mxu0 0.0
      %6011 = vmatprep.subr.mxu0 0.0
      %6012 = vmatpush2.msra.mxu0 0.0
      %6013 = vmatprep.subr.mxu0 0.0
      %6014 = vmatpush2.msra.mxu0 0.0
      %6015 = vmatprep.subr.mxu0 0.0
      %6016 = vmatpush2.msra.mxu0 0.0
      %6017 = vmatprep.mubr.f32.mxu0 0.0
      %6018 = vmatmul.mubr.f32.gmra.mxu0 %v5948
      %v6019 = vpop.f32.mrf.mxu0
      %v6020 = vadd.f32 %v5945, %v6019
      %v6021 = vpop.f32.mrf.mxu0
      %6022 = vmatprep.mubr.f32.mxu0 0.0
      %6023 = vmatmul.mubr.f32.gmra.mxu0 %v5951
      %v6024 = vpop.f32.mrf.mxu0
      %v6025 = vadd.f32 %v5945, %v6024
      %v6026 = vpop.f32.mrf.mxu0
      %6027 = vdwg.mxu0
      %v6028 = vmax.f32 %v6020, 0.0
      %v6029 = vmax.f32 %v6025, 0.0
      %v6030 = vld [vmem:[%s16] sm:$0xff]
      %v6031 = vld [vmem:[%s16 + $0x8] sm:$0xff]
      %v6032 = vld [vmem:[%s16 + $0x10] sm:$0xff]
      %v6033 = vld [vmem:[%s16 + $0x18] sm:$0xff]
      %v6034 = vld [vmem:[%s16 + $0x20] sm:$0xff]
      %v6035 = vld [vmem:[%s16 + $0x28] sm:$0xff]
      %v6036 = vld [vmem:[%s16 + $0x30] sm:$0xff]
      %v6037 = vld [vmem:[%s16 + $0x38] sm:$0xff]
      %vm6038 = vcmask 523264
      %v6040 = vsel %vm6038, %v6028, 0
      %v6043 = vsel %vm6038, %v6029, 0
      %6045 = vmatprep.subr.mxu0 0.0
      %6046 = vmatpush1.msra.mxu0 0.0
      %6047 = vmatprep.subr.mxu0 0.0
      %6048 = vmatpush1.msra.mxu0 0.0
      %6049 = vmatprep.subr.mxu0 0.0
      %6050 = vmatpush1.msra.mxu0 0.0
      %6051 = vmatprep.subr.mxu0 0.0
      %6052 = vmatpush1.msra.mxu0 0.0
      %6053 = vmatprep.subr.mxu0 0.0
      %6054 = vmatpush1.msra.mxu0 0.0
      %6055 = vmatprep.subr.mxu0 0.0
      %6056 = vmatpush1.msra.mxu0 0.0
      %6057 = vmatprep.subr.mxu0 0.0
      %6058 = vmatpush1.msra.mxu0 0.0
      %6059 = vmatprep.subr.mxu0 0.0
      %6060 = vmatpush1.msra.mxu0 0.0
      %6061 = vmatprep.subr.mxu0 0.0
      %6062 = vmatpush1.msra.mxu0 %v6037
      %6063 = vmatprep.subr.mxu0 0.0
      %6064 = vmatpush1.msra.mxu0 %v6036
      %6065 = vmatprep.subr.mxu0 0.0
      %6066 = vmatpush1.msra.mxu0 %v6035
      %6067 = vmatprep.subr.mxu0 0.0
      %6068 = vmatpush1.msra.mxu0 %v6034
      %6069 = vmatprep.subr.mxu0 0.0
      %6070 = vmatpush1.msra.mxu0 %v6033
      %6071 = vmatprep.subr.mxu0 0.0
      %6072 = vmatpush1.msra.mxu0 %v6032
      %6073 = vmatprep.subr.mxu0 0.0
      %6074 = vmatpush1.msra.mxu0 %v6031
      %6075 = vmatprep.subr.mxu0 0.0
      %6076 = vmatpush1.msra.mxu0 %v6030
      %6077 = vmatprep.subr.mxu0 0.0
      %6078 = vmatpush2.msra.mxu0 0.0
      %6079 = vmatprep.subr.mxu0 0.0
      %6080 = vmatpush2.msra.mxu0 0.0
      %6081 = vmatprep.subr.mxu0 0.0
      %6082 = vmatpush2.msra.mxu0 0.0
      %6083 = vmatprep.subr.mxu0 0.0
      %6084 = vmatpush2.msra.mxu0 0.0
      %6085 = vmatprep.subr.mxu0 0.0
      %6086 = vmatpush2.msra.mxu0 0.0
      %6087 = vmatprep.subr.mxu0 0.0
      %6088 = vmatpush2.msra.mxu0 0.0
      %6089 = vmatprep.subr.mxu0 0.0
      %6090 = vmatpush2.msra.mxu0 0.0
      %6091 = vmatprep.subr.mxu0 0.0
      %6092 = vmatpush2.msra.mxu0 0.0
      %6093 = vmatprep.subr.mxu0 0.0
      %6094 = vmatpush2.msra.mxu0 0.0
      %6095 = vmatprep.subr.mxu0 0.0
      %6096 = vmatpush2.msra.mxu0 0.0
      %6097 = vmatprep.subr.mxu0 0.0
      %6098 = vmatpush2.msra.mxu0 0.0
      %6099 = vmatprep.subr.mxu0 0.0
      %6100 = vmatpush2.msra.mxu0 0.0
      %6101 = vmatprep.subr.mxu0 0.0
      %6102 = vmatpush2.msra.mxu0 0.0
      %6103 = vmatprep.subr.mxu0 0.0
      %6104 = vmatpush2.msra.mxu0 0.0
      %6105 = vmatprep.subr.mxu0 0.0
      %6106 = vmatpush2.msra.mxu0 0.0
      %6107 = vmatprep.subr.mxu0 0.0
      %6108 = vmatpush2.msra.mxu0 0.0
      %6109 = vmatprep.mubr.f32.mxu0 0.0
      %6110 = vmatmul.mubr.f32.gmra.mxu0 %v6040
      %v6111 = vpop.f32.mrf.mxu0
      %v6112 = vadd.f32 0.0, %v6111
      %v6113 = vpop.f32.mrf.mxu0
      %6114 = vmatprep.mubr.f32.mxu0 0.0
      %6115 = vmatmul.mubr.f32.gmra.mxu0 %v6043
      %v6116 = vpop.f32.mrf.mxu0
      %v6117 = vadd.f32 0.0, %v6116
      %v6118 = vpop.f32.mrf.mxu0
      %6119 = vdwg.mxu0
      %v6120 = vadd.f32 %v5934, %v6112
      %v6121 = vadd.f32 %v5935, %v6117
      %v6122 = vld [vmem:[%s17] sm:$0x1]
      %v6124 = vlaneseq
      %v6125 = vshrl.u32 %v6124, 7
      %v6126 = vsub.s32 0, %v6125
      %v6127 = vrot.slane %v6122, %v6126
      %v6129 = vadd.f32 %v6120, %v6127
      %v6130 = vadd.f32 %v6121, %v6127
      %v6131 = vld [vmem:[%s18 + $0x2] sm:$0x1]
      %v6132 = vld [vmem:[%s19 + $0x2] sm:$0x1]
      %v6133 = vsel %vm748, %v6129, 0.0
      %6134 = vadd.xlane.f32.xlu0 %v6133
      %v6135 = vpop.xlane.xlu0 %6134
      %v6136 = vsel %vm748, %v6130, 0.0
      %6137 = vadd.xlane.f32.xlu0 %v6136
      %v6138 = vpop.xlane.xlu0 %6137
      %v6139 = vmul.f32 %v6135, %v3333
      %v6140 = vmul.f32 %v6138, %v3333
      %v6141 = vsub.f32 %v6129, %v6139
      %v6142 = vsub.f32 %v6130, %v6140
      %v6143 = vmul.f32 %v6141, %v6141
      %v6144 = vmul.f32 %v6142, %v6142
      %v6145 = vsel %vm748, %v6143, 0.0
      %6146 = vadd.xlane.f32.xlu0 %v6145
      %v6147 = vpop.xlane.xlu0 %6146
      %v6148 = vsel %vm748, %v6144, 0.0
      %6149 = vadd.xlane.f32.xlu0 %v6148
      %v6150 = vpop.xlane.xlu0 %6149
      %v6151 = vmul.f32 %v6147, %v3333
      %v6152 = vmul.f32 %v6150, %v3333
      %v6153 = vadd.f32 %v6151, 1e-05
      %v6154 = vadd.f32 %v6152, 1e-05
      %v6155 = vrsqrt.pop %v6153
      %v6156 = vrsqrt.pop %v6154
      %v6157 = vmul.f32 %v6141, %v6155
      %v6158 = vmul.f32 %v6142, %v6156
      %v6159 = vlaneseq
      %v6160 = vshrl.u32 %v6159, 7
      %v6161 = vsub.s32 0, %v6160
      %v6162 = vrot.slane %v6131, %v6161
      %v6163 = vmul.f32 %v6157, %v6162
      %v6164 = vmul.f32 %v6158, %v6162
      %v6165 = vlaneseq
      %v6166 = vshrl.u32 %v6165, 7
      %v6167 = vsub.s32 0, %v6166
      %v6168 = vrot.slane %v6132, %v6167
      %v6169 = vadd.f32 %v6163, %v6168
      %v6170 = vadd.f32 %v6164, %v6168
      %6171 = vst.msk [vmem:[%s720] sm:$0xff] %vm748, %v6169
      %6172 = vst.msk [vmem:[%s720 + $0x8] sm:$0xff] %vm748, %v6170
      %p6173 = scmp.lt.s32.totalorder %s31, 1
      %s6174 = scalar_select %p6173, %s31, 1
      %s6175 = smul.addr %s6174, 2
      %s6176 = smul.addr %s6175, 8
      %s6177 = scalar_lea.vmem %s20, %s6176
      // Predicated region
      $region101: #{uv_transformer_encoder_layer.1} parent=99 // pred_check
        %p6178 = pneg %p499
      $region102: #{uv_transformer_encoder_layer.1} parent=99 // pred_check_branch
        %6180 = sbr.rel (%p6178) target = $region104
      $region103: #{uv_transformer_encoder_layer.1} parent=99 // pred_region
        _
      $region104: #{uv_transformer_encoder_layer.1} parent=99 // pred_fallthru
        _
    $region100: #{uv_transformer_encoder_layer.1} parent=5 // pred_fallthru
      _
    %p6181 = scmp.le.s32.totalorder 2, %s26
    // Predicated region
    $region105: #{uv_transformer_encoder_layer.1} parent=5 // pred_check
      %p6182 = pneg %p6181
    $region106: #{uv_transformer_encoder_layer.1} parent=5 // pred_check_branch
      %6184 = sbr.rel (%p6182) target = $region108
    $region107: #{uv_transformer_encoder_layer.1} parent=5 // pred_region
      %s6185 = ssub.s32 %s26, 2
      // Predicated region
      $region109: #{uv_transformer_encoder_layer.1} parent=107 // pred_check
        %p6186 = pneg %p505
      $region110: #{uv_transformer_encoder_layer.1} parent=107 // pred_check_branch
        %6188 = sbr.rel (%p6186) target = $region112
      $region111: #{uv_transformer_encoder_layer.1} parent=107 // pred_region
        %p6189 = scmp.lt.s32.totalorder %s32, 1
        %s6190 = scalar_select %p6189, %s32, 1
        %s6191 = smul.addr %s6190, 2
        %s6192 = smul.addr %s6191, 8
        %s6193 = scalar_lea.vmem %s20, %s6192
      $region112: #{uv_transformer_encoder_layer.1} parent=107 // pred_fallthru
        _
    $region108: #{uv_transformer_encoder_layer.1} parent=5 // pred_fallthru
      _
  $region6: #{uv_transformer_encoder_layer.1} parent=0 // loop_footer
    %s30 = sadd.s32 1, %s26
  $region7: #{uv_transformer_encoder_layer.1} parent=0 // loop_footer_branch
    %25 = sbr.rel target = $region3
  $region8: #{uv_transformer_encoder_layer.1} parent=0 // loop_exit
    _

</llo_original>
